<compile_context>
chip_gen: v5e
topology: v5e:2x2
jax: 0.10.0
libtpu: 0.0.40
codegen_flags: <defaults>
</compile_context>

<pallas_src>
import functools

import jax
import jax.numpy as jnp
from jax.experimental import pallas as pl
from jax.experimental.pallas import tpu as pltpu


# ---------------------------------------------------------------------------
# Fused conv GEMM + bias + ReLU + 2x2 max-pool kernel
# ---------------------------------------------------------------------------
def _conv_gemm_relu_pool_kernel(x_ref, w_ref, b_ref, o_ref, y_ref, *,
                                imgs_per_tile, q):
    # x_ref: (tm, K) patch rows for `imgs_per_tile` whole images.
    #        Row order per image is (ph, pw, h2, w2): 4 contiguous slabs of
    #        q = Ho2*Wo2 rows, one per pool partner.
    # w_ref: (K, Cout)        b_ref: (1, Cout) f32
    # o_ref: (imgs_per_tile * q, Cout) -- pooled output, row order (h2, w2)
    # y_ref: VMEM scratch (tm, Cout) f32 -- pre-pool conv output (never in HBM)
    y_ref[...] = (
        jnp.dot(x_ref[...], w_ref[...], preferred_element_type=jnp.float32)
        + b_ref[...]
    )
    for im in range(imgs_per_tile):            # tiny static unroll
        base = im * 4 * q
        m = y_ref[pl.ds(base, q), :]
        for j in range(1, 4):                  # dense slab reads, no strides
            m = jnp.maximum(m, y_ref[pl.ds(base + j * q, q), :])
        # relu(max(.)) == max(relu(.)) because max is monotone.
        o_ref[pl.ds(im * q, q), :] = jnp.maximum(m, 0.0).astype(o_ref.dtype)


def _pick_images_per_tile(batch, Ho, Wo, K, itemsize,
                          vmem_tile_bytes=4 << 20):
    """Largest divisor of `batch` whose patch tile fits a VMEM budget and
    whose M-tile / output-tile satisfy the (8,128) sublane rule (or cover the
    full array, which is always legal)."""
    rows_img = Ho * Wo
    pooled_img = (Ho // 2) * (Wo // 2)
    max_rows = max(rows_img, vmem_tile_bytes // (K * itemsize))
    divisors = [d for d in range(1, batch + 1) if batch % d == 0]
    ok = [d for d in divisors
          if d == batch
          or ((d * rows_img) % 8 == 0 and (d * pooled_img) % 8 == 0)]
    fitting = [d for d in ok if d * rows_img <= max_rows]
    return max(fitting) if fitting else min(ok)


def conv2d_relu_pool_pallas(x, w, b, *, compute_dtype):
    """VALID kxk conv + bias + ReLU + MaxPool2d(2,2) on NHWC, one Pallas kernel.

    x: (B, H, W, Cin)   w: (kh, kw, Cin, Cout) HWIO   b: (Cout,)
    returns (B, (H-k+1)//2, (W-k+1)//2, Cout) in compute_dtype.
    """
    B, H, W, Cin = x.shape
    k = w.shape[0]
    Cout = w.shape[-1]
    Ho, Wo = H - k + 1, W - k + 1
    assert Ho % 2 == 0 and Wo % 2 == 0, "pool expects even pre-pool dims"
    Ho2, Wo2 = Ho // 2, Wo // 2
    q = Ho2 * Wo2
    K = k * k * Cin
    itemsize = jnp.dtype(compute_dtype).itemsize

    # im2col glue (compute_dtype so the patch matrix is half-width in bf16).
    # Row order: (img, ph, pw, h2, w2); column order: (dh, dw, cin).
    xc = x.astype(compute_dtype)
    cols = [xc[:, dh:dh + Ho, dw:dw + Wo, :]
            for dh in range(k) for dw in range(k)]
    p = jnp.stack(cols, axis=3)                       # (B, Ho, Wo, kk, Cin)
    p = p.reshape(B, Ho2, 2, Wo2, 2, k * k, Cin)
    p = p.transpose(0, 2, 4, 1, 3, 5, 6)              # (B, ph, pw, h2, w2, ..)
    patches = p.reshape(B * Ho * Wo, K)
    wm = w.reshape(K, Cout).astype(compute_dtype)     # same (dh, dw, cin) order
    bm = b.reshape(1, Cout).astype(jnp.float32)

    ib = _pick_images_per_tile(B, Ho, Wo, K, itemsize)   # images per M-tile
    tm = ib * Ho * Wo                                     # exact cover, no pad
    grid = (B // ib,)
    cost = pl.CostEstimate(
        flops=2 * B * Ho * Wo * K * Cout,
        transcendentals=0,
        bytes_accessed=(B * Ho * Wo * K + K * Cout) * itemsize
        + B * q * Cout * itemsize,
    )

    pooled = pl.pallas_call(
        functools.partial(_conv_gemm_relu_pool_kernel, imgs_per_tile=ib, q=q),
        out_shape=jax.ShapeDtypeStruct((B * q, Cout), compute_dtype),
        grid_spec=pltpu.PrefetchScalarGridSpec(
            num_scalar_prefetch=0,
            grid=grid,
            in_specs=[
                pl.BlockSpec((tm, K), lambda i: (i, 0)),
                pl.BlockSpec((K, Cout), lambda i: (0, 0)),
                pl.BlockSpec((1, Cout), lambda i: (0, 0)),
            ],
            out_specs=pl.BlockSpec((ib * q, Cout), lambda i: (i, 0)),
            scratch_shapes=[pltpu.VMEM((tm, Cout), jnp.float32)],
        ),
        compiler_params=pltpu.CompilerParams(
            dimension_semantics=("parallel",)),
        cost_estimate=cost,
    )(patches, wm, bm)
    return pooled.reshape(B, Ho2, Wo2, Cout)   # contiguous -> free reshape


# ---------------------------------------------------------------------------
# Fused fc1 -> ReLU -> fc2 -> ReLU -> fc3 kernel (all weights VMEM-resident)
# ---------------------------------------------------------------------------
def _fc_stack_kernel(x_ref, w1_ref, b1_ref, w2_ref, b2_ref, w3_ref, b3_ref,
                     o_ref):
    h = jnp.dot(x_ref[...], w1_ref[...], preferred_element_type=jnp.float32)
    h = jnp.maximum(h + b1_ref[...], 0.0).astype(w2_ref.dtype)
    h = jnp.dot(h, w2_ref[...], preferred_element_type=jnp.float32)
    h = jnp.maximum(h + b2_ref[...], 0.0).astype(w3_ref.dtype)
    y = jnp.dot(h, w3_ref[...], preferred_element_type=jnp.float32)
    o_ref[...] = (y + b3_ref[...]).astype(o_ref.dtype)


def fc_stack_pallas(x, w1, b1, w2, b2, w3, b3, *, compute_dtype):
    B, K1 = x.shape
    N1, N2, N3 = w1.shape[1], w2.shape[1], w3.shape[1]
    args = (
        x.astype(compute_dtype),
        w1.astype(compute_dtype), b1.reshape(1, N1).astype(jnp.float32),
        w2.astype(compute_dtype), b2.reshape(1, N2).astype(jnp.float32),
        w3.astype(compute_dtype), b3.reshape(1, N3).astype(jnp.float32),
    )

    def full(shape):
        return pl.BlockSpec(shape, lambda i: (0,) * len(shape))

    cost = pl.CostEstimate(
        flops=2 * B * (K1 * N1 + N1 * N2 + N2 * N3),
        transcendentals=0,
        bytes_accessed=(B * K1 + K1 * N1 + N1 * N2 + N2 * N3)
        * jnp.dtype(compute_dtype).itemsize + B * N3 * 4,
    )

    return pl.pallas_call(
        _fc_stack_kernel,
        out_shape=jax.ShapeDtypeStruct((B, N3), jnp.float32),
        grid_spec=pltpu.PrefetchScalarGridSpec(
            num_scalar_prefetch=0,
            grid=(1,),
            in_specs=[full(a.shape) for a in args],
            out_specs=full((B, N3)),
        ),
        compiler_params=pltpu.CompilerParams(
            dimension_semantics=("arbitrary",)),
        cost_estimate=cost,
    )(*args)


# ---------------------------------------------------------------------------
# Model: parameters + forward
# ---------------------------------------------------------------------------
def init_params(key):
    ks = jax.random.split(key, 10)

    def u(k, shape, fan_in):
        bound = 1.0 / jnp.sqrt(jnp.float32(fan_in))
        return jax.random.uniform(k, shape, jnp.float32, -bound, bound)

    # Conv weights are HWIO.  fc1_w rows are ordered (h, w, c) so the NHWC
    # pooled feature map flattens directly (torch's (c,h,w) view-flatten is
    # absorbed into a one-time weight permutation at load time:
    # fc1_w = torch_w.reshape(384,64,5,5).permute(2,3,1,0).reshape(1600,384)).
    return dict(
        conv1_w=u(ks[0], (5, 5, 3, 64), 3 * 5 * 5),
        conv1_b=u(ks[1], (64,), 3 * 5 * 5),
        conv2_w=u(ks[2], (5, 5, 64, 64), 64 * 5 * 5),
        conv2_b=u(ks[3], (64,), 64 * 5 * 5),
        fc1_w=u(ks[4], (64 * 5 * 5, 384), 64 * 5 * 5),
        fc1_b=u(ks[5], (384,), 64 * 5 * 5),
        fc2_w=u(ks[6], (384, 192), 384),
        fc2_b=u(ks[7], (192,), 384),
        fc3_w=u(ks[8], (192, 10), 192),
        fc3_b=u(ks[9], (10,), 192),
    )


def cnn_cifar10_forward(params, x_nchw, *, compute_dtype=jnp.bfloat16):
    # x_nchw: [B, 3, 32, 32] float32 (PyTorch NCHW convention)
    x = jnp.transpose(x_nchw, (0, 2, 3, 1))                      # NHWC
    x = conv2d_relu_pool_pallas(x, params["conv1_w"], params["conv1_b"],
                                compute_dtype=compute_dtype)     # [B,14,14,64]
    x = conv2d_relu_pool_pallas(x, params["conv2_w"], params["conv2_b"],
                                compute_dtype=compute_dtype)     # [B, 5, 5,64]
    B = x.shape[0]
    x = x.reshape(B, 64 * 5 * 5)         # (h, w, c) flatten; fc1_w matches
    return fc_stack_pallas(x, params["fc1_w"], params["fc1_b"],
                           params["fc2_w"], params["fc2_b"],
                           params["fc3_w"], params["fc3_b"],
                           compute_dtype=compute_dtype)          # [B, 10] f32


# ---------------------------------------------------------------------------
# Pure-JAX reference (same math, f32, HIGHEST precision) for validation
# ---------------------------------------------------------------------------
def cnn_cifar10_reference(params, x_nchw):
    hi = jax.lax.Precision.HIGHEST
    x = jnp.transpose(x_nchw, (0, 2, 3, 1)).astype(jnp.float32)

    def conv_relu_pool(x, w, b):
        y = jax.lax.conv_general_dilated(
            x, w, window_strides=(1, 1), padding="VALID",
            dimension_numbers=("NHWC", "HWIO", "NHWC"), precision=hi)
        y = jnp.maximum(y + b, 0.0)
        return jnp.maximum(jnp.maximum(y[:, ::2, ::2], y[:, 1::2, ::2]),
                           jnp.maximum(y[:, ::2, 1::2], y[:, 1::2, 1::2]))

    x = conv_relu_pool(x, params["conv1_w"], params["conv1_b"])
    x = conv_relu_pool(x, params["conv2_w"], params["conv2_b"])
    x = x.reshape(x.shape[0], -1)
    x = jnp.maximum(jnp.dot(x, params["fc1_w"], precision=hi)
                    + params["fc1_b"], 0.0)
    x = jnp.maximum(jnp.dot(x, params["fc2_w"], precision=hi)
                    + params["fc2_b"], 0.0)
    return jnp.dot(x, params["fc3_w"], precision=hi) + params["fc3_b"]


if __name__ == "__main__":
    key = jax.random.PRNGKey(0)
    k_param, k_x = jax.random.split(key)
    params = init_params(k_param)
    # Spatial size must be 32x32 so that after two (conv5 + pool2) stages the
    # feature map is 64*5*5, matching fc1's expected input.
    x = jax.random.normal(k_x, (2, 3, 32, 32), dtype=jnp.float32)

    fwd_f32 = jax.jit(functools.partial(cnn_cifar10_forward,
                                        compute_dtype=jnp.float32))
    fwd_bf16 = jax.jit(functools.partial(cnn_cifar10_forward,
                                         compute_dtype=jnp.bfloat16))
    ref_fn = jax.jit(cnn_cifar10_reference)

    logits_f32 = jax.block_until_ready(fwd_f32(params, x))
    logits_bf16 = jax.block_until_ready(fwd_bf16(params, x))
    ref = jax.block_until_ready(ref_fn(params, x))

    assert logits_f32.shape == (2, 10), logits_f32.shape
    assert logits_bf16.shape == (2, 10), logits_bf16.shape
    assert bool(jnp.all(jnp.isfinite(logits_f32)))
    assert bool(jnp.all(jnp.isfinite(logits_bf16)))

    err_f32 = float(jnp.max(jnp.abs(logits_f32 - ref)))
    err_bf16 = float(jnp.max(jnp.abs(logits_bf16 - ref)))
    assert err_f32 < 2e-2, f"f32 Pallas vs reference mismatch: {err_f32}"
    assert err_bf16 < 2e-1, f"bf16 Pallas sanity check failed: {err_bf16}"
    print("KERNEL_OK")
</pallas_src>

<mosaic_0001>
module attributes {stable_mosaic.version = 11 : i64} {
  func.func @_conv_gemm_relu_pool_kernel(%arg0: i32, %arg1: memref<1568x75xf32, #tpu.memory_space<vmem>>, %arg2: memref<75x64xf32, #tpu.memory_space<vmem>>, %arg3: memref<1x64xf32, #tpu.memory_space<vmem>>, %arg4: memref<392x64xf32, #tpu.memory_space<vmem>>, %arg5: memref<1568x64xf32, #tpu.memory_space<vmem>>) attributes {dimension_semantics = [#tpu.dimension_semantics<parallel>], iteration_bounds = array<i64: 1>, scalar_prefetch = 0 : i64, scratch_operands = 1 : i64, tpu.core_type = #tpu.core_type<tc>, window_params = [{transform_indices = @transform_0, window_bounds = array<i64: 1568, 75>}, {pipeline_mode = #tpu.pipeline_mode<synchronous>, transform_indices = @transform_1, window_bounds = array<i64: 75, 64>}, {pipeline_mode = #tpu.pipeline_mode<synchronous>, transform_indices = @transform_2, window_bounds = array<i64: 1, 64>}, {transform_indices = @transform_3, window_bounds = array<i64: 392, 64>}]} {
    %c0 = arith.constant 0 : index
    %c0_0 = arith.constant 0 : index
    %0 = vector.load %arg1[%c0, %c0_0] : memref<1568x75xf32, #tpu.memory_space<vmem>>, vector<1568x75xf32>
    %c0_1 = arith.constant 0 : index
    %c0_2 = arith.constant 0 : index
    %1 = vector.load %arg2[%c0_1, %c0_2] : memref<75x64xf32, #tpu.memory_space<vmem>>, vector<75x64xf32>
    %cst = arith.constant dense<0.000000e+00> : vector<1568x64xf32>
    %2 = tpu.matmul %0, %1, %cst {dimension_numbers = #tpu.dot_dimension_numbers<[1], [0], [0], [1], [0, 0, 1, 1], [], []>} : vector<1568x75xf32>, vector<75x64xf32>, vector<1568x64xf32> -> vector<1568x64xf32>
    %c0_3 = arith.constant 0 : index
    %c0_4 = arith.constant 0 : index
    %3 = vector.load %arg3[%c0_3, %c0_4] : memref<1x64xf32, #tpu.memory_space<vmem>>, vector<1x64xf32>
    %4 = vector.broadcast %3 : vector<1x64xf32> to vector<1568x64xf32>
    %5 = arith.addf %2, %4 : vector<1568x64xf32>
    %c0_5 = arith.constant 0 : index
    %c0_6 = arith.constant 0 : index
    %6 = vector.load %arg5[%c0_5, %c0_6] : memref<1568x64xf32, #tpu.memory_space<vmem>>, vector<1568x64xf32>
    tpu.vector_store %arg5[%c0_5, %c0_6], %5 {strides = array<i32>} : memref<1568x64xf32, #tpu.memory_space<vmem>>, vector<1568x64xf32>,
    %c0_7 = arith.constant 0 : index
    %c0_8 = arith.constant 0 : index
    %7 = vector.load %arg5[%c0_7, %c0_8] : memref<1568x64xf32, #tpu.memory_space<vmem>>, vector<196x64xf32>
    %c196 = arith.constant 196 : index
    %c0_9 = arith.constant 0 : index
    %8 = vector.load %arg5[%c196, %c0_9] : memref<1568x64xf32, #tpu.memory_space<vmem>>, vector<196x64xf32>
    %9 = arith.maximumf %7, %8 : vector<196x64xf32>
    %c392 = arith.constant 392 : index
    %c0_10 = arith.constant 0 : index
    %10 = vector.load %arg5[%c392, %c0_10] : memref<1568x64xf32, #tpu.memory_space<vmem>>, vector<196x64xf32>
    %11 = arith.maximumf %9, %10 : vector<196x64xf32>
    %c588 = arith.constant 588 : index
    %c0_11 = arith.constant 0 : index
    %12 = vector.load %arg5[%c588, %c0_11] : memref<1568x64xf32, #tpu.memory_space<vmem>>, vector<196x64xf32>
    %13 = arith.maximumf %11, %12 : vector<196x64xf32>
    %cst_12 = arith.constant 0.000000e+00 : f32
    %14 = vector.broadcast %cst_12 : f32 to vector<196x64xf32>
    %15 = arith.maximumf %13, %14 : vector<196x64xf32>
    %c0_13 = arith.constant 0 : index
    %c0_14 = arith.constant 0 : index
    %16 = vector.load %arg4[%c0_13, %c0_14] : memref<392x64xf32, #tpu.memory_space<vmem>>, vector<196x64xf32>
    tpu.vector_store %arg4[%c0_13, %c0_14], %15 {strides = array<i32>} : memref<392x64xf32, #tpu.memory_space<vmem>>, vector<196x64xf32>,
    %c784 = arith.constant 784 : index
    %c0_15 = arith.constant 0 : index
    %17 = vector.load %arg5[%c784, %c0_15] : memref<1568x64xf32, #tpu.memory_space<vmem>>, vector<196x64xf32>
    %c980 = arith.constant 980 : index
    %c0_16 = arith.constant 0 : index
    %18 = vector.load %arg5[%c980, %c0_16] : memref<1568x64xf32, #tpu.memory_space<vmem>>, vector<196x64xf32>
    %19 = arith.maximumf %17, %18 : vector<196x64xf32>
    %c1176 = arith.constant 1176 : index
    %c0_17 = arith.constant 0 : index
    %20 = vector.load %arg5[%c1176, %c0_17] : memref<1568x64xf32, #tpu.memory_space<vmem>>, vector<196x64xf32>
    %21 = arith.maximumf %19, %20 : vector<196x64xf32>
    %c1372 = arith.constant 1372 : index
    %c0_18 = arith.constant 0 : index
    %22 = vector.load %arg5[%c1372, %c0_18] : memref<1568x64xf32, #tpu.memory_space<vmem>>, vector<196x64xf32>
    %23 = arith.maximumf %21, %22 : vector<196x64xf32>
    %cst_19 = arith.constant 0.000000e+00 : f32
    %24 = vector.broadcast %cst_19 : f32 to vector<196x64xf32>
    %25 = arith.maximumf %23, %24 : vector<196x64xf32>
    %c196_20 = arith.constant 196 : index
    %c0_21 = arith.constant 0 : index
    %26 = vector.load %arg4[%c196_20, %c0_21] : memref<392x64xf32, #tpu.memory_space<vmem>>, vector<196x64xf32>
    tpu.vector_store %arg4[%c196_20, %c0_21], %25 {strides = array<i32>} : memref<392x64xf32, #tpu.memory_space<vmem>>, vector<196x64xf32>,
    return
  }
  func.func @transform_0(%arg0: i32) -> (i32, i32) {
    %c0_i32 = arith.constant 0 : i32
    %c0_i32_0 = arith.constant 0 : i32
    return %arg0, %c0_i32 : i32, i32
  }
  func.func @transform_1(%arg0: i32) -> (i32, i32) {
    %c0_i32 = arith.constant 0 : i32
    %c0_i32_0 = arith.constant 0 : i32
    %c0_i32_1 = arith.constant 0 : i32
    return %c0_i32, %c0_i32_0 : i32, i32
  }
  func.func @transform_2(%arg0: i32) -> (i32, i32) {
    %c0_i32 = arith.constant 0 : i32
    %c0_i32_0 = arith.constant 0 : i32
    %c0_i32_1 = arith.constant 0 : i32
    return %c0_i32, %c0_i32_0 : i32, i32
  }
  func.func @transform_3(%arg0: i32) -> (i32, i32) {
    %c0_i32 = arith.constant 0 : i32
    %c0_i32_0 = arith.constant 0 : i32
    return %arg0, %c0_i32 : i32, i32
  }
}

module attributes {stable_mosaic.version = 11 : i64} {
  func.func @_conv_gemm_relu_pool_kernel(%arg0: i32, %arg1: memref<200x1600xf32, #tpu.memory_space<vmem>>, %arg2: memref<1600x64xf32, #tpu.memory_space<vmem>>, %arg3: memref<1x64xf32, #tpu.memory_space<vmem>>, %arg4: memref<50x64xf32, #tpu.memory_space<vmem>>, %arg5: memref<200x64xf32, #tpu.memory_space<vmem>>) attributes {dimension_semantics = [#tpu.dimension_semantics<parallel>], iteration_bounds = array<i64: 1>, scalar_prefetch = 0 : i64, scratch_operands = 1 : i64, tpu.core_type = #tpu.core_type<tc>, window_params = [{transform_indices = @transform_0, window_bounds = array<i64: 200, 1600>}, {pipeline_mode = #tpu.pipeline_mode<synchronous>, transform_indices = @transform_1, window_bounds = array<i64: 1600, 64>}, {pipeline_mode = #tpu.pipeline_mode<synchronous>, transform_indices = @transform_2, window_bounds = array<i64: 1, 64>}, {transform_indices = @transform_3, window_bounds = array<i64: 50, 64>}]} {
    %c0 = arith.constant 0 : index
    %c0_0 = arith.constant 0 : index
    %0 = vector.load %arg1[%c0, %c0_0] : memref<200x1600xf32, #tpu.memory_space<vmem>>, vector<200x1600xf32>
    %c0_1 = arith.constant 0 : index
    %c0_2 = arith.constant 0 : index
    %1 = vector.load %arg2[%c0_1, %c0_2] : memref<1600x64xf32, #tpu.memory_space<vmem>>, vector<1600x64xf32>
    %cst = arith.constant dense<0.000000e+00> : vector<200x64xf32>
    %2 = tpu.matmul %0, %1, %cst {dimension_numbers = #tpu.dot_dimension_numbers<[1], [0], [0], [1], [0, 0, 1, 1], [], []>} : vector<200x1600xf32>, vector<1600x64xf32>, vector<200x64xf32> -> vector<200x64xf32>
    %c0_3 = arith.constant 0 : index
    %c0_4 = arith.constant 0 : index
    %3 = vector.load %arg3[%c0_3, %c0_4] : memref<1x64xf32, #tpu.memory_space<vmem>>, vector<1x64xf32>
    %4 = vector.broadcast %3 : vector<1x64xf32> to vector<200x64xf32>
    %5 = arith.addf %2, %4 : vector<200x64xf32>
    %c0_5 = arith.constant 0 : index
    %c0_6 = arith.constant 0 : index
    %6 = vector.load %arg5[%c0_5, %c0_6] : memref<200x64xf32, #tpu.memory_space<vmem>>, vector<200x64xf32>
    tpu.vector_store %arg5[%c0_5, %c0_6], %5 {strides = array<i32>} : memref<200x64xf32, #tpu.memory_space<vmem>>, vector<200x64xf32>,
    %c0_7 = arith.constant 0 : index
    %c0_8 = arith.constant 0 : index
    %7 = vector.load %arg5[%c0_7, %c0_8] : memref<200x64xf32, #tpu.memory_space<vmem>>, vector<25x64xf32>
    %c25 = arith.constant 25 : index
    %c0_9 = arith.constant 0 : index
    %8 = vector.load %arg5[%c25, %c0_9] : memref<200x64xf32, #tpu.memory_space<vmem>>, vector<25x64xf32>
    %9 = arith.maximumf %7, %8 : vector<25x64xf32>
    %c50 = arith.constant 50 : index
    %c0_10 = arith.constant 0 : index
    %10 = vector.load %arg5[%c50, %c0_10] : memref<200x64xf32, #tpu.memory_space<vmem>>, vector<25x64xf32>
    %11 = arith.maximumf %9, %10 : vector<25x64xf32>
    %c75 = arith.constant 75 : index
    %c0_11 = arith.constant 0 : index
    %12 = vector.load %arg5[%c75, %c0_11] : memref<200x64xf32, #tpu.memory_space<vmem>>, vector<25x64xf32>
    %13 = arith.maximumf %11, %12 : vector<25x64xf32>
    %cst_12 = arith.constant 0.000000e+00 : f32
    %14 = vector.broadcast %cst_12 : f32 to vector<25x64xf32>
    %15 = arith.maximumf %13, %14 : vector<25x64xf32>
    %c0_13 = arith.constant 0 : index
    %c0_14 = arith.constant 0 : index
    %16 = vector.load %arg4[%c0_13, %c0_14] : memref<50x64xf32, #tpu.memory_space<vmem>>, vector<25x64xf32>
    tpu.vector_store %arg4[%c0_13, %c0_14], %15 {strides = array<i32>} : memref<50x64xf32, #tpu.memory_space<vmem>>, vector<25x64xf32>,
    %c100 = arith.constant 100 : index
    %c0_15 = arith.constant 0 : index
    %17 = vector.load %arg5[%c100, %c0_15] : memref<200x64xf32, #tpu.memory_space<vmem>>, vector<25x64xf32>
    %c125 = arith.constant 125 : index
    %c0_16 = arith.constant 0 : index
    %18 = vector.load %arg5[%c125, %c0_16] : memref<200x64xf32, #tpu.memory_space<vmem>>, vector<25x64xf32>
    %19 = arith.maximumf %17, %18 : vector<25x64xf32>
    %c150 = arith.constant 150 : index
    %c0_17 = arith.constant 0 : index
    %20 = vector.load %arg5[%c150, %c0_17] : memref<200x64xf32, #tpu.memory_space<vmem>>, vector<25x64xf32>
    %21 = arith.maximumf %19, %20 : vector<25x64xf32>
    %c175 = arith.constant 175 : index
    %c0_18 = arith.constant 0 : index
    %22 = vector.load %arg5[%c175, %c0_18] : memref<200x64xf32, #tpu.memory_space<vmem>>, vector<25x64xf32>
    %23 = arith.maximumf %21, %22 : vector<25x64xf32>
    %cst_19 = arith.constant 0.000000e+00 : f32
    %24 = vector.broadcast %cst_19 : f32 to vector<25x64xf32>
    %25 = arith.maximumf %23, %24 : vector<25x64xf32>
    %c25_20 = arith.constant 25 : index
    %c0_21 = arith.constant 0 : index
    %26 = vector.load %arg4[%c25_20, %c0_21] : memref<50x64xf32, #tpu.memory_space<vmem>>, vector<25x64xf32>
    tpu.vector_store %arg4[%c25_20, %c0_21], %25 {strides = array<i32>} : memref<50x64xf32, #tpu.memory_space<vmem>>, vector<25x64xf32>,
    return
  }
  func.func @transform_0(%arg0: i32) -> (i32, i32) {
    %c0_i32 = arith.constant 0 : i32
    %c0_i32_0 = arith.constant 0 : i32
    return %arg0, %c0_i32 : i32, i32
  }
  func.func @transform_1(%arg0: i32) -> (i32, i32) {
    %c0_i32 = arith.constant 0 : i32
    %c0_i32_0 = arith.constant 0 : i32
    %c0_i32_1 = arith.constant 0 : i32
    return %c0_i32, %c0_i32_0 : i32, i32
  }
  func.func @transform_2(%arg0: i32) -> (i32, i32) {
    %c0_i32 = arith.constant 0 : i32
    %c0_i32_0 = arith.constant 0 : i32
    %c0_i32_1 = arith.constant 0 : i32
    return %c0_i32, %c0_i32_0 : i32, i32
  }
  func.func @transform_3(%arg0: i32) -> (i32, i32) {
    %c0_i32 = arith.constant 0 : i32
    %c0_i32_0 = arith.constant 0 : i32
    return %arg0, %c0_i32 : i32, i32
  }
}

module attributes {stable_mosaic.version = 11 : i64} {
  func.func @_fc_stack_kernel(%arg0: i32, %arg1: memref<2x1600xf32, #tpu.memory_space<vmem>>, %arg2: memref<1600x384xf32, #tpu.memory_space<vmem>>, %arg3: memref<1x384xf32, #tpu.memory_space<vmem>>, %arg4: memref<384x192xf32, #tpu.memory_space<vmem>>, %arg5: memref<1x192xf32, #tpu.memory_space<vmem>>, %arg6: memref<192x10xf32, #tpu.memory_space<vmem>>, %arg7: memref<1x10xf32, #tpu.memory_space<vmem>>, %arg8: memref<2x10xf32, #tpu.memory_space<vmem>>) attributes {dimension_semantics = [#tpu.dimension_semantics<arbitrary>], iteration_bounds = array<i64: 1>, scalar_prefetch = 0 : i64, scratch_operands = 0 : i64, tpu.core_type = #tpu.core_type<tc>, window_params = [{pipeline_mode = #tpu.pipeline_mode<synchronous>, transform_indices = @transform_0, window_bounds = array<i64: 2, 1600>}, {pipeline_mode = #tpu.pipeline_mode<synchronous>, transform_indices = @transform_1, window_bounds = array<i64: 1600, 384>}, {pipeline_mode = #tpu.pipeline_mode<synchronous>, transform_indices = @transform_2, window_bounds = array<i64: 1, 384>}, {pipeline_mode = #tpu.pipeline_mode<synchronous>, transform_indices = @transform_3, window_bounds = array<i64: 384, 192>}, {pipeline_mode = #tpu.pipeline_mode<synchronous>, transform_indices = @transform_4, window_bounds = array<i64: 1, 192>}, {pipeline_mode = #tpu.pipeline_mode<synchronous>, transform_indices = @transform_5, window_bounds = array<i64: 192, 10>}, {pipeline_mode = #tpu.pipeline_mode<synchronous>, transform_indices = @transform_6, window_bounds = array<i64: 1, 10>}, {pipeline_mode = #tpu.pipeline_mode<synchronous>, transform_indices = @transform_7, window_bounds = array<i64: 2, 10>}]} {
    %c0 = arith.constant 0 : index
    %c0_0 = arith.constant 0 : index
    %0 = vector.load %arg1[%c0, %c0_0] : memref<2x1600xf32, #tpu.memory_space<vmem>>, vector<2x1600xf32>
    %c0_1 = arith.constant 0 : index
    %c0_2 = arith.constant 0 : index
    %1 = vector.load %arg2[%c0_1, %c0_2] : memref<1600x384xf32, #tpu.memory_space<vmem>>, vector<1600x384xf32>
    %cst = arith.constant dense<0.000000e+00> : vector<2x384xf32>
    %2 = tpu.matmul %0, %1, %cst {dimension_numbers = #tpu.dot_dimension_numbers<[1], [0], [0], [1], [0, 0, 1, 1], [], []>} : vector<2x1600xf32>, vector<1600x384xf32>, vector<2x384xf32> -> vector<2x384xf32>
    %c0_3 = arith.constant 0 : index
    %c0_4 = arith.constant 0 : index
    %3 = vector.load %arg3[%c0_3, %c0_4] : memref<1x384xf32, #tpu.memory_space<vmem>>, vector<1x384xf32>
    %4 = vector.broadcast %3 : vector<1x384xf32> to vector<2x384xf32>
    %5 = arith.addf %2, %4 : vector<2x384xf32>
    %cst_5 = arith.constant 0.000000e+00 : f32
    %6 = vector.broadcast %cst_5 : f32 to vector<2x384xf32>
    %7 = arith.maximumf %5, %6 : vector<2x384xf32>
    %c0_6 = arith.constant 0 : index
    %c0_7 = arith.constant 0 : index
    %8 = vector.load %arg4[%c0_6, %c0_7] : memref<384x192xf32, #tpu.memory_space<vmem>>, vector<384x192xf32>
    %cst_8 = arith.constant dense<0.000000e+00> : vector<2x192xf32>
    %9 = tpu.matmul %7, %8, %cst_8 {dimension_numbers = #tpu.dot_dimension_numbers<[1], [0], [0], [1], [0, 0, 1, 1], [], []>} : vector<2x384xf32>, vector<384x192xf32>, vector<2x192xf32> -> vector<2x192xf32>
    %c0_9 = arith.constant 0 : index
    %c0_10 = arith.constant 0 : index
    %10 = vector.load %arg5[%c0_9, %c0_10] : memref<1x192xf32, #tpu.memory_space<vmem>>, vector<1x192xf32>
    %11 = vector.broadcast %10 : vector<1x192xf32> to vector<2x192xf32>
    %12 = arith.addf %9, %11 : vector<2x192xf32>
    %cst_11 = arith.constant 0.000000e+00 : f32
    %13 = vector.broadcast %cst_11 : f32 to vector<2x192xf32>
    %14 = arith.maximumf %12, %13 : vector<2x192xf32>
    %c0_12 = arith.constant 0 : index
    %c0_13 = arith.constant 0 : index
    %15 = vector.load %arg6[%c0_12, %c0_13] : memref<192x10xf32, #tpu.memory_space<vmem>>, vector<192x10xf32>
    %cst_14 = arith.constant dense<0.000000e+00> : vector<2x10xf32>
    %16 = tpu.matmul %14, %15, %cst_14 {dimension_numbers = #tpu.dot_dimension_numbers<[1], [0], [0], [1], [0, 0, 1, 1], [], []>} : vector<2x192xf32>, vector<192x10xf32>, vector<2x10xf32> -> vector<2x10xf32>
    %c0_15 = arith.constant 0 : index
    %c0_16 = arith.constant 0 : index
    %17 = vector.load %arg7[%c0_15, %c0_16] : memref<1x10xf32, #tpu.memory_space<vmem>>, vector<1x10xf32>
    %18 = vector.broadcast %17 : vector<1x10xf32> to vector<2x10xf32>
    %19 = arith.addf %16, %18 : vector<2x10xf32>
    %c0_17 = arith.constant 0 : index
    %c0_18 = arith.constant 0 : index
    %20 = vector.load %arg8[%c0_17, %c0_18] : memref<2x10xf32, #tpu.memory_space<vmem>>, vector<2x10xf32>
    tpu.vector_store %arg8[%c0_17, %c0_18], %19 {strides = array<i32>} : memref<2x10xf32, #tpu.memory_space<vmem>>, vector<2x10xf32>,
    return
  }
  func.func @transform_0(%arg0: i32) -> (i32, i32) {
    %c0_i32 = arith.constant 0 : i32
    %c0_i32_0 = arith.constant 0 : i32
    %c0_i32_1 = arith.constant 0 : i32
    return %c0_i32, %c0_i32_0 : i32, i32
  }
  func.func @transform_1(%arg0: i32) -> (i32, i32) {
    %c0_i32 = arith.constant 0 : i32
    %c0_i32_0 = arith.constant 0 : i32
    %c0_i32_1 = arith.constant 0 : i32
    return %c0_i32, %c0_i32_0 : i32, i32
  }
  func.func @transform_2(%arg0: i32) -> (i32, i32) {
    %c0_i32 = arith.constant 0 : i32
    %c0_i32_0 = arith.constant 0 : i32
    %c0_i32_1 = arith.constant 0 : i32
    return %c0_i32, %c0_i32_0 : i32, i32
  }
  func.func @transform_3(%arg0: i32) -> (i32, i32) {
    %c0_i32 = arith.constant 0 : i32
    %c0_i32_0 = arith.constant 0 : i32
    %c0_i32_1 = arith.constant 0 : i32
    return %c0_i32, %c0_i32_0 : i32, i32
  }
  func.func @transform_4(%arg0: i32) -> (i32, i32) {
    %c0_i32 = arith.constant 0 : i32
    %c0_i32_0 = arith.constant 0 : i32
    %c0_i32_1 = arith.constant 0 : i32
    return %c0_i32, %c0_i32_0 : i32, i32
  }
  func.func @transform_5(%arg0: i32) -> (i32, i32) {
    %c0_i32 = arith.constant 0 : i32
    %c0_i32_0 = arith.constant 0 : i32
    %c0_i32_1 = arith.constant 0 : i32
    return %c0_i32, %c0_i32_0 : i32, i32
  }
  func.func @transform_6(%arg0: i32) -> (i32, i32) {
    %c0_i32 = arith.constant 0 : i32
    %c0_i32_0 = arith.constant 0 : i32
    %c0_i32_1 = arith.constant 0 : i32
    return %c0_i32, %c0_i32_0 : i32, i32
  }
  func.func @transform_7(%arg0: i32) -> (i32, i32) {
    %c0_i32 = arith.constant 0 : i32
    %c0_i32_0 = arith.constant 0 : i32
    %c0_i32_1 = arith.constant 0 : i32
    return %c0_i32, %c0_i32_0 : i32, i32
  }
}

</mosaic_0001>

<llo_original>
// kernel: cnn_cifar10_forward.3
$region0: #{cnn_cifar10_forward.3}
  #allocation0 [shape = 'u32[]', space=smem, size = 0x4, offset = 0x4, fixed_abs, tag = 'smem constant byte address 0x4 - core index']
  #allocation1 [shape = 'u32[72,128]{1,0:T(1,128)}', space=vmem, size = 0x9000, scoped, tag = 'internal scratch']
  #allocation2 [shape = 'f32[1568,64]{1,0:T(8,128)}', space=vmem, size = 0xc4000, scoped, tag = 'scratch operand']
  %s0 = inlined_call_operand.vmem [shape: f32[1568,75], index: 0, kind: input, shape index: {}]
  %s1 = inlined_call_operand.vmem [shape: f32[75,64], index: 1, kind: input, shape index: {}]
  %s2 = inlined_call_operand.vmem [shape: f32[1,64], index: 2, kind: input, shape index: {}]
  %s3 = inlined_call_operand.vmem [shape: f32[392,64], index: 3, kind: output, shape index: {}]
  %s4 = sld [smem:[#allocation0]]
  $region22: #{cnn_cifar10_forward.3} parent=0
    _
  %s6 = ssub.s32 1, %s4
  %s7 = scalar_select 0, %s6, %s4
  // Predicated region
  $region2: #{cnn_cifar10_forward.3} parent=0 // pred_check
    _
  $region3: #{cnn_cifar10_forward.3} parent=0 // pred_check_branch
    %9 = sbr.rel (0) target = $region5
  $region4: #{cnn_cifar10_forward.3} parent=0 // pred_region
    _
  $region5: #{cnn_cifar10_forward.3} parent=0 // pred_fallthru
    _
  // Predicated region
  $region6: #{cnn_cifar10_forward.3} parent=0 // pred_check
    _
  $region7: #{cnn_cifar10_forward.3} parent=0 // pred_check_branch
    %11 = sbr.rel (0) target = $region9
  $region8: #{cnn_cifar10_forward.3} parent=0 // pred_region
    _
  $region9: #{cnn_cifar10_forward.3} parent=0 // pred_fallthru
    _
  // Predicated region
  $region10: #{cnn_cifar10_forward.3} parent=0 // pred_check
    _
  $region11: #{cnn_cifar10_forward.3} parent=0 // pred_check_branch
    %13 = sbr.rel (0) target = $region13
  $region12: #{cnn_cifar10_forward.3} parent=0 // pred_region
    _
  $region13: #{cnn_cifar10_forward.3} parent=0 // pred_fallthru
    _
  %v14 = vld [vmem:[%s0] sm:$0xff]
  %v15 = vld [vmem:[%s0 + $0x8] sm:$0xff]
  %v16 = vld [vmem:[%s0 + $0x10] sm:$0xff]
  %v17 = vld [vmem:[%s0 + $0x18] sm:$0xff]
  %v18 = vld [vmem:[%s0 + $0x20] sm:$0xff]
  %v19 = vld [vmem:[%s0 + $0x28] sm:$0xff]
  %v20 = vld [vmem:[%s0 + $0x30] sm:$0xff]
  %v21 = vld [vmem:[%s0 + $0x38] sm:$0xff]
  %v22 = vld [vmem:[%s0 + $0x40] sm:$0xff]
  %v23 = vld [vmem:[%s0 + $0x48] sm:$0xff]
  %v24 = vld [vmem:[%s0 + $0x50] sm:$0xff]
  %v25 = vld [vmem:[%s0 + $0x58] sm:$0xff]
  %v26 = vld [vmem:[%s0 + $0x60] sm:$0xff]
  %v27 = vld [vmem:[%s0 + $0x68] sm:$0xff]
  %v28 = vld [vmem:[%s0 + $0x70] sm:$0xff]
  %v29 = vld [vmem:[%s0 + $0x78] sm:$0xff]
  %v30 = vld [vmem:[%s0 + $0x80] sm:$0xff]
  %v31 = vld [vmem:[%s0 + $0x88] sm:$0xff]
  %v32 = vld [vmem:[%s0 + $0x90] sm:$0xff]
  %v33 = vld [vmem:[%s0 + $0x98] sm:$0xff]
  %v34 = vld [vmem:[%s0 + $0xa0] sm:$0xff]
  %v35 = vld [vmem:[%s0 + $0xa8] sm:$0xff]
  %v36 = vld [vmem:[%s0 + $0xb0] sm:$0xff]
  %v37 = vld [vmem:[%s0 + $0xb8] sm:$0xff]
  %v38 = vld [vmem:[%s0 + $0xc0] sm:$0xff]
  %v39 = vld [vmem:[%s0 + $0xc8] sm:$0xff]
  %v40 = vld [vmem:[%s0 + $0xd0] sm:$0xff]
  %v41 = vld [vmem:[%s0 + $0xd8] sm:$0xff]
  %v42 = vld [vmem:[%s0 + $0xe0] sm:$0xff]
  %v43 = vld [vmem:[%s0 + $0xe8] sm:$0xff]
  %v44 = vld [vmem:[%s0 + $0xf0] sm:$0xff]
  %v45 = vld [vmem:[%s0 + $0xf8] sm:$0xff]
  %v46 = vld [vmem:[%s0 + $0x100] sm:$0xff]
  %v47 = vld [vmem:[%s0 + $0x108] sm:$0xff]
  %v48 = vld [vmem:[%s0 + $0x110] sm:$0xff]
  %v49 = vld [vmem:[%s0 + $0x118] sm:$0xff]
  %v50 = vld [vmem:[%s0 + $0x120] sm:$0xff]
  %v51 = vld [vmem:[%s0 + $0x128] sm:$0xff]
  %v52 = vld [vmem:[%s0 + $0x130] sm:$0xff]
  %v53 = vld [vmem:[%s0 + $0x138] sm:$0xff]
  %v54 = vld [vmem:[%s0 + $0x140] sm:$0xff]
  %v55 = vld [vmem:[%s0 + $0x148] sm:$0xff]
  %v56 = vld [vmem:[%s0 + $0x150] sm:$0xff]
  %v57 = vld [vmem:[%s0 + $0x158] sm:$0xff]
  %v58 = vld [vmem:[%s0 + $0x160] sm:$0xff]
  %v59 = vld [vmem:[%s0 + $0x168] sm:$0xff]
  %v60 = vld [vmem:[%s0 + $0x170] sm:$0xff]
  %v61 = vld [vmem:[%s0 + $0x178] sm:$0xff]
  %v62 = vld [vmem:[%s0 + $0x180] sm:$0xff]
  %v63 = vld [vmem:[%s0 + $0x188] sm:$0xff]
  %v64 = vld [vmem:[%s0 + $0x190] sm:$0xff]
  %v65 = vld [vmem:[%s0 + $0x198] sm:$0xff]
  %v66 = vld [vmem:[%s0 + $0x1a0] sm:$0xff]
  %v67 = vld [vmem:[%s0 + $0x1a8] sm:$0xff]
  %v68 = vld [vmem:[%s0 + $0x1b0] sm:$0xff]
  %v69 = vld [vmem:[%s0 + $0x1b8] sm:$0xff]
  %v70 = vld [vmem:[%s0 + $0x1c0] sm:$0xff]
  %v71 = vld [vmem:[%s0 + $0x1c8] sm:$0xff]
  %v72 = vld [vmem:[%s0 + $0x1d0] sm:$0xff]
  %v73 = vld [vmem:[%s0 + $0x1d8] sm:$0xff]
  %v74 = vld [vmem:[%s0 + $0x1e0] sm:$0xff]
  %v75 = vld [vmem:[%s0 + $0x1e8] sm:$0xff]
  %v76 = vld [vmem:[%s0 + $0x1f0] sm:$0xff]
  %v77 = vld [vmem:[%s0 + $0x1f8] sm:$0xff]
  %v78 = vld [vmem:[%s0 + $0x200] sm:$0xff]
  %v79 = vld [vmem:[%s0 + $0x208] sm:$0xff]
  %v80 = vld [vmem:[%s0 + $0x210] sm:$0xff]
  %v81 = vld [vmem:[%s0 + $0x218] sm:$0xff]
  %v82 = vld [vmem:[%s0 + $0x220] sm:$0xff]
  %v83 = vld [vmem:[%s0 + $0x228] sm:$0xff]
  %v84 = vld [vmem:[%s0 + $0x230] sm:$0xff]
  %v85 = vld [vmem:[%s0 + $0x238] sm:$0xff]
  %v86 = vld [vmem:[%s0 + $0x240] sm:$0xff]
  %v87 = vld [vmem:[%s0 + $0x248] sm:$0xff]
  %v88 = vld [vmem:[%s0 + $0x250] sm:$0xff]
  %v89 = vld [vmem:[%s0 + $0x258] sm:$0xff]
  %v90 = vld [vmem:[%s0 + $0x260] sm:$0xff]
  %v91 = vld [vmem:[%s0 + $0x268] sm:$0xff]
  %v92 = vld [vmem:[%s0 + $0x270] sm:$0xff]
  %v93 = vld [vmem:[%s0 + $0x278] sm:$0xff]
  %v94 = vld [vmem:[%s0 + $0x280] sm:$0xff]
  %v95 = vld [vmem:[%s0 + $0x288] sm:$0xff]
  %v96 = vld [vmem:[%s0 + $0x290] sm:$0xff]
  %v97 = vld [vmem:[%s0 + $0x298] sm:$0xff]
  %v98 = vld [vmem:[%s0 + $0x2a0] sm:$0xff]
  %v99 = vld [vmem:[%s0 + $0x2a8] sm:$0xff]
  %v100 = vld [vmem:[%s0 + $0x2b0] sm:$0xff]
  %v101 = vld [vmem:[%s0 + $0x2b8] sm:$0xff]
  %v102 = vld [vmem:[%s0 + $0x2c0] sm:$0xff]
  %v103 = vld [vmem:[%s0 + $0x2c8] sm:$0xff]
  %v104 = vld [vmem:[%s0 + $0x2d0] sm:$0xff]
  %v105 = vld [vmem:[%s0 + $0x2d8] sm:$0xff]
  %v106 = vld [vmem:[%s0 + $0x2e0] sm:$0xff]
  %v107 = vld [vmem:[%s0 + $0x2e8] sm:$0xff]
  %v108 = vld [vmem:[%s0 + $0x2f0] sm:$0xff]
  %v109 = vld [vmem:[%s0 + $0x2f8] sm:$0xff]
  %v110 = vld [vmem:[%s0 + $0x300] sm:$0xff]
  %v111 = vld [vmem:[%s0 + $0x308] sm:$0xff]
  %v112 = vld [vmem:[%s0 + $0x310] sm:$0xff]
  %v113 = vld [vmem:[%s0 + $0x318] sm:$0xff]
  %v114 = vld [vmem:[%s0 + $0x320] sm:$0xff]
  %v115 = vld [vmem:[%s0 + $0x328] sm:$0xff]
  %v116 = vld [vmem:[%s0 + $0x330] sm:$0xff]
  %v117 = vld [vmem:[%s0 + $0x338] sm:$0xff]
  %v118 = vld [vmem:[%s0 + $0x340] sm:$0xff]
  %v119 = vld [vmem:[%s0 + $0x348] sm:$0xff]
  %v120 = vld [vmem:[%s0 + $0x350] sm:$0xff]
  %v121 = vld [vmem:[%s0 + $0x358] sm:$0xff]
  %v122 = vld [vmem:[%s0 + $0x360] sm:$0xff]
  %v123 = vld [vmem:[%s0 + $0x368] sm:$0xff]
  %v124 = vld [vmem:[%s0 + $0x370] sm:$0xff]
  %v125 = vld [vmem:[%s0 + $0x378] sm:$0xff]
  %v126 = vld [vmem:[%s0 + $0x380] sm:$0xff]
  %v127 = vld [vmem:[%s0 + $0x388] sm:$0xff]
  %v128 = vld [vmem:[%s0 + $0x390] sm:$0xff]
  %v129 = vld [vmem:[%s0 + $0x398] sm:$0xff]
  %v130 = vld [vmem:[%s0 + $0x3a0] sm:$0xff]
  %v131 = vld [vmem:[%s0 + $0x3a8] sm:$0xff]
  %v132 = vld [vmem:[%s0 + $0x3b0] sm:$0xff]
  %v133 = vld [vmem:[%s0 + $0x3b8] sm:$0xff]
  %v134 = vld [vmem:[%s0 + $0x3c0] sm:$0xff]
  %v135 = vld [vmem:[%s0 + $0x3c8] sm:$0xff]
  %v136 = vld [vmem:[%s0 + $0x3d0] sm:$0xff]
  %v137 = vld [vmem:[%s0 + $0x3d8] sm:$0xff]
  %v138 = vld [vmem:[%s0 + $0x3e0] sm:$0xff]
  %v139 = vld [vmem:[%s0 + $0x3e8] sm:$0xff]
  %v140 = vld [vmem:[%s0 + $0x3f0] sm:$0xff]
  %v141 = vld [vmem:[%s0 + $0x3f8] sm:$0xff]
  %v142 = vld [vmem:[%s0 + $0x400] sm:$0xff]
  %v143 = vld [vmem:[%s0 + $0x408] sm:$0xff]
  %v144 = vld [vmem:[%s0 + $0x410] sm:$0xff]
  %v145 = vld [vmem:[%s0 + $0x418] sm:$0xff]
  %v146 = vld [vmem:[%s0 + $0x420] sm:$0xff]
  %v147 = vld [vmem:[%s0 + $0x428] sm:$0xff]
  %v148 = vld [vmem:[%s0 + $0x430] sm:$0xff]
  %v149 = vld [vmem:[%s0 + $0x438] sm:$0xff]
  %v150 = vld [vmem:[%s0 + $0x440] sm:$0xff]
  %v151 = vld [vmem:[%s0 + $0x448] sm:$0xff]
  %v152 = vld [vmem:[%s0 + $0x450] sm:$0xff]
  %v153 = vld [vmem:[%s0 + $0x458] sm:$0xff]
  %v154 = vld [vmem:[%s0 + $0x460] sm:$0xff]
  %v155 = vld [vmem:[%s0 + $0x468] sm:$0xff]
  %v156 = vld [vmem:[%s0 + $0x470] sm:$0xff]
  %v157 = vld [vmem:[%s0 + $0x478] sm:$0xff]
  %v158 = vld [vmem:[%s0 + $0x480] sm:$0xff]
  %v159 = vld [vmem:[%s0 + $0x488] sm:$0xff]
  %v160 = vld [vmem:[%s0 + $0x490] sm:$0xff]
  %v161 = vld [vmem:[%s0 + $0x498] sm:$0xff]
  %v162 = vld [vmem:[%s0 + $0x4a0] sm:$0xff]
  %v163 = vld [vmem:[%s0 + $0x4a8] sm:$0xff]
  %v164 = vld [vmem:[%s0 + $0x4b0] sm:$0xff]
  %v165 = vld [vmem:[%s0 + $0x4b8] sm:$0xff]
  %v166 = vld [vmem:[%s0 + $0x4c0] sm:$0xff]
  %v167 = vld [vmem:[%s0 + $0x4c8] sm:$0xff]
  %v168 = vld [vmem:[%s0 + $0x4d0] sm:$0xff]
  %v169 = vld [vmem:[%s0 + $0x4d8] sm:$0xff]
  %v170 = vld [vmem:[%s0 + $0x4e0] sm:$0xff]
  %v171 = vld [vmem:[%s0 + $0x4e8] sm:$0xff]
  %v172 = vld [vmem:[%s0 + $0x4f0] sm:$0xff]
  %v173 = vld [vmem:[%s0 + $0x4f8] sm:$0xff]
  %v174 = vld [vmem:[%s0 + $0x500] sm:$0xff]
  %v175 = vld [vmem:[%s0 + $0x508] sm:$0xff]
  %v176 = vld [vmem:[%s0 + $0x510] sm:$0xff]
  %v177 = vld [vmem:[%s0 + $0x518] sm:$0xff]
  %v178 = vld [vmem:[%s0 + $0x520] sm:$0xff]
  %v179 = vld [vmem:[%s0 + $0x528] sm:$0xff]
  %v180 = vld [vmem:[%s0 + $0x530] sm:$0xff]
  %v181 = vld [vmem:[%s0 + $0x538] sm:$0xff]
  %v182 = vld [vmem:[%s0 + $0x540] sm:$0xff]
  %v183 = vld [vmem:[%s0 + $0x548] sm:$0xff]
  %v184 = vld [vmem:[%s0 + $0x550] sm:$0xff]
  %v185 = vld [vmem:[%s0 + $0x558] sm:$0xff]
  %v186 = vld [vmem:[%s0 + $0x560] sm:$0xff]
  %v187 = vld [vmem:[%s0 + $0x568] sm:$0xff]
  %v188 = vld [vmem:[%s0 + $0x570] sm:$0xff]
  %v189 = vld [vmem:[%s0 + $0x578] sm:$0xff]
  %v190 = vld [vmem:[%s0 + $0x580] sm:$0xff]
  %v191 = vld [vmem:[%s0 + $0x588] sm:$0xff]
  %v192 = vld [vmem:[%s0 + $0x590] sm:$0xff]
  %v193 = vld [vmem:[%s0 + $0x598] sm:$0xff]
  %v194 = vld [vmem:[%s0 + $0x5a0] sm:$0xff]
  %v195 = vld [vmem:[%s0 + $0x5a8] sm:$0xff]
  %v196 = vld [vmem:[%s0 + $0x5b0] sm:$0xff]
  %v197 = vld [vmem:[%s0 + $0x5b8] sm:$0xff]
  %v198 = vld [vmem:[%s0 + $0x5c0] sm:$0xff]
  %v199 = vld [vmem:[%s0 + $0x5c8] sm:$0xff]
  %v200 = vld [vmem:[%s0 + $0x5d0] sm:$0xff]
  %v201 = vld [vmem:[%s0 + $0x5d8] sm:$0xff]
  %v202 = vld [vmem:[%s0 + $0x5e0] sm:$0xff]
  %v203 = vld [vmem:[%s0 + $0x5e8] sm:$0xff]
  %v204 = vld [vmem:[%s0 + $0x5f0] sm:$0xff]
  %v205 = vld [vmem:[%s0 + $0x5f8] sm:$0xff]
  %v206 = vld [vmem:[%s0 + $0x600] sm:$0xff]
  %v207 = vld [vmem:[%s0 + $0x608] sm:$0xff]
  %v208 = vld [vmem:[%s0 + $0x610] sm:$0xff]
  %v209 = vld [vmem:[%s0 + $0x618] sm:$0xff]
  %v210 = vld [vmem:[%s1] sm:$0xff]
  %v211 = vld [vmem:[%s1 + $0x8] sm:$0xff]
  %v212 = vld [vmem:[%s1 + $0x10] sm:$0xff]
  %v213 = vld [vmem:[%s1 + $0x18] sm:$0xff]
  %v214 = vld [vmem:[%s1 + $0x20] sm:$0xff]
  %v215 = vld [vmem:[%s1 + $0x28] sm:$0xff]
  %v216 = vld [vmem:[%s1 + $0x30] sm:$0xff]
  %v217 = vld [vmem:[%s1 + $0x38] sm:$0xff]
  %v218 = vld [vmem:[%s1 + $0x40] sm:$0xff]
  %v219 = vld [vmem:[%s1 + $0x48] sm:$0x7]
  %v220 = vld [vmem:[%s2] sm:$0x1]
  %v222 = vperm.slane %v220, 0
  %vm224 = vcmask 613376
  %v226 = vsel %vm224, %v14, 0
  %v229 = vsel %vm224, %v15, 0
  %v232 = vsel %vm224, %v16, 0
  %v235 = vsel %vm224, %v17, 0
  %v238 = vsel %vm224, %v18, 0
  %v241 = vsel %vm224, %v19, 0
  %v244 = vsel %vm224, %v20, 0
  %v247 = vsel %vm224, %v21, 0
  %v250 = vsel %vm224, %v22, 0
  %v253 = vsel %vm224, %v23, 0
  %v256 = vsel %vm224, %v24, 0
  %v259 = vsel %vm224, %v25, 0
  %v262 = vsel %vm224, %v26, 0
  %v265 = vsel %vm224, %v27, 0
  %v268 = vsel %vm224, %v28, 0
  %v271 = vsel %vm224, %v29, 0
  %v274 = vsel %vm224, %v30, 0
  %v277 = vsel %vm224, %v31, 0
  %v280 = vsel %vm224, %v32, 0
  %v283 = vsel %vm224, %v33, 0
  %v286 = vsel %vm224, %v34, 0
  %v289 = vsel %vm224, %v35, 0
  %v292 = vsel %vm224, %v36, 0
  %v295 = vsel %vm224, %v37, 0
  %v298 = vsel %vm224, %v38, 0
  %v301 = vsel %vm224, %v39, 0
  %v304 = vsel %vm224, %v40, 0
  %v307 = vsel %vm224, %v41, 0
  %v310 = vsel %vm224, %v42, 0
  %v313 = vsel %vm224, %v43, 0
  %v316 = vsel %vm224, %v44, 0
  %v319 = vsel %vm224, %v45, 0
  %v322 = vsel %vm224, %v46, 0
  %v325 = vsel %vm224, %v47, 0
  %v328 = vsel %vm224, %v48, 0
  %v331 = vsel %vm224, %v49, 0
  %v334 = vsel %vm224, %v50, 0
  %v337 = vsel %vm224, %v51, 0
  %v340 = vsel %vm224, %v52, 0
  %v343 = vsel %vm224, %v53, 0
  %v346 = vsel %vm224, %v54, 0
  %v349 = vsel %vm224, %v55, 0
  %v352 = vsel %vm224, %v56, 0
  %v355 = vsel %vm224, %v57, 0
  %v358 = vsel %vm224, %v58, 0
  %v361 = vsel %vm224, %v59, 0
  %v364 = vsel %vm224, %v60, 0
  %v367 = vsel %vm224, %v61, 0
  %v370 = vsel %vm224, %v62, 0
  %v373 = vsel %vm224, %v63, 0
  %v376 = vsel %vm224, %v64, 0
  %v379 = vsel %vm224, %v65, 0
  %v382 = vsel %vm224, %v66, 0
  %v385 = vsel %vm224, %v67, 0
  %v388 = vsel %vm224, %v68, 0
  %v391 = vsel %vm224, %v69, 0
  %v394 = vsel %vm224, %v70, 0
  %v397 = vsel %vm224, %v71, 0
  %v400 = vsel %vm224, %v72, 0
  %v403 = vsel %vm224, %v73, 0
  %v406 = vsel %vm224, %v74, 0
  %v409 = vsel %vm224, %v75, 0
  %v412 = vsel %vm224, %v76, 0
  %v415 = vsel %vm224, %v77, 0
  %v418 = vsel %vm224, %v78, 0
  %v421 = vsel %vm224, %v79, 0
  %v424 = vsel %vm224, %v80, 0
  %v427 = vsel %vm224, %v81, 0
  %v430 = vsel %vm224, %v82, 0
  %v433 = vsel %vm224, %v83, 0
  %v436 = vsel %vm224, %v84, 0
  %v439 = vsel %vm224, %v85, 0
  %v442 = vsel %vm224, %v86, 0
  %v445 = vsel %vm224, %v87, 0
  %v448 = vsel %vm224, %v88, 0
  %v451 = vsel %vm224, %v89, 0
  %v454 = vsel %vm224, %v90, 0
  %v457 = vsel %vm224, %v91, 0
  %v460 = vsel %vm224, %v92, 0
  %v463 = vsel %vm224, %v93, 0
  %v466 = vsel %vm224, %v94, 0
  %v469 = vsel %vm224, %v95, 0
  %v472 = vsel %vm224, %v96, 0
  %v475 = vsel %vm224, %v97, 0
  %v478 = vsel %vm224, %v98, 0
  %v481 = vsel %vm224, %v99, 0
  %v484 = vsel %vm224, %v100, 0
  %v487 = vsel %vm224, %v101, 0
  %v490 = vsel %vm224, %v102, 0
  %v493 = vsel %vm224, %v103, 0
  %v496 = vsel %vm224, %v104, 0
  %v499 = vsel %vm224, %v105, 0
  %v502 = vsel %vm224, %v106, 0
  %v505 = vsel %vm224, %v107, 0
  %v508 = vsel %vm224, %v108, 0
  %v511 = vsel %vm224, %v109, 0
  %v514 = vsel %vm224, %v110, 0
  %v517 = vsel %vm224, %v111, 0
  %v520 = vsel %vm224, %v112, 0
  %v523 = vsel %vm224, %v113, 0
  %v526 = vsel %vm224, %v114, 0
  %v529 = vsel %vm224, %v115, 0
  %v532 = vsel %vm224, %v116, 0
  %v535 = vsel %vm224, %v117, 0
  %v538 = vsel %vm224, %v118, 0
  %v541 = vsel %vm224, %v119, 0
  %v544 = vsel %vm224, %v120, 0
  %v547 = vsel %vm224, %v121, 0
  %v550 = vsel %vm224, %v122, 0
  %v553 = vsel %vm224, %v123, 0
  %v556 = vsel %vm224, %v124, 0
  %v559 = vsel %vm224, %v125, 0
  %v562 = vsel %vm224, %v126, 0
  %v565 = vsel %vm224, %v127, 0
  %v568 = vsel %vm224, %v128, 0
  %v571 = vsel %vm224, %v129, 0
  %v574 = vsel %vm224, %v130, 0
  %v577 = vsel %vm224, %v131, 0
  %v580 = vsel %vm224, %v132, 0
  %v583 = vsel %vm224, %v133, 0
  %v586 = vsel %vm224, %v134, 0
  %v589 = vsel %vm224, %v135, 0
  %v592 = vsel %vm224, %v136, 0
  %v595 = vsel %vm224, %v137, 0
  %v598 = vsel %vm224, %v138, 0
  %v601 = vsel %vm224, %v139, 0
  %v604 = vsel %vm224, %v140, 0
  %v607 = vsel %vm224, %v141, 0
  %v610 = vsel %vm224, %v142, 0
  %v613 = vsel %vm224, %v143, 0
  %v616 = vsel %vm224, %v144, 0
  %v619 = vsel %vm224, %v145, 0
  %v622 = vsel %vm224, %v146, 0
  %v625 = vsel %vm224, %v147, 0
  %v628 = vsel %vm224, %v148, 0
  %v631 = vsel %vm224, %v149, 0
  %v634 = vsel %vm224, %v150, 0
  %v637 = vsel %vm224, %v151, 0
  %v640 = vsel %vm224, %v152, 0
  %v643 = vsel %vm224, %v153, 0
  %v646 = vsel %vm224, %v154, 0
  %v649 = vsel %vm224, %v155, 0
  %v652 = vsel %vm224, %v156, 0
  %v655 = vsel %vm224, %v157, 0
  %v658 = vsel %vm224, %v158, 0
  %v661 = vsel %vm224, %v159, 0
  %v664 = vsel %vm224, %v160, 0
  %v667 = vsel %vm224, %v161, 0
  %v670 = vsel %vm224, %v162, 0
  %v673 = vsel %vm224, %v163, 0
  %v676 = vsel %vm224, %v164, 0
  %v679 = vsel %vm224, %v165, 0
  %v682 = vsel %vm224, %v166, 0
  %v685 = vsel %vm224, %v167, 0
  %v688 = vsel %vm224, %v168, 0
  %v691 = vsel %vm224, %v169, 0
  %v694 = vsel %vm224, %v170, 0
  %v697 = vsel %vm224, %v171, 0
  %v700 = vsel %vm224, %v172, 0
  %v703 = vsel %vm224, %v173, 0
  %v706 = vsel %vm224, %v174, 0
  %v709 = vsel %vm224, %v175, 0
  %v712 = vsel %vm224, %v176, 0
  %v715 = vsel %vm224, %v177, 0
  %v718 = vsel %vm224, %v178, 0
  %v721 = vsel %vm224, %v179, 0
  %v724 = vsel %vm224, %v180, 0
  %v727 = vsel %vm224, %v181, 0
  %v730 = vsel %vm224, %v182, 0
  %v733 = vsel %vm224, %v183, 0
  %v736 = vsel %vm224, %v184, 0
  %v739 = vsel %vm224, %v185, 0
  %v742 = vsel %vm224, %v186, 0
  %v745 = vsel %vm224, %v187, 0
  %v748 = vsel %vm224, %v188, 0
  %v751 = vsel %vm224, %v189, 0
  %v754 = vsel %vm224, %v190, 0
  %v757 = vsel %vm224, %v191, 0
  %v760 = vsel %vm224, %v192, 0
  %v763 = vsel %vm224, %v193, 0
  %v766 = vsel %vm224, %v194, 0
  %v769 = vsel %vm224, %v195, 0
  %v772 = vsel %vm224, %v196, 0
  %v775 = vsel %vm224, %v197, 0
  %v778 = vsel %vm224, %v198, 0
  %v781 = vsel %vm224, %v199, 0
  %v784 = vsel %vm224, %v200, 0
  %v787 = vsel %vm224, %v201, 0
  %v790 = vsel %vm224, %v202, 0
  %v793 = vsel %vm224, %v203, 0
  %v796 = vsel %vm224, %v204, 0
  %v799 = vsel %vm224, %v205, 0
  %v802 = vsel %vm224, %v206, 0
  %v805 = vsel %vm224, %v207, 0
  %v808 = vsel %vm224, %v208, 0
  %v811 = vsel %vm224, %v209, 0
  %vm813 = vcmask 1042432
  %v815 = vsel %vm813, %v219, 0
  %817 = vmatpush.msra.mxu0 0.0
  %818 = vmatpush.msra.mxu0 0.0
  %819 = vmatpush.msra.mxu0 0.0
  %820 = vmatpush.msra.mxu0 0.0
  %821 = vmatpush.msra.mxu0 0.0
  %822 = vmatpush.msra.mxu0 0.0
  %823 = vmatpush.msra.mxu0 %v815
  %824 = vmatpush.msra.mxu0 %v218
  %825 = vmatpush.msra.mxu0 %v217
  %826 = vmatpush.msra.mxu0 %v216
  %827 = vmatpush.msra.mxu0 %v215
  %828 = vmatpush.msra.mxu0 %v214
  %829 = vmatpush.msra.mxu0 %v213
  %830 = vmatpush.msra.mxu0 %v212
  %831 = vmatpush.msra.mxu0 %v211
  %832 = vmatpush.msra.mxu0 %v210
  %833 = vmatmul.f32.gmra.mxu0 %v226
  %v834 = vpop.f32.mrf.mxu0
  %v835 = vadd.f32 %v222, %v834
  %836 = vmatmul.f32.gmra.mxu0 %v229
  %v837 = vpop.f32.mrf.mxu0
  %v838 = vadd.f32 %v222, %v837
  %839 = vmatmul.f32.gmra.mxu0 %v232
  %v840 = vpop.f32.mrf.mxu0
  %v841 = vadd.f32 %v222, %v840
  %842 = vmatmul.f32.gmra.mxu0 %v235
  %v843 = vpop.f32.mrf.mxu0
  %v844 = vadd.f32 %v222, %v843
  %845 = vmatmul.f32.gmra.mxu0 %v238
  %v846 = vpop.f32.mrf.mxu0
  %v847 = vadd.f32 %v222, %v846
  %848 = vmatmul.f32.gmra.mxu0 %v241
  %v849 = vpop.f32.mrf.mxu0
  %v850 = vadd.f32 %v222, %v849
  %851 = vmatmul.f32.gmra.mxu0 %v244
  %v852 = vpop.f32.mrf.mxu0
  %v853 = vadd.f32 %v222, %v852
  %854 = vmatmul.f32.gmra.mxu0 %v247
  %v855 = vpop.f32.mrf.mxu0
  %v856 = vadd.f32 %v222, %v855
  %857 = vmatmul.f32.gmra.mxu0 %v250
  %v858 = vpop.f32.mrf.mxu0
  %v859 = vadd.f32 %v222, %v858
  %860 = vmatmul.f32.gmra.mxu0 %v253
  %v861 = vpop.f32.mrf.mxu0
  %v862 = vadd.f32 %v222, %v861
  %863 = vmatmul.f32.gmra.mxu0 %v256
  %v864 = vpop.f32.mrf.mxu0
  %v865 = vadd.f32 %v222, %v864
  %866 = vmatmul.f32.gmra.mxu0 %v259
  %v867 = vpop.f32.mrf.mxu0
  %v868 = vadd.f32 %v222, %v867
  %869 = vmatmul.f32.gmra.mxu0 %v262
  %v870 = vpop.f32.mrf.mxu0
  %v871 = vadd.f32 %v222, %v870
  %872 = vmatmul.f32.gmra.mxu0 %v265
  %v873 = vpop.f32.mrf.mxu0
  %v874 = vadd.f32 %v222, %v873
  %875 = vmatmul.f32.gmra.mxu0 %v268
  %v876 = vpop.f32.mrf.mxu0
  %v877 = vadd.f32 %v222, %v876
  %878 = vmatmul.f32.gmra.mxu0 %v271
  %v879 = vpop.f32.mrf.mxu0
  %v880 = vadd.f32 %v222, %v879
  %881 = vmatmul.f32.gmra.mxu0 %v274
  %v882 = vpop.f32.mrf.mxu0
  %v883 = vadd.f32 %v222, %v882
  %884 = vmatmul.f32.gmra.mxu0 %v277
  %v885 = vpop.f32.mrf.mxu0
  %v886 = vadd.f32 %v222, %v885
  %887 = vmatmul.f32.gmra.mxu0 %v280
  %v888 = vpop.f32.mrf.mxu0
  %v889 = vadd.f32 %v222, %v888
  %890 = vmatmul.f32.gmra.mxu0 %v283
  %v891 = vpop.f32.mrf.mxu0
  %v892 = vadd.f32 %v222, %v891
  %893 = vmatmul.f32.gmra.mxu0 %v286
  %v894 = vpop.f32.mrf.mxu0
  %v895 = vadd.f32 %v222, %v894
  %896 = vmatmul.f32.gmra.mxu0 %v289
  %v897 = vpop.f32.mrf.mxu0
  %v898 = vadd.f32 %v222, %v897
  %899 = vmatmul.f32.gmra.mxu0 %v292
  %v900 = vpop.f32.mrf.mxu0
  %v901 = vadd.f32 %v222, %v900
  %902 = vmatmul.f32.gmra.mxu0 %v295
  %v903 = vpop.f32.mrf.mxu0
  %v904 = vadd.f32 %v222, %v903
  %905 = vmatmul.f32.gmra.mxu0 %v298
  %v906 = vpop.f32.mrf.mxu0
  %v907 = vadd.f32 %v222, %v906
  %908 = vmatmul.f32.gmra.mxu0 %v301
  %v909 = vpop.f32.mrf.mxu0
  %v910 = vadd.f32 %v222, %v909
  %911 = vmatmul.f32.gmra.mxu0 %v304
  %v912 = vpop.f32.mrf.mxu0
  %v913 = vadd.f32 %v222, %v912
  %914 = vmatmul.f32.gmra.mxu0 %v307
  %v915 = vpop.f32.mrf.mxu0
  %v916 = vadd.f32 %v222, %v915
  %917 = vmatmul.f32.gmra.mxu0 %v310
  %v918 = vpop.f32.mrf.mxu0
  %v919 = vadd.f32 %v222, %v918
  %920 = vmatmul.f32.gmra.mxu0 %v313
  %v921 = vpop.f32.mrf.mxu0
  %v922 = vadd.f32 %v222, %v921
  %923 = vmatmul.f32.gmra.mxu0 %v316
  %v924 = vpop.f32.mrf.mxu0
  %v925 = vadd.f32 %v222, %v924
  %926 = vmatmul.f32.gmra.mxu0 %v319
  %v927 = vpop.f32.mrf.mxu0
  %v928 = vadd.f32 %v222, %v927
  %929 = vmatmul.f32.gmra.mxu0 %v322
  %v930 = vpop.f32.mrf.mxu0
  %v931 = vadd.f32 %v222, %v930
  %932 = vmatmul.f32.gmra.mxu0 %v325
  %v933 = vpop.f32.mrf.mxu0
  %v934 = vadd.f32 %v222, %v933
  %935 = vmatmul.f32.gmra.mxu0 %v328
  %v936 = vpop.f32.mrf.mxu0
  %v937 = vadd.f32 %v222, %v936
  %938 = vmatmul.f32.gmra.mxu0 %v331
  %v939 = vpop.f32.mrf.mxu0
  %v940 = vadd.f32 %v222, %v939
  %941 = vmatmul.f32.gmra.mxu0 %v334
  %v942 = vpop.f32.mrf.mxu0
  %v943 = vadd.f32 %v222, %v942
  %944 = vmatmul.f32.gmra.mxu0 %v337
  %v945 = vpop.f32.mrf.mxu0
  %v946 = vadd.f32 %v222, %v945
  %947 = vmatmul.f32.gmra.mxu0 %v340
  %v948 = vpop.f32.mrf.mxu0
  %v949 = vadd.f32 %v222, %v948
  %950 = vmatmul.f32.gmra.mxu0 %v343
  %v951 = vpop.f32.mrf.mxu0
  %v952 = vadd.f32 %v222, %v951
  %953 = vmatmul.f32.gmra.mxu0 %v346
  %v954 = vpop.f32.mrf.mxu0
  %v955 = vadd.f32 %v222, %v954
  %956 = vmatmul.f32.gmra.mxu0 %v349
  %v957 = vpop.f32.mrf.mxu0
  %v958 = vadd.f32 %v222, %v957
  %959 = vmatmul.f32.gmra.mxu0 %v352
  %v960 = vpop.f32.mrf.mxu0
  %v961 = vadd.f32 %v222, %v960
  %962 = vmatmul.f32.gmra.mxu0 %v355
  %v963 = vpop.f32.mrf.mxu0
  %v964 = vadd.f32 %v222, %v963
  %965 = vmatmul.f32.gmra.mxu0 %v358
  %v966 = vpop.f32.mrf.mxu0
  %v967 = vadd.f32 %v222, %v966
  %968 = vmatmul.f32.gmra.mxu0 %v361
  %v969 = vpop.f32.mrf.mxu0
  %v970 = vadd.f32 %v222, %v969
  %971 = vmatmul.f32.gmra.mxu0 %v364
  %v972 = vpop.f32.mrf.mxu0
  %v973 = vadd.f32 %v222, %v972
  %974 = vmatmul.f32.gmra.mxu0 %v367
  %v975 = vpop.f32.mrf.mxu0
  %v976 = vadd.f32 %v222, %v975
  %977 = vmatmul.f32.gmra.mxu0 %v370
  %v978 = vpop.f32.mrf.mxu0
  %v979 = vadd.f32 %v222, %v978
  %980 = vmatmul.f32.gmra.mxu0 %v373
  %v981 = vpop.f32.mrf.mxu0
  %v982 = vadd.f32 %v222, %v981
  %983 = vmatmul.f32.gmra.mxu0 %v376
  %v984 = vpop.f32.mrf.mxu0
  %v985 = vadd.f32 %v222, %v984
  %986 = vmatmul.f32.gmra.mxu0 %v379
  %v987 = vpop.f32.mrf.mxu0
  %v988 = vadd.f32 %v222, %v987
  %989 = vmatmul.f32.gmra.mxu0 %v382
  %v990 = vpop.f32.mrf.mxu0
  %v991 = vadd.f32 %v222, %v990
  %992 = vmatmul.f32.gmra.mxu0 %v385
  %v993 = vpop.f32.mrf.mxu0
  %v994 = vadd.f32 %v222, %v993
  %995 = vmatmul.f32.gmra.mxu0 %v388
  %v996 = vpop.f32.mrf.mxu0
  %v997 = vadd.f32 %v222, %v996
  %998 = vmatmul.f32.gmra.mxu0 %v391
  %v999 = vpop.f32.mrf.mxu0
  %v1000 = vadd.f32 %v222, %v999
  %1001 = vmatmul.f32.gmra.mxu0 %v394
  %v1002 = vpop.f32.mrf.mxu0
  %v1003 = vadd.f32 %v222, %v1002
  %1004 = vmatmul.f32.gmra.mxu0 %v397
  %v1005 = vpop.f32.mrf.mxu0
  %v1006 = vadd.f32 %v222, %v1005
  %1007 = vmatmul.f32.gmra.mxu0 %v400
  %v1008 = vpop.f32.mrf.mxu0
  %v1009 = vadd.f32 %v222, %v1008
  %1010 = vmatmul.f32.gmra.mxu0 %v403
  %v1011 = vpop.f32.mrf.mxu0
  %v1012 = vadd.f32 %v222, %v1011
  %1013 = vmatmul.f32.gmra.mxu0 %v406
  %v1014 = vpop.f32.mrf.mxu0
  %v1015 = vadd.f32 %v222, %v1014
  %1016 = vmatmul.f32.gmra.mxu0 %v409
  %v1017 = vpop.f32.mrf.mxu0
  %v1018 = vadd.f32 %v222, %v1017
  %1019 = vmatmul.f32.gmra.mxu0 %v412
  %v1020 = vpop.f32.mrf.mxu0
  %v1021 = vadd.f32 %v222, %v1020
  %1022 = vmatmul.f32.gmra.mxu0 %v415
  %v1023 = vpop.f32.mrf.mxu0
  %v1024 = vadd.f32 %v222, %v1023
  %1025 = vmatmul.f32.gmra.mxu0 %v418
  %v1026 = vpop.f32.mrf.mxu0
  %v1027 = vadd.f32 %v222, %v1026
  %1028 = vmatmul.f32.gmra.mxu0 %v421
  %v1029 = vpop.f32.mrf.mxu0
  %v1030 = vadd.f32 %v222, %v1029
  %1031 = vmatmul.f32.gmra.mxu0 %v424
  %v1032 = vpop.f32.mrf.mxu0
  %v1033 = vadd.f32 %v222, %v1032
  %1034 = vmatmul.f32.gmra.mxu0 %v427
  %v1035 = vpop.f32.mrf.mxu0
  %v1036 = vadd.f32 %v222, %v1035
  %1037 = vmatmul.f32.gmra.mxu0 %v430
  %v1038 = vpop.f32.mrf.mxu0
  %v1039 = vadd.f32 %v222, %v1038
  %1040 = vmatmul.f32.gmra.mxu0 %v433
  %v1041 = vpop.f32.mrf.mxu0
  %v1042 = vadd.f32 %v222, %v1041
  %1043 = vmatmul.f32.gmra.mxu0 %v436
  %v1044 = vpop.f32.mrf.mxu0
  %v1045 = vadd.f32 %v222, %v1044
  %1046 = vmatmul.f32.gmra.mxu0 %v439
  %v1047 = vpop.f32.mrf.mxu0
  %v1048 = vadd.f32 %v222, %v1047
  %1049 = vmatmul.f32.gmra.mxu0 %v442
  %v1050 = vpop.f32.mrf.mxu0
  %v1051 = vadd.f32 %v222, %v1050
  %1052 = vmatmul.f32.gmra.mxu0 %v445
  %v1053 = vpop.f32.mrf.mxu0
  %v1054 = vadd.f32 %v222, %v1053
  %1055 = vmatmul.f32.gmra.mxu0 %v448
  %v1056 = vpop.f32.mrf.mxu0
  %v1057 = vadd.f32 %v222, %v1056
  %1058 = vmatmul.f32.gmra.mxu0 %v451
  %v1059 = vpop.f32.mrf.mxu0
  %v1060 = vadd.f32 %v222, %v1059
  %1061 = vmatmul.f32.gmra.mxu0 %v454
  %v1062 = vpop.f32.mrf.mxu0
  %v1063 = vadd.f32 %v222, %v1062
  %1064 = vmatmul.f32.gmra.mxu0 %v457
  %v1065 = vpop.f32.mrf.mxu0
  %v1066 = vadd.f32 %v222, %v1065
  %1067 = vmatmul.f32.gmra.mxu0 %v460
  %v1068 = vpop.f32.mrf.mxu0
  %v1069 = vadd.f32 %v222, %v1068
  %1070 = vmatmul.f32.gmra.mxu0 %v463
  %v1071 = vpop.f32.mrf.mxu0
  %v1072 = vadd.f32 %v222, %v1071
  %1073 = vmatmul.f32.gmra.mxu0 %v466
  %v1074 = vpop.f32.mrf.mxu0
  %v1075 = vadd.f32 %v222, %v1074
  %1076 = vmatmul.f32.gmra.mxu0 %v469
  %v1077 = vpop.f32.mrf.mxu0
  %v1078 = vadd.f32 %v222, %v1077
  %1079 = vmatmul.f32.gmra.mxu0 %v472
  %v1080 = vpop.f32.mrf.mxu0
  %v1081 = vadd.f32 %v222, %v1080
  %1082 = vmatmul.f32.gmra.mxu0 %v475
  %v1083 = vpop.f32.mrf.mxu0
  %v1084 = vadd.f32 %v222, %v1083
  %1085 = vmatmul.f32.gmra.mxu0 %v478
  %v1086 = vpop.f32.mrf.mxu0
  %v1087 = vadd.f32 %v222, %v1086
  %1088 = vmatmul.f32.gmra.mxu0 %v481
  %v1089 = vpop.f32.mrf.mxu0
  %v1090 = vadd.f32 %v222, %v1089
  %1091 = vmatmul.f32.gmra.mxu0 %v484
  %v1092 = vpop.f32.mrf.mxu0
  %v1093 = vadd.f32 %v222, %v1092
  %1094 = vmatmul.f32.gmra.mxu0 %v487
  %v1095 = vpop.f32.mrf.mxu0
  %v1096 = vadd.f32 %v222, %v1095
  %1097 = vmatmul.f32.gmra.mxu0 %v490
  %v1098 = vpop.f32.mrf.mxu0
  %v1099 = vadd.f32 %v222, %v1098
  %1100 = vmatmul.f32.gmra.mxu0 %v493
  %v1101 = vpop.f32.mrf.mxu0
  %v1102 = vadd.f32 %v222, %v1101
  %1103 = vmatmul.f32.gmra.mxu0 %v496
  %v1104 = vpop.f32.mrf.mxu0
  %v1105 = vadd.f32 %v222, %v1104
  %1106 = vmatmul.f32.gmra.mxu0 %v499
  %v1107 = vpop.f32.mrf.mxu0
  %v1108 = vadd.f32 %v222, %v1107
  %1109 = vmatmul.f32.gmra.mxu0 %v502
  %v1110 = vpop.f32.mrf.mxu0
  %v1111 = vadd.f32 %v222, %v1110
  %1112 = vmatmul.f32.gmra.mxu0 %v505
  %v1113 = vpop.f32.mrf.mxu0
  %v1114 = vadd.f32 %v222, %v1113
  %1115 = vmatmul.f32.gmra.mxu0 %v508
  %v1116 = vpop.f32.mrf.mxu0
  %v1117 = vadd.f32 %v222, %v1116
  %1118 = vmatmul.f32.gmra.mxu0 %v511
  %v1119 = vpop.f32.mrf.mxu0
  %v1120 = vadd.f32 %v222, %v1119
  %1121 = vmatmul.f32.gmra.mxu0 %v514
  %v1122 = vpop.f32.mrf.mxu0
  %v1123 = vadd.f32 %v222, %v1122
  %1124 = vmatmul.f32.gmra.mxu0 %v517
  %v1125 = vpop.f32.mrf.mxu0
  %v1126 = vadd.f32 %v222, %v1125
  %1127 = vmatmul.f32.gmra.mxu0 %v520
  %v1128 = vpop.f32.mrf.mxu0
  %v1129 = vadd.f32 %v222, %v1128
  %1130 = vmatmul.f32.gmra.mxu0 %v523
  %v1131 = vpop.f32.mrf.mxu0
  %v1132 = vadd.f32 %v222, %v1131
  %1133 = vmatmul.f32.gmra.mxu0 %v526
  %v1134 = vpop.f32.mrf.mxu0
  %v1135 = vadd.f32 %v222, %v1134
  %1136 = vmatmul.f32.gmra.mxu0 %v529
  %v1137 = vpop.f32.mrf.mxu0
  %v1138 = vadd.f32 %v222, %v1137
  %1139 = vmatmul.f32.gmra.mxu0 %v532
  %v1140 = vpop.f32.mrf.mxu0
  %v1141 = vadd.f32 %v222, %v1140
  %1142 = vmatmul.f32.gmra.mxu0 %v535
  %v1143 = vpop.f32.mrf.mxu0
  %v1144 = vadd.f32 %v222, %v1143
  %1145 = vmatmul.f32.gmra.mxu0 %v538
  %v1146 = vpop.f32.mrf.mxu0
  %v1147 = vadd.f32 %v222, %v1146
  %1148 = vmatmul.f32.gmra.mxu0 %v541
  %v1149 = vpop.f32.mrf.mxu0
  %v1150 = vadd.f32 %v222, %v1149
  %1151 = vmatmul.f32.gmra.mxu0 %v544
  %v1152 = vpop.f32.mrf.mxu0
  %v1153 = vadd.f32 %v222, %v1152
  %1154 = vmatmul.f32.gmra.mxu0 %v547
  %v1155 = vpop.f32.mrf.mxu0
  %v1156 = vadd.f32 %v222, %v1155
  %1157 = vmatmul.f32.gmra.mxu0 %v550
  %v1158 = vpop.f32.mrf.mxu0
  %v1159 = vadd.f32 %v222, %v1158
  %1160 = vmatmul.f32.gmra.mxu0 %v553
  %v1161 = vpop.f32.mrf.mxu0
  %v1162 = vadd.f32 %v222, %v1161
  %1163 = vmatmul.f32.gmra.mxu0 %v556
  %v1164 = vpop.f32.mrf.mxu0
  %v1165 = vadd.f32 %v222, %v1164
  %1166 = vmatmul.f32.gmra.mxu0 %v559
  %v1167 = vpop.f32.mrf.mxu0
  %v1168 = vadd.f32 %v222, %v1167
  %1169 = vmatmul.f32.gmra.mxu0 %v562
  %v1170 = vpop.f32.mrf.mxu0
  %v1171 = vadd.f32 %v222, %v1170
  %1172 = vmatmul.f32.gmra.mxu0 %v565
  %v1173 = vpop.f32.mrf.mxu0
  %v1174 = vadd.f32 %v222, %v1173
  %1175 = vmatmul.f32.gmra.mxu0 %v568
  %v1176 = vpop.f32.mrf.mxu0
  %v1177 = vadd.f32 %v222, %v1176
  %1178 = vmatmul.f32.gmra.mxu0 %v571
  %v1179 = vpop.f32.mrf.mxu0
  %v1180 = vadd.f32 %v222, %v1179
  %1181 = vmatmul.f32.gmra.mxu0 %v574
  %v1182 = vpop.f32.mrf.mxu0
  %v1183 = vadd.f32 %v222, %v1182
  %1184 = vmatmul.f32.gmra.mxu0 %v577
  %v1185 = vpop.f32.mrf.mxu0
  %v1186 = vadd.f32 %v222, %v1185
  %1187 = vmatmul.f32.gmra.mxu0 %v580
  %v1188 = vpop.f32.mrf.mxu0
  %v1189 = vadd.f32 %v222, %v1188
  %1190 = vmatmul.f32.gmra.mxu0 %v583
  %v1191 = vpop.f32.mrf.mxu0
  %v1192 = vadd.f32 %v222, %v1191
  %1193 = vmatmul.f32.gmra.mxu0 %v586
  %v1194 = vpop.f32.mrf.mxu0
  %v1195 = vadd.f32 %v222, %v1194
  %1196 = vmatmul.f32.gmra.mxu0 %v589
  %v1197 = vpop.f32.mrf.mxu0
  %v1198 = vadd.f32 %v222, %v1197
  %1199 = vmatmul.f32.gmra.mxu0 %v592
  %v1200 = vpop.f32.mrf.mxu0
  %v1201 = vadd.f32 %v222, %v1200
  %1202 = vmatmul.f32.gmra.mxu0 %v595
  %v1203 = vpop.f32.mrf.mxu0
  %v1204 = vadd.f32 %v222, %v1203
  %1205 = vmatmul.f32.gmra.mxu0 %v598
  %v1206 = vpop.f32.mrf.mxu0
  %v1207 = vadd.f32 %v222, %v1206
  %1208 = vmatmul.f32.gmra.mxu0 %v601
  %v1209 = vpop.f32.mrf.mxu0
  %v1210 = vadd.f32 %v222, %v1209
  %1211 = vmatmul.f32.gmra.mxu0 %v604
  %v1212 = vpop.f32.mrf.mxu0
  %v1213 = vadd.f32 %v222, %v1212
  %1214 = vmatmul.f32.gmra.mxu0 %v607
  %v1215 = vpop.f32.mrf.mxu0
  %v1216 = vadd.f32 %v222, %v1215
  %1217 = vmatmul.f32.gmra.mxu0 %v610
  %v1218 = vpop.f32.mrf.mxu0
  %v1219 = vadd.f32 %v222, %v1218
  %1220 = vmatmul.f32.gmra.mxu0 %v613
  %v1221 = vpop.f32.mrf.mxu0
  %v1222 = vadd.f32 %v222, %v1221
  %1223 = vmatmul.f32.gmra.mxu0 %v616
  %v1224 = vpop.f32.mrf.mxu0
  %v1225 = vadd.f32 %v222, %v1224
  %1226 = vmatmul.f32.gmra.mxu0 %v619
  %v1227 = vpop.f32.mrf.mxu0
  %v1228 = vadd.f32 %v222, %v1227
  %1229 = vmatmul.f32.gmra.mxu0 %v622
  %v1230 = vpop.f32.mrf.mxu0
  %v1231 = vadd.f32 %v222, %v1230
  %1232 = vmatmul.f32.gmra.mxu0 %v625
  %v1233 = vpop.f32.mrf.mxu0
  %v1234 = vadd.f32 %v222, %v1233
  %1235 = vmatmul.f32.gmra.mxu0 %v628
  %v1236 = vpop.f32.mrf.mxu0
  %v1237 = vadd.f32 %v222, %v1236
  %1238 = vmatmul.f32.gmra.mxu0 %v631
  %v1239 = vpop.f32.mrf.mxu0
  %v1240 = vadd.f32 %v222, %v1239
  %1241 = vmatmul.f32.gmra.mxu0 %v634
  %v1242 = vpop.f32.mrf.mxu0
  %v1243 = vadd.f32 %v222, %v1242
  %1244 = vmatmul.f32.gmra.mxu0 %v637
  %v1245 = vpop.f32.mrf.mxu0
  %v1246 = vadd.f32 %v222, %v1245
  %1247 = vmatmul.f32.gmra.mxu0 %v640
  %v1248 = vpop.f32.mrf.mxu0
  %v1249 = vadd.f32 %v222, %v1248
  %1250 = vmatmul.f32.gmra.mxu0 %v643
  %v1251 = vpop.f32.mrf.mxu0
  %v1252 = vadd.f32 %v222, %v1251
  %1253 = vmatmul.f32.gmra.mxu0 %v646
  %v1254 = vpop.f32.mrf.mxu0
  %v1255 = vadd.f32 %v222, %v1254
  %1256 = vmatmul.f32.gmra.mxu0 %v649
  %v1257 = vpop.f32.mrf.mxu0
  %v1258 = vadd.f32 %v222, %v1257
  %1259 = vmatmul.f32.gmra.mxu0 %v652
  %v1260 = vpop.f32.mrf.mxu0
  %v1261 = vadd.f32 %v222, %v1260
  %1262 = vmatmul.f32.gmra.mxu0 %v655
  %v1263 = vpop.f32.mrf.mxu0
  %v1264 = vadd.f32 %v222, %v1263
  %1265 = vmatmul.f32.gmra.mxu0 %v658
  %v1266 = vpop.f32.mrf.mxu0
  %v1267 = vadd.f32 %v222, %v1266
  %1268 = vmatmul.f32.gmra.mxu0 %v661
  %v1269 = vpop.f32.mrf.mxu0
  %v1270 = vadd.f32 %v222, %v1269
  %1271 = vmatmul.f32.gmra.mxu0 %v664
  %v1272 = vpop.f32.mrf.mxu0
  %v1273 = vadd.f32 %v222, %v1272
  %1274 = vmatmul.f32.gmra.mxu0 %v667
  %v1275 = vpop.f32.mrf.mxu0
  %v1276 = vadd.f32 %v222, %v1275
  %1277 = vmatmul.f32.gmra.mxu0 %v670
  %v1278 = vpop.f32.mrf.mxu0
  %v1279 = vadd.f32 %v222, %v1278
  %1280 = vmatmul.f32.gmra.mxu0 %v673
  %v1281 = vpop.f32.mrf.mxu0
  %v1282 = vadd.f32 %v222, %v1281
  %1283 = vmatmul.f32.gmra.mxu0 %v676
  %v1284 = vpop.f32.mrf.mxu0
  %v1285 = vadd.f32 %v222, %v1284
  %1286 = vmatmul.f32.gmra.mxu0 %v679
  %v1287 = vpop.f32.mrf.mxu0
  %v1288 = vadd.f32 %v222, %v1287
  %1289 = vmatmul.f32.gmra.mxu0 %v682
  %v1290 = vpop.f32.mrf.mxu0
  %v1291 = vadd.f32 %v222, %v1290
  %1292 = vmatmul.f32.gmra.mxu0 %v685
  %v1293 = vpop.f32.mrf.mxu0
  %v1294 = vadd.f32 %v222, %v1293
  %1295 = vmatmul.f32.gmra.mxu0 %v688
  %v1296 = vpop.f32.mrf.mxu0
  %v1297 = vadd.f32 %v222, %v1296
  %1298 = vmatmul.f32.gmra.mxu0 %v691
  %v1299 = vpop.f32.mrf.mxu0
  %v1300 = vadd.f32 %v222, %v1299
  %1301 = vmatmul.f32.gmra.mxu0 %v694
  %v1302 = vpop.f32.mrf.mxu0
  %v1303 = vadd.f32 %v222, %v1302
  %1304 = vmatmul.f32.gmra.mxu0 %v697
  %v1305 = vpop.f32.mrf.mxu0
  %v1306 = vadd.f32 %v222, %v1305
  %1307 = vmatmul.f32.gmra.mxu0 %v700
  %v1308 = vpop.f32.mrf.mxu0
  %v1309 = vadd.f32 %v222, %v1308
  %1310 = vmatmul.f32.gmra.mxu0 %v703
  %v1311 = vpop.f32.mrf.mxu0
  %v1312 = vadd.f32 %v222, %v1311
  %1313 = vmatmul.f32.gmra.mxu0 %v706
  %v1314 = vpop.f32.mrf.mxu0
  %v1315 = vadd.f32 %v222, %v1314
  %1316 = vmatmul.f32.gmra.mxu0 %v709
  %v1317 = vpop.f32.mrf.mxu0
  %v1318 = vadd.f32 %v222, %v1317
  %1319 = vmatmul.f32.gmra.mxu0 %v712
  %v1320 = vpop.f32.mrf.mxu0
  %v1321 = vadd.f32 %v222, %v1320
  %1322 = vmatmul.f32.gmra.mxu0 %v715
  %v1323 = vpop.f32.mrf.mxu0
  %v1324 = vadd.f32 %v222, %v1323
  %1325 = vmatmul.f32.gmra.mxu0 %v718
  %v1326 = vpop.f32.mrf.mxu0
  %v1327 = vadd.f32 %v222, %v1326
  %1328 = vmatmul.f32.gmra.mxu0 %v721
  %v1329 = vpop.f32.mrf.mxu0
  %v1330 = vadd.f32 %v222, %v1329
  %1331 = vmatmul.f32.gmra.mxu0 %v724
  %v1332 = vpop.f32.mrf.mxu0
  %v1333 = vadd.f32 %v222, %v1332
  %1334 = vmatmul.f32.gmra.mxu0 %v727
  %v1335 = vpop.f32.mrf.mxu0
  %v1336 = vadd.f32 %v222, %v1335
  %1337 = vmatmul.f32.gmra.mxu0 %v730
  %v1338 = vpop.f32.mrf.mxu0
  %v1339 = vadd.f32 %v222, %v1338
  %1340 = vmatmul.f32.gmra.mxu0 %v733
  %v1341 = vpop.f32.mrf.mxu0
  %v1342 = vadd.f32 %v222, %v1341
  %1343 = vmatmul.f32.gmra.mxu0 %v736
  %v1344 = vpop.f32.mrf.mxu0
  %v1345 = vadd.f32 %v222, %v1344
  %1346 = vmatmul.f32.gmra.mxu0 %v739
  %v1347 = vpop.f32.mrf.mxu0
  %v1348 = vadd.f32 %v222, %v1347
  %1349 = vmatmul.f32.gmra.mxu0 %v742
  %v1350 = vpop.f32.mrf.mxu0
  %v1351 = vadd.f32 %v222, %v1350
  %1352 = vmatmul.f32.gmra.mxu0 %v745
  %v1353 = vpop.f32.mrf.mxu0
  %v1354 = vadd.f32 %v222, %v1353
  %1355 = vmatmul.f32.gmra.mxu0 %v748
  %v1356 = vpop.f32.mrf.mxu0
  %v1357 = vadd.f32 %v222, %v1356
  %1358 = vmatmul.f32.gmra.mxu0 %v751
  %v1359 = vpop.f32.mrf.mxu0
  %v1360 = vadd.f32 %v222, %v1359
  %1361 = vmatmul.f32.gmra.mxu0 %v754
  %v1362 = vpop.f32.mrf.mxu0
  %v1363 = vadd.f32 %v222, %v1362
  %1364 = vmatmul.f32.gmra.mxu0 %v757
  %v1365 = vpop.f32.mrf.mxu0
  %v1366 = vadd.f32 %v222, %v1365
  %1367 = vmatmul.f32.gmra.mxu0 %v760
  %v1368 = vpop.f32.mrf.mxu0
  %v1369 = vadd.f32 %v222, %v1368
  %1370 = vmatmul.f32.gmra.mxu0 %v763
  %v1371 = vpop.f32.mrf.mxu0
  %v1372 = vadd.f32 %v222, %v1371
  %1373 = vmatmul.f32.gmra.mxu0 %v766
  %v1374 = vpop.f32.mrf.mxu0
  %v1375 = vadd.f32 %v222, %v1374
  %1376 = vmatmul.f32.gmra.mxu0 %v769
  %v1377 = vpop.f32.mrf.mxu0
  %v1378 = vadd.f32 %v222, %v1377
  %1379 = vmatmul.f32.gmra.mxu0 %v772
  %v1380 = vpop.f32.mrf.mxu0
  %v1381 = vadd.f32 %v222, %v1380
  %1382 = vmatmul.f32.gmra.mxu0 %v775
  %v1383 = vpop.f32.mrf.mxu0
  %v1384 = vadd.f32 %v222, %v1383
  %1385 = vmatmul.f32.gmra.mxu0 %v778
  %v1386 = vpop.f32.mrf.mxu0
  %v1387 = vadd.f32 %v222, %v1386
  %1388 = vmatmul.f32.gmra.mxu0 %v781
  %v1389 = vpop.f32.mrf.mxu0
  %v1390 = vadd.f32 %v222, %v1389
  %1391 = vmatmul.f32.gmra.mxu0 %v784
  %v1392 = vpop.f32.mrf.mxu0
  %v1393 = vadd.f32 %v222, %v1392
  %1394 = vmatmul.f32.gmra.mxu0 %v787
  %v1395 = vpop.f32.mrf.mxu0
  %v1396 = vadd.f32 %v222, %v1395
  %1397 = vmatmul.f32.gmra.mxu0 %v790
  %v1398 = vpop.f32.mrf.mxu0
  %v1399 = vadd.f32 %v222, %v1398
  %1400 = vmatmul.f32.gmra.mxu0 %v793
  %v1401 = vpop.f32.mrf.mxu0
  %v1402 = vadd.f32 %v222, %v1401
  %1403 = vmatmul.f32.gmra.mxu0 %v796
  %v1404 = vpop.f32.mrf.mxu0
  %v1405 = vadd.f32 %v222, %v1404
  %1406 = vmatmul.f32.gmra.mxu0 %v799
  %v1407 = vpop.f32.mrf.mxu0
  %v1408 = vadd.f32 %v222, %v1407
  %1409 = vmatmul.f32.gmra.mxu0 %v802
  %v1410 = vpop.f32.mrf.mxu0
  %v1411 = vadd.f32 %v222, %v1410
  %1412 = vmatmul.f32.gmra.mxu0 %v805
  %v1413 = vpop.f32.mrf.mxu0
  %v1414 = vadd.f32 %v222, %v1413
  %1415 = vmatmul.f32.gmra.mxu0 %v808
  %v1416 = vpop.f32.mrf.mxu0
  %v1417 = vadd.f32 %v222, %v1416
  %1418 = vmatmul.f32.gmra.mxu0 %v811
  %v1419 = vpop.f32.mrf.mxu0
  %v1420 = vadd.f32 %v222, %v1419
  %1421 = vdwg.mxu0
  %vm1422 = vcmask 523264
  %1423 = vst.msk [vmem:[#allocation2] sm:$0xff] %vm1422, %v835
  %1424 = vst.msk [vmem:[#allocation2 + $0x8] sm:$0xff] %vm1422, %v838
  %1425 = vst.msk [vmem:[#allocation2 + $0x10] sm:$0xff] %vm1422, %v841
  %1426 = vst.msk [vmem:[#allocation2 + $0x18] sm:$0xff] %vm1422, %v844
  %1427 = vst.msk [vmem:[#allocation2 + $0x20] sm:$0xff] %vm1422, %v847
  %1428 = vst.msk [vmem:[#allocation2 + $0x28] sm:$0xff] %vm1422, %v850
  %1429 = vst.msk [vmem:[#allocation2 + $0x30] sm:$0xff] %vm1422, %v853
  %1430 = vst.msk [vmem:[#allocation2 + $0x38] sm:$0xff] %vm1422, %v856
  %1431 = vst.msk [vmem:[#allocation2 + $0x40] sm:$0xff] %vm1422, %v859
  %1432 = vst.msk [vmem:[#allocation2 + $0x48] sm:$0xff] %vm1422, %v862
  %1433 = vst.msk [vmem:[#allocation2 + $0x50] sm:$0xff] %vm1422, %v865
  %1434 = vst.msk [vmem:[#allocation2 + $0x58] sm:$0xff] %vm1422, %v868
  %1435 = vst.msk [vmem:[#allocation2 + $0x60] sm:$0xff] %vm1422, %v871
  %1436 = vst.msk [vmem:[#allocation2 + $0x68] sm:$0xff] %vm1422, %v874
  %1437 = vst.msk [vmem:[#allocation2 + $0x70] sm:$0xff] %vm1422, %v877
  %1438 = vst.msk [vmem:[#allocation2 + $0x78] sm:$0xff] %vm1422, %v880
  %1439 = vst.msk [vmem:[#allocation2 + $0x80] sm:$0xff] %vm1422, %v883
  %1440 = vst.msk [vmem:[#allocation2 + $0x88] sm:$0xff] %vm1422, %v886
  %1441 = vst.msk [vmem:[#allocation2 + $0x90] sm:$0xff] %vm1422, %v889
  %1442 = vst.msk [vmem:[#allocation2 + $0x98] sm:$0xff] %vm1422, %v892
  %1443 = vst.msk [vmem:[#allocation2 + $0xa0] sm:$0xff] %vm1422, %v895
  %1444 = vst.msk [vmem:[#allocation2 + $0xa8] sm:$0xff] %vm1422, %v898
  %1445 = vst.msk [vmem:[#allocation2 + $0xb0] sm:$0xff] %vm1422, %v901
  %1446 = vst.msk [vmem:[#allocation2 + $0xb8] sm:$0xff] %vm1422, %v904
  %1447 = vst.msk [vmem:[#allocation2 + $0xc0] sm:$0xff] %vm1422, %v907
  %1448 = vst.msk [vmem:[#allocation2 + $0xc8] sm:$0xff] %vm1422, %v910
  %1449 = vst.msk [vmem:[#allocation2 + $0xd0] sm:$0xff] %vm1422, %v913
  %1450 = vst.msk [vmem:[#allocation2 + $0xd8] sm:$0xff] %vm1422, %v916
  %1451 = vst.msk [vmem:[#allocation2 + $0xe0] sm:$0xff] %vm1422, %v919
  %1452 = vst.msk [vmem:[#allocation2 + $0xe8] sm:$0xff] %vm1422, %v922
  %1453 = vst.msk [vmem:[#allocation2 + $0xf0] sm:$0xff] %vm1422, %v925
  %1454 = vst.msk [vmem:[#allocation2 + $0xf8] sm:$0xff] %vm1422, %v928
  %1455 = vst.msk [vmem:[#allocation2 + $0x100] sm:$0xff] %vm1422, %v931
  %1456 = vst.msk [vmem:[#allocation2 + $0x108] sm:$0xff] %vm1422, %v934
  %1457 = vst.msk [vmem:[#allocation2 + $0x110] sm:$0xff] %vm1422, %v937
  %1458 = vst.msk [vmem:[#allocation2 + $0x118] sm:$0xff] %vm1422, %v940
  %1459 = vst.msk [vmem:[#allocation2 + $0x120] sm:$0xff] %vm1422, %v943
  %1460 = vst.msk [vmem:[#allocation2 + $0x128] sm:$0xff] %vm1422, %v946
  %1461 = vst.msk [vmem:[#allocation2 + $0x130] sm:$0xff] %vm1422, %v949
  %1462 = vst.msk [vmem:[#allocation2 + $0x138] sm:$0xff] %vm1422, %v952
  %1463 = vst.msk [vmem:[#allocation2 + $0x140] sm:$0xff] %vm1422, %v955
  %1464 = vst.msk [vmem:[#allocation2 + $0x148] sm:$0xff] %vm1422, %v958
  %1465 = vst.msk [vmem:[#allocation2 + $0x150] sm:$0xff] %vm1422, %v961
  %1466 = vst.msk [vmem:[#allocation2 + $0x158] sm:$0xff] %vm1422, %v964
  %1467 = vst.msk [vmem:[#allocation2 + $0x160] sm:$0xff] %vm1422, %v967
  %1468 = vst.msk [vmem:[#allocation2 + $0x168] sm:$0xff] %vm1422, %v970
  %1469 = vst.msk [vmem:[#allocation2 + $0x170] sm:$0xff] %vm1422, %v973
  %1470 = vst.msk [vmem:[#allocation2 + $0x178] sm:$0xff] %vm1422, %v976
  %1471 = vst.msk [vmem:[#allocation2 + $0x180] sm:$0xff] %vm1422, %v979
  %1472 = vst.msk [vmem:[#allocation2 + $0x188] sm:$0xff] %vm1422, %v982
  %1473 = vst.msk [vmem:[#allocation2 + $0x190] sm:$0xff] %vm1422, %v985
  %1474 = vst.msk [vmem:[#allocation2 + $0x198] sm:$0xff] %vm1422, %v988
  %1475 = vst.msk [vmem:[#allocation2 + $0x1a0] sm:$0xff] %vm1422, %v991
  %1476 = vst.msk [vmem:[#allocation2 + $0x1a8] sm:$0xff] %vm1422, %v994
  %1477 = vst.msk [vmem:[#allocation2 + $0x1b0] sm:$0xff] %vm1422, %v997
  %1478 = vst.msk [vmem:[#allocation2 + $0x1b8] sm:$0xff] %vm1422, %v1000
  %1479 = vst.msk [vmem:[#allocation2 + $0x1c0] sm:$0xff] %vm1422, %v1003
  %1480 = vst.msk [vmem:[#allocation2 + $0x1c8] sm:$0xff] %vm1422, %v1006
  %1481 = vst.msk [vmem:[#allocation2 + $0x1d0] sm:$0xff] %vm1422, %v1009
  %1482 = vst.msk [vmem:[#allocation2 + $0x1d8] sm:$0xff] %vm1422, %v1012
  %1483 = vst.msk [vmem:[#allocation2 + $0x1e0] sm:$0xff] %vm1422, %v1015
  %1484 = vst.msk [vmem:[#allocation2 + $0x1e8] sm:$0xff] %vm1422, %v1018
  %1485 = vst.msk [vmem:[#allocation2 + $0x1f0] sm:$0xff] %vm1422, %v1021
  %1486 = vst.msk [vmem:[#allocation2 + $0x1f8] sm:$0xff] %vm1422, %v1024
  %1487 = vst.msk [vmem:[#allocation2 + $0x200] sm:$0xff] %vm1422, %v1027
  %1488 = vst.msk [vmem:[#allocation2 + $0x208] sm:$0xff] %vm1422, %v1030
  %1489 = vst.msk [vmem:[#allocation2 + $0x210] sm:$0xff] %vm1422, %v1033
  %1490 = vst.msk [vmem:[#allocation2 + $0x218] sm:$0xff] %vm1422, %v1036
  %1491 = vst.msk [vmem:[#allocation2 + $0x220] sm:$0xff] %vm1422, %v1039
  %1492 = vst.msk [vmem:[#allocation2 + $0x228] sm:$0xff] %vm1422, %v1042
  %1493 = vst.msk [vmem:[#allocation2 + $0x230] sm:$0xff] %vm1422, %v1045
  %1494 = vst.msk [vmem:[#allocation2 + $0x238] sm:$0xff] %vm1422, %v1048
  %1495 = vst.msk [vmem:[#allocation2 + $0x240] sm:$0xff] %vm1422, %v1051
  %1496 = vst.msk [vmem:[#allocation2 + $0x248] sm:$0xff] %vm1422, %v1054
  %1497 = vst.msk [vmem:[#allocation2 + $0x250] sm:$0xff] %vm1422, %v1057
  %1498 = vst.msk [vmem:[#allocation2 + $0x258] sm:$0xff] %vm1422, %v1060
  %1499 = vst.msk [vmem:[#allocation2 + $0x260] sm:$0xff] %vm1422, %v1063
  %1500 = vst.msk [vmem:[#allocation2 + $0x268] sm:$0xff] %vm1422, %v1066
  %1501 = vst.msk [vmem:[#allocation2 + $0x270] sm:$0xff] %vm1422, %v1069
  %1502 = vst.msk [vmem:[#allocation2 + $0x278] sm:$0xff] %vm1422, %v1072
  %1503 = vst.msk [vmem:[#allocation2 + $0x280] sm:$0xff] %vm1422, %v1075
  %1504 = vst.msk [vmem:[#allocation2 + $0x288] sm:$0xff] %vm1422, %v1078
  %1505 = vst.msk [vmem:[#allocation2 + $0x290] sm:$0xff] %vm1422, %v1081
  %1506 = vst.msk [vmem:[#allocation2 + $0x298] sm:$0xff] %vm1422, %v1084
  %1507 = vst.msk [vmem:[#allocation2 + $0x2a0] sm:$0xff] %vm1422, %v1087
  %1508 = vst.msk [vmem:[#allocation2 + $0x2a8] sm:$0xff] %vm1422, %v1090
  %1509 = vst.msk [vmem:[#allocation2 + $0x2b0] sm:$0xff] %vm1422, %v1093
  %1510 = vst.msk [vmem:[#allocation2 + $0x2b8] sm:$0xff] %vm1422, %v1096
  %1511 = vst.msk [vmem:[#allocation2 + $0x2c0] sm:$0xff] %vm1422, %v1099
  %1512 = vst.msk [vmem:[#allocation2 + $0x2c8] sm:$0xff] %vm1422, %v1102
  %1513 = vst.msk [vmem:[#allocation2 + $0x2d0] sm:$0xff] %vm1422, %v1105
  %1514 = vst.msk [vmem:[#allocation2 + $0x2d8] sm:$0xff] %vm1422, %v1108
  %1515 = vst.msk [vmem:[#allocation2 + $0x2e0] sm:$0xff] %vm1422, %v1111
  %1516 = vst.msk [vmem:[#allocation2 + $0x2e8] sm:$0xff] %vm1422, %v1114
  %1517 = vst.msk [vmem:[#allocation2 + $0x2f0] sm:$0xff] %vm1422, %v1117
  %1518 = vst.msk [vmem:[#allocation2 + $0x2f8] sm:$0xff] %vm1422, %v1120
  %1519 = vst.msk [vmem:[#allocation2 + $0x300] sm:$0xff] %vm1422, %v1123
  %1520 = vst.msk [vmem:[#allocation2 + $0x308] sm:$0xff] %vm1422, %v1126
  %1521 = vst.msk [vmem:[#allocation2 + $0x310] sm:$0xff] %vm1422, %v1129
  %1522 = vst.msk [vmem:[#allocation2 + $0x318] sm:$0xff] %vm1422, %v1132
  %1523 = vst.msk [vmem:[#allocation2 + $0x320] sm:$0xff] %vm1422, %v1135
  %1524 = vst.msk [vmem:[#allocation2 + $0x328] sm:$0xff] %vm1422, %v1138
  %1525 = vst.msk [vmem:[#allocation2 + $0x330] sm:$0xff] %vm1422, %v1141
  %1526 = vst.msk [vmem:[#allocation2 + $0x338] sm:$0xff] %vm1422, %v1144
  %1527 = vst.msk [vmem:[#allocation2 + $0x340] sm:$0xff] %vm1422, %v1147
  %1528 = vst.msk [vmem:[#allocation2 + $0x348] sm:$0xff] %vm1422, %v1150
  %1529 = vst.msk [vmem:[#allocation2 + $0x350] sm:$0xff] %vm1422, %v1153
  %1530 = vst.msk [vmem:[#allocation2 + $0x358] sm:$0xff] %vm1422, %v1156
  %1531 = vst.msk [vmem:[#allocation2 + $0x360] sm:$0xff] %vm1422, %v1159
  %1532 = vst.msk [vmem:[#allocation2 + $0x368] sm:$0xff] %vm1422, %v1162
  %1533 = vst.msk [vmem:[#allocation2 + $0x370] sm:$0xff] %vm1422, %v1165
  %1534 = vst.msk [vmem:[#allocation2 + $0x378] sm:$0xff] %vm1422, %v1168
  %1535 = vst.msk [vmem:[#allocation2 + $0x380] sm:$0xff] %vm1422, %v1171
  %1536 = vst.msk [vmem:[#allocation2 + $0x388] sm:$0xff] %vm1422, %v1174
  %1537 = vst.msk [vmem:[#allocation2 + $0x390] sm:$0xff] %vm1422, %v1177
  %1538 = vst.msk [vmem:[#allocation2 + $0x398] sm:$0xff] %vm1422, %v1180
  %1539 = vst.msk [vmem:[#allocation2 + $0x3a0] sm:$0xff] %vm1422, %v1183
  %1540 = vst.msk [vmem:[#allocation2 + $0x3a8] sm:$0xff] %vm1422, %v1186
  %1541 = vst.msk [vmem:[#allocation2 + $0x3b0] sm:$0xff] %vm1422, %v1189
  %1542 = vst.msk [vmem:[#allocation2 + $0x3b8] sm:$0xff] %vm1422, %v1192
  %1543 = vst.msk [vmem:[#allocation2 + $0x3c0] sm:$0xff] %vm1422, %v1195
  %1544 = vst.msk [vmem:[#allocation2 + $0x3c8] sm:$0xff] %vm1422, %v1198
  %1545 = vst.msk [vmem:[#allocation2 + $0x3d0] sm:$0xff] %vm1422, %v1201
  %1546 = vst.msk [vmem:[#allocation2 + $0x3d8] sm:$0xff] %vm1422, %v1204
  %1547 = vst.msk [vmem:[#allocation2 + $0x3e0] sm:$0xff] %vm1422, %v1207
  %1548 = vst.msk [vmem:[#allocation2 + $0x3e8] sm:$0xff] %vm1422, %v1210
  %1549 = vst.msk [vmem:[#allocation2 + $0x3f0] sm:$0xff] %vm1422, %v1213
  %1550 = vst.msk [vmem:[#allocation2 + $0x3f8] sm:$0xff] %vm1422, %v1216
  %1551 = vst.msk [vmem:[#allocation2 + $0x400] sm:$0xff] %vm1422, %v1219
  %1552 = vst.msk [vmem:[#allocation2 + $0x408] sm:$0xff] %vm1422, %v1222
  %1553 = vst.msk [vmem:[#allocation2 + $0x410] sm:$0xff] %vm1422, %v1225
  %1554 = vst.msk [vmem:[#allocation2 + $0x418] sm:$0xff] %vm1422, %v1228
  %1555 = vst.msk [vmem:[#allocation2 + $0x420] sm:$0xff] %vm1422, %v1231
  %1556 = vst.msk [vmem:[#allocation2 + $0x428] sm:$0xff] %vm1422, %v1234
  %1557 = vst.msk [vmem:[#allocation2 + $0x430] sm:$0xff] %vm1422, %v1237
  %1558 = vst.msk [vmem:[#allocation2 + $0x438] sm:$0xff] %vm1422, %v1240
  %1559 = vst.msk [vmem:[#allocation2 + $0x440] sm:$0xff] %vm1422, %v1243
  %1560 = vst.msk [vmem:[#allocation2 + $0x448] sm:$0xff] %vm1422, %v1246
  %1561 = vst.msk [vmem:[#allocation2 + $0x450] sm:$0xff] %vm1422, %v1249
  %1562 = vst.msk [vmem:[#allocation2 + $0x458] sm:$0xff] %vm1422, %v1252
  %1563 = vst.msk [vmem:[#allocation2 + $0x460] sm:$0xff] %vm1422, %v1255
  %1564 = vst.msk [vmem:[#allocation2 + $0x468] sm:$0xff] %vm1422, %v1258
  %1565 = vst.msk [vmem:[#allocation2 + $0x470] sm:$0xff] %vm1422, %v1261
  %1566 = vst.msk [vmem:[#allocation2 + $0x478] sm:$0xff] %vm1422, %v1264
  %1567 = vst.msk [vmem:[#allocation2 + $0x480] sm:$0xff] %vm1422, %v1267
  %1568 = vst.msk [vmem:[#allocation2 + $0x488] sm:$0xff] %vm1422, %v1270
  %1569 = vst.msk [vmem:[#allocation2 + $0x490] sm:$0xff] %vm1422, %v1273
  %1570 = vst.msk [vmem:[#allocation2 + $0x498] sm:$0xff] %vm1422, %v1276
  %1571 = vst.msk [vmem:[#allocation2 + $0x4a0] sm:$0xff] %vm1422, %v1279
  %1572 = vst.msk [vmem:[#allocation2 + $0x4a8] sm:$0xff] %vm1422, %v1282
  %1573 = vst.msk [vmem:[#allocation2 + $0x4b0] sm:$0xff] %vm1422, %v1285
  %1574 = vst.msk [vmem:[#allocation2 + $0x4b8] sm:$0xff] %vm1422, %v1288
  %1575 = vst.msk [vmem:[#allocation2 + $0x4c0] sm:$0xff] %vm1422, %v1291
  %1576 = vst.msk [vmem:[#allocation2 + $0x4c8] sm:$0xff] %vm1422, %v1294
  %1577 = vst.msk [vmem:[#allocation2 + $0x4d0] sm:$0xff] %vm1422, %v1297
  %1578 = vst.msk [vmem:[#allocation2 + $0x4d8] sm:$0xff] %vm1422, %v1300
  %1579 = vst.msk [vmem:[#allocation2 + $0x4e0] sm:$0xff] %vm1422, %v1303
  %1580 = vst.msk [vmem:[#allocation2 + $0x4e8] sm:$0xff] %vm1422, %v1306
  %1581 = vst.msk [vmem:[#allocation2 + $0x4f0] sm:$0xff] %vm1422, %v1309
  %1582 = vst.msk [vmem:[#allocation2 + $0x4f8] sm:$0xff] %vm1422, %v1312
  %1583 = vst.msk [vmem:[#allocation2 + $0x500] sm:$0xff] %vm1422, %v1315
  %1584 = vst.msk [vmem:[#allocation2 + $0x508] sm:$0xff] %vm1422, %v1318
  %1585 = vst.msk [vmem:[#allocation2 + $0x510] sm:$0xff] %vm1422, %v1321
  %1586 = vst.msk [vmem:[#allocation2 + $0x518] sm:$0xff] %vm1422, %v1324
  %1587 = vst.msk [vmem:[#allocation2 + $0x520] sm:$0xff] %vm1422, %v1327
  %1588 = vst.msk [vmem:[#allocation2 + $0x528] sm:$0xff] %vm1422, %v1330
  %1589 = vst.msk [vmem:[#allocation2 + $0x530] sm:$0xff] %vm1422, %v1333
  %1590 = vst.msk [vmem:[#allocation2 + $0x538] sm:$0xff] %vm1422, %v1336
  %1591 = vst.msk [vmem:[#allocation2 + $0x540] sm:$0xff] %vm1422, %v1339
  %1592 = vst.msk [vmem:[#allocation2 + $0x548] sm:$0xff] %vm1422, %v1342
  %1593 = vst.msk [vmem:[#allocation2 + $0x550] sm:$0xff] %vm1422, %v1345
  %1594 = vst.msk [vmem:[#allocation2 + $0x558] sm:$0xff] %vm1422, %v1348
  %1595 = vst.msk [vmem:[#allocation2 + $0x560] sm:$0xff] %vm1422, %v1351
  %1596 = vst.msk [vmem:[#allocation2 + $0x568] sm:$0xff] %vm1422, %v1354
  %1597 = vst.msk [vmem:[#allocation2 + $0x570] sm:$0xff] %vm1422, %v1357
  %1598 = vst.msk [vmem:[#allocation2 + $0x578] sm:$0xff] %vm1422, %v1360
  %1599 = vst.msk [vmem:[#allocation2 + $0x580] sm:$0xff] %vm1422, %v1363
  %1600 = vst.msk [vmem:[#allocation2 + $0x588] sm:$0xff] %vm1422, %v1366
  %1601 = vst.msk [vmem:[#allocation2 + $0x590] sm:$0xff] %vm1422, %v1369
  %1602 = vst.msk [vmem:[#allocation2 + $0x598] sm:$0xff] %vm1422, %v1372
  %1603 = vst.msk [vmem:[#allocation2 + $0x5a0] sm:$0xff] %vm1422, %v1375
  %1604 = vst.msk [vmem:[#allocation2 + $0x5a8] sm:$0xff] %vm1422, %v1378
  %1605 = vst.msk [vmem:[#allocation2 + $0x5b0] sm:$0xff] %vm1422, %v1381
  %1606 = vst.msk [vmem:[#allocation2 + $0x5b8] sm:$0xff] %vm1422, %v1384
  %1607 = vst.msk [vmem:[#allocation2 + $0x5c0] sm:$0xff] %vm1422, %v1387
  %1608 = vst.msk [vmem:[#allocation2 + $0x5c8] sm:$0xff] %vm1422, %v1390
  %1609 = vst.msk [vmem:[#allocation2 + $0x5d0] sm:$0xff] %vm1422, %v1393
  %1610 = vst.msk [vmem:[#allocation2 + $0x5d8] sm:$0xff] %vm1422, %v1396
  %1611 = vst.msk [vmem:[#allocation2 + $0x5e0] sm:$0xff] %vm1422, %v1399
  %1612 = vst.msk [vmem:[#allocation2 + $0x5e8] sm:$0xff] %vm1422, %v1402
  %1613 = vst.msk [vmem:[#allocation2 + $0x5f0] sm:$0xff] %vm1422, %v1405
  %1614 = vst.msk [vmem:[#allocation2 + $0x5f8] sm:$0xff] %vm1422, %v1408
  %1615 = vst.msk [vmem:[#allocation2 + $0x600] sm:$0xff] %vm1422, %v1411
  %1616 = vst.msk [vmem:[#allocation2 + $0x608] sm:$0xff] %vm1422, %v1414
  %1617 = vst.msk [vmem:[#allocation2 + $0x610] sm:$0xff] %vm1422, %v1417
  %1618 = vst.msk [vmem:[#allocation2 + $0x618] sm:$0xff] %vm1422, %v1420
  %v1619 = vld [vmem:[#allocation2] sm:$0xff]
  %v1620 = vld [vmem:[#allocation2 + $0x8] sm:$0xff]
  %v1621 = vld [vmem:[#allocation2 + $0x10] sm:$0xff]
  %v1622 = vld [vmem:[#allocation2 + $0x18] sm:$0xff]
  %v1623 = vld [vmem:[#allocation2 + $0x20] sm:$0xff]
  %v1624 = vld [vmem:[#allocation2 + $0x28] sm:$0xff]
  %v1625 = vld [vmem:[#allocation2 + $0x30] sm:$0xff]
  %v1626 = vld [vmem:[#allocation2 + $0x38] sm:$0xff]
  %v1627 = vld [vmem:[#allocation2 + $0x40] sm:$0xff]
  %v1628 = vld [vmem:[#allocation2 + $0x48] sm:$0xff]
  %v1629 = vld [vmem:[#allocation2 + $0x50] sm:$0xff]
  %v1630 = vld [vmem:[#allocation2 + $0x58] sm:$0xff]
  %v1631 = vld [vmem:[#allocation2 + $0x60] sm:$0xff]
  %v1632 = vld [vmem:[#allocation2 + $0x68] sm:$0xff]
  %v1633 = vld [vmem:[#allocation2 + $0x70] sm:$0xff]
  %v1634 = vld [vmem:[#allocation2 + $0x78] sm:$0xff]
  %v1635 = vld [vmem:[#allocation2 + $0x80] sm:$0xff]
  %v1636 = vld [vmem:[#allocation2 + $0x88] sm:$0xff]
  %v1637 = vld [vmem:[#allocation2 + $0x90] sm:$0xff]
  %v1638 = vld [vmem:[#allocation2 + $0x98] sm:$0xff]
  %v1639 = vld [vmem:[#allocation2 + $0xa0] sm:$0xff]
  %v1640 = vld [vmem:[#allocation2 + $0xa8] sm:$0xff]
  %v1641 = vld [vmem:[#allocation2 + $0xb0] sm:$0xff]
  %v1642 = vld [vmem:[#allocation2 + $0xb8] sm:$0xff]
  %v1643 = vld [vmem:[#allocation2 + $0xc0] sm:$0xf]
  %v1644 = vld [vmem:[#allocation2 + $0xc4] sm:$0xff]
  %v1645 = vld [vmem:[#allocation2 + $0xcc] sm:$0xff]
  %v1646 = vld [vmem:[#allocation2 + $0xd4] sm:$0xff]
  %v1647 = vld [vmem:[#allocation2 + $0xdc] sm:$0xff]
  %v1648 = vld [vmem:[#allocation2 + $0xe4] sm:$0xff]
  %v1649 = vld [vmem:[#allocation2 + $0xec] sm:$0xff]
  %v1650 = vld [vmem:[#allocation2 + $0xf4] sm:$0xff]
  %v1651 = vld [vmem:[#allocation2 + $0xfc] sm:$0xff]
  %v1652 = vld [vmem:[#allocation2 + $0x104] sm:$0xff]
  %v1653 = vld [vmem:[#allocation2 + $0x10c] sm:$0xff]
  %v1654 = vld [vmem:[#allocation2 + $0x114] sm:$0xff]
  %v1655 = vld [vmem:[#allocation2 + $0x11c] sm:$0xff]
  %v1656 = vld [vmem:[#allocation2 + $0x124] sm:$0xff]
  %v1657 = vld [vmem:[#allocation2 + $0x12c] sm:$0xff]
  %v1658 = vld [vmem:[#allocation2 + $0x134] sm:$0xff]
  %v1659 = vld [vmem:[#allocation2 + $0x13c] sm:$0xff]
  %v1660 = vld [vmem:[#allocation2 + $0x144] sm:$0xff]
  %v1661 = vld [vmem:[#allocation2 + $0x14c] sm:$0xff]
  %v1662 = vld [vmem:[#allocation2 + $0x154] sm:$0xff]
  %v1663 = vld [vmem:[#allocation2 + $0x15c] sm:$0xff]
  %v1664 = vld [vmem:[#allocation2 + $0x164] sm:$0xff]
  %v1665 = vld [vmem:[#allocation2 + $0x16c] sm:$0xff]
  %v1666 = vld [vmem:[#allocation2 + $0x174] sm:$0xff]
  %v1667 = vld [vmem:[#allocation2 + $0x17c] sm:$0xff]
  %v1668 = vld [vmem:[#allocation2 + $0x184] sm:$0xf]
  %v1669 = vmax.f32 %v1619, %v1644
  %v1670 = vmax.f32 %v1620, %v1645
  %v1671 = vmax.f32 %v1621, %v1646
  %v1672 = vmax.f32 %v1622, %v1647
  %v1673 = vmax.f32 %v1623, %v1648
  %v1674 = vmax.f32 %v1624, %v1649
  %v1675 = vmax.f32 %v1625, %v1650
  %v1676 = vmax.f32 %v1626, %v1651
  %v1677 = vmax.f32 %v1627, %v1652
  %v1678 = vmax.f32 %v1628, %v1653
  %v1679 = vmax.f32 %v1629, %v1654
  %v1680 = vmax.f32 %v1630, %v1655
  %v1681 = vmax.f32 %v1631, %v1656
  %v1682 = vmax.f32 %v1632, %v1657
  %v1683 = vmax.f32 %v1633, %v1658
  %v1684 = vmax.f32 %v1634, %v1659
  %v1685 = vmax.f32 %v1635, %v1660
  %v1686 = vmax.f32 %v1636, %v1661
  %v1687 = vmax.f32 %v1637, %v1662
  %v1688 = vmax.f32 %v1638, %v1663
  %v1689 = vmax.f32 %v1639, %v1664
  %v1690 = vmax.f32 %v1640, %v1665
  %v1691 = vmax.f32 %v1641, %v1666
  %v1692 = vmax.f32 %v1642, %v1667
  %v1693 = vmax.f32 %v1643, %v1668
  %v1694 = vld [vmem:[#allocation2 + $0x188] sm:$0xff]
  %v1695 = vld [vmem:[#allocation2 + $0x190] sm:$0xff]
  %v1696 = vld [vmem:[#allocation2 + $0x198] sm:$0xff]
  %v1697 = vld [vmem:[#allocation2 + $0x1a0] sm:$0xff]
  %v1698 = vld [vmem:[#allocation2 + $0x1a8] sm:$0xff]
  %v1699 = vld [vmem:[#allocation2 + $0x1b0] sm:$0xff]
  %v1700 = vld [vmem:[#allocation2 + $0x1b8] sm:$0xff]
  %v1701 = vld [vmem:[#allocation2 + $0x1c0] sm:$0xff]
  %v1702 = vld [vmem:[#allocation2 + $0x1c8] sm:$0xff]
  %v1703 = vld [vmem:[#allocation2 + $0x1d0] sm:$0xff]
  %v1704 = vld [vmem:[#allocation2 + $0x1d8] sm:$0xff]
  %v1705 = vld [vmem:[#allocation2 + $0x1e0] sm:$0xff]
  %v1706 = vld [vmem:[#allocation2 + $0x1e8] sm:$0xff]
  %v1707 = vld [vmem:[#allocation2 + $0x1f0] sm:$0xff]
  %v1708 = vld [vmem:[#allocation2 + $0x1f8] sm:$0xff]
  %v1709 = vld [vmem:[#allocation2 + $0x200] sm:$0xff]
  %v1710 = vld [vmem:[#allocation2 + $0x208] sm:$0xff]
  %v1711 = vld [vmem:[#allocation2 + $0x210] sm:$0xff]
  %v1712 = vld [vmem:[#allocation2 + $0x218] sm:$0xff]
  %v1713 = vld [vmem:[#allocation2 + $0x220] sm:$0xff]
  %v1714 = vld [vmem:[#allocation2 + $0x228] sm:$0xff]
  %v1715 = vld [vmem:[#allocation2 + $0x230] sm:$0xff]
  %v1716 = vld [vmem:[#allocation2 + $0x238] sm:$0xff]
  %v1717 = vld [vmem:[#allocation2 + $0x240] sm:$0xff]
  %v1718 = vld [vmem:[#allocation2 + $0x248] sm:$0xf]
  %v1719 = vmax.f32 %v1669, %v1694
  %v1720 = vmax.f32 %v1670, %v1695
  %v1721 = vmax.f32 %v1671, %v1696
  %v1722 = vmax.f32 %v1672, %v1697
  %v1723 = vmax.f32 %v1673, %v1698
  %v1724 = vmax.f32 %v1674, %v1699
  %v1725 = vmax.f32 %v1675, %v1700
  %v1726 = vmax.f32 %v1676, %v1701
  %v1727 = vmax.f32 %v1677, %v1702
  %v1728 = vmax.f32 %v1678, %v1703
  %v1729 = vmax.f32 %v1679, %v1704
  %v1730 = vmax.f32 %v1680, %v1705
  %v1731 = vmax.f32 %v1681, %v1706
  %v1732 = vmax.f32 %v1682, %v1707
  %v1733 = vmax.f32 %v1683, %v1708
  %v1734 = vmax.f32 %v1684, %v1709
  %v1735 = vmax.f32 %v1685, %v1710
  %v1736 = vmax.f32 %v1686, %v1711
  %v1737 = vmax.f32 %v1687, %v1712
  %v1738 = vmax.f32 %v1688, %v1713
  %v1739 = vmax.f32 %v1689, %v1714
  %v1740 = vmax.f32 %v1690, %v1715
  %v1741 = vmax.f32 %v1691, %v1716
  %v1742 = vmax.f32 %v1692, %v1717
  %v1743 = vmax.f32 %v1693, %v1718
  %v1744 = vld [vmem:[#allocation2 + $0x24c] sm:$0xff]
  %v1745 = vld [vmem:[#allocation2 + $0x254] sm:$0xff]
  %v1746 = vld [vmem:[#allocation2 + $0x25c] sm:$0xff]
  %v1747 = vld [vmem:[#allocation2 + $0x264] sm:$0xff]
  %v1748 = vld [vmem:[#allocation2 + $0x26c] sm:$0xff]
  %v1749 = vld [vmem:[#allocation2 + $0x274] sm:$0xff]
  %v1750 = vld [vmem:[#allocation2 + $0x27c] sm:$0xff]
  %v1751 = vld [vmem:[#allocation2 + $0x284] sm:$0xff]
  %v1752 = vld [vmem:[#allocation2 + $0x28c] sm:$0xff]
  %v1753 = vld [vmem:[#allocation2 + $0x294] sm:$0xff]
  %v1754 = vld [vmem:[#allocation2 + $0x29c] sm:$0xff]
  %v1755 = vld [vmem:[#allocation2 + $0x2a4] sm:$0xff]
  %v1756 = vld [vmem:[#allocation2 + $0x2ac] sm:$0xff]
  %v1757 = vld [vmem:[#allocation2 + $0x2b4] sm:$0xff]
  %v1758 = vld [vmem:[#allocation2 + $0x2bc] sm:$0xff]
  %v1759 = vld [vmem:[#allocation2 + $0x2c4] sm:$0xff]
  %v1760 = vld [vmem:[#allocation2 + $0x2cc] sm:$0xff]
  %v1761 = vld [vmem:[#allocation2 + $0x2d4] sm:$0xff]
  %v1762 = vld [vmem:[#allocation2 + $0x2dc] sm:$0xff]
  %v1763 = vld [vmem:[#allocation2 + $0x2e4] sm:$0xff]
  %v1764 = vld [vmem:[#allocation2 + $0x2ec] sm:$0xff]
  %v1765 = vld [vmem:[#allocation2 + $0x2f4] sm:$0xff]
  %v1766 = vld [vmem:[#allocation2 + $0x2fc] sm:$0xff]
  %v1767 = vld [vmem:[#allocation2 + $0x304] sm:$0xff]
  %v1768 = vld [vmem:[#allocation2 + $0x30c] sm:$0xf]
  %v1769 = vmax.f32 %v1719, %v1744
  %v1770 = vmax.f32 %v1720, %v1745
  %v1771 = vmax.f32 %v1721, %v1746
  %v1772 = vmax.f32 %v1722, %v1747
  %v1773 = vmax.f32 %v1723, %v1748
  %v1774 = vmax.f32 %v1724, %v1749
  %v1775 = vmax.f32 %v1725, %v1750
  %v1776 = vmax.f32 %v1726, %v1751
  %v1777 = vmax.f32 %v1727, %v1752
  %v1778 = vmax.f32 %v1728, %v1753
  %v1779 = vmax.f32 %v1729, %v1754
  %v1780 = vmax.f32 %v1730, %v1755
  %v1781 = vmax.f32 %v1731, %v1756
  %v1782 = vmax.f32 %v1732, %v1757
  %v1783 = vmax.f32 %v1733, %v1758
  %v1784 = vmax.f32 %v1734, %v1759
  %v1785 = vmax.f32 %v1735, %v1760
  %v1786 = vmax.f32 %v1736, %v1761
  %v1787 = vmax.f32 %v1737, %v1762
  %v1788 = vmax.f32 %v1738, %v1763
  %v1789 = vmax.f32 %v1739, %v1764
  %v1790 = vmax.f32 %v1740, %v1765
  %v1791 = vmax.f32 %v1741, %v1766
  %v1792 = vmax.f32 %v1742, %v1767
  %v1793 = vmax.f32 %v1743, %v1768
  %v1794 = vmax.f32 %v1769, 0.0
  %v1795 = vmax.f32 %v1770, 0.0
  %v1796 = vmax.f32 %v1771, 0.0
  %v1797 = vmax.f32 %v1772, 0.0
  %v1798 = vmax.f32 %v1773, 0.0
  %v1799 = vmax.f32 %v1774, 0.0
  %v1800 = vmax.f32 %v1775, 0.0
  %v1801 = vmax.f32 %v1776, 0.0
  %v1802 = vmax.f32 %v1777, 0.0
  %v1803 = vmax.f32 %v1778, 0.0
  %v1804 = vmax.f32 %v1779, 0.0
  %v1805 = vmax.f32 %v1780, 0.0
  %v1806 = vmax.f32 %v1781, 0.0
  %v1807 = vmax.f32 %v1782, 0.0
  %v1808 = vmax.f32 %v1783, 0.0
  %v1809 = vmax.f32 %v1784, 0.0
  %v1810 = vmax.f32 %v1785, 0.0
  %v1811 = vmax.f32 %v1786, 0.0
  %v1812 = vmax.f32 %v1787, 0.0
  %v1813 = vmax.f32 %v1788, 0.0
  %v1814 = vmax.f32 %v1789, 0.0
  %v1815 = vmax.f32 %v1790, 0.0
  %v1816 = vmax.f32 %v1791, 0.0
  %v1817 = vmax.f32 %v1792, 0.0
  %v1818 = vmax.f32 %v1793, 0.0
  %1819 = vst.msk [vmem:[%s3] sm:$0xff] %vm1422, %v1794
  %1820 = vst.msk [vmem:[%s3 + $0x8] sm:$0xff] %vm1422, %v1795
  %1821 = vst.msk [vmem:[%s3 + $0x10] sm:$0xff] %vm1422, %v1796
  %1822 = vst.msk [vmem:[%s3 + $0x18] sm:$0xff] %vm1422, %v1797
  %1823 = vst.msk [vmem:[%s3 + $0x20] sm:$0xff] %vm1422, %v1798
  %1824 = vst.msk [vmem:[%s3 + $0x28] sm:$0xff] %vm1422, %v1799
  %1825 = vst.msk [vmem:[%s3 + $0x30] sm:$0xff] %vm1422, %v1800
  %1826 = vst.msk [vmem:[%s3 + $0x38] sm:$0xff] %vm1422, %v1801
  %1827 = vst.msk [vmem:[%s3 + $0x40] sm:$0xff] %vm1422, %v1802
  %1828 = vst.msk [vmem:[%s3 + $0x48] sm:$0xff] %vm1422, %v1803
  %1829 = vst.msk [vmem:[%s3 + $0x50] sm:$0xff] %vm1422, %v1804
  %1830 = vst.msk [vmem:[%s3 + $0x58] sm:$0xff] %vm1422, %v1805
  %1831 = vst.msk [vmem:[%s3 + $0x60] sm:$0xff] %vm1422, %v1806
  %1832 = vst.msk [vmem:[%s3 + $0x68] sm:$0xff] %vm1422, %v1807
  %1833 = vst.msk [vmem:[%s3 + $0x70] sm:$0xff] %vm1422, %v1808
  %1834 = vst.msk [vmem:[%s3 + $0x78] sm:$0xff] %vm1422, %v1809
  %1835 = vst.msk [vmem:[%s3 + $0x80] sm:$0xff] %vm1422, %v1810
  %1836 = vst.msk [vmem:[%s3 + $0x88] sm:$0xff] %vm1422, %v1811
  %1837 = vst.msk [vmem:[%s3 + $0x90] sm:$0xff] %vm1422, %v1812
  %1838 = vst.msk [vmem:[%s3 + $0x98] sm:$0xff] %vm1422, %v1813
  %1839 = vst.msk [vmem:[%s3 + $0xa0] sm:$0xff] %vm1422, %v1814
  %1840 = vst.msk [vmem:[%s3 + $0xa8] sm:$0xff] %vm1422, %v1815
  %1841 = vst.msk [vmem:[%s3 + $0xb0] sm:$0xff] %vm1422, %v1816
  %1842 = vst.msk [vmem:[%s3 + $0xb8] sm:$0xff] %vm1422, %v1817
  %vm1843 = vcmask 519168
  %1844 = vst.msk [vmem:[%s3 + $0xc0] sm:$0xf] %vm1843, %v1818
  %v1845 = vld [vmem:[#allocation2 + $0x310] sm:$0xff]
  %v1846 = vld [vmem:[#allocation2 + $0x318] sm:$0xff]
  %v1847 = vld [vmem:[#allocation2 + $0x320] sm:$0xff]
  %v1848 = vld [vmem:[#allocation2 + $0x328] sm:$0xff]
  %v1849 = vld [vmem:[#allocation2 + $0x330] sm:$0xff]
  %v1850 = vld [vmem:[#allocation2 + $0x338] sm:$0xff]
  %v1851 = vld [vmem:[#allocation2 + $0x340] sm:$0xff]
  %v1852 = vld [vmem:[#allocation2 + $0x348] sm:$0xff]
  %v1853 = vld [vmem:[#allocation2 + $0x350] sm:$0xff]
  %v1854 = vld [vmem:[#allocation2 + $0x358] sm:$0xff]
  %v1855 = vld [vmem:[#allocation2 + $0x360] sm:$0xff]
  %v1856 = vld [vmem:[#allocation2 + $0x368] sm:$0xff]
  %v1857 = vld [vmem:[#allocation2 + $0x370] sm:$0xff]
  %v1858 = vld [vmem:[#allocation2 + $0x378] sm:$0xff]
  %v1859 = vld [vmem:[#allocation2 + $0x380] sm:$0xff]
  %v1860 = vld [vmem:[#allocation2 + $0x388] sm:$0xff]
  %v1861 = vld [vmem:[#allocation2 + $0x390] sm:$0xff]
  %v1862 = vld [vmem:[#allocation2 + $0x398] sm:$0xff]
  %v1863 = vld [vmem:[#allocation2 + $0x3a0] sm:$0xff]
  %v1864 = vld [vmem:[#allocation2 + $0x3a8] sm:$0xff]
  %v1865 = vld [vmem:[#allocation2 + $0x3b0] sm:$0xff]
  %v1866 = vld [vmem:[#allocation2 + $0x3b8] sm:$0xff]
  %v1867 = vld [vmem:[#allocation2 + $0x3c0] sm:$0xff]
  %v1868 = vld [vmem:[#allocation2 + $0x3c8] sm:$0xff]
  %v1869 = vld [vmem:[#allocation2 + $0x3d0] sm:$0xf]
  %v1870 = vld [vmem:[#allocation2 + $0x3d4] sm:$0xff]
  %v1871 = vld [vmem:[#allocation2 + $0x3dc] sm:$0xff]
  %v1872 = vld [vmem:[#allocation2 + $0x3e4] sm:$0xff]
  %v1873 = vld [vmem:[#allocation2 + $0x3ec] sm:$0xff]
  %v1874 = vld [vmem:[#allocation2 + $0x3f4] sm:$0xff]
  %v1875 = vld [vmem:[#allocation2 + $0x3fc] sm:$0xff]
  %v1876 = vld [vmem:[#allocation2 + $0x404] sm:$0xff]
  %v1877 = vld [vmem:[#allocation2 + $0x40c] sm:$0xff]
  %v1878 = vld [vmem:[#allocation2 + $0x414] sm:$0xff]
  %v1879 = vld [vmem:[#allocation2 + $0x41c] sm:$0xff]
  %v1880 = vld [vmem:[#allocation2 + $0x424] sm:$0xff]
  %v1881 = vld [vmem:[#allocation2 + $0x42c] sm:$0xff]
  %v1882 = vld [vmem:[#allocation2 + $0x434] sm:$0xff]
  %v1883 = vld [vmem:[#allocation2 + $0x43c] sm:$0xff]
  %v1884 = vld [vmem:[#allocation2 + $0x444] sm:$0xff]
  %v1885 = vld [vmem:[#allocation2 + $0x44c] sm:$0xff]
  %v1886 = vld [vmem:[#allocation2 + $0x454] sm:$0xff]
  %v1887 = vld [vmem:[#allocation2 + $0x45c] sm:$0xff]
  %v1888 = vld [vmem:[#allocation2 + $0x464] sm:$0xff]
  %v1889 = vld [vmem:[#allocation2 + $0x46c] sm:$0xff]
  %v1890 = vld [vmem:[#allocation2 + $0x474] sm:$0xff]
  %v1891 = vld [vmem:[#allocation2 + $0x47c] sm:$0xff]
  %v1892 = vld [vmem:[#allocation2 + $0x484] sm:$0xff]
  %v1893 = vld [vmem:[#allocation2 + $0x48c] sm:$0xff]
  %v1894 = vld [vmem:[#allocation2 + $0x494] sm:$0xf]
  %v1895 = vmax.f32 %v1845, %v1870
  %v1896 = vmax.f32 %v1846, %v1871
  %v1897 = vmax.f32 %v1847, %v1872
  %v1898 = vmax.f32 %v1848, %v1873
  %v1899 = vmax.f32 %v1849, %v1874
  %v1900 = vmax.f32 %v1850, %v1875
  %v1901 = vmax.f32 %v1851, %v1876
  %v1902 = vmax.f32 %v1852, %v1877
  %v1903 = vmax.f32 %v1853, %v1878
  %v1904 = vmax.f32 %v1854, %v1879
  %v1905 = vmax.f32 %v1855, %v1880
  %v1906 = vmax.f32 %v1856, %v1881
  %v1907 = vmax.f32 %v1857, %v1882
  %v1908 = vmax.f32 %v1858, %v1883
  %v1909 = vmax.f32 %v1859, %v1884
  %v1910 = vmax.f32 %v1860, %v1885
  %v1911 = vmax.f32 %v1861, %v1886
  %v1912 = vmax.f32 %v1862, %v1887
  %v1913 = vmax.f32 %v1863, %v1888
  %v1914 = vmax.f32 %v1864, %v1889
  %v1915 = vmax.f32 %v1865, %v1890
  %v1916 = vmax.f32 %v1866, %v1891
  %v1917 = vmax.f32 %v1867, %v1892
  %v1918 = vmax.f32 %v1868, %v1893
  %v1919 = vmax.f32 %v1869, %v1894
  %v1920 = vld [vmem:[#allocation2 + $0x498] sm:$0xff]
  %v1921 = vld [vmem:[#allocation2 + $0x4a0] sm:$0xff]
  %v1922 = vld [vmem:[#allocation2 + $0x4a8] sm:$0xff]
  %v1923 = vld [vmem:[#allocation2 + $0x4b0] sm:$0xff]
  %v1924 = vld [vmem:[#allocation2 + $0x4b8] sm:$0xff]
  %v1925 = vld [vmem:[#allocation2 + $0x4c0] sm:$0xff]
  %v1926 = vld [vmem:[#allocation2 + $0x4c8] sm:$0xff]
  %v1927 = vld [vmem:[#allocation2 + $0x4d0] sm:$0xff]
  %v1928 = vld [vmem:[#allocation2 + $0x4d8] sm:$0xff]
  %v1929 = vld [vmem:[#allocation2 + $0x4e0] sm:$0xff]
  %v1930 = vld [vmem:[#allocation2 + $0x4e8] sm:$0xff]
  %v1931 = vld [vmem:[#allocation2 + $0x4f0] sm:$0xff]
  %v1932 = vld [vmem:[#allocation2 + $0x4f8] sm:$0xff]
  %v1933 = vld [vmem:[#allocation2 + $0x500] sm:$0xff]
  %v1934 = vld [vmem:[#allocation2 + $0x508] sm:$0xff]
  %v1935 = vld [vmem:[#allocation2 + $0x510] sm:$0xff]
  %v1936 = vld [vmem:[#allocation2 + $0x518] sm:$0xff]
  %v1937 = vld [vmem:[#allocation2 + $0x520] sm:$0xff]
  %v1938 = vld [vmem:[#allocation2 + $0x528] sm:$0xff]
  %v1939 = vld [vmem:[#allocation2 + $0x530] sm:$0xff]
  %v1940 = vld [vmem:[#allocation2 + $0x538] sm:$0xff]
  %v1941 = vld [vmem:[#allocation2 + $0x540] sm:$0xff]
  %v1942 = vld [vmem:[#allocation2 + $0x548] sm:$0xff]
  %v1943 = vld [vmem:[#allocation2 + $0x550] sm:$0xff]
  %v1944 = vld [vmem:[#allocation2 + $0x558] sm:$0xf]
  %v1945 = vmax.f32 %v1895, %v1920
  %v1946 = vmax.f32 %v1896, %v1921
  %v1947 = vmax.f32 %v1897, %v1922
  %v1948 = vmax.f32 %v1898, %v1923
  %v1949 = vmax.f32 %v1899, %v1924
  %v1950 = vmax.f32 %v1900, %v1925
  %v1951 = vmax.f32 %v1901, %v1926
  %v1952 = vmax.f32 %v1902, %v1927
  %v1953 = vmax.f32 %v1903, %v1928
  %v1954 = vmax.f32 %v1904, %v1929
  %v1955 = vmax.f32 %v1905, %v1930
  %v1956 = vmax.f32 %v1906, %v1931
  %v1957 = vmax.f32 %v1907, %v1932
  %v1958 = vmax.f32 %v1908, %v1933
  %v1959 = vmax.f32 %v1909, %v1934
  %v1960 = vmax.f32 %v1910, %v1935
  %v1961 = vmax.f32 %v1911, %v1936
  %v1962 = vmax.f32 %v1912, %v1937
  %v1963 = vmax.f32 %v1913, %v1938
  %v1964 = vmax.f32 %v1914, %v1939
  %v1965 = vmax.f32 %v1915, %v1940
  %v1966 = vmax.f32 %v1916, %v1941
  %v1967 = vmax.f32 %v1917, %v1942
  %v1968 = vmax.f32 %v1918, %v1943
  %v1969 = vmax.f32 %v1919, %v1944
  %v1970 = vld [vmem:[#allocation2 + $0x55c] sm:$0xff]
  %v1971 = vld [vmem:[#allocation2 + $0x564] sm:$0xff]
  %v1972 = vld [vmem:[#allocation2 + $0x56c] sm:$0xff]
  %v1973 = vld [vmem:[#allocation2 + $0x574] sm:$0xff]
  %v1974 = vld [vmem:[#allocation2 + $0x57c] sm:$0xff]
  %v1975 = vld [vmem:[#allocation2 + $0x584] sm:$0xff]
  %v1976 = vld [vmem:[#allocation2 + $0x58c] sm:$0xff]
  %v1977 = vld [vmem:[#allocation2 + $0x594] sm:$0xff]
  %v1978 = vld [vmem:[#allocation2 + $0x59c] sm:$0xff]
  %v1979 = vld [vmem:[#allocation2 + $0x5a4] sm:$0xff]
  %v1980 = vld [vmem:[#allocation2 + $0x5ac] sm:$0xff]
  %v1981 = vld [vmem:[#allocation2 + $0x5b4] sm:$0xff]
  %v1982 = vld [vmem:[#allocation2 + $0x5bc] sm:$0xff]
  %v1983 = vld [vmem:[#allocation2 + $0x5c4] sm:$0xff]
  %v1984 = vld [vmem:[#allocation2 + $0x5cc] sm:$0xff]
  %v1985 = vld [vmem:[#allocation2 + $0x5d4] sm:$0xff]
  %v1986 = vld [vmem:[#allocation2 + $0x5dc] sm:$0xff]
  %v1987 = vld [vmem:[#allocation2 + $0x5e4] sm:$0xff]
  %v1988 = vld [vmem:[#allocation2 + $0x5ec] sm:$0xff]
  %v1989 = vld [vmem:[#allocation2 + $0x5f4] sm:$0xff]
  %v1990 = vld [vmem:[#allocation2 + $0x5fc] sm:$0xff]
  %v1991 = vld [vmem:[#allocation2 + $0x604] sm:$0xff]
  %v1992 = vld [vmem:[#allocation2 + $0x60c] sm:$0xff]
  %v1993 = vld [vmem:[#allocation2 + $0x614] sm:$0xff]
  %v1994 = vld [vmem:[#allocation2 + $0x61c] sm:$0xf]
  %v1995 = vmax.f32 %v1945, %v1970
  %v1996 = vmax.f32 %v1946, %v1971
  %v1997 = vmax.f32 %v1947, %v1972
  %v1998 = vmax.f32 %v1948, %v1973
  %v1999 = vmax.f32 %v1949, %v1974
  %v2000 = vmax.f32 %v1950, %v1975
  %v2001 = vmax.f32 %v1951, %v1976
  %v2002 = vmax.f32 %v1952, %v1977
  %v2003 = vmax.f32 %v1953, %v1978
  %v2004 = vmax.f32 %v1954, %v1979
  %v2005 = vmax.f32 %v1955, %v1980
  %v2006 = vmax.f32 %v1956, %v1981
  %v2007 = vmax.f32 %v1957, %v1982
  %v2008 = vmax.f32 %v1958, %v1983
  %v2009 = vmax.f32 %v1959, %v1984
  %v2010 = vmax.f32 %v1960, %v1985
  %v2011 = vmax.f32 %v1961, %v1986
  %v2012 = vmax.f32 %v1962, %v1987
  %v2013 = vmax.f32 %v1963, %v1988
  %v2014 = vmax.f32 %v1964, %v1989
  %v2015 = vmax.f32 %v1965, %v1990
  %v2016 = vmax.f32 %v1966, %v1991
  %v2017 = vmax.f32 %v1967, %v1992
  %v2018 = vmax.f32 %v1968, %v1993
  %v2019 = vmax.f32 %v1969, %v1994
  %v2020 = vmax.f32 %v1995, 0.0
  %v2021 = vmax.f32 %v1996, 0.0
  %v2022 = vmax.f32 %v1997, 0.0
  %v2023 = vmax.f32 %v1998, 0.0
  %v2024 = vmax.f32 %v1999, 0.0
  %v2025 = vmax.f32 %v2000, 0.0
  %v2026 = vmax.f32 %v2001, 0.0
  %v2027 = vmax.f32 %v2002, 0.0
  %v2028 = vmax.f32 %v2003, 0.0
  %v2029 = vmax.f32 %v2004, 0.0
  %v2030 = vmax.f32 %v2005, 0.0
  %v2031 = vmax.f32 %v2006, 0.0
  %v2032 = vmax.f32 %v2007, 0.0
  %v2033 = vmax.f32 %v2008, 0.0
  %v2034 = vmax.f32 %v2009, 0.0
  %v2035 = vmax.f32 %v2010, 0.0
  %v2036 = vmax.f32 %v2011, 0.0
  %v2037 = vmax.f32 %v2012, 0.0
  %v2038 = vmax.f32 %v2013, 0.0
  %v2039 = vmax.f32 %v2014, 0.0
  %v2040 = vmax.f32 %v2015, 0.0
  %v2041 = vmax.f32 %v2016, 0.0
  %v2042 = vmax.f32 %v2017, 0.0
  %v2043 = vmax.f32 %v2018, 0.0
  %v2044 = vmax.f32 %v2019, 0.0
  %2045 = vst.msk [vmem:[%s3 + $0xc4] sm:$0xff] %vm1422, %v2020
  %2046 = vst.msk [vmem:[%s3 + $0xcc] sm:$0xff] %vm1422, %v2021
  %2047 = vst.msk [vmem:[%s3 + $0xd4] sm:$0xff] %vm1422, %v2022
  %2048 = vst.msk [vmem:[%s3 + $0xdc] sm:$0xff] %vm1422, %v2023
  %2049 = vst.msk [vmem:[%s3 + $0xe4] sm:$0xff] %vm1422, %v2024
  %2050 = vst.msk [vmem:[%s3 + $0xec] sm:$0xff] %vm1422, %v2025
  %2051 = vst.msk [vmem:[%s3 + $0xf4] sm:$0xff] %vm1422, %v2026
  %2052 = vst.msk [vmem:[%s3 + $0xfc] sm:$0xff] %vm1422, %v2027
  %2053 = vst.msk [vmem:[%s3 + $0x104] sm:$0xff] %vm1422, %v2028
  %2054 = vst.msk [vmem:[%s3 + $0x10c] sm:$0xff] %vm1422, %v2029
  %2055 = vst.msk [vmem:[%s3 + $0x114] sm:$0xff] %vm1422, %v2030
  %2056 = vst.msk [vmem:[%s3 + $0x11c] sm:$0xff] %vm1422, %v2031
  %2057 = vst.msk [vmem:[%s3 + $0x124] sm:$0xff] %vm1422, %v2032
  %2058 = vst.msk [vmem:[%s3 + $0x12c] sm:$0xff] %vm1422, %v2033
  %2059 = vst.msk [vmem:[%s3 + $0x134] sm:$0xff] %vm1422, %v2034
  %2060 = vst.msk [vmem:[%s3 + $0x13c] sm:$0xff] %vm1422, %v2035
  %2061 = vst.msk [vmem:[%s3 + $0x144] sm:$0xff] %vm1422, %v2036
  %2062 = vst.msk [vmem:[%s3 + $0x14c] sm:$0xff] %vm1422, %v2037
  %2063 = vst.msk [vmem:[%s3 + $0x154] sm:$0xff] %vm1422, %v2038
  %2064 = vst.msk [vmem:[%s3 + $0x15c] sm:$0xff] %vm1422, %v2039
  %2065 = vst.msk [vmem:[%s3 + $0x164] sm:$0xff] %vm1422, %v2040
  %2066 = vst.msk [vmem:[%s3 + $0x16c] sm:$0xff] %vm1422, %v2041
  %2067 = vst.msk [vmem:[%s3 + $0x174] sm:$0xff] %vm1422, %v2042
  %2068 = vst.msk [vmem:[%s3 + $0x17c] sm:$0xff] %vm1422, %v2043
  %2069 = vst.msk [vmem:[%s3 + $0x184] sm:$0xf] %vm1843, %v2044
  // Predicated region
  $region14: #{cnn_cifar10_forward.3} parent=0 // pred_check
    _
  $region15: #{cnn_cifar10_forward.3} parent=0 // pred_check_branch
    %2071 = sbr.rel (0) target = $region17
  $region16: #{cnn_cifar10_forward.3} parent=0 // pred_region
    _
  $region17: #{cnn_cifar10_forward.3} parent=0 // pred_fallthru
    _
  // Predicated region
  $region18: #{cnn_cifar10_forward.3} parent=0 // pred_check
    _
  $region19: #{cnn_cifar10_forward.3} parent=0 // pred_check_branch
    %2073 = sbr.rel (0) target = $region21
  $region20: #{cnn_cifar10_forward.3} parent=0 // pred_region
    _
  $region21: #{cnn_cifar10_forward.3} parent=0 // pred_fallthru
    _

// kernel: cnn_cifar10_forward.4
$region0: #{cnn_cifar10_forward.4}
  #allocation0 [shape = 'u32[]', space=smem, size = 0x4, offset = 0x4, fixed_abs, tag = 'smem constant byte address 0x4 - core index']
  #allocation1 [shape = 'u32[72,128]{1,0:T(1,128)}', space=vmem, size = 0x9000, scoped, tag = 'internal scratch']
  #allocation2 [shape = 'f32[200,64]{1,0:T(8,128)}', space=vmem, size = 0x19000, scoped, tag = 'scratch operand']
  %s0 = inlined_call_operand.vmem [shape: f32[200,1600], index: 0, kind: input, shape index: {}]
  %s1 = inlined_call_operand.vmem [shape: f32[1600,64], index: 1, kind: input, shape index: {}]
  %s2 = inlined_call_operand.vmem [shape: f32[1,64], index: 2, kind: input, shape index: {}]
  %s3 = inlined_call_operand.vmem [shape: f32[50,64], index: 3, kind: output, shape index: {}]
  %s4 = sld [smem:[#allocation0]]
  $region22: #{cnn_cifar10_forward.4} parent=0
    _
  %s6 = ssub.s32 1, %s4
  %s7 = scalar_select 0, %s6, %s4
  // Predicated region
  $region2: #{cnn_cifar10_forward.4} parent=0 // pred_check
    _
  $region3: #{cnn_cifar10_forward.4} parent=0 // pred_check_branch
    %9 = sbr.rel (0) target = $region5
  $region4: #{cnn_cifar10_forward.4} parent=0 // pred_region
    _
  $region5: #{cnn_cifar10_forward.4} parent=0 // pred_fallthru
    _
  // Predicated region
  $region6: #{cnn_cifar10_forward.4} parent=0 // pred_check
    _
  $region7: #{cnn_cifar10_forward.4} parent=0 // pred_check_branch
    %11 = sbr.rel (0) target = $region9
  $region8: #{cnn_cifar10_forward.4} parent=0 // pred_region
    _
  $region9: #{cnn_cifar10_forward.4} parent=0 // pred_fallthru
    _
  // Predicated region
  $region10: #{cnn_cifar10_forward.4} parent=0 // pred_check
    _
  $region11: #{cnn_cifar10_forward.4} parent=0 // pred_check_branch
    %13 = sbr.rel (0) target = $region13
  $region12: #{cnn_cifar10_forward.4} parent=0 // pred_region
    _
  $region13: #{cnn_cifar10_forward.4} parent=0 // pred_fallthru
    _
  %v14 = vld [vmem:[%s0] sm:$0xff]
  %v15 = vld [vmem:[%s0 + $0x8] sm:$0xff]
  %v16 = vld [vmem:[%s0 + $0x10] sm:$0xff]
  %v17 = vld [vmem:[%s0 + $0x18] sm:$0xff]
  %v18 = vld [vmem:[%s0 + $0x20] sm:$0xff]
  %v19 = vld [vmem:[%s0 + $0x28] sm:$0xff]
  %v20 = vld [vmem:[%s0 + $0x30] sm:$0xff]
  %v21 = vld [vmem:[%s0 + $0x38] sm:$0xff]
  %v22 = vld [vmem:[%s0 + $0x40] sm:$0xff]
  %v23 = vld [vmem:[%s0 + $0x48] sm:$0xff]
  %v24 = vld [vmem:[%s0 + $0x50] sm:$0xff]
  %v25 = vld [vmem:[%s0 + $0x58] sm:$0xff]
  %v26 = vld [vmem:[%s0 + $0x60] sm:$0xff]
  %v27 = vld [vmem:[%s0 + $0x68] sm:$0xff]
  %v28 = vld [vmem:[%s0 + $0x70] sm:$0xff]
  %v29 = vld [vmem:[%s0 + $0x78] sm:$0xff]
  %v30 = vld [vmem:[%s0 + $0x80] sm:$0xff]
  %v31 = vld [vmem:[%s0 + $0x88] sm:$0xff]
  %v32 = vld [vmem:[%s0 + $0x90] sm:$0xff]
  %v33 = vld [vmem:[%s0 + $0x98] sm:$0xff]
  %v34 = vld [vmem:[%s0 + $0xa0] sm:$0xff]
  %v35 = vld [vmem:[%s0 + $0xa8] sm:$0xff]
  %v36 = vld [vmem:[%s0 + $0xb0] sm:$0xff]
  %v37 = vld [vmem:[%s0 + $0xb8] sm:$0xff]
  %v38 = vld [vmem:[%s0 + $0xc0] sm:$0xff]
  %v39 = vld [vmem:[%s0 + $0xc8] sm:$0xff]
  %v40 = vld [vmem:[%s0 + $0xd0] sm:$0xff]
  %v41 = vld [vmem:[%s0 + $0xd8] sm:$0xff]
  %v42 = vld [vmem:[%s0 + $0xe0] sm:$0xff]
  %v43 = vld [vmem:[%s0 + $0xe8] sm:$0xff]
  %v44 = vld [vmem:[%s0 + $0xf0] sm:$0xff]
  %v45 = vld [vmem:[%s0 + $0xf8] sm:$0xff]
  %v46 = vld [vmem:[%s0 + $0x100] sm:$0xff]
  %v47 = vld [vmem:[%s0 + $0x108] sm:$0xff]
  %v48 = vld [vmem:[%s0 + $0x110] sm:$0xff]
  %v49 = vld [vmem:[%s0 + $0x118] sm:$0xff]
  %v50 = vld [vmem:[%s0 + $0x120] sm:$0xff]
  %v51 = vld [vmem:[%s0 + $0x128] sm:$0xff]
  %v52 = vld [vmem:[%s0 + $0x130] sm:$0xff]
  %v53 = vld [vmem:[%s0 + $0x138] sm:$0xff]
  %v54 = vld [vmem:[%s0 + $0x140] sm:$0xff]
  %v55 = vld [vmem:[%s0 + $0x148] sm:$0xff]
  %v56 = vld [vmem:[%s0 + $0x150] sm:$0xff]
  %v57 = vld [vmem:[%s0 + $0x158] sm:$0xff]
  %v58 = vld [vmem:[%s0 + $0x160] sm:$0xff]
  %v59 = vld [vmem:[%s0 + $0x168] sm:$0xff]
  %v60 = vld [vmem:[%s0 + $0x170] sm:$0xff]
  %v61 = vld [vmem:[%s0 + $0x178] sm:$0xff]
  %v62 = vld [vmem:[%s0 + $0x180] sm:$0xff]
  %v63 = vld [vmem:[%s0 + $0x188] sm:$0xff]
  %v64 = vld [vmem:[%s0 + $0x190] sm:$0xff]
  %v65 = vld [vmem:[%s0 + $0x198] sm:$0xff]
  %v66 = vld [vmem:[%s0 + $0x1a0] sm:$0xff]
  %v67 = vld [vmem:[%s0 + $0x1a8] sm:$0xff]
  %v68 = vld [vmem:[%s0 + $0x1b0] sm:$0xff]
  %v69 = vld [vmem:[%s0 + $0x1b8] sm:$0xff]
  %v70 = vld [vmem:[%s0 + $0x1c0] sm:$0xff]
  %v71 = vld [vmem:[%s0 + $0x1c8] sm:$0xff]
  %v72 = vld [vmem:[%s0 + $0x1d0] sm:$0xff]
  %v73 = vld [vmem:[%s0 + $0x1d8] sm:$0xff]
  %v74 = vld [vmem:[%s0 + $0x1e0] sm:$0xff]
  %v75 = vld [vmem:[%s0 + $0x1e8] sm:$0xff]
  %v76 = vld [vmem:[%s0 + $0x1f0] sm:$0xff]
  %v77 = vld [vmem:[%s0 + $0x1f8] sm:$0xff]
  %v78 = vld [vmem:[%s0 + $0x200] sm:$0xff]
  %v79 = vld [vmem:[%s0 + $0x208] sm:$0xff]
  %v80 = vld [vmem:[%s0 + $0x210] sm:$0xff]
  %v81 = vld [vmem:[%s0 + $0x218] sm:$0xff]
  %v82 = vld [vmem:[%s0 + $0x220] sm:$0xff]
  %v83 = vld [vmem:[%s0 + $0x228] sm:$0xff]
  %v84 = vld [vmem:[%s0 + $0x230] sm:$0xff]
  %v85 = vld [vmem:[%s0 + $0x238] sm:$0xff]
  %v86 = vld [vmem:[%s0 + $0x240] sm:$0xff]
  %v87 = vld [vmem:[%s0 + $0x248] sm:$0xff]
  %v88 = vld [vmem:[%s0 + $0x250] sm:$0xff]
  %v89 = vld [vmem:[%s0 + $0x258] sm:$0xff]
  %v90 = vld [vmem:[%s0 + $0x260] sm:$0xff]
  %v91 = vld [vmem:[%s0 + $0x268] sm:$0xff]
  %v92 = vld [vmem:[%s0 + $0x270] sm:$0xff]
  %v93 = vld [vmem:[%s0 + $0x278] sm:$0xff]
  %v94 = vld [vmem:[%s0 + $0x280] sm:$0xff]
  %v95 = vld [vmem:[%s0 + $0x288] sm:$0xff]
  %v96 = vld [vmem:[%s0 + $0x290] sm:$0xff]
  %v97 = vld [vmem:[%s0 + $0x298] sm:$0xff]
  %v98 = vld [vmem:[%s0 + $0x2a0] sm:$0xff]
  %v99 = vld [vmem:[%s0 + $0x2a8] sm:$0xff]
  %v100 = vld [vmem:[%s0 + $0x2b0] sm:$0xff]
  %v101 = vld [vmem:[%s0 + $0x2b8] sm:$0xff]
  %v102 = vld [vmem:[%s0 + $0x2c0] sm:$0xff]
  %v103 = vld [vmem:[%s0 + $0x2c8] sm:$0xff]
  %v104 = vld [vmem:[%s0 + $0x2d0] sm:$0xff]
  %v105 = vld [vmem:[%s0 + $0x2d8] sm:$0xff]
  %v106 = vld [vmem:[%s0 + $0x2e0] sm:$0xff]
  %v107 = vld [vmem:[%s0 + $0x2e8] sm:$0xff]
  %v108 = vld [vmem:[%s0 + $0x2f0] sm:$0xff]
  %v109 = vld [vmem:[%s0 + $0x2f8] sm:$0xff]
  %v110 = vld [vmem:[%s0 + $0x300] sm:$0xff]
  %v111 = vld [vmem:[%s0 + $0x308] sm:$0xff]
  %v112 = vld [vmem:[%s0 + $0x310] sm:$0xff]
  %v113 = vld [vmem:[%s0 + $0x318] sm:$0xff]
  %v114 = vld [vmem:[%s0 + $0x320] sm:$0xff]
  %v115 = vld [vmem:[%s0 + $0x328] sm:$0xff]
  %v116 = vld [vmem:[%s0 + $0x330] sm:$0xff]
  %v117 = vld [vmem:[%s0 + $0x338] sm:$0xff]
  %v118 = vld [vmem:[%s0 + $0x340] sm:$0xff]
  %v119 = vld [vmem:[%s0 + $0x348] sm:$0xff]
  %v120 = vld [vmem:[%s0 + $0x350] sm:$0xff]
  %v121 = vld [vmem:[%s0 + $0x358] sm:$0xff]
  %v122 = vld [vmem:[%s0 + $0x360] sm:$0xff]
  %v123 = vld [vmem:[%s0 + $0x368] sm:$0xff]
  %v124 = vld [vmem:[%s0 + $0x370] sm:$0xff]
  %v125 = vld [vmem:[%s0 + $0x378] sm:$0xff]
  %v126 = vld [vmem:[%s0 + $0x380] sm:$0xff]
  %v127 = vld [vmem:[%s0 + $0x388] sm:$0xff]
  %v128 = vld [vmem:[%s0 + $0x390] sm:$0xff]
  %v129 = vld [vmem:[%s0 + $0x398] sm:$0xff]
  %v130 = vld [vmem:[%s0 + $0x3a0] sm:$0xff]
  %v131 = vld [vmem:[%s0 + $0x3a8] sm:$0xff]
  %v132 = vld [vmem:[%s0 + $0x3b0] sm:$0xff]
  %v133 = vld [vmem:[%s0 + $0x3b8] sm:$0xff]
  %v134 = vld [vmem:[%s0 + $0x3c0] sm:$0xff]
  %v135 = vld [vmem:[%s0 + $0x3c8] sm:$0xff]
  %v136 = vld [vmem:[%s0 + $0x3d0] sm:$0xff]
  %v137 = vld [vmem:[%s0 + $0x3d8] sm:$0xff]
  %v138 = vld [vmem:[%s0 + $0x3e0] sm:$0xff]
  %v139 = vld [vmem:[%s0 + $0x3e8] sm:$0xff]
  %v140 = vld [vmem:[%s0 + $0x3f0] sm:$0xff]
  %v141 = vld [vmem:[%s0 + $0x3f8] sm:$0xff]
  %v142 = vld [vmem:[%s0 + $0x400] sm:$0xff]
  %v143 = vld [vmem:[%s0 + $0x408] sm:$0xff]
  %v144 = vld [vmem:[%s0 + $0x410] sm:$0xff]
  %v145 = vld [vmem:[%s0 + $0x418] sm:$0xff]
  %v146 = vld [vmem:[%s0 + $0x420] sm:$0xff]
  %v147 = vld [vmem:[%s0 + $0x428] sm:$0xff]
  %v148 = vld [vmem:[%s0 + $0x430] sm:$0xff]
  %v149 = vld [vmem:[%s0 + $0x438] sm:$0xff]
  %v150 = vld [vmem:[%s0 + $0x440] sm:$0xff]
  %v151 = vld [vmem:[%s0 + $0x448] sm:$0xff]
  %v152 = vld [vmem:[%s0 + $0x450] sm:$0xff]
  %v153 = vld [vmem:[%s0 + $0x458] sm:$0xff]
  %v154 = vld [vmem:[%s0 + $0x460] sm:$0xff]
  %v155 = vld [vmem:[%s0 + $0x468] sm:$0xff]
  %v156 = vld [vmem:[%s0 + $0x470] sm:$0xff]
  %v157 = vld [vmem:[%s0 + $0x478] sm:$0xff]
  %v158 = vld [vmem:[%s0 + $0x480] sm:$0xff]
  %v159 = vld [vmem:[%s0 + $0x488] sm:$0xff]
  %v160 = vld [vmem:[%s0 + $0x490] sm:$0xff]
  %v161 = vld [vmem:[%s0 + $0x498] sm:$0xff]
  %v162 = vld [vmem:[%s0 + $0x4a0] sm:$0xff]
  %v163 = vld [vmem:[%s0 + $0x4a8] sm:$0xff]
  %v164 = vld [vmem:[%s0 + $0x4b0] sm:$0xff]
  %v165 = vld [vmem:[%s0 + $0x4b8] sm:$0xff]
  %v166 = vld [vmem:[%s0 + $0x4c0] sm:$0xff]
  %v167 = vld [vmem:[%s0 + $0x4c8] sm:$0xff]
  %v168 = vld [vmem:[%s0 + $0x4d0] sm:$0xff]
  %v169 = vld [vmem:[%s0 + $0x4d8] sm:$0xff]
  %v170 = vld [vmem:[%s0 + $0x4e0] sm:$0xff]
  %v171 = vld [vmem:[%s0 + $0x4e8] sm:$0xff]
  %v172 = vld [vmem:[%s0 + $0x4f0] sm:$0xff]
  %v173 = vld [vmem:[%s0 + $0x4f8] sm:$0xff]
  %v174 = vld [vmem:[%s0 + $0x500] sm:$0xff]
  %v175 = vld [vmem:[%s0 + $0x508] sm:$0xff]
  %v176 = vld [vmem:[%s0 + $0x510] sm:$0xff]
  %v177 = vld [vmem:[%s0 + $0x518] sm:$0xff]
  %v178 = vld [vmem:[%s0 + $0x520] sm:$0xff]
  %v179 = vld [vmem:[%s0 + $0x528] sm:$0xff]
  %v180 = vld [vmem:[%s0 + $0x530] sm:$0xff]
  %v181 = vld [vmem:[%s0 + $0x538] sm:$0xff]
  %v182 = vld [vmem:[%s0 + $0x540] sm:$0xff]
  %v183 = vld [vmem:[%s0 + $0x548] sm:$0xff]
  %v184 = vld [vmem:[%s0 + $0x550] sm:$0xff]
  %v185 = vld [vmem:[%s0 + $0x558] sm:$0xff]
  %v186 = vld [vmem:[%s0 + $0x560] sm:$0xff]
  %v187 = vld [vmem:[%s0 + $0x568] sm:$0xff]
  %v188 = vld [vmem:[%s0 + $0x570] sm:$0xff]
  %v189 = vld [vmem:[%s0 + $0x578] sm:$0xff]
  %v190 = vld [vmem:[%s0 + $0x580] sm:$0xff]
  %v191 = vld [vmem:[%s0 + $0x588] sm:$0xff]
  %v192 = vld [vmem:[%s0 + $0x590] sm:$0xff]
  %v193 = vld [vmem:[%s0 + $0x598] sm:$0xff]
  %v194 = vld [vmem:[%s0 + $0x5a0] sm:$0xff]
  %v195 = vld [vmem:[%s0 + $0x5a8] sm:$0xff]
  %v196 = vld [vmem:[%s0 + $0x5b0] sm:$0xff]
  %v197 = vld [vmem:[%s0 + $0x5b8] sm:$0xff]
  %v198 = vld [vmem:[%s0 + $0x5c0] sm:$0xff]
  %v199 = vld [vmem:[%s0 + $0x5c8] sm:$0xff]
  %v200 = vld [vmem:[%s0 + $0x5d0] sm:$0xff]
  %v201 = vld [vmem:[%s0 + $0x5d8] sm:$0xff]
  %v202 = vld [vmem:[%s0 + $0x5e0] sm:$0xff]
  %v203 = vld [vmem:[%s0 + $0x5e8] sm:$0xff]
  %v204 = vld [vmem:[%s0 + $0x5f0] sm:$0xff]
  %v205 = vld [vmem:[%s0 + $0x5f8] sm:$0xff]
  %v206 = vld [vmem:[%s0 + $0x600] sm:$0xff]
  %v207 = vld [vmem:[%s0 + $0x608] sm:$0xff]
  %v208 = vld [vmem:[%s0 + $0x610] sm:$0xff]
  %v209 = vld [vmem:[%s0 + $0x618] sm:$0xff]
  %v210 = vld [vmem:[%s0 + $0x620] sm:$0xff]
  %v211 = vld [vmem:[%s0 + $0x628] sm:$0xff]
  %v212 = vld [vmem:[%s0 + $0x630] sm:$0xff]
  %v213 = vld [vmem:[%s0 + $0x638] sm:$0xff]
  %v214 = vld [vmem:[%s0 + $0x640] sm:$0xff]
  %v215 = vld [vmem:[%s0 + $0x648] sm:$0xff]
  %v216 = vld [vmem:[%s0 + $0x650] sm:$0xff]
  %v217 = vld [vmem:[%s0 + $0x658] sm:$0xff]
  %v218 = vld [vmem:[%s0 + $0x660] sm:$0xff]
  %v219 = vld [vmem:[%s0 + $0x668] sm:$0xff]
  %v220 = vld [vmem:[%s0 + $0x670] sm:$0xff]
  %v221 = vld [vmem:[%s0 + $0x678] sm:$0xff]
  %v222 = vld [vmem:[%s0 + $0x680] sm:$0xff]
  %v223 = vld [vmem:[%s0 + $0x688] sm:$0xff]
  %v224 = vld [vmem:[%s0 + $0x690] sm:$0xff]
  %v225 = vld [vmem:[%s0 + $0x698] sm:$0xff]
  %v226 = vld [vmem:[%s0 + $0x6a0] sm:$0xff]
  %v227 = vld [vmem:[%s0 + $0x6a8] sm:$0xff]
  %v228 = vld [vmem:[%s0 + $0x6b0] sm:$0xff]
  %v229 = vld [vmem:[%s0 + $0x6b8] sm:$0xff]
  %v230 = vld [vmem:[%s0 + $0x6c0] sm:$0xff]
  %v231 = vld [vmem:[%s0 + $0x6c8] sm:$0xff]
  %v232 = vld [vmem:[%s0 + $0x6d0] sm:$0xff]
  %v233 = vld [vmem:[%s0 + $0x6d8] sm:$0xff]
  %v234 = vld [vmem:[%s0 + $0x6e0] sm:$0xff]
  %v235 = vld [vmem:[%s0 + $0x6e8] sm:$0xff]
  %v236 = vld [vmem:[%s0 + $0x6f0] sm:$0xff]
  %v237 = vld [vmem:[%s0 + $0x6f8] sm:$0xff]
  %v238 = vld [vmem:[%s0 + $0x700] sm:$0xff]
  %v239 = vld [vmem:[%s0 + $0x708] sm:$0xff]
  %v240 = vld [vmem:[%s0 + $0x710] sm:$0xff]
  %v241 = vld [vmem:[%s0 + $0x718] sm:$0xff]
  %v242 = vld [vmem:[%s0 + $0x720] sm:$0xff]
  %v243 = vld [vmem:[%s0 + $0x728] sm:$0xff]
  %v244 = vld [vmem:[%s0 + $0x730] sm:$0xff]
  %v245 = vld [vmem:[%s0 + $0x738] sm:$0xff]
  %v246 = vld [vmem:[%s0 + $0x740] sm:$0xff]
  %v247 = vld [vmem:[%s0 + $0x748] sm:$0xff]
  %v248 = vld [vmem:[%s0 + $0x750] sm:$0xff]
  %v249 = vld [vmem:[%s0 + $0x758] sm:$0xff]
  %v250 = vld [vmem:[%s0 + $0x760] sm:$0xff]
  %v251 = vld [vmem:[%s0 + $0x768] sm:$0xff]
  %v252 = vld [vmem:[%s0 + $0x770] sm:$0xff]
  %v253 = vld [vmem:[%s0 + $0x778] sm:$0xff]
  %v254 = vld [vmem:[%s0 + $0x780] sm:$0xff]
  %v255 = vld [vmem:[%s0 + $0x788] sm:$0xff]
  %v256 = vld [vmem:[%s0 + $0x790] sm:$0xff]
  %v257 = vld [vmem:[%s0 + $0x798] sm:$0xff]
  %v258 = vld [vmem:[%s0 + $0x7a0] sm:$0xff]
  %v259 = vld [vmem:[%s0 + $0x7a8] sm:$0xff]
  %v260 = vld [vmem:[%s0 + $0x7b0] sm:$0xff]
  %v261 = vld [vmem:[%s0 + $0x7b8] sm:$0xff]
  %v262 = vld [vmem:[%s0 + $0x7c0] sm:$0xff]
  %v263 = vld [vmem:[%s0 + $0x7c8] sm:$0xff]
  %v264 = vld [vmem:[%s0 + $0x7d0] sm:$0xff]
  %v265 = vld [vmem:[%s0 + $0x7d8] sm:$0xff]
  %v266 = vld [vmem:[%s0 + $0x7e0] sm:$0xff]
  %v267 = vld [vmem:[%s0 + $0x7e8] sm:$0xff]
  %v268 = vld [vmem:[%s0 + $0x7f0] sm:$0xff]
  %v269 = vld [vmem:[%s0 + $0x7f8] sm:$0xff]
  %v270 = vld [vmem:[%s0 + $0x800] sm:$0xff]
  %v271 = vld [vmem:[%s0 + $0x808] sm:$0xff]
  %v272 = vld [vmem:[%s0 + $0x810] sm:$0xff]
  %v273 = vld [vmem:[%s0 + $0x818] sm:$0xff]
  %v274 = vld [vmem:[%s0 + $0x820] sm:$0xff]
  %v275 = vld [vmem:[%s0 + $0x828] sm:$0xff]
  %v276 = vld [vmem:[%s0 + $0x830] sm:$0xff]
  %v277 = vld [vmem:[%s0 + $0x838] sm:$0xff]
  %v278 = vld [vmem:[%s0 + $0x840] sm:$0xff]
  %v279 = vld [vmem:[%s0 + $0x848] sm:$0xff]
  %v280 = vld [vmem:[%s0 + $0x850] sm:$0xff]
  %v281 = vld [vmem:[%s0 + $0x858] sm:$0xff]
  %v282 = vld [vmem:[%s0 + $0x860] sm:$0xff]
  %v283 = vld [vmem:[%s0 + $0x868] sm:$0xff]
  %v284 = vld [vmem:[%s0 + $0x870] sm:$0xff]
  %v285 = vld [vmem:[%s0 + $0x878] sm:$0xff]
  %v286 = vld [vmem:[%s0 + $0x880] sm:$0xff]
  %v287 = vld [vmem:[%s0 + $0x888] sm:$0xff]
  %v288 = vld [vmem:[%s0 + $0x890] sm:$0xff]
  %v289 = vld [vmem:[%s0 + $0x898] sm:$0xff]
  %v290 = vld [vmem:[%s0 + $0x8a0] sm:$0xff]
  %v291 = vld [vmem:[%s0 + $0x8a8] sm:$0xff]
  %v292 = vld [vmem:[%s0 + $0x8b0] sm:$0xff]
  %v293 = vld [vmem:[%s0 + $0x8b8] sm:$0xff]
  %v294 = vld [vmem:[%s0 + $0x8c0] sm:$0xff]
  %v295 = vld [vmem:[%s0 + $0x8c8] sm:$0xff]
  %v296 = vld [vmem:[%s0 + $0x8d0] sm:$0xff]
  %v297 = vld [vmem:[%s0 + $0x8d8] sm:$0xff]
  %v298 = vld [vmem:[%s0 + $0x8e0] sm:$0xff]
  %v299 = vld [vmem:[%s0 + $0x8e8] sm:$0xff]
  %v300 = vld [vmem:[%s0 + $0x8f0] sm:$0xff]
  %v301 = vld [vmem:[%s0 + $0x8f8] sm:$0xff]
  %v302 = vld [vmem:[%s0 + $0x900] sm:$0xff]
  %v303 = vld [vmem:[%s0 + $0x908] sm:$0xff]
  %v304 = vld [vmem:[%s0 + $0x910] sm:$0xff]
  %v305 = vld [vmem:[%s0 + $0x918] sm:$0xff]
  %v306 = vld [vmem:[%s0 + $0x920] sm:$0xff]
  %v307 = vld [vmem:[%s0 + $0x928] sm:$0xff]
  %v308 = vld [vmem:[%s0 + $0x930] sm:$0xff]
  %v309 = vld [vmem:[%s0 + $0x938] sm:$0xff]
  %v310 = vld [vmem:[%s0 + $0x940] sm:$0xff]
  %v311 = vld [vmem:[%s0 + $0x948] sm:$0xff]
  %v312 = vld [vmem:[%s0 + $0x950] sm:$0xff]
  %v313 = vld [vmem:[%s0 + $0x958] sm:$0xff]
  %v314 = vld [vmem:[%s0 + $0x960] sm:$0xff]
  %v315 = vld [vmem:[%s0 + $0x968] sm:$0xff]
  %v316 = vld [vmem:[%s0 + $0x970] sm:$0xff]
  %v317 = vld [vmem:[%s0 + $0x978] sm:$0xff]
  %v318 = vld [vmem:[%s0 + $0x980] sm:$0xff]
  %v319 = vld [vmem:[%s0 + $0x988] sm:$0xff]
  %v320 = vld [vmem:[%s0 + $0x990] sm:$0xff]
  %v321 = vld [vmem:[%s0 + $0x998] sm:$0xff]
  %v322 = vld [vmem:[%s0 + $0x9a0] sm:$0xff]
  %v323 = vld [vmem:[%s0 + $0x9a8] sm:$0xff]
  %v324 = vld [vmem:[%s0 + $0x9b0] sm:$0xff]
  %v325 = vld [vmem:[%s0 + $0x9b8] sm:$0xff]
  %v326 = vld [vmem:[%s0 + $0x9c0] sm:$0xff]
  %v327 = vld [vmem:[%s0 + $0x9c8] sm:$0xff]
  %v328 = vld [vmem:[%s0 + $0x9d0] sm:$0xff]
  %v329 = vld [vmem:[%s0 + $0x9d8] sm:$0xff]
  %v330 = vld [vmem:[%s0 + $0x9e0] sm:$0xff]
  %v331 = vld [vmem:[%s0 + $0x9e8] sm:$0xff]
  %v332 = vld [vmem:[%s0 + $0x9f0] sm:$0xff]
  %v333 = vld [vmem:[%s0 + $0x9f8] sm:$0xff]
  %v334 = vld [vmem:[%s0 + $0xa00] sm:$0xff]
  %v335 = vld [vmem:[%s0 + $0xa08] sm:$0xff]
  %v336 = vld [vmem:[%s0 + $0xa10] sm:$0xff]
  %v337 = vld [vmem:[%s0 + $0xa18] sm:$0xff]
  %v338 = vld [vmem:[%s0 + $0xa20] sm:$0xff]
  %v339 = vld [vmem:[%s1] sm:$0xff]
  %v340 = vld [vmem:[%s1 + $0x8] sm:$0xff]
  %v341 = vld [vmem:[%s1 + $0x10] sm:$0xff]
  %v342 = vld [vmem:[%s1 + $0x18] sm:$0xff]
  %v343 = vld [vmem:[%s1 + $0x20] sm:$0xff]
  %v344 = vld [vmem:[%s1 + $0x28] sm:$0xff]
  %v345 = vld [vmem:[%s1 + $0x30] sm:$0xff]
  %v346 = vld [vmem:[%s1 + $0x38] sm:$0xff]
  %v347 = vld [vmem:[%s1 + $0x40] sm:$0xff]
  %v348 = vld [vmem:[%s1 + $0x48] sm:$0xff]
  %v349 = vld [vmem:[%s1 + $0x50] sm:$0xff]
  %v350 = vld [vmem:[%s1 + $0x58] sm:$0xff]
  %v351 = vld [vmem:[%s1 + $0x60] sm:$0xff]
  %v352 = vld [vmem:[%s1 + $0x68] sm:$0xff]
  %v353 = vld [vmem:[%s1 + $0x70] sm:$0xff]
  %v354 = vld [vmem:[%s1 + $0x78] sm:$0xff]
  %v355 = vld [vmem:[%s1 + $0x80] sm:$0xff]
  %v356 = vld [vmem:[%s1 + $0x88] sm:$0xff]
  %v357 = vld [vmem:[%s1 + $0x90] sm:$0xff]
  %v358 = vld [vmem:[%s1 + $0x98] sm:$0xff]
  %v359 = vld [vmem:[%s1 + $0xa0] sm:$0xff]
  %v360 = vld [vmem:[%s1 + $0xa8] sm:$0xff]
  %v361 = vld [vmem:[%s1 + $0xb0] sm:$0xff]
  %v362 = vld [vmem:[%s1 + $0xb8] sm:$0xff]
  %v363 = vld [vmem:[%s1 + $0xc0] sm:$0xff]
  %v364 = vld [vmem:[%s1 + $0xc8] sm:$0xff]
  %v365 = vld [vmem:[%s1 + $0xd0] sm:$0xff]
  %v366 = vld [vmem:[%s1 + $0xd8] sm:$0xff]
  %v367 = vld [vmem:[%s1 + $0xe0] sm:$0xff]
  %v368 = vld [vmem:[%s1 + $0xe8] sm:$0xff]
  %v369 = vld [vmem:[%s1 + $0xf0] sm:$0xff]
  %v370 = vld [vmem:[%s1 + $0xf8] sm:$0xff]
  %v371 = vld [vmem:[%s1 + $0x100] sm:$0xff]
  %v372 = vld [vmem:[%s1 + $0x108] sm:$0xff]
  %v373 = vld [vmem:[%s1 + $0x110] sm:$0xff]
  %v374 = vld [vmem:[%s1 + $0x118] sm:$0xff]
  %v375 = vld [vmem:[%s1 + $0x120] sm:$0xff]
  %v376 = vld [vmem:[%s1 + $0x128] sm:$0xff]
  %v377 = vld [vmem:[%s1 + $0x130] sm:$0xff]
  %v378 = vld [vmem:[%s1 + $0x138] sm:$0xff]
  %v379 = vld [vmem:[%s1 + $0x140] sm:$0xff]
  %v380 = vld [vmem:[%s1 + $0x148] sm:$0xff]
  %v381 = vld [vmem:[%s1 + $0x150] sm:$0xff]
  %v382 = vld [vmem:[%s1 + $0x158] sm:$0xff]
  %v383 = vld [vmem:[%s1 + $0x160] sm:$0xff]
  %v384 = vld [vmem:[%s1 + $0x168] sm:$0xff]
  %v385 = vld [vmem:[%s1 + $0x170] sm:$0xff]
  %v386 = vld [vmem:[%s1 + $0x178] sm:$0xff]
  %v387 = vld [vmem:[%s1 + $0x180] sm:$0xff]
  %v388 = vld [vmem:[%s1 + $0x188] sm:$0xff]
  %v389 = vld [vmem:[%s1 + $0x190] sm:$0xff]
  %v390 = vld [vmem:[%s1 + $0x198] sm:$0xff]
  %v391 = vld [vmem:[%s1 + $0x1a0] sm:$0xff]
  %v392 = vld [vmem:[%s1 + $0x1a8] sm:$0xff]
  %v393 = vld [vmem:[%s1 + $0x1b0] sm:$0xff]
  %v394 = vld [vmem:[%s1 + $0x1b8] sm:$0xff]
  %v395 = vld [vmem:[%s1 + $0x1c0] sm:$0xff]
  %v396 = vld [vmem:[%s1 + $0x1c8] sm:$0xff]
  %v397 = vld [vmem:[%s1 + $0x1d0] sm:$0xff]
  %v398 = vld [vmem:[%s1 + $0x1d8] sm:$0xff]
  %v399 = vld [vmem:[%s1 + $0x1e0] sm:$0xff]
  %v400 = vld [vmem:[%s1 + $0x1e8] sm:$0xff]
  %v401 = vld [vmem:[%s1 + $0x1f0] sm:$0xff]
  %v402 = vld [vmem:[%s1 + $0x1f8] sm:$0xff]
  %v403 = vld [vmem:[%s1 + $0x200] sm:$0xff]
  %v404 = vld [vmem:[%s1 + $0x208] sm:$0xff]
  %v405 = vld [vmem:[%s1 + $0x210] sm:$0xff]
  %v406 = vld [vmem:[%s1 + $0x218] sm:$0xff]
  %v407 = vld [vmem:[%s1 + $0x220] sm:$0xff]
  %v408 = vld [vmem:[%s1 + $0x228] sm:$0xff]
  %v409 = vld [vmem:[%s1 + $0x230] sm:$0xff]
  %v410 = vld [vmem:[%s1 + $0x238] sm:$0xff]
  %v411 = vld [vmem:[%s1 + $0x240] sm:$0xff]
  %v412 = vld [vmem:[%s1 + $0x248] sm:$0xff]
  %v413 = vld [vmem:[%s1 + $0x250] sm:$0xff]
  %v414 = vld [vmem:[%s1 + $0x258] sm:$0xff]
  %v415 = vld [vmem:[%s1 + $0x260] sm:$0xff]
  %v416 = vld [vmem:[%s1 + $0x268] sm:$0xff]
  %v417 = vld [vmem:[%s1 + $0x270] sm:$0xff]
  %v418 = vld [vmem:[%s1 + $0x278] sm:$0xff]
  %v419 = vld [vmem:[%s1 + $0x280] sm:$0xff]
  %v420 = vld [vmem:[%s1 + $0x288] sm:$0xff]
  %v421 = vld [vmem:[%s1 + $0x290] sm:$0xff]
  %v422 = vld [vmem:[%s1 + $0x298] sm:$0xff]
  %v423 = vld [vmem:[%s1 + $0x2a0] sm:$0xff]
  %v424 = vld [vmem:[%s1 + $0x2a8] sm:$0xff]
  %v425 = vld [vmem:[%s1 + $0x2b0] sm:$0xff]
  %v426 = vld [vmem:[%s1 + $0x2b8] sm:$0xff]
  %v427 = vld [vmem:[%s1 + $0x2c0] sm:$0xff]
  %v428 = vld [vmem:[%s1 + $0x2c8] sm:$0xff]
  %v429 = vld [vmem:[%s1 + $0x2d0] sm:$0xff]
  %v430 = vld [vmem:[%s1 + $0x2d8] sm:$0xff]
  %v431 = vld [vmem:[%s1 + $0x2e0] sm:$0xff]
  %v432 = vld [vmem:[%s1 + $0x2e8] sm:$0xff]
  %v433 = vld [vmem:[%s1 + $0x2f0] sm:$0xff]
  %v434 = vld [vmem:[%s1 + $0x2f8] sm:$0xff]
  %v435 = vld [vmem:[%s1 + $0x300] sm:$0xff]
  %v436 = vld [vmem:[%s1 + $0x308] sm:$0xff]
  %v437 = vld [vmem:[%s1 + $0x310] sm:$0xff]
  %v438 = vld [vmem:[%s1 + $0x318] sm:$0xff]
  %v439 = vld [vmem:[%s1 + $0x320] sm:$0xff]
  %v440 = vld [vmem:[%s1 + $0x328] sm:$0xff]
  %v441 = vld [vmem:[%s1 + $0x330] sm:$0xff]
  %v442 = vld [vmem:[%s1 + $0x338] sm:$0xff]
  %v443 = vld [vmem:[%s1 + $0x340] sm:$0xff]
  %v444 = vld [vmem:[%s1 + $0x348] sm:$0xff]
  %v445 = vld [vmem:[%s1 + $0x350] sm:$0xff]
  %v446 = vld [vmem:[%s1 + $0x358] sm:$0xff]
  %v447 = vld [vmem:[%s1 + $0x360] sm:$0xff]
  %v448 = vld [vmem:[%s1 + $0x368] sm:$0xff]
  %v449 = vld [vmem:[%s1 + $0x370] sm:$0xff]
  %v450 = vld [vmem:[%s1 + $0x378] sm:$0xff]
  %v451 = vld [vmem:[%s1 + $0x380] sm:$0xff]
  %v452 = vld [vmem:[%s1 + $0x388] sm:$0xff]
  %v453 = vld [vmem:[%s1 + $0x390] sm:$0xff]
  %v454 = vld [vmem:[%s1 + $0x398] sm:$0xff]
  %v455 = vld [vmem:[%s1 + $0x3a0] sm:$0xff]
  %v456 = vld [vmem:[%s1 + $0x3a8] sm:$0xff]
  %v457 = vld [vmem:[%s1 + $0x3b0] sm:$0xff]
  %v458 = vld [vmem:[%s1 + $0x3b8] sm:$0xff]
  %v459 = vld [vmem:[%s1 + $0x3c0] sm:$0xff]
  %v460 = vld [vmem:[%s1 + $0x3c8] sm:$0xff]
  %v461 = vld [vmem:[%s1 + $0x3d0] sm:$0xff]
  %v462 = vld [vmem:[%s1 + $0x3d8] sm:$0xff]
  %v463 = vld [vmem:[%s1 + $0x3e0] sm:$0xff]
  %v464 = vld [vmem:[%s1 + $0x3e8] sm:$0xff]
  %v465 = vld [vmem:[%s1 + $0x3f0] sm:$0xff]
  %v466 = vld [vmem:[%s1 + $0x3f8] sm:$0xff]
  %v467 = vld [vmem:[%s1 + $0x400] sm:$0xff]
  %v468 = vld [vmem:[%s1 + $0x408] sm:$0xff]
  %v469 = vld [vmem:[%s1 + $0x410] sm:$0xff]
  %v470 = vld [vmem:[%s1 + $0x418] sm:$0xff]
  %v471 = vld [vmem:[%s1 + $0x420] sm:$0xff]
  %v472 = vld [vmem:[%s1 + $0x428] sm:$0xff]
  %v473 = vld [vmem:[%s1 + $0x430] sm:$0xff]
  %v474 = vld [vmem:[%s1 + $0x438] sm:$0xff]
  %v475 = vld [vmem:[%s1 + $0x440] sm:$0xff]
  %v476 = vld [vmem:[%s1 + $0x448] sm:$0xff]
  %v477 = vld [vmem:[%s1 + $0x450] sm:$0xff]
  %v478 = vld [vmem:[%s1 + $0x458] sm:$0xff]
  %v479 = vld [vmem:[%s1 + $0x460] sm:$0xff]
  %v480 = vld [vmem:[%s1 + $0x468] sm:$0xff]
  %v481 = vld [vmem:[%s1 + $0x470] sm:$0xff]
  %v482 = vld [vmem:[%s1 + $0x478] sm:$0xff]
  %v483 = vld [vmem:[%s1 + $0x480] sm:$0xff]
  %v484 = vld [vmem:[%s1 + $0x488] sm:$0xff]
  %v485 = vld [vmem:[%s1 + $0x490] sm:$0xff]
  %v486 = vld [vmem:[%s1 + $0x498] sm:$0xff]
  %v487 = vld [vmem:[%s1 + $0x4a0] sm:$0xff]
  %v488 = vld [vmem:[%s1 + $0x4a8] sm:$0xff]
  %v489 = vld [vmem:[%s1 + $0x4b0] sm:$0xff]
  %v490 = vld [vmem:[%s1 + $0x4b8] sm:$0xff]
  %v491 = vld [vmem:[%s1 + $0x4c0] sm:$0xff]
  %v492 = vld [vmem:[%s1 + $0x4c8] sm:$0xff]
  %v493 = vld [vmem:[%s1 + $0x4d0] sm:$0xff]
  %v494 = vld [vmem:[%s1 + $0x4d8] sm:$0xff]
  %v495 = vld [vmem:[%s1 + $0x4e0] sm:$0xff]
  %v496 = vld [vmem:[%s1 + $0x4e8] sm:$0xff]
  %v497 = vld [vmem:[%s1 + $0x4f0] sm:$0xff]
  %v498 = vld [vmem:[%s1 + $0x4f8] sm:$0xff]
  %v499 = vld [vmem:[%s1 + $0x500] sm:$0xff]
  %v500 = vld [vmem:[%s1 + $0x508] sm:$0xff]
  %v501 = vld [vmem:[%s1 + $0x510] sm:$0xff]
  %v502 = vld [vmem:[%s1 + $0x518] sm:$0xff]
  %v503 = vld [vmem:[%s1 + $0x520] sm:$0xff]
  %v504 = vld [vmem:[%s1 + $0x528] sm:$0xff]
  %v505 = vld [vmem:[%s1 + $0x530] sm:$0xff]
  %v506 = vld [vmem:[%s1 + $0x538] sm:$0xff]
  %v507 = vld [vmem:[%s1 + $0x540] sm:$0xff]
  %v508 = vld [vmem:[%s1 + $0x548] sm:$0xff]
  %v509 = vld [vmem:[%s1 + $0x550] sm:$0xff]
  %v510 = vld [vmem:[%s1 + $0x558] sm:$0xff]
  %v511 = vld [vmem:[%s1 + $0x560] sm:$0xff]
  %v512 = vld [vmem:[%s1 + $0x568] sm:$0xff]
  %v513 = vld [vmem:[%s1 + $0x570] sm:$0xff]
  %v514 = vld [vmem:[%s1 + $0x578] sm:$0xff]
  %v515 = vld [vmem:[%s1 + $0x580] sm:$0xff]
  %v516 = vld [vmem:[%s1 + $0x588] sm:$0xff]
  %v517 = vld [vmem:[%s1 + $0x590] sm:$0xff]
  %v518 = vld [vmem:[%s1 + $0x598] sm:$0xff]
  %v519 = vld [vmem:[%s1 + $0x5a0] sm:$0xff]
  %v520 = vld [vmem:[%s1 + $0x5a8] sm:$0xff]
  %v521 = vld [vmem:[%s1 + $0x5b0] sm:$0xff]
  %v522 = vld [vmem:[%s1 + $0x5b8] sm:$0xff]
  %v523 = vld [vmem:[%s1 + $0x5c0] sm:$0xff]
  %v524 = vld [vmem:[%s1 + $0x5c8] sm:$0xff]
  %v525 = vld [vmem:[%s1 + $0x5d0] sm:$0xff]
  %v526 = vld [vmem:[%s1 + $0x5d8] sm:$0xff]
  %v527 = vld [vmem:[%s1 + $0x5e0] sm:$0xff]
  %v528 = vld [vmem:[%s1 + $0x5e8] sm:$0xff]
  %v529 = vld [vmem:[%s1 + $0x5f0] sm:$0xff]
  %v530 = vld [vmem:[%s1 + $0x5f8] sm:$0xff]
  %v531 = vld [vmem:[%s1 + $0x600] sm:$0xff]
  %v532 = vld [vmem:[%s1 + $0x608] sm:$0xff]
  %v533 = vld [vmem:[%s1 + $0x610] sm:$0xff]
  %v534 = vld [vmem:[%s1 + $0x618] sm:$0xff]
  %v535 = vld [vmem:[%s1 + $0x620] sm:$0xff]
  %v536 = vld [vmem:[%s1 + $0x628] sm:$0xff]
  %v537 = vld [vmem:[%s1 + $0x630] sm:$0xff]
  %v538 = vld [vmem:[%s1 + $0x638] sm:$0xff]
  %v539 = vld [vmem:[%s2] sm:$0x1]
  %v541 = vperm.slane %v539, 0
  %vm543 = vcmask 523264
  %v545 = vsel %vm543, %v26, 0
  %v548 = vsel %vm543, %v39, 0
  %v551 = vsel %vm543, %v52, 0
  %v554 = vsel %vm543, %v65, 0
  %v557 = vsel %vm543, %v78, 0
  %v560 = vsel %vm543, %v91, 0
  %v563 = vsel %vm543, %v104, 0
  %v566 = vsel %vm543, %v117, 0
  %v569 = vsel %vm543, %v130, 0
  %v572 = vsel %vm543, %v143, 0
  %v575 = vsel %vm543, %v156, 0
  %v578 = vsel %vm543, %v169, 0
  %v581 = vsel %vm543, %v182, 0
  %v584 = vsel %vm543, %v195, 0
  %v587 = vsel %vm543, %v208, 0
  %v590 = vsel %vm543, %v221, 0
  %v593 = vsel %vm543, %v234, 0
  %v596 = vsel %vm543, %v247, 0
  %v599 = vsel %vm543, %v260, 0
  %v602 = vsel %vm543, %v273, 0
  %v605 = vsel %vm543, %v286, 0
  %v608 = vsel %vm543, %v299, 0
  %v611 = vsel %vm543, %v312, 0
  %v614 = vsel %vm543, %v325, 0
  %v617 = vsel %vm543, %v338, 0
  %619 = vmatpush.msra.mxu0 %v354
  %620 = vmatpush.msra.mxu0 %v353
  %621 = vmatpush.msra.mxu0 %v352
  %622 = vmatpush.msra.mxu0 %v351
  %623 = vmatpush.msra.mxu0 %v350
  %624 = vmatpush.msra.mxu0 %v349
  %625 = vmatpush.msra.mxu0 %v348
  %626 = vmatpush.msra.mxu0 %v347
  %627 = vmatpush.msra.mxu0 %v346
  %628 = vmatpush.msra.mxu0 %v345
  %629 = vmatpush.msra.mxu0 %v344
  %630 = vmatpush.msra.mxu0 %v343
  %631 = vmatpush.msra.mxu0 %v342
  %632 = vmatpush.msra.mxu0 %v341
  %633 = vmatpush.msra.mxu0 %v340
  %634 = vmatpush.msra.mxu0 %v339
  %635 = vmatmul.f32.gmra.mxu0 %v14
  %v636 = vpop.f32.mrf.mxu0
  %v637 = vadd.f32 %v541, %v636
  %638 = vmatmul.f32.gmra.mxu0 %v27
  %v639 = vpop.f32.mrf.mxu0
  %v640 = vadd.f32 %v541, %v639
  %641 = vmatmul.f32.gmra.mxu0 %v40
  %v642 = vpop.f32.mrf.mxu0
  %v643 = vadd.f32 %v541, %v642
  %644 = vmatmul.f32.gmra.mxu0 %v53
  %v645 = vpop.f32.mrf.mxu0
  %v646 = vadd.f32 %v541, %v645
  %647 = vmatmul.f32.gmra.mxu0 %v66
  %v648 = vpop.f32.mrf.mxu0
  %v649 = vadd.f32 %v541, %v648
  %650 = vmatmul.f32.gmra.mxu0 %v79
  %v651 = vpop.f32.mrf.mxu0
  %v652 = vadd.f32 %v541, %v651
  %653 = vmatmul.f32.gmra.mxu0 %v92
  %v654 = vpop.f32.mrf.mxu0
  %v655 = vadd.f32 %v541, %v654
  %656 = vmatmul.f32.gmra.mxu0 %v105
  %v657 = vpop.f32.mrf.mxu0
  %v658 = vadd.f32 %v541, %v657
  %659 = vmatmul.f32.gmra.mxu0 %v118
  %v660 = vpop.f32.mrf.mxu0
  %v661 = vadd.f32 %v541, %v660
  %662 = vmatmul.f32.gmra.mxu0 %v131
  %v663 = vpop.f32.mrf.mxu0
  %v664 = vadd.f32 %v541, %v663
  %665 = vmatmul.f32.gmra.mxu0 %v144
  %v666 = vpop.f32.mrf.mxu0
  %v667 = vadd.f32 %v541, %v666
  %668 = vmatmul.f32.gmra.mxu0 %v157
  %v669 = vpop.f32.mrf.mxu0
  %v670 = vadd.f32 %v541, %v669
  %671 = vmatmul.f32.gmra.mxu0 %v170
  %v672 = vpop.f32.mrf.mxu0
  %v673 = vadd.f32 %v541, %v672
  %674 = vmatmul.f32.gmra.mxu0 %v183
  %v675 = vpop.f32.mrf.mxu0
  %v676 = vadd.f32 %v541, %v675
  %677 = vmatmul.f32.gmra.mxu0 %v196
  %v678 = vpop.f32.mrf.mxu0
  %v679 = vadd.f32 %v541, %v678
  %680 = vmatmul.f32.gmra.mxu0 %v209
  %v681 = vpop.f32.mrf.mxu0
  %v682 = vadd.f32 %v541, %v681
  %683 = vmatmul.f32.gmra.mxu0 %v222
  %v684 = vpop.f32.mrf.mxu0
  %v685 = vadd.f32 %v541, %v684
  %686 = vmatmul.f32.gmra.mxu0 %v235
  %v687 = vpop.f32.mrf.mxu0
  %v688 = vadd.f32 %v541, %v687
  %689 = vmatmul.f32.gmra.mxu0 %v248
  %v690 = vpop.f32.mrf.mxu0
  %v691 = vadd.f32 %v541, %v690
  %692 = vmatmul.f32.gmra.mxu0 %v261
  %v693 = vpop.f32.mrf.mxu0
  %v694 = vadd.f32 %v541, %v693
  %695 = vmatmul.f32.gmra.mxu0 %v274
  %v696 = vpop.f32.mrf.mxu0
  %v697 = vadd.f32 %v541, %v696
  %698 = vmatmul.f32.gmra.mxu0 %v287
  %v699 = vpop.f32.mrf.mxu0
  %v700 = vadd.f32 %v541, %v699
  %701 = vmatmul.f32.gmra.mxu0 %v300
  %v702 = vpop.f32.mrf.mxu0
  %v703 = vadd.f32 %v541, %v702
  %704 = vmatmul.f32.gmra.mxu0 %v313
  %v705 = vpop.f32.mrf.mxu0
  %v706 = vadd.f32 %v541, %v705
  %707 = vmatmul.f32.gmra.mxu0 %v326
  %v708 = vpop.f32.mrf.mxu0
  %v709 = vadd.f32 %v541, %v708
  %710 = vdwg.mxu0
  %711 = vmatpush.msra.mxu0 %v370
  %712 = vmatpush.msra.mxu0 %v369
  %713 = vmatpush.msra.mxu0 %v368
  %714 = vmatpush.msra.mxu0 %v367
  %715 = vmatpush.msra.mxu0 %v366
  %716 = vmatpush.msra.mxu0 %v365
  %717 = vmatpush.msra.mxu0 %v364
  %718 = vmatpush.msra.mxu0 %v363
  %719 = vmatpush.msra.mxu0 %v362
  %720 = vmatpush.msra.mxu0 %v361
  %721 = vmatpush.msra.mxu0 %v360
  %722 = vmatpush.msra.mxu0 %v359
  %723 = vmatpush.msra.mxu0 %v358
  %724 = vmatpush.msra.mxu0 %v357
  %725 = vmatpush.msra.mxu0 %v356
  %726 = vmatpush.msra.mxu0 %v355
  %727 = vmatmul.f32.gmra.mxu0 %v15
  %v728 = vpop.f32.mrf.mxu0
  %v729 = vadd.f32 %v637, %v728
  %730 = vmatmul.f32.gmra.mxu0 %v28
  %v731 = vpop.f32.mrf.mxu0
  %v732 = vadd.f32 %v640, %v731
  %733 = vmatmul.f32.gmra.mxu0 %v41
  %v734 = vpop.f32.mrf.mxu0
  %v735 = vadd.f32 %v643, %v734
  %736 = vmatmul.f32.gmra.mxu0 %v54
  %v737 = vpop.f32.mrf.mxu0
  %v738 = vadd.f32 %v646, %v737
  %739 = vmatmul.f32.gmra.mxu0 %v67
  %v740 = vpop.f32.mrf.mxu0
  %v741 = vadd.f32 %v649, %v740
  %742 = vmatmul.f32.gmra.mxu0 %v80
  %v743 = vpop.f32.mrf.mxu0
  %v744 = vadd.f32 %v652, %v743
  %745 = vmatmul.f32.gmra.mxu0 %v93
  %v746 = vpop.f32.mrf.mxu0
  %v747 = vadd.f32 %v655, %v746
  %748 = vmatmul.f32.gmra.mxu0 %v106
  %v749 = vpop.f32.mrf.mxu0
  %v750 = vadd.f32 %v658, %v749
  %751 = vmatmul.f32.gmra.mxu0 %v119
  %v752 = vpop.f32.mrf.mxu0
  %v753 = vadd.f32 %v661, %v752
  %754 = vmatmul.f32.gmra.mxu0 %v132
  %v755 = vpop.f32.mrf.mxu0
  %v756 = vadd.f32 %v664, %v755
  %757 = vmatmul.f32.gmra.mxu0 %v145
  %v758 = vpop.f32.mrf.mxu0
  %v759 = vadd.f32 %v667, %v758
  %760 = vmatmul.f32.gmra.mxu0 %v158
  %v761 = vpop.f32.mrf.mxu0
  %v762 = vadd.f32 %v670, %v761
  %763 = vmatmul.f32.gmra.mxu0 %v171
  %v764 = vpop.f32.mrf.mxu0
  %v765 = vadd.f32 %v673, %v764
  %766 = vmatmul.f32.gmra.mxu0 %v184
  %v767 = vpop.f32.mrf.mxu0
  %v768 = vadd.f32 %v676, %v767
  %769 = vmatmul.f32.gmra.mxu0 %v197
  %v770 = vpop.f32.mrf.mxu0
  %v771 = vadd.f32 %v679, %v770
  %772 = vmatmul.f32.gmra.mxu0 %v210
  %v773 = vpop.f32.mrf.mxu0
  %v774 = vadd.f32 %v682, %v773
  %775 = vmatmul.f32.gmra.mxu0 %v223
  %v776 = vpop.f32.mrf.mxu0
  %v777 = vadd.f32 %v685, %v776
  %778 = vmatmul.f32.gmra.mxu0 %v236
  %v779 = vpop.f32.mrf.mxu0
  %v780 = vadd.f32 %v688, %v779
  %781 = vmatmul.f32.gmra.mxu0 %v249
  %v782 = vpop.f32.mrf.mxu0
  %v783 = vadd.f32 %v691, %v782
  %784 = vmatmul.f32.gmra.mxu0 %v262
  %v785 = vpop.f32.mrf.mxu0
  %v786 = vadd.f32 %v694, %v785
  %787 = vmatmul.f32.gmra.mxu0 %v275
  %v788 = vpop.f32.mrf.mxu0
  %v789 = vadd.f32 %v697, %v788
  %790 = vmatmul.f32.gmra.mxu0 %v288
  %v791 = vpop.f32.mrf.mxu0
  %v792 = vadd.f32 %v700, %v791
  %793 = vmatmul.f32.gmra.mxu0 %v301
  %v794 = vpop.f32.mrf.mxu0
  %v795 = vadd.f32 %v703, %v794
  %796 = vmatmul.f32.gmra.mxu0 %v314
  %v797 = vpop.f32.mrf.mxu0
  %v798 = vadd.f32 %v706, %v797
  %799 = vmatmul.f32.gmra.mxu0 %v327
  %v800 = vpop.f32.mrf.mxu0
  %v801 = vadd.f32 %v709, %v800
  %802 = vdwg.mxu0
  %803 = vmatpush.msra.mxu0 %v386
  %804 = vmatpush.msra.mxu0 %v385
  %805 = vmatpush.msra.mxu0 %v384
  %806 = vmatpush.msra.mxu0 %v383
  %807 = vmatpush.msra.mxu0 %v382
  %808 = vmatpush.msra.mxu0 %v381
  %809 = vmatpush.msra.mxu0 %v380
  %810 = vmatpush.msra.mxu0 %v379
  %811 = vmatpush.msra.mxu0 %v378
  %812 = vmatpush.msra.mxu0 %v377
  %813 = vmatpush.msra.mxu0 %v376
  %814 = vmatpush.msra.mxu0 %v375
  %815 = vmatpush.msra.mxu0 %v374
  %816 = vmatpush.msra.mxu0 %v373
  %817 = vmatpush.msra.mxu0 %v372
  %818 = vmatpush.msra.mxu0 %v371
  %819 = vmatmul.f32.gmra.mxu0 %v16
  %v820 = vpop.f32.mrf.mxu0
  %v821 = vadd.f32 %v729, %v820
  %822 = vmatmul.f32.gmra.mxu0 %v29
  %v823 = vpop.f32.mrf.mxu0
  %v824 = vadd.f32 %v732, %v823
  %825 = vmatmul.f32.gmra.mxu0 %v42
  %v826 = vpop.f32.mrf.mxu0
  %v827 = vadd.f32 %v735, %v826
  %828 = vmatmul.f32.gmra.mxu0 %v55
  %v829 = vpop.f32.mrf.mxu0
  %v830 = vadd.f32 %v738, %v829
  %831 = vmatmul.f32.gmra.mxu0 %v68
  %v832 = vpop.f32.mrf.mxu0
  %v833 = vadd.f32 %v741, %v832
  %834 = vmatmul.f32.gmra.mxu0 %v81
  %v835 = vpop.f32.mrf.mxu0
  %v836 = vadd.f32 %v744, %v835
  %837 = vmatmul.f32.gmra.mxu0 %v94
  %v838 = vpop.f32.mrf.mxu0
  %v839 = vadd.f32 %v747, %v838
  %840 = vmatmul.f32.gmra.mxu0 %v107
  %v841 = vpop.f32.mrf.mxu0
  %v842 = vadd.f32 %v750, %v841
  %843 = vmatmul.f32.gmra.mxu0 %v120
  %v844 = vpop.f32.mrf.mxu0
  %v845 = vadd.f32 %v753, %v844
  %846 = vmatmul.f32.gmra.mxu0 %v133
  %v847 = vpop.f32.mrf.mxu0
  %v848 = vadd.f32 %v756, %v847
  %849 = vmatmul.f32.gmra.mxu0 %v146
  %v850 = vpop.f32.mrf.mxu0
  %v851 = vadd.f32 %v759, %v850
  %852 = vmatmul.f32.gmra.mxu0 %v159
  %v853 = vpop.f32.mrf.mxu0
  %v854 = vadd.f32 %v762, %v853
  %855 = vmatmul.f32.gmra.mxu0 %v172
  %v856 = vpop.f32.mrf.mxu0
  %v857 = vadd.f32 %v765, %v856
  %858 = vmatmul.f32.gmra.mxu0 %v185
  %v859 = vpop.f32.mrf.mxu0
  %v860 = vadd.f32 %v768, %v859
  %861 = vmatmul.f32.gmra.mxu0 %v198
  %v862 = vpop.f32.mrf.mxu0
  %v863 = vadd.f32 %v771, %v862
  %864 = vmatmul.f32.gmra.mxu0 %v211
  %v865 = vpop.f32.mrf.mxu0
  %v866 = vadd.f32 %v774, %v865
  %867 = vmatmul.f32.gmra.mxu0 %v224
  %v868 = vpop.f32.mrf.mxu0
  %v869 = vadd.f32 %v777, %v868
  %870 = vmatmul.f32.gmra.mxu0 %v237
  %v871 = vpop.f32.mrf.mxu0
  %v872 = vadd.f32 %v780, %v871
  %873 = vmatmul.f32.gmra.mxu0 %v250
  %v874 = vpop.f32.mrf.mxu0
  %v875 = vadd.f32 %v783, %v874
  %876 = vmatmul.f32.gmra.mxu0 %v263
  %v877 = vpop.f32.mrf.mxu0
  %v878 = vadd.f32 %v786, %v877
  %879 = vmatmul.f32.gmra.mxu0 %v276
  %v880 = vpop.f32.mrf.mxu0
  %v881 = vadd.f32 %v789, %v880
  %882 = vmatmul.f32.gmra.mxu0 %v289
  %v883 = vpop.f32.mrf.mxu0
  %v884 = vadd.f32 %v792, %v883
  %885 = vmatmul.f32.gmra.mxu0 %v302
  %v886 = vpop.f32.mrf.mxu0
  %v887 = vadd.f32 %v795, %v886
  %888 = vmatmul.f32.gmra.mxu0 %v315
  %v889 = vpop.f32.mrf.mxu0
  %v890 = vadd.f32 %v798, %v889
  %891 = vmatmul.f32.gmra.mxu0 %v328
  %v892 = vpop.f32.mrf.mxu0
  %v893 = vadd.f32 %v801, %v892
  %894 = vdwg.mxu0
  %895 = vmatpush.msra.mxu0 %v402
  %896 = vmatpush.msra.mxu0 %v401
  %897 = vmatpush.msra.mxu0 %v400
  %898 = vmatpush.msra.mxu0 %v399
  %899 = vmatpush.msra.mxu0 %v398
  %900 = vmatpush.msra.mxu0 %v397
  %901 = vmatpush.msra.mxu0 %v396
  %902 = vmatpush.msra.mxu0 %v395
  %903 = vmatpush.msra.mxu0 %v394
  %904 = vmatpush.msra.mxu0 %v393
  %905 = vmatpush.msra.mxu0 %v392
  %906 = vmatpush.msra.mxu0 %v391
  %907 = vmatpush.msra.mxu0 %v390
  %908 = vmatpush.msra.mxu0 %v389
  %909 = vmatpush.msra.mxu0 %v388
  %910 = vmatpush.msra.mxu0 %v387
  %911 = vmatmul.f32.gmra.mxu0 %v17
  %v912 = vpop.f32.mrf.mxu0
  %v913 = vadd.f32 %v821, %v912
  %914 = vmatmul.f32.gmra.mxu0 %v30
  %v915 = vpop.f32.mrf.mxu0
  %v916 = vadd.f32 %v824, %v915
  %917 = vmatmul.f32.gmra.mxu0 %v43
  %v918 = vpop.f32.mrf.mxu0
  %v919 = vadd.f32 %v827, %v918
  %920 = vmatmul.f32.gmra.mxu0 %v56
  %v921 = vpop.f32.mrf.mxu0
  %v922 = vadd.f32 %v830, %v921
  %923 = vmatmul.f32.gmra.mxu0 %v69
  %v924 = vpop.f32.mrf.mxu0
  %v925 = vadd.f32 %v833, %v924
  %926 = vmatmul.f32.gmra.mxu0 %v82
  %v927 = vpop.f32.mrf.mxu0
  %v928 = vadd.f32 %v836, %v927
  %929 = vmatmul.f32.gmra.mxu0 %v95
  %v930 = vpop.f32.mrf.mxu0
  %v931 = vadd.f32 %v839, %v930
  %932 = vmatmul.f32.gmra.mxu0 %v108
  %v933 = vpop.f32.mrf.mxu0
  %v934 = vadd.f32 %v842, %v933
  %935 = vmatmul.f32.gmra.mxu0 %v121
  %v936 = vpop.f32.mrf.mxu0
  %v937 = vadd.f32 %v845, %v936
  %938 = vmatmul.f32.gmra.mxu0 %v134
  %v939 = vpop.f32.mrf.mxu0
  %v940 = vadd.f32 %v848, %v939
  %941 = vmatmul.f32.gmra.mxu0 %v147
  %v942 = vpop.f32.mrf.mxu0
  %v943 = vadd.f32 %v851, %v942
  %944 = vmatmul.f32.gmra.mxu0 %v160
  %v945 = vpop.f32.mrf.mxu0
  %v946 = vadd.f32 %v854, %v945
  %947 = vmatmul.f32.gmra.mxu0 %v173
  %v948 = vpop.f32.mrf.mxu0
  %v949 = vadd.f32 %v857, %v948
  %950 = vmatmul.f32.gmra.mxu0 %v186
  %v951 = vpop.f32.mrf.mxu0
  %v952 = vadd.f32 %v860, %v951
  %953 = vmatmul.f32.gmra.mxu0 %v199
  %v954 = vpop.f32.mrf.mxu0
  %v955 = vadd.f32 %v863, %v954
  %956 = vmatmul.f32.gmra.mxu0 %v212
  %v957 = vpop.f32.mrf.mxu0
  %v958 = vadd.f32 %v866, %v957
  %959 = vmatmul.f32.gmra.mxu0 %v225
  %v960 = vpop.f32.mrf.mxu0
  %v961 = vadd.f32 %v869, %v960
  %962 = vmatmul.f32.gmra.mxu0 %v238
  %v963 = vpop.f32.mrf.mxu0
  %v964 = vadd.f32 %v872, %v963
  %965 = vmatmul.f32.gmra.mxu0 %v251
  %v966 = vpop.f32.mrf.mxu0
  %v967 = vadd.f32 %v875, %v966
  %968 = vmatmul.f32.gmra.mxu0 %v264
  %v969 = vpop.f32.mrf.mxu0
  %v970 = vadd.f32 %v878, %v969
  %971 = vmatmul.f32.gmra.mxu0 %v277
  %v972 = vpop.f32.mrf.mxu0
  %v973 = vadd.f32 %v881, %v972
  %974 = vmatmul.f32.gmra.mxu0 %v290
  %v975 = vpop.f32.mrf.mxu0
  %v976 = vadd.f32 %v884, %v975
  %977 = vmatmul.f32.gmra.mxu0 %v303
  %v978 = vpop.f32.mrf.mxu0
  %v979 = vadd.f32 %v887, %v978
  %980 = vmatmul.f32.gmra.mxu0 %v316
  %v981 = vpop.f32.mrf.mxu0
  %v982 = vadd.f32 %v890, %v981
  %983 = vmatmul.f32.gmra.mxu0 %v329
  %v984 = vpop.f32.mrf.mxu0
  %v985 = vadd.f32 %v893, %v984
  %986 = vdwg.mxu0
  %987 = vmatpush.msra.mxu0 %v418
  %988 = vmatpush.msra.mxu0 %v417
  %989 = vmatpush.msra.mxu0 %v416
  %990 = vmatpush.msra.mxu0 %v415
  %991 = vmatpush.msra.mxu0 %v414
  %992 = vmatpush.msra.mxu0 %v413
  %993 = vmatpush.msra.mxu0 %v412
  %994 = vmatpush.msra.mxu0 %v411
  %995 = vmatpush.msra.mxu0 %v410
  %996 = vmatpush.msra.mxu0 %v409
  %997 = vmatpush.msra.mxu0 %v408
  %998 = vmatpush.msra.mxu0 %v407
  %999 = vmatpush.msra.mxu0 %v406
  %1000 = vmatpush.msra.mxu0 %v405
  %1001 = vmatpush.msra.mxu0 %v404
  %1002 = vmatpush.msra.mxu0 %v403
  %1003 = vmatmul.f32.gmra.mxu0 %v18
  %v1004 = vpop.f32.mrf.mxu0
  %v1005 = vadd.f32 %v913, %v1004
  %1006 = vmatmul.f32.gmra.mxu0 %v31
  %v1007 = vpop.f32.mrf.mxu0
  %v1008 = vadd.f32 %v916, %v1007
  %1009 = vmatmul.f32.gmra.mxu0 %v44
  %v1010 = vpop.f32.mrf.mxu0
  %v1011 = vadd.f32 %v919, %v1010
  %1012 = vmatmul.f32.gmra.mxu0 %v57
  %v1013 = vpop.f32.mrf.mxu0
  %v1014 = vadd.f32 %v922, %v1013
  %1015 = vmatmul.f32.gmra.mxu0 %v70
  %v1016 = vpop.f32.mrf.mxu0
  %v1017 = vadd.f32 %v925, %v1016
  %1018 = vmatmul.f32.gmra.mxu0 %v83
  %v1019 = vpop.f32.mrf.mxu0
  %v1020 = vadd.f32 %v928, %v1019
  %1021 = vmatmul.f32.gmra.mxu0 %v96
  %v1022 = vpop.f32.mrf.mxu0
  %v1023 = vadd.f32 %v931, %v1022
  %1024 = vmatmul.f32.gmra.mxu0 %v109
  %v1025 = vpop.f32.mrf.mxu0
  %v1026 = vadd.f32 %v934, %v1025
  %1027 = vmatmul.f32.gmra.mxu0 %v122
  %v1028 = vpop.f32.mrf.mxu0
  %v1029 = vadd.f32 %v937, %v1028
  %1030 = vmatmul.f32.gmra.mxu0 %v135
  %v1031 = vpop.f32.mrf.mxu0
  %v1032 = vadd.f32 %v940, %v1031
  %1033 = vmatmul.f32.gmra.mxu0 %v148
  %v1034 = vpop.f32.mrf.mxu0
  %v1035 = vadd.f32 %v943, %v1034
  %1036 = vmatmul.f32.gmra.mxu0 %v161
  %v1037 = vpop.f32.mrf.mxu0
  %v1038 = vadd.f32 %v946, %v1037
  %1039 = vmatmul.f32.gmra.mxu0 %v174
  %v1040 = vpop.f32.mrf.mxu0
  %v1041 = vadd.f32 %v949, %v1040
  %1042 = vmatmul.f32.gmra.mxu0 %v187
  %v1043 = vpop.f32.mrf.mxu0
  %v1044 = vadd.f32 %v952, %v1043
  %1045 = vmatmul.f32.gmra.mxu0 %v200
  %v1046 = vpop.f32.mrf.mxu0
  %v1047 = vadd.f32 %v955, %v1046
  %1048 = vmatmul.f32.gmra.mxu0 %v213
  %v1049 = vpop.f32.mrf.mxu0
  %v1050 = vadd.f32 %v958, %v1049
  %1051 = vmatmul.f32.gmra.mxu0 %v226
  %v1052 = vpop.f32.mrf.mxu0
  %v1053 = vadd.f32 %v961, %v1052
  %1054 = vmatmul.f32.gmra.mxu0 %v239
  %v1055 = vpop.f32.mrf.mxu0
  %v1056 = vadd.f32 %v964, %v1055
  %1057 = vmatmul.f32.gmra.mxu0 %v252
  %v1058 = vpop.f32.mrf.mxu0
  %v1059 = vadd.f32 %v967, %v1058
  %1060 = vmatmul.f32.gmra.mxu0 %v265
  %v1061 = vpop.f32.mrf.mxu0
  %v1062 = vadd.f32 %v970, %v1061
  %1063 = vmatmul.f32.gmra.mxu0 %v278
  %v1064 = vpop.f32.mrf.mxu0
  %v1065 = vadd.f32 %v973, %v1064
  %1066 = vmatmul.f32.gmra.mxu0 %v291
  %v1067 = vpop.f32.mrf.mxu0
  %v1068 = vadd.f32 %v976, %v1067
  %1069 = vmatmul.f32.gmra.mxu0 %v304
  %v1070 = vpop.f32.mrf.mxu0
  %v1071 = vadd.f32 %v979, %v1070
  %1072 = vmatmul.f32.gmra.mxu0 %v317
  %v1073 = vpop.f32.mrf.mxu0
  %v1074 = vadd.f32 %v982, %v1073
  %1075 = vmatmul.f32.gmra.mxu0 %v330
  %v1076 = vpop.f32.mrf.mxu0
  %v1077 = vadd.f32 %v985, %v1076
  %1078 = vdwg.mxu0
  %1079 = vmatpush.msra.mxu0 %v434
  %1080 = vmatpush.msra.mxu0 %v433
  %1081 = vmatpush.msra.mxu0 %v432
  %1082 = vmatpush.msra.mxu0 %v431
  %1083 = vmatpush.msra.mxu0 %v430
  %1084 = vmatpush.msra.mxu0 %v429
  %1085 = vmatpush.msra.mxu0 %v428
  %1086 = vmatpush.msra.mxu0 %v427
  %1087 = vmatpush.msra.mxu0 %v426
  %1088 = vmatpush.msra.mxu0 %v425
  %1089 = vmatpush.msra.mxu0 %v424
  %1090 = vmatpush.msra.mxu0 %v423
  %1091 = vmatpush.msra.mxu0 %v422
  %1092 = vmatpush.msra.mxu0 %v421
  %1093 = vmatpush.msra.mxu0 %v420
  %1094 = vmatpush.msra.mxu0 %v419
  %1095 = vmatmul.f32.gmra.mxu0 %v19
  %v1096 = vpop.f32.mrf.mxu0
  %v1097 = vadd.f32 %v1005, %v1096
  %1098 = vmatmul.f32.gmra.mxu0 %v32
  %v1099 = vpop.f32.mrf.mxu0
  %v1100 = vadd.f32 %v1008, %v1099
  %1101 = vmatmul.f32.gmra.mxu0 %v45
  %v1102 = vpop.f32.mrf.mxu0
  %v1103 = vadd.f32 %v1011, %v1102
  %1104 = vmatmul.f32.gmra.mxu0 %v58
  %v1105 = vpop.f32.mrf.mxu0
  %v1106 = vadd.f32 %v1014, %v1105
  %1107 = vmatmul.f32.gmra.mxu0 %v71
  %v1108 = vpop.f32.mrf.mxu0
  %v1109 = vadd.f32 %v1017, %v1108
  %1110 = vmatmul.f32.gmra.mxu0 %v84
  %v1111 = vpop.f32.mrf.mxu0
  %v1112 = vadd.f32 %v1020, %v1111
  %1113 = vmatmul.f32.gmra.mxu0 %v97
  %v1114 = vpop.f32.mrf.mxu0
  %v1115 = vadd.f32 %v1023, %v1114
  %1116 = vmatmul.f32.gmra.mxu0 %v110
  %v1117 = vpop.f32.mrf.mxu0
  %v1118 = vadd.f32 %v1026, %v1117
  %1119 = vmatmul.f32.gmra.mxu0 %v123
  %v1120 = vpop.f32.mrf.mxu0
  %v1121 = vadd.f32 %v1029, %v1120
  %1122 = vmatmul.f32.gmra.mxu0 %v136
  %v1123 = vpop.f32.mrf.mxu0
  %v1124 = vadd.f32 %v1032, %v1123
  %1125 = vmatmul.f32.gmra.mxu0 %v149
  %v1126 = vpop.f32.mrf.mxu0
  %v1127 = vadd.f32 %v1035, %v1126
  %1128 = vmatmul.f32.gmra.mxu0 %v162
  %v1129 = vpop.f32.mrf.mxu0
  %v1130 = vadd.f32 %v1038, %v1129
  %1131 = vmatmul.f32.gmra.mxu0 %v175
  %v1132 = vpop.f32.mrf.mxu0
  %v1133 = vadd.f32 %v1041, %v1132
  %1134 = vmatmul.f32.gmra.mxu0 %v188
  %v1135 = vpop.f32.mrf.mxu0
  %v1136 = vadd.f32 %v1044, %v1135
  %1137 = vmatmul.f32.gmra.mxu0 %v201
  %v1138 = vpop.f32.mrf.mxu0
  %v1139 = vadd.f32 %v1047, %v1138
  %1140 = vmatmul.f32.gmra.mxu0 %v214
  %v1141 = vpop.f32.mrf.mxu0
  %v1142 = vadd.f32 %v1050, %v1141
  %1143 = vmatmul.f32.gmra.mxu0 %v227
  %v1144 = vpop.f32.mrf.mxu0
  %v1145 = vadd.f32 %v1053, %v1144
  %1146 = vmatmul.f32.gmra.mxu0 %v240
  %v1147 = vpop.f32.mrf.mxu0
  %v1148 = vadd.f32 %v1056, %v1147
  %1149 = vmatmul.f32.gmra.mxu0 %v253
  %v1150 = vpop.f32.mrf.mxu0
  %v1151 = vadd.f32 %v1059, %v1150
  %1152 = vmatmul.f32.gmra.mxu0 %v266
  %v1153 = vpop.f32.mrf.mxu0
  %v1154 = vadd.f32 %v1062, %v1153
  %1155 = vmatmul.f32.gmra.mxu0 %v279
  %v1156 = vpop.f32.mrf.mxu0
  %v1157 = vadd.f32 %v1065, %v1156
  %1158 = vmatmul.f32.gmra.mxu0 %v292
  %v1159 = vpop.f32.mrf.mxu0
  %v1160 = vadd.f32 %v1068, %v1159
  %1161 = vmatmul.f32.gmra.mxu0 %v305
  %v1162 = vpop.f32.mrf.mxu0
  %v1163 = vadd.f32 %v1071, %v1162
  %1164 = vmatmul.f32.gmra.mxu0 %v318
  %v1165 = vpop.f32.mrf.mxu0
  %v1166 = vadd.f32 %v1074, %v1165
  %1167 = vmatmul.f32.gmra.mxu0 %v331
  %v1168 = vpop.f32.mrf.mxu0
  %v1169 = vadd.f32 %v1077, %v1168
  %1170 = vdwg.mxu0
  %1171 = vmatpush.msra.mxu0 %v450
  %1172 = vmatpush.msra.mxu0 %v449
  %1173 = vmatpush.msra.mxu0 %v448
  %1174 = vmatpush.msra.mxu0 %v447
  %1175 = vmatpush.msra.mxu0 %v446
  %1176 = vmatpush.msra.mxu0 %v445
  %1177 = vmatpush.msra.mxu0 %v444
  %1178 = vmatpush.msra.mxu0 %v443
  %1179 = vmatpush.msra.mxu0 %v442
  %1180 = vmatpush.msra.mxu0 %v441
  %1181 = vmatpush.msra.mxu0 %v440
  %1182 = vmatpush.msra.mxu0 %v439
  %1183 = vmatpush.msra.mxu0 %v438
  %1184 = vmatpush.msra.mxu0 %v437
  %1185 = vmatpush.msra.mxu0 %v436
  %1186 = vmatpush.msra.mxu0 %v435
  %1187 = vmatmul.f32.gmra.mxu0 %v20
  %v1188 = vpop.f32.mrf.mxu0
  %v1189 = vadd.f32 %v1097, %v1188
  %1190 = vmatmul.f32.gmra.mxu0 %v33
  %v1191 = vpop.f32.mrf.mxu0
  %v1192 = vadd.f32 %v1100, %v1191
  %1193 = vmatmul.f32.gmra.mxu0 %v46
  %v1194 = vpop.f32.mrf.mxu0
  %v1195 = vadd.f32 %v1103, %v1194
  %1196 = vmatmul.f32.gmra.mxu0 %v59
  %v1197 = vpop.f32.mrf.mxu0
  %v1198 = vadd.f32 %v1106, %v1197
  %1199 = vmatmul.f32.gmra.mxu0 %v72
  %v1200 = vpop.f32.mrf.mxu0
  %v1201 = vadd.f32 %v1109, %v1200
  %1202 = vmatmul.f32.gmra.mxu0 %v85
  %v1203 = vpop.f32.mrf.mxu0
  %v1204 = vadd.f32 %v1112, %v1203
  %1205 = vmatmul.f32.gmra.mxu0 %v98
  %v1206 = vpop.f32.mrf.mxu0
  %v1207 = vadd.f32 %v1115, %v1206
  %1208 = vmatmul.f32.gmra.mxu0 %v111
  %v1209 = vpop.f32.mrf.mxu0
  %v1210 = vadd.f32 %v1118, %v1209
  %1211 = vmatmul.f32.gmra.mxu0 %v124
  %v1212 = vpop.f32.mrf.mxu0
  %v1213 = vadd.f32 %v1121, %v1212
  %1214 = vmatmul.f32.gmra.mxu0 %v137
  %v1215 = vpop.f32.mrf.mxu0
  %v1216 = vadd.f32 %v1124, %v1215
  %1217 = vmatmul.f32.gmra.mxu0 %v150
  %v1218 = vpop.f32.mrf.mxu0
  %v1219 = vadd.f32 %v1127, %v1218
  %1220 = vmatmul.f32.gmra.mxu0 %v163
  %v1221 = vpop.f32.mrf.mxu0
  %v1222 = vadd.f32 %v1130, %v1221
  %1223 = vmatmul.f32.gmra.mxu0 %v176
  %v1224 = vpop.f32.mrf.mxu0
  %v1225 = vadd.f32 %v1133, %v1224
  %1226 = vmatmul.f32.gmra.mxu0 %v189
  %v1227 = vpop.f32.mrf.mxu0
  %v1228 = vadd.f32 %v1136, %v1227
  %1229 = vmatmul.f32.gmra.mxu0 %v202
  %v1230 = vpop.f32.mrf.mxu0
  %v1231 = vadd.f32 %v1139, %v1230
  %1232 = vmatmul.f32.gmra.mxu0 %v215
  %v1233 = vpop.f32.mrf.mxu0
  %v1234 = vadd.f32 %v1142, %v1233
  %1235 = vmatmul.f32.gmra.mxu0 %v228
  %v1236 = vpop.f32.mrf.mxu0
  %v1237 = vadd.f32 %v1145, %v1236
  %1238 = vmatmul.f32.gmra.mxu0 %v241
  %v1239 = vpop.f32.mrf.mxu0
  %v1240 = vadd.f32 %v1148, %v1239
  %1241 = vmatmul.f32.gmra.mxu0 %v254
  %v1242 = vpop.f32.mrf.mxu0
  %v1243 = vadd.f32 %v1151, %v1242
  %1244 = vmatmul.f32.gmra.mxu0 %v267
  %v1245 = vpop.f32.mrf.mxu0
  %v1246 = vadd.f32 %v1154, %v1245
  %1247 = vmatmul.f32.gmra.mxu0 %v280
  %v1248 = vpop.f32.mrf.mxu0
  %v1249 = vadd.f32 %v1157, %v1248
  %1250 = vmatmul.f32.gmra.mxu0 %v293
  %v1251 = vpop.f32.mrf.mxu0
  %v1252 = vadd.f32 %v1160, %v1251
  %1253 = vmatmul.f32.gmra.mxu0 %v306
  %v1254 = vpop.f32.mrf.mxu0
  %v1255 = vadd.f32 %v1163, %v1254
  %1256 = vmatmul.f32.gmra.mxu0 %v319
  %v1257 = vpop.f32.mrf.mxu0
  %v1258 = vadd.f32 %v1166, %v1257
  %1259 = vmatmul.f32.gmra.mxu0 %v332
  %v1260 = vpop.f32.mrf.mxu0
  %v1261 = vadd.f32 %v1169, %v1260
  %1262 = vdwg.mxu0
  %1263 = vmatpush.msra.mxu0 %v466
  %1264 = vmatpush.msra.mxu0 %v465
  %1265 = vmatpush.msra.mxu0 %v464
  %1266 = vmatpush.msra.mxu0 %v463
  %1267 = vmatpush.msra.mxu0 %v462
  %1268 = vmatpush.msra.mxu0 %v461
  %1269 = vmatpush.msra.mxu0 %v460
  %1270 = vmatpush.msra.mxu0 %v459
  %1271 = vmatpush.msra.mxu0 %v458
  %1272 = vmatpush.msra.mxu0 %v457
  %1273 = vmatpush.msra.mxu0 %v456
  %1274 = vmatpush.msra.mxu0 %v455
  %1275 = vmatpush.msra.mxu0 %v454
  %1276 = vmatpush.msra.mxu0 %v453
  %1277 = vmatpush.msra.mxu0 %v452
  %1278 = vmatpush.msra.mxu0 %v451
  %1279 = vmatmul.f32.gmra.mxu0 %v21
  %v1280 = vpop.f32.mrf.mxu0
  %v1281 = vadd.f32 %v1189, %v1280
  %1282 = vmatmul.f32.gmra.mxu0 %v34
  %v1283 = vpop.f32.mrf.mxu0
  %v1284 = vadd.f32 %v1192, %v1283
  %1285 = vmatmul.f32.gmra.mxu0 %v47
  %v1286 = vpop.f32.mrf.mxu0
  %v1287 = vadd.f32 %v1195, %v1286
  %1288 = vmatmul.f32.gmra.mxu0 %v60
  %v1289 = vpop.f32.mrf.mxu0
  %v1290 = vadd.f32 %v1198, %v1289
  %1291 = vmatmul.f32.gmra.mxu0 %v73
  %v1292 = vpop.f32.mrf.mxu0
  %v1293 = vadd.f32 %v1201, %v1292
  %1294 = vmatmul.f32.gmra.mxu0 %v86
  %v1295 = vpop.f32.mrf.mxu0
  %v1296 = vadd.f32 %v1204, %v1295
  %1297 = vmatmul.f32.gmra.mxu0 %v99
  %v1298 = vpop.f32.mrf.mxu0
  %v1299 = vadd.f32 %v1207, %v1298
  %1300 = vmatmul.f32.gmra.mxu0 %v112
  %v1301 = vpop.f32.mrf.mxu0
  %v1302 = vadd.f32 %v1210, %v1301
  %1303 = vmatmul.f32.gmra.mxu0 %v125
  %v1304 = vpop.f32.mrf.mxu0
  %v1305 = vadd.f32 %v1213, %v1304
  %1306 = vmatmul.f32.gmra.mxu0 %v138
  %v1307 = vpop.f32.mrf.mxu0
  %v1308 = vadd.f32 %v1216, %v1307
  %1309 = vmatmul.f32.gmra.mxu0 %v151
  %v1310 = vpop.f32.mrf.mxu0
  %v1311 = vadd.f32 %v1219, %v1310
  %1312 = vmatmul.f32.gmra.mxu0 %v164
  %v1313 = vpop.f32.mrf.mxu0
  %v1314 = vadd.f32 %v1222, %v1313
  %1315 = vmatmul.f32.gmra.mxu0 %v177
  %v1316 = vpop.f32.mrf.mxu0
  %v1317 = vadd.f32 %v1225, %v1316
  %1318 = vmatmul.f32.gmra.mxu0 %v190
  %v1319 = vpop.f32.mrf.mxu0
  %v1320 = vadd.f32 %v1228, %v1319
  %1321 = vmatmul.f32.gmra.mxu0 %v203
  %v1322 = vpop.f32.mrf.mxu0
  %v1323 = vadd.f32 %v1231, %v1322
  %1324 = vmatmul.f32.gmra.mxu0 %v216
  %v1325 = vpop.f32.mrf.mxu0
  %v1326 = vadd.f32 %v1234, %v1325
  %1327 = vmatmul.f32.gmra.mxu0 %v229
  %v1328 = vpop.f32.mrf.mxu0
  %v1329 = vadd.f32 %v1237, %v1328
  %1330 = vmatmul.f32.gmra.mxu0 %v242
  %v1331 = vpop.f32.mrf.mxu0
  %v1332 = vadd.f32 %v1240, %v1331
  %1333 = vmatmul.f32.gmra.mxu0 %v255
  %v1334 = vpop.f32.mrf.mxu0
  %v1335 = vadd.f32 %v1243, %v1334
  %1336 = vmatmul.f32.gmra.mxu0 %v268
  %v1337 = vpop.f32.mrf.mxu0
  %v1338 = vadd.f32 %v1246, %v1337
  %1339 = vmatmul.f32.gmra.mxu0 %v281
  %v1340 = vpop.f32.mrf.mxu0
  %v1341 = vadd.f32 %v1249, %v1340
  %1342 = vmatmul.f32.gmra.mxu0 %v294
  %v1343 = vpop.f32.mrf.mxu0
  %v1344 = vadd.f32 %v1252, %v1343
  %1345 = vmatmul.f32.gmra.mxu0 %v307
  %v1346 = vpop.f32.mrf.mxu0
  %v1347 = vadd.f32 %v1255, %v1346
  %1348 = vmatmul.f32.gmra.mxu0 %v320
  %v1349 = vpop.f32.mrf.mxu0
  %v1350 = vadd.f32 %v1258, %v1349
  %1351 = vmatmul.f32.gmra.mxu0 %v333
  %v1352 = vpop.f32.mrf.mxu0
  %v1353 = vadd.f32 %v1261, %v1352
  %1354 = vdwg.mxu0
  %1355 = vmatpush.msra.mxu0 %v482
  %1356 = vmatpush.msra.mxu0 %v481
  %1357 = vmatpush.msra.mxu0 %v480
  %1358 = vmatpush.msra.mxu0 %v479
  %1359 = vmatpush.msra.mxu0 %v478
  %1360 = vmatpush.msra.mxu0 %v477
  %1361 = vmatpush.msra.mxu0 %v476
  %1362 = vmatpush.msra.mxu0 %v475
  %1363 = vmatpush.msra.mxu0 %v474
  %1364 = vmatpush.msra.mxu0 %v473
  %1365 = vmatpush.msra.mxu0 %v472
  %1366 = vmatpush.msra.mxu0 %v471
  %1367 = vmatpush.msra.mxu0 %v470
  %1368 = vmatpush.msra.mxu0 %v469
  %1369 = vmatpush.msra.mxu0 %v468
  %1370 = vmatpush.msra.mxu0 %v467
  %1371 = vmatmul.f32.gmra.mxu0 %v22
  %v1372 = vpop.f32.mrf.mxu0
  %v1373 = vadd.f32 %v1281, %v1372
  %1374 = vmatmul.f32.gmra.mxu0 %v35
  %v1375 = vpop.f32.mrf.mxu0
  %v1376 = vadd.f32 %v1284, %v1375
  %1377 = vmatmul.f32.gmra.mxu0 %v48
  %v1378 = vpop.f32.mrf.mxu0
  %v1379 = vadd.f32 %v1287, %v1378
  %1380 = vmatmul.f32.gmra.mxu0 %v61
  %v1381 = vpop.f32.mrf.mxu0
  %v1382 = vadd.f32 %v1290, %v1381
  %1383 = vmatmul.f32.gmra.mxu0 %v74
  %v1384 = vpop.f32.mrf.mxu0
  %v1385 = vadd.f32 %v1293, %v1384
  %1386 = vmatmul.f32.gmra.mxu0 %v87
  %v1387 = vpop.f32.mrf.mxu0
  %v1388 = vadd.f32 %v1296, %v1387
  %1389 = vmatmul.f32.gmra.mxu0 %v100
  %v1390 = vpop.f32.mrf.mxu0
  %v1391 = vadd.f32 %v1299, %v1390
  %1392 = vmatmul.f32.gmra.mxu0 %v113
  %v1393 = vpop.f32.mrf.mxu0
  %v1394 = vadd.f32 %v1302, %v1393
  %1395 = vmatmul.f32.gmra.mxu0 %v126
  %v1396 = vpop.f32.mrf.mxu0
  %v1397 = vadd.f32 %v1305, %v1396
  %1398 = vmatmul.f32.gmra.mxu0 %v139
  %v1399 = vpop.f32.mrf.mxu0
  %v1400 = vadd.f32 %v1308, %v1399
  %1401 = vmatmul.f32.gmra.mxu0 %v152
  %v1402 = vpop.f32.mrf.mxu0
  %v1403 = vadd.f32 %v1311, %v1402
  %1404 = vmatmul.f32.gmra.mxu0 %v165
  %v1405 = vpop.f32.mrf.mxu0
  %v1406 = vadd.f32 %v1314, %v1405
  %1407 = vmatmul.f32.gmra.mxu0 %v178
  %v1408 = vpop.f32.mrf.mxu0
  %v1409 = vadd.f32 %v1317, %v1408
  %1410 = vmatmul.f32.gmra.mxu0 %v191
  %v1411 = vpop.f32.mrf.mxu0
  %v1412 = vadd.f32 %v1320, %v1411
  %1413 = vmatmul.f32.gmra.mxu0 %v204
  %v1414 = vpop.f32.mrf.mxu0
  %v1415 = vadd.f32 %v1323, %v1414
  %1416 = vmatmul.f32.gmra.mxu0 %v217
  %v1417 = vpop.f32.mrf.mxu0
  %v1418 = vadd.f32 %v1326, %v1417
  %1419 = vmatmul.f32.gmra.mxu0 %v230
  %v1420 = vpop.f32.mrf.mxu0
  %v1421 = vadd.f32 %v1329, %v1420
  %1422 = vmatmul.f32.gmra.mxu0 %v243
  %v1423 = vpop.f32.mrf.mxu0
  %v1424 = vadd.f32 %v1332, %v1423
  %1425 = vmatmul.f32.gmra.mxu0 %v256
  %v1426 = vpop.f32.mrf.mxu0
  %v1427 = vadd.f32 %v1335, %v1426
  %1428 = vmatmul.f32.gmra.mxu0 %v269
  %v1429 = vpop.f32.mrf.mxu0
  %v1430 = vadd.f32 %v1338, %v1429
  %1431 = vmatmul.f32.gmra.mxu0 %v282
  %v1432 = vpop.f32.mrf.mxu0
  %v1433 = vadd.f32 %v1341, %v1432
  %1434 = vmatmul.f32.gmra.mxu0 %v295
  %v1435 = vpop.f32.mrf.mxu0
  %v1436 = vadd.f32 %v1344, %v1435
  %1437 = vmatmul.f32.gmra.mxu0 %v308
  %v1438 = vpop.f32.mrf.mxu0
  %v1439 = vadd.f32 %v1347, %v1438
  %1440 = vmatmul.f32.gmra.mxu0 %v321
  %v1441 = vpop.f32.mrf.mxu0
  %v1442 = vadd.f32 %v1350, %v1441
  %1443 = vmatmul.f32.gmra.mxu0 %v334
  %v1444 = vpop.f32.mrf.mxu0
  %v1445 = vadd.f32 %v1353, %v1444
  %1446 = vdwg.mxu0
  %1447 = vmatpush.msra.mxu0 %v498
  %1448 = vmatpush.msra.mxu0 %v497
  %1449 = vmatpush.msra.mxu0 %v496
  %1450 = vmatpush.msra.mxu0 %v495
  %1451 = vmatpush.msra.mxu0 %v494
  %1452 = vmatpush.msra.mxu0 %v493
  %1453 = vmatpush.msra.mxu0 %v492
  %1454 = vmatpush.msra.mxu0 %v491
  %1455 = vmatpush.msra.mxu0 %v490
  %1456 = vmatpush.msra.mxu0 %v489
  %1457 = vmatpush.msra.mxu0 %v488
  %1458 = vmatpush.msra.mxu0 %v487
  %1459 = vmatpush.msra.mxu0 %v486
  %1460 = vmatpush.msra.mxu0 %v485
  %1461 = vmatpush.msra.mxu0 %v484
  %1462 = vmatpush.msra.mxu0 %v483
  %1463 = vmatmul.f32.gmra.mxu0 %v23
  %v1464 = vpop.f32.mrf.mxu0
  %v1465 = vadd.f32 %v1373, %v1464
  %1466 = vmatmul.f32.gmra.mxu0 %v36
  %v1467 = vpop.f32.mrf.mxu0
  %v1468 = vadd.f32 %v1376, %v1467
  %1469 = vmatmul.f32.gmra.mxu0 %v49
  %v1470 = vpop.f32.mrf.mxu0
  %v1471 = vadd.f32 %v1379, %v1470
  %1472 = vmatmul.f32.gmra.mxu0 %v62
  %v1473 = vpop.f32.mrf.mxu0
  %v1474 = vadd.f32 %v1382, %v1473
  %1475 = vmatmul.f32.gmra.mxu0 %v75
  %v1476 = vpop.f32.mrf.mxu0
  %v1477 = vadd.f32 %v1385, %v1476
  %1478 = vmatmul.f32.gmra.mxu0 %v88
  %v1479 = vpop.f32.mrf.mxu0
  %v1480 = vadd.f32 %v1388, %v1479
  %1481 = vmatmul.f32.gmra.mxu0 %v101
  %v1482 = vpop.f32.mrf.mxu0
  %v1483 = vadd.f32 %v1391, %v1482
  %1484 = vmatmul.f32.gmra.mxu0 %v114
  %v1485 = vpop.f32.mrf.mxu0
  %v1486 = vadd.f32 %v1394, %v1485
  %1487 = vmatmul.f32.gmra.mxu0 %v127
  %v1488 = vpop.f32.mrf.mxu0
  %v1489 = vadd.f32 %v1397, %v1488
  %1490 = vmatmul.f32.gmra.mxu0 %v140
  %v1491 = vpop.f32.mrf.mxu0
  %v1492 = vadd.f32 %v1400, %v1491
  %1493 = vmatmul.f32.gmra.mxu0 %v153
  %v1494 = vpop.f32.mrf.mxu0
  %v1495 = vadd.f32 %v1403, %v1494
  %1496 = vmatmul.f32.gmra.mxu0 %v166
  %v1497 = vpop.f32.mrf.mxu0
  %v1498 = vadd.f32 %v1406, %v1497
  %1499 = vmatmul.f32.gmra.mxu0 %v179
  %v1500 = vpop.f32.mrf.mxu0
  %v1501 = vadd.f32 %v1409, %v1500
  %1502 = vmatmul.f32.gmra.mxu0 %v192
  %v1503 = vpop.f32.mrf.mxu0
  %v1504 = vadd.f32 %v1412, %v1503
  %1505 = vmatmul.f32.gmra.mxu0 %v205
  %v1506 = vpop.f32.mrf.mxu0
  %v1507 = vadd.f32 %v1415, %v1506
  %1508 = vmatmul.f32.gmra.mxu0 %v218
  %v1509 = vpop.f32.mrf.mxu0
  %v1510 = vadd.f32 %v1418, %v1509
  %1511 = vmatmul.f32.gmra.mxu0 %v231
  %v1512 = vpop.f32.mrf.mxu0
  %v1513 = vadd.f32 %v1421, %v1512
  %1514 = vmatmul.f32.gmra.mxu0 %v244
  %v1515 = vpop.f32.mrf.mxu0
  %v1516 = vadd.f32 %v1424, %v1515
  %1517 = vmatmul.f32.gmra.mxu0 %v257
  %v1518 = vpop.f32.mrf.mxu0
  %v1519 = vadd.f32 %v1427, %v1518
  %1520 = vmatmul.f32.gmra.mxu0 %v270
  %v1521 = vpop.f32.mrf.mxu0
  %v1522 = vadd.f32 %v1430, %v1521
  %1523 = vmatmul.f32.gmra.mxu0 %v283
  %v1524 = vpop.f32.mrf.mxu0
  %v1525 = vadd.f32 %v1433, %v1524
  %1526 = vmatmul.f32.gmra.mxu0 %v296
  %v1527 = vpop.f32.mrf.mxu0
  %v1528 = vadd.f32 %v1436, %v1527
  %1529 = vmatmul.f32.gmra.mxu0 %v309
  %v1530 = vpop.f32.mrf.mxu0
  %v1531 = vadd.f32 %v1439, %v1530
  %1532 = vmatmul.f32.gmra.mxu0 %v322
  %v1533 = vpop.f32.mrf.mxu0
  %v1534 = vadd.f32 %v1442, %v1533
  %1535 = vmatmul.f32.gmra.mxu0 %v335
  %v1536 = vpop.f32.mrf.mxu0
  %v1537 = vadd.f32 %v1445, %v1536
  %1538 = vdwg.mxu0
  %1539 = vmatpush.msra.mxu0 %v514
  %1540 = vmatpush.msra.mxu0 %v513
  %1541 = vmatpush.msra.mxu0 %v512
  %1542 = vmatpush.msra.mxu0 %v511
  %1543 = vmatpush.msra.mxu0 %v510
  %1544 = vmatpush.msra.mxu0 %v509
  %1545 = vmatpush.msra.mxu0 %v508
  %1546 = vmatpush.msra.mxu0 %v507
  %1547 = vmatpush.msra.mxu0 %v506
  %1548 = vmatpush.msra.mxu0 %v505
  %1549 = vmatpush.msra.mxu0 %v504
  %1550 = vmatpush.msra.mxu0 %v503
  %1551 = vmatpush.msra.mxu0 %v502
  %1552 = vmatpush.msra.mxu0 %v501
  %1553 = vmatpush.msra.mxu0 %v500
  %1554 = vmatpush.msra.mxu0 %v499
  %1555 = vmatmul.f32.gmra.mxu0 %v24
  %v1556 = vpop.f32.mrf.mxu0
  %v1557 = vadd.f32 %v1465, %v1556
  %1558 = vmatmul.f32.gmra.mxu0 %v37
  %v1559 = vpop.f32.mrf.mxu0
  %v1560 = vadd.f32 %v1468, %v1559
  %1561 = vmatmul.f32.gmra.mxu0 %v50
  %v1562 = vpop.f32.mrf.mxu0
  %v1563 = vadd.f32 %v1471, %v1562
  %1564 = vmatmul.f32.gmra.mxu0 %v63
  %v1565 = vpop.f32.mrf.mxu0
  %v1566 = vadd.f32 %v1474, %v1565
  %1567 = vmatmul.f32.gmra.mxu0 %v76
  %v1568 = vpop.f32.mrf.mxu0
  %v1569 = vadd.f32 %v1477, %v1568
  %1570 = vmatmul.f32.gmra.mxu0 %v89
  %v1571 = vpop.f32.mrf.mxu0
  %v1572 = vadd.f32 %v1480, %v1571
  %1573 = vmatmul.f32.gmra.mxu0 %v102
  %v1574 = vpop.f32.mrf.mxu0
  %v1575 = vadd.f32 %v1483, %v1574
  %1576 = vmatmul.f32.gmra.mxu0 %v115
  %v1577 = vpop.f32.mrf.mxu0
  %v1578 = vadd.f32 %v1486, %v1577
  %1579 = vmatmul.f32.gmra.mxu0 %v128
  %v1580 = vpop.f32.mrf.mxu0
  %v1581 = vadd.f32 %v1489, %v1580
  %1582 = vmatmul.f32.gmra.mxu0 %v141
  %v1583 = vpop.f32.mrf.mxu0
  %v1584 = vadd.f32 %v1492, %v1583
  %1585 = vmatmul.f32.gmra.mxu0 %v154
  %v1586 = vpop.f32.mrf.mxu0
  %v1587 = vadd.f32 %v1495, %v1586
  %1588 = vmatmul.f32.gmra.mxu0 %v167
  %v1589 = vpop.f32.mrf.mxu0
  %v1590 = vadd.f32 %v1498, %v1589
  %1591 = vmatmul.f32.gmra.mxu0 %v180
  %v1592 = vpop.f32.mrf.mxu0
  %v1593 = vadd.f32 %v1501, %v1592
  %1594 = vmatmul.f32.gmra.mxu0 %v193
  %v1595 = vpop.f32.mrf.mxu0
  %v1596 = vadd.f32 %v1504, %v1595
  %1597 = vmatmul.f32.gmra.mxu0 %v206
  %v1598 = vpop.f32.mrf.mxu0
  %v1599 = vadd.f32 %v1507, %v1598
  %1600 = vmatmul.f32.gmra.mxu0 %v219
  %v1601 = vpop.f32.mrf.mxu0
  %v1602 = vadd.f32 %v1510, %v1601
  %1603 = vmatmul.f32.gmra.mxu0 %v232
  %v1604 = vpop.f32.mrf.mxu0
  %v1605 = vadd.f32 %v1513, %v1604
  %1606 = vmatmul.f32.gmra.mxu0 %v245
  %v1607 = vpop.f32.mrf.mxu0
  %v1608 = vadd.f32 %v1516, %v1607
  %1609 = vmatmul.f32.gmra.mxu0 %v258
  %v1610 = vpop.f32.mrf.mxu0
  %v1611 = vadd.f32 %v1519, %v1610
  %1612 = vmatmul.f32.gmra.mxu0 %v271
  %v1613 = vpop.f32.mrf.mxu0
  %v1614 = vadd.f32 %v1522, %v1613
  %1615 = vmatmul.f32.gmra.mxu0 %v284
  %v1616 = vpop.f32.mrf.mxu0
  %v1617 = vadd.f32 %v1525, %v1616
  %1618 = vmatmul.f32.gmra.mxu0 %v297
  %v1619 = vpop.f32.mrf.mxu0
  %v1620 = vadd.f32 %v1528, %v1619
  %1621 = vmatmul.f32.gmra.mxu0 %v310
  %v1622 = vpop.f32.mrf.mxu0
  %v1623 = vadd.f32 %v1531, %v1622
  %1624 = vmatmul.f32.gmra.mxu0 %v323
  %v1625 = vpop.f32.mrf.mxu0
  %v1626 = vadd.f32 %v1534, %v1625
  %1627 = vmatmul.f32.gmra.mxu0 %v336
  %v1628 = vpop.f32.mrf.mxu0
  %v1629 = vadd.f32 %v1537, %v1628
  %1630 = vdwg.mxu0
  %1631 = vmatpush.msra.mxu0 %v530
  %1632 = vmatpush.msra.mxu0 %v529
  %1633 = vmatpush.msra.mxu0 %v528
  %1634 = vmatpush.msra.mxu0 %v527
  %1635 = vmatpush.msra.mxu0 %v526
  %1636 = vmatpush.msra.mxu0 %v525
  %1637 = vmatpush.msra.mxu0 %v524
  %1638 = vmatpush.msra.mxu0 %v523
  %1639 = vmatpush.msra.mxu0 %v522
  %1640 = vmatpush.msra.mxu0 %v521
  %1641 = vmatpush.msra.mxu0 %v520
  %1642 = vmatpush.msra.mxu0 %v519
  %1643 = vmatpush.msra.mxu0 %v518
  %1644 = vmatpush.msra.mxu0 %v517
  %1645 = vmatpush.msra.mxu0 %v516
  %1646 = vmatpush.msra.mxu0 %v515
  %1647 = vmatmul.f32.gmra.mxu0 %v25
  %v1648 = vpop.f32.mrf.mxu0
  %v1649 = vadd.f32 %v1557, %v1648
  %1650 = vmatmul.f32.gmra.mxu0 %v38
  %v1651 = vpop.f32.mrf.mxu0
  %v1652 = vadd.f32 %v1560, %v1651
  %1653 = vmatmul.f32.gmra.mxu0 %v51
  %v1654 = vpop.f32.mrf.mxu0
  %v1655 = vadd.f32 %v1563, %v1654
  %1656 = vmatmul.f32.gmra.mxu0 %v64
  %v1657 = vpop.f32.mrf.mxu0
  %v1658 = vadd.f32 %v1566, %v1657
  %1659 = vmatmul.f32.gmra.mxu0 %v77
  %v1660 = vpop.f32.mrf.mxu0
  %v1661 = vadd.f32 %v1569, %v1660
  %1662 = vmatmul.f32.gmra.mxu0 %v90
  %v1663 = vpop.f32.mrf.mxu0
  %v1664 = vadd.f32 %v1572, %v1663
  %1665 = vmatmul.f32.gmra.mxu0 %v103
  %v1666 = vpop.f32.mrf.mxu0
  %v1667 = vadd.f32 %v1575, %v1666
  %1668 = vmatmul.f32.gmra.mxu0 %v116
  %v1669 = vpop.f32.mrf.mxu0
  %v1670 = vadd.f32 %v1578, %v1669
  %1671 = vmatmul.f32.gmra.mxu0 %v129
  %v1672 = vpop.f32.mrf.mxu0
  %v1673 = vadd.f32 %v1581, %v1672
  %1674 = vmatmul.f32.gmra.mxu0 %v142
  %v1675 = vpop.f32.mrf.mxu0
  %v1676 = vadd.f32 %v1584, %v1675
  %1677 = vmatmul.f32.gmra.mxu0 %v155
  %v1678 = vpop.f32.mrf.mxu0
  %v1679 = vadd.f32 %v1587, %v1678
  %1680 = vmatmul.f32.gmra.mxu0 %v168
  %v1681 = vpop.f32.mrf.mxu0
  %v1682 = vadd.f32 %v1590, %v1681
  %1683 = vmatmul.f32.gmra.mxu0 %v181
  %v1684 = vpop.f32.mrf.mxu0
  %v1685 = vadd.f32 %v1593, %v1684
  %1686 = vmatmul.f32.gmra.mxu0 %v194
  %v1687 = vpop.f32.mrf.mxu0
  %v1688 = vadd.f32 %v1596, %v1687
  %1689 = vmatmul.f32.gmra.mxu0 %v207
  %v1690 = vpop.f32.mrf.mxu0
  %v1691 = vadd.f32 %v1599, %v1690
  %1692 = vmatmul.f32.gmra.mxu0 %v220
  %v1693 = vpop.f32.mrf.mxu0
  %v1694 = vadd.f32 %v1602, %v1693
  %1695 = vmatmul.f32.gmra.mxu0 %v233
  %v1696 = vpop.f32.mrf.mxu0
  %v1697 = vadd.f32 %v1605, %v1696
  %1698 = vmatmul.f32.gmra.mxu0 %v246
  %v1699 = vpop.f32.mrf.mxu0
  %v1700 = vadd.f32 %v1608, %v1699
  %1701 = vmatmul.f32.gmra.mxu0 %v259
  %v1702 = vpop.f32.mrf.mxu0
  %v1703 = vadd.f32 %v1611, %v1702
  %1704 = vmatmul.f32.gmra.mxu0 %v272
  %v1705 = vpop.f32.mrf.mxu0
  %v1706 = vadd.f32 %v1614, %v1705
  %1707 = vmatmul.f32.gmra.mxu0 %v285
  %v1708 = vpop.f32.mrf.mxu0
  %v1709 = vadd.f32 %v1617, %v1708
  %1710 = vmatmul.f32.gmra.mxu0 %v298
  %v1711 = vpop.f32.mrf.mxu0
  %v1712 = vadd.f32 %v1620, %v1711
  %1713 = vmatmul.f32.gmra.mxu0 %v311
  %v1714 = vpop.f32.mrf.mxu0
  %v1715 = vadd.f32 %v1623, %v1714
  %1716 = vmatmul.f32.gmra.mxu0 %v324
  %v1717 = vpop.f32.mrf.mxu0
  %v1718 = vadd.f32 %v1626, %v1717
  %1719 = vmatmul.f32.gmra.mxu0 %v337
  %v1720 = vpop.f32.mrf.mxu0
  %v1721 = vadd.f32 %v1629, %v1720
  %1722 = vdwg.mxu0
  %1723 = vmatpush.msra.mxu0 0.0
  %1724 = vmatpush.msra.mxu0 0.0
  %1725 = vmatpush.msra.mxu0 0.0
  %1726 = vmatpush.msra.mxu0 0.0
  %1727 = vmatpush.msra.mxu0 0.0
  %1728 = vmatpush.msra.mxu0 0.0
  %1729 = vmatpush.msra.mxu0 0.0
  %1730 = vmatpush.msra.mxu0 0.0
  %1731 = vmatpush.msra.mxu0 %v538
  %1732 = vmatpush.msra.mxu0 %v537
  %1733 = vmatpush.msra.mxu0 %v536
  %1734 = vmatpush.msra.mxu0 %v535
  %1735 = vmatpush.msra.mxu0 %v534
  %1736 = vmatpush.msra.mxu0 %v533
  %1737 = vmatpush.msra.mxu0 %v532
  %1738 = vmatpush.msra.mxu0 %v531
  %1739 = vmatmul.f32.gmra.mxu0 %v545
  %v1740 = vpop.f32.mrf.mxu0
  %v1741 = vadd.f32 %v1649, %v1740
  %1742 = vmatmul.f32.gmra.mxu0 %v548
  %v1743 = vpop.f32.mrf.mxu0
  %v1744 = vadd.f32 %v1652, %v1743
  %1745 = vmatmul.f32.gmra.mxu0 %v551
  %v1746 = vpop.f32.mrf.mxu0
  %v1747 = vadd.f32 %v1655, %v1746
  %1748 = vmatmul.f32.gmra.mxu0 %v554
  %v1749 = vpop.f32.mrf.mxu0
  %v1750 = vadd.f32 %v1658, %v1749
  %1751 = vmatmul.f32.gmra.mxu0 %v557
  %v1752 = vpop.f32.mrf.mxu0
  %v1753 = vadd.f32 %v1661, %v1752
  %1754 = vmatmul.f32.gmra.mxu0 %v560
  %v1755 = vpop.f32.mrf.mxu0
  %v1756 = vadd.f32 %v1664, %v1755
  %1757 = vmatmul.f32.gmra.mxu0 %v563
  %v1758 = vpop.f32.mrf.mxu0
  %v1759 = vadd.f32 %v1667, %v1758
  %1760 = vmatmul.f32.gmra.mxu0 %v566
  %v1761 = vpop.f32.mrf.mxu0
  %v1762 = vadd.f32 %v1670, %v1761
  %1763 = vmatmul.f32.gmra.mxu0 %v569
  %v1764 = vpop.f32.mrf.mxu0
  %v1765 = vadd.f32 %v1673, %v1764
  %1766 = vmatmul.f32.gmra.mxu0 %v572
  %v1767 = vpop.f32.mrf.mxu0
  %v1768 = vadd.f32 %v1676, %v1767
  %1769 = vmatmul.f32.gmra.mxu0 %v575
  %v1770 = vpop.f32.mrf.mxu0
  %v1771 = vadd.f32 %v1679, %v1770
  %1772 = vmatmul.f32.gmra.mxu0 %v578
  %v1773 = vpop.f32.mrf.mxu0
  %v1774 = vadd.f32 %v1682, %v1773
  %1775 = vmatmul.f32.gmra.mxu0 %v581
  %v1776 = vpop.f32.mrf.mxu0
  %v1777 = vadd.f32 %v1685, %v1776
  %1778 = vmatmul.f32.gmra.mxu0 %v584
  %v1779 = vpop.f32.mrf.mxu0
  %v1780 = vadd.f32 %v1688, %v1779
  %1781 = vmatmul.f32.gmra.mxu0 %v587
  %v1782 = vpop.f32.mrf.mxu0
  %v1783 = vadd.f32 %v1691, %v1782
  %1784 = vmatmul.f32.gmra.mxu0 %v590
  %v1785 = vpop.f32.mrf.mxu0
  %v1786 = vadd.f32 %v1694, %v1785
  %1787 = vmatmul.f32.gmra.mxu0 %v593
  %v1788 = vpop.f32.mrf.mxu0
  %v1789 = vadd.f32 %v1697, %v1788
  %1790 = vmatmul.f32.gmra.mxu0 %v596
  %v1791 = vpop.f32.mrf.mxu0
  %v1792 = vadd.f32 %v1700, %v1791
  %1793 = vmatmul.f32.gmra.mxu0 %v599
  %v1794 = vpop.f32.mrf.mxu0
  %v1795 = vadd.f32 %v1703, %v1794
  %1796 = vmatmul.f32.gmra.mxu0 %v602
  %v1797 = vpop.f32.mrf.mxu0
  %v1798 = vadd.f32 %v1706, %v1797
  %1799 = vmatmul.f32.gmra.mxu0 %v605
  %v1800 = vpop.f32.mrf.mxu0
  %v1801 = vadd.f32 %v1709, %v1800
  %1802 = vmatmul.f32.gmra.mxu0 %v608
  %v1803 = vpop.f32.mrf.mxu0
  %v1804 = vadd.f32 %v1712, %v1803
  %1805 = vmatmul.f32.gmra.mxu0 %v611
  %v1806 = vpop.f32.mrf.mxu0
  %v1807 = vadd.f32 %v1715, %v1806
  %1808 = vmatmul.f32.gmra.mxu0 %v614
  %v1809 = vpop.f32.mrf.mxu0
  %v1810 = vadd.f32 %v1718, %v1809
  %1811 = vmatmul.f32.gmra.mxu0 %v617
  %v1812 = vpop.f32.mrf.mxu0
  %v1813 = vadd.f32 %v1721, %v1812
  %1814 = vdwg.mxu0
  %1815 = vst.msk [vmem:[#allocation2] sm:$0xff] %vm543, %v1741
  %1816 = vst.msk [vmem:[#allocation2 + $0x8] sm:$0xff] %vm543, %v1744
  %1817 = vst.msk [vmem:[#allocation2 + $0x10] sm:$0xff] %vm543, %v1747
  %1818 = vst.msk [vmem:[#allocation2 + $0x18] sm:$0xff] %vm543, %v1750
  %1819 = vst.msk [vmem:[#allocation2 + $0x20] sm:$0xff] %vm543, %v1753
  %1820 = vst.msk [vmem:[#allocation2 + $0x28] sm:$0xff] %vm543, %v1756
  %1821 = vst.msk [vmem:[#allocation2 + $0x30] sm:$0xff] %vm543, %v1759
  %1822 = vst.msk [vmem:[#allocation2 + $0x38] sm:$0xff] %vm543, %v1762
  %1823 = vst.msk [vmem:[#allocation2 + $0x40] sm:$0xff] %vm543, %v1765
  %1824 = vst.msk [vmem:[#allocation2 + $0x48] sm:$0xff] %vm543, %v1768
  %1825 = vst.msk [vmem:[#allocation2 + $0x50] sm:$0xff] %vm543, %v1771
  %1826 = vst.msk [vmem:[#allocation2 + $0x58] sm:$0xff] %vm543, %v1774
  %1827 = vst.msk [vmem:[#allocation2 + $0x60] sm:$0xff] %vm543, %v1777
  %1828 = vst.msk [vmem:[#allocation2 + $0x68] sm:$0xff] %vm543, %v1780
  %1829 = vst.msk [vmem:[#allocation2 + $0x70] sm:$0xff] %vm543, %v1783
  %1830 = vst.msk [vmem:[#allocation2 + $0x78] sm:$0xff] %vm543, %v1786
  %1831 = vst.msk [vmem:[#allocation2 + $0x80] sm:$0xff] %vm543, %v1789
  %1832 = vst.msk [vmem:[#allocation2 + $0x88] sm:$0xff] %vm543, %v1792
  %1833 = vst.msk [vmem:[#allocation2 + $0x90] sm:$0xff] %vm543, %v1795
  %1834 = vst.msk [vmem:[#allocation2 + $0x98] sm:$0xff] %vm543, %v1798
  %1835 = vst.msk [vmem:[#allocation2 + $0xa0] sm:$0xff] %vm543, %v1801
  %1836 = vst.msk [vmem:[#allocation2 + $0xa8] sm:$0xff] %vm543, %v1804
  %1837 = vst.msk [vmem:[#allocation2 + $0xb0] sm:$0xff] %vm543, %v1807
  %1838 = vst.msk [vmem:[#allocation2 + $0xb8] sm:$0xff] %vm543, %v1810
  %1839 = vst.msk [vmem:[#allocation2 + $0xc0] sm:$0xff] %vm543, %v1813
  %v1840 = vld [vmem:[#allocation2] sm:$0xff]
  %v1841 = vld [vmem:[#allocation2 + $0x8] sm:$0xff]
  %v1842 = vld [vmem:[#allocation2 + $0x10] sm:$0xff]
  %v1843 = vld [vmem:[#allocation2 + $0x18] sm:$0x1]
  %v1844 = vld [vmem:[#allocation2 + $0x19] sm:$0xff]
  %v1845 = vld [vmem:[#allocation2 + $0x21] sm:$0xff]
  %v1846 = vld [vmem:[#allocation2 + $0x29] sm:$0xff]
  %v1847 = vld [vmem:[#allocation2 + $0x31] sm:$0x1]
  %v1848 = vmax.f32 %v1840, %v1844
  %v1849 = vmax.f32 %v1841, %v1845
  %v1850 = vmax.f32 %v1842, %v1846
  %v1851 = vmax.f32 %v1843, %v1847
  %v1852 = vld [vmem:[#allocation2 + $0x32] sm:$0xff]
  %v1853 = vld [vmem:[#allocation2 + $0x3a] sm:$0xff]
  %v1854 = vld [vmem:[#allocation2 + $0x42] sm:$0xff]
  %v1855 = vld [vmem:[#allocation2 + $0x4a] sm:$0x1]
  %v1856 = vmax.f32 %v1848, %v1852
  %v1857 = vmax.f32 %v1849, %v1853
  %v1858 = vmax.f32 %v1850, %v1854
  %v1859 = vmax.f32 %v1851, %v1855
  %v1860 = vld [vmem:[#allocation2 + $0x4b] sm:$0xff]
  %v1861 = vld [vmem:[#allocation2 + $0x53] sm:$0xff]
  %v1862 = vld [vmem:[#allocation2 + $0x5b] sm:$0xff]
  %v1863 = vld [vmem:[#allocation2 + $0x63] sm:$0x1]
  %v1864 = vmax.f32 %v1856, %v1860
  %v1865 = vmax.f32 %v1857, %v1861
  %v1866 = vmax.f32 %v1858, %v1862
  %v1867 = vmax.f32 %v1859, %v1863
  %v1868 = vmax.f32 %v1864, 0.0
  %v1869 = vmax.f32 %v1865, 0.0
  %v1870 = vmax.f32 %v1866, 0.0
  %v1871 = vmax.f32 %v1867, 0.0
  %1872 = vst.msk [vmem:[%s3] sm:$0xff] %vm543, %v1868
  %1873 = vst.msk [vmem:[%s3 + $0x8] sm:$0xff] %vm543, %v1869
  %1874 = vst.msk [vmem:[%s3 + $0x10] sm:$0xff] %vm543, %v1870
  %vm1875 = vcmask 516096
  %1876 = vst.msk [vmem:[%s3 + $0x18] sm:$0x1] %vm1875, %v1871
  %v1877 = vld [vmem:[#allocation2 + $0x64] sm:$0xff]
  %v1878 = vld [vmem:[#allocation2 + $0x6c] sm:$0xff]
  %v1879 = vld [vmem:[#allocation2 + $0x74] sm:$0xff]
  %v1880 = vld [vmem:[#allocation2 + $0x7c] sm:$0x1]
  %v1881 = vld [vmem:[#allocation2 + $0x7d] sm:$0xff]
  %v1882 = vld [vmem:[#allocation2 + $0x85] sm:$0xff]
  %v1883 = vld [vmem:[#allocation2 + $0x8d] sm:$0xff]
  %v1884 = vld [vmem:[#allocation2 + $0x95] sm:$0x1]
  %v1885 = vmax.f32 %v1877, %v1881
  %v1886 = vmax.f32 %v1878, %v1882
  %v1887 = vmax.f32 %v1879, %v1883
  %v1888 = vmax.f32 %v1880, %v1884
  %v1889 = vld [vmem:[#allocation2 + $0x96] sm:$0xff]
  %v1890 = vld [vmem:[#allocation2 + $0x9e] sm:$0xff]
  %v1891 = vld [vmem:[#allocation2 + $0xa6] sm:$0xff]
  %v1892 = vld [vmem:[#allocation2 + $0xae] sm:$0x1]
  %v1893 = vmax.f32 %v1885, %v1889
  %v1894 = vmax.f32 %v1886, %v1890
  %v1895 = vmax.f32 %v1887, %v1891
  %v1896 = vmax.f32 %v1888, %v1892
  %v1897 = vld [vmem:[#allocation2 + $0xaf] sm:$0xff]
  %v1898 = vld [vmem:[#allocation2 + $0xb7] sm:$0xff]
  %v1899 = vld [vmem:[#allocation2 + $0xbf] sm:$0xff]
  %v1900 = vld [vmem:[#allocation2 + $0xc7] sm:$0x1]
  %v1901 = vmax.f32 %v1893, %v1897
  %v1902 = vmax.f32 %v1894, %v1898
  %v1903 = vmax.f32 %v1895, %v1899
  %v1904 = vmax.f32 %v1896, %v1900
  %v1905 = vmax.f32 %v1901, 0.0
  %v1906 = vmax.f32 %v1902, 0.0
  %v1907 = vmax.f32 %v1903, 0.0
  %v1908 = vmax.f32 %v1904, 0.0
  %1909 = vst.msk [vmem:[%s3 + $0x19] sm:$0xff] %vm543, %v1905
  %1910 = vst.msk [vmem:[%s3 + $0x21] sm:$0xff] %vm543, %v1906
  %1911 = vst.msk [vmem:[%s3 + $0x29] sm:$0xff] %vm543, %v1907
  %1912 = vst.msk [vmem:[%s3 + $0x31] sm:$0x1] %vm1875, %v1908
  // Predicated region
  $region14: #{cnn_cifar10_forward.4} parent=0 // pred_check
    _
  $region15: #{cnn_cifar10_forward.4} parent=0 // pred_check_branch
    %1914 = sbr.rel (0) target = $region17
  $region16: #{cnn_cifar10_forward.4} parent=0 // pred_region
    _
  $region17: #{cnn_cifar10_forward.4} parent=0 // pred_fallthru
    _
  // Predicated region
  $region18: #{cnn_cifar10_forward.4} parent=0 // pred_check
    _
  $region19: #{cnn_cifar10_forward.4} parent=0 // pred_check_branch
    %1916 = sbr.rel (0) target = $region21
  $region20: #{cnn_cifar10_forward.4} parent=0 // pred_region
    _
  $region21: #{cnn_cifar10_forward.4} parent=0 // pred_fallthru
    _

// kernel: cnn_cifar10_forward.5
$region0: #{cnn_cifar10_forward.5}
  #allocation0 [shape = 'u32[]', space=smem, size = 0x4, offset = 0x4, fixed_abs, tag = 'smem constant byte address 0x4 - core index']
  #allocation1 [shape = 'u32[72,128]{1,0:T(1,128)}', space=vmem, size = 0x9000, scoped, tag = 'internal scratch']
  %s0 = inlined_call_operand.vmem [shape: f32[2,1600], index: 0, kind: input, shape index: {}]
  %s1 = inlined_call_operand.vmem [shape: f32[1600,384], index: 1, kind: input, shape index: {}]
  %s2 = inlined_call_operand.vmem [shape: f32[1,384], index: 2, kind: input, shape index: {}]
  %s3 = inlined_call_operand.vmem [shape: f32[384,192], index: 3, kind: input, shape index: {}]
  %s4 = inlined_call_operand.vmem [shape: f32[1,192], index: 4, kind: input, shape index: {}]
  %s5 = inlined_call_operand.vmem [shape: f32[192,10], index: 5, kind: input, shape index: {}]
  %s6 = inlined_call_operand.vmem [shape: f32[1,10], index: 6, kind: input, shape index: {}]
  %s7 = inlined_call_operand.hbm [shape: f32[2,10], index: 7, kind: output, shape index: {}]
  %s8 = sld [smem:[#allocation0]]
  $region38: #{cnn_cifar10_forward.5} parent=0
    _
  %s10 = ssub.s32 1, %s8
  %s11 = scalar_select 0, %s10, %s8
  $region1: #{cnn_cifar10_forward.5} parent=0
    #allocation2 [shape = 'u8[1024]{0}', space=vmem, size = 0x400, scoped, tag = 'output window, operand 0, single buffered']
    #allocation3 [shape = 's32[1]{0}', space=sflag, size = 0x4, scoped, tag = 'scoped memory for cnn_cifar10_forward.5']
    %12 = vsyncpa [#allocation3], 0
    // Predicated region
    $region2: #{cnn_cifar10_forward.5} parent=1 // pred_check
      _
    $region3: #{cnn_cifar10_forward.5} parent=1 // pred_check_branch
      %14 = sbr.rel (0) target = $region5
    $region4: #{cnn_cifar10_forward.5} parent=1 // pred_region
      _
    $region5: #{cnn_cifar10_forward.5} parent=1 // pred_fallthru
      _
    // Predicated region
    $region6: #{cnn_cifar10_forward.5} parent=1 // pred_check
      _
    $region7: #{cnn_cifar10_forward.5} parent=1 // pred_check_branch
      %16 = sbr.rel (0) target = $region9
    $region8: #{cnn_cifar10_forward.5} parent=1 // pred_region
      _
    $region9: #{cnn_cifar10_forward.5} parent=1 // pred_fallthru
      _
    // Predicated region
    $region10: #{cnn_cifar10_forward.5} parent=1 // pred_check
      _
    $region11: #{cnn_cifar10_forward.5} parent=1 // pred_check_branch
      %18 = sbr.rel (0) target = $region13
    $region12: #{cnn_cifar10_forward.5} parent=1 // pred_region
      _
    $region13: #{cnn_cifar10_forward.5} parent=1 // pred_fallthru
      _
    // Predicated region
    $region14: #{cnn_cifar10_forward.5} parent=1 // pred_check
      _
    $region15: #{cnn_cifar10_forward.5} parent=1 // pred_check_branch
      %20 = sbr.rel (0) target = $region17
    $region16: #{cnn_cifar10_forward.5} parent=1 // pred_region
      _
    $region17: #{cnn_cifar10_forward.5} parent=1 // pred_fallthru
      _
    // Predicated region
    $region18: #{cnn_cifar10_forward.5} parent=1 // pred_check
      _
    $region19: #{cnn_cifar10_forward.5} parent=1 // pred_check_branch
      %22 = sbr.rel (0) target = $region21
    $region20: #{cnn_cifar10_forward.5} parent=1 // pred_region
      _
    $region21: #{cnn_cifar10_forward.5} parent=1 // pred_fallthru
      _
    // Predicated region
    $region22: #{cnn_cifar10_forward.5} parent=1 // pred_check
      _
    $region23: #{cnn_cifar10_forward.5} parent=1 // pred_check_branch
      %24 = sbr.rel (0) target = $region25
    $region24: #{cnn_cifar10_forward.5} parent=1 // pred_region
      _
    $region25: #{cnn_cifar10_forward.5} parent=1 // pred_fallthru
      _
    // Predicated region
    $region26: #{cnn_cifar10_forward.5} parent=1 // pred_check
      _
    $region27: #{cnn_cifar10_forward.5} parent=1 // pred_check_branch
      %26 = sbr.rel (0) target = $region29
    $region28: #{cnn_cifar10_forward.5} parent=1 // pred_region
      _
    $region29: #{cnn_cifar10_forward.5} parent=1 // pred_fallthru
      _
    %v27 = vld [vmem:[%s0] sm:$0xff]
    %v28 = vld [vmem:[%s0 + $0x8] sm:$0xff]
    %v29 = vld [vmem:[%s0 + $0x10] sm:$0xff]
    %v30 = vld [vmem:[%s0 + $0x18] sm:$0x3]
    %v31 = vld [vmem:[%s1] sm:$0xff]
    %v32 = vld [vmem:[%s1 + $0x8] sm:$0xff]
    %v33 = vld [vmem:[%s1 + $0x10] sm:$0xff]
    %v34 = vld [vmem:[%s1 + $0x18] sm:$0xff]
    %v35 = vld [vmem:[%s1 + $0x20] sm:$0xff]
    %v36 = vld [vmem:[%s1 + $0x28] sm:$0xff]
    %v37 = vld [vmem:[%s1 + $0x30] sm:$0xff]
    %v38 = vld [vmem:[%s1 + $0x38] sm:$0xff]
    %v39 = vld [vmem:[%s1 + $0x40] sm:$0xff]
    %v40 = vld [vmem:[%s1 + $0x48] sm:$0xff]
    %v41 = vld [vmem:[%s1 + $0x50] sm:$0xff]
    %v42 = vld [vmem:[%s1 + $0x58] sm:$0xff]
    %v43 = vld [vmem:[%s1 + $0x60] sm:$0xff]
    %v44 = vld [vmem:[%s1 + $0x68] sm:$0xff]
    %v45 = vld [vmem:[%s1 + $0x70] sm:$0xff]
    %v46 = vld [vmem:[%s1 + $0x78] sm:$0xff]
    %v47 = vld [vmem:[%s1 + $0x80] sm:$0xff]
    %v48 = vld [vmem:[%s1 + $0x88] sm:$0xff]
    %v49 = vld [vmem:[%s1 + $0x90] sm:$0xff]
    %v50 = vld [vmem:[%s1 + $0x98] sm:$0xff]
    %v51 = vld [vmem:[%s1 + $0xa0] sm:$0xff]
    %v52 = vld [vmem:[%s1 + $0xa8] sm:$0xff]
    %v53 = vld [vmem:[%s1 + $0xb0] sm:$0xff]
    %v54 = vld [vmem:[%s1 + $0xb8] sm:$0xff]
    %v55 = vld [vmem:[%s1 + $0xc0] sm:$0xff]
    %v56 = vld [vmem:[%s1 + $0xc8] sm:$0xff]
    %v57 = vld [vmem:[%s1 + $0xd0] sm:$0xff]
    %v58 = vld [vmem:[%s1 + $0xd8] sm:$0xff]
    %v59 = vld [vmem:[%s1 + $0xe0] sm:$0xff]
    %v60 = vld [vmem:[%s1 + $0xe8] sm:$0xff]
    %v61 = vld [vmem:[%s1 + $0xf0] sm:$0xff]
    %v62 = vld [vmem:[%s1 + $0xf8] sm:$0xff]
    %v63 = vld [vmem:[%s1 + $0x100] sm:$0xff]
    %v64 = vld [vmem:[%s1 + $0x108] sm:$0xff]
    %v65 = vld [vmem:[%s1 + $0x110] sm:$0xff]
    %v66 = vld [vmem:[%s1 + $0x118] sm:$0xff]
    %v67 = vld [vmem:[%s1 + $0x120] sm:$0xff]
    %v68 = vld [vmem:[%s1 + $0x128] sm:$0xff]
    %v69 = vld [vmem:[%s1 + $0x130] sm:$0xff]
    %v70 = vld [vmem:[%s1 + $0x138] sm:$0xff]
    %v71 = vld [vmem:[%s1 + $0x140] sm:$0xff]
    %v72 = vld [vmem:[%s1 + $0x148] sm:$0xff]
    %v73 = vld [vmem:[%s1 + $0x150] sm:$0xff]
    %v74 = vld [vmem:[%s1 + $0x158] sm:$0xff]
    %v75 = vld [vmem:[%s1 + $0x160] sm:$0xff]
    %v76 = vld [vmem:[%s1 + $0x168] sm:$0xff]
    %v77 = vld [vmem:[%s1 + $0x170] sm:$0xff]
    %v78 = vld [vmem:[%s1 + $0x178] sm:$0xff]
    %v79 = vld [vmem:[%s1 + $0x180] sm:$0xff]
    %v80 = vld [vmem:[%s1 + $0x188] sm:$0xff]
    %v81 = vld [vmem:[%s1 + $0x190] sm:$0xff]
    %v82 = vld [vmem:[%s1 + $0x198] sm:$0xff]
    %v83 = vld [vmem:[%s1 + $0x1a0] sm:$0xff]
    %v84 = vld [vmem:[%s1 + $0x1a8] sm:$0xff]
    %v85 = vld [vmem:[%s1 + $0x1b0] sm:$0xff]
    %v86 = vld [vmem:[%s1 + $0x1b8] sm:$0xff]
    %v87 = vld [vmem:[%s1 + $0x1c0] sm:$0xff]
    %v88 = vld [vmem:[%s1 + $0x1c8] sm:$0xff]
    %v89 = vld [vmem:[%s1 + $0x1d0] sm:$0xff]
    %v90 = vld [vmem:[%s1 + $0x1d8] sm:$0xff]
    %v91 = vld [vmem:[%s1 + $0x1e0] sm:$0xff]
    %v92 = vld [vmem:[%s1 + $0x1e8] sm:$0xff]
    %v93 = vld [vmem:[%s1 + $0x1f0] sm:$0xff]
    %v94 = vld [vmem:[%s1 + $0x1f8] sm:$0xff]
    %v95 = vld [vmem:[%s1 + $0x200] sm:$0xff]
    %v96 = vld [vmem:[%s1 + $0x208] sm:$0xff]
    %v97 = vld [vmem:[%s1 + $0x210] sm:$0xff]
    %v98 = vld [vmem:[%s1 + $0x218] sm:$0xff]
    %v99 = vld [vmem:[%s1 + $0x220] sm:$0xff]
    %v100 = vld [vmem:[%s1 + $0x228] sm:$0xff]
    %v101 = vld [vmem:[%s1 + $0x230] sm:$0xff]
    %v102 = vld [vmem:[%s1 + $0x238] sm:$0xff]
    %v103 = vld [vmem:[%s1 + $0x240] sm:$0xff]
    %v104 = vld [vmem:[%s1 + $0x248] sm:$0xff]
    %v105 = vld [vmem:[%s1 + $0x250] sm:$0xff]
    %v106 = vld [vmem:[%s1 + $0x258] sm:$0xff]
    %v107 = vld [vmem:[%s1 + $0x260] sm:$0xff]
    %v108 = vld [vmem:[%s1 + $0x268] sm:$0xff]
    %v109 = vld [vmem:[%s1 + $0x270] sm:$0xff]
    %v110 = vld [vmem:[%s1 + $0x278] sm:$0xff]
    %v111 = vld [vmem:[%s1 + $0x280] sm:$0xff]
    %v112 = vld [vmem:[%s1 + $0x288] sm:$0xff]
    %v113 = vld [vmem:[%s1 + $0x290] sm:$0xff]
    %v114 = vld [vmem:[%s1 + $0x298] sm:$0xff]
    %v115 = vld [vmem:[%s1 + $0x2a0] sm:$0xff]
    %v116 = vld [vmem:[%s1 + $0x2a8] sm:$0xff]
    %v117 = vld [vmem:[%s1 + $0x2b0] sm:$0xff]
    %v118 = vld [vmem:[%s1 + $0x2b8] sm:$0xff]
    %v119 = vld [vmem:[%s1 + $0x2c0] sm:$0xff]
    %v120 = vld [vmem:[%s1 + $0x2c8] sm:$0xff]
    %v121 = vld [vmem:[%s1 + $0x2d0] sm:$0xff]
    %v122 = vld [vmem:[%s1 + $0x2d8] sm:$0xff]
    %v123 = vld [vmem:[%s1 + $0x2e0] sm:$0xff]
    %v124 = vld [vmem:[%s1 + $0x2e8] sm:$0xff]
    %v125 = vld [vmem:[%s1 + $0x2f0] sm:$0xff]
    %v126 = vld [vmem:[%s1 + $0x2f8] sm:$0xff]
    %v127 = vld [vmem:[%s1 + $0x300] sm:$0xff]
    %v128 = vld [vmem:[%s1 + $0x308] sm:$0xff]
    %v129 = vld [vmem:[%s1 + $0x310] sm:$0xff]
    %v130 = vld [vmem:[%s1 + $0x318] sm:$0xff]
    %v131 = vld [vmem:[%s1 + $0x320] sm:$0xff]
    %v132 = vld [vmem:[%s1 + $0x328] sm:$0xff]
    %v133 = vld [vmem:[%s1 + $0x330] sm:$0xff]
    %v134 = vld [vmem:[%s1 + $0x338] sm:$0xff]
    %v135 = vld [vmem:[%s1 + $0x340] sm:$0xff]
    %v136 = vld [vmem:[%s1 + $0x348] sm:$0xff]
    %v137 = vld [vmem:[%s1 + $0x350] sm:$0xff]
    %v138 = vld [vmem:[%s1 + $0x358] sm:$0xff]
    %v139 = vld [vmem:[%s1 + $0x360] sm:$0xff]
    %v140 = vld [vmem:[%s1 + $0x368] sm:$0xff]
    %v141 = vld [vmem:[%s1 + $0x370] sm:$0xff]
    %v142 = vld [vmem:[%s1 + $0x378] sm:$0xff]
    %v143 = vld [vmem:[%s1 + $0x380] sm:$0xff]
    %v144 = vld [vmem:[%s1 + $0x388] sm:$0xff]
    %v145 = vld [vmem:[%s1 + $0x390] sm:$0xff]
    %v146 = vld [vmem:[%s1 + $0x398] sm:$0xff]
    %v147 = vld [vmem:[%s1 + $0x3a0] sm:$0xff]
    %v148 = vld [vmem:[%s1 + $0x3a8] sm:$0xff]
    %v149 = vld [vmem:[%s1 + $0x3b0] sm:$0xff]
    %v150 = vld [vmem:[%s1 + $0x3b8] sm:$0xff]
    %v151 = vld [vmem:[%s1 + $0x3c0] sm:$0xff]
    %v152 = vld [vmem:[%s1 + $0x3c8] sm:$0xff]
    %v153 = vld [vmem:[%s1 + $0x3d0] sm:$0xff]
    %v154 = vld [vmem:[%s1 + $0x3d8] sm:$0xff]
    %v155 = vld [vmem:[%s1 + $0x3e0] sm:$0xff]
    %v156 = vld [vmem:[%s1 + $0x3e8] sm:$0xff]
    %v157 = vld [vmem:[%s1 + $0x3f0] sm:$0xff]
    %v158 = vld [vmem:[%s1 + $0x3f8] sm:$0xff]
    %v159 = vld [vmem:[%s1 + $0x400] sm:$0xff]
    %v160 = vld [vmem:[%s1 + $0x408] sm:$0xff]
    %v161 = vld [vmem:[%s1 + $0x410] sm:$0xff]
    %v162 = vld [vmem:[%s1 + $0x418] sm:$0xff]
    %v163 = vld [vmem:[%s1 + $0x420] sm:$0xff]
    %v164 = vld [vmem:[%s1 + $0x428] sm:$0xff]
    %v165 = vld [vmem:[%s1 + $0x430] sm:$0xff]
    %v166 = vld [vmem:[%s1 + $0x438] sm:$0xff]
    %v167 = vld [vmem:[%s1 + $0x440] sm:$0xff]
    %v168 = vld [vmem:[%s1 + $0x448] sm:$0xff]
    %v169 = vld [vmem:[%s1 + $0x450] sm:$0xff]
    %v170 = vld [vmem:[%s1 + $0x458] sm:$0xff]
    %v171 = vld [vmem:[%s1 + $0x460] sm:$0xff]
    %v172 = vld [vmem:[%s1 + $0x468] sm:$0xff]
    %v173 = vld [vmem:[%s1 + $0x470] sm:$0xff]
    %v174 = vld [vmem:[%s1 + $0x478] sm:$0xff]
    %v175 = vld [vmem:[%s1 + $0x480] sm:$0xff]
    %v176 = vld [vmem:[%s1 + $0x488] sm:$0xff]
    %v177 = vld [vmem:[%s1 + $0x490] sm:$0xff]
    %v178 = vld [vmem:[%s1 + $0x498] sm:$0xff]
    %v179 = vld [vmem:[%s1 + $0x4a0] sm:$0xff]
    %v180 = vld [vmem:[%s1 + $0x4a8] sm:$0xff]
    %v181 = vld [vmem:[%s1 + $0x4b0] sm:$0xff]
    %v182 = vld [vmem:[%s1 + $0x4b8] sm:$0xff]
    %v183 = vld [vmem:[%s1 + $0x4c0] sm:$0xff]
    %v184 = vld [vmem:[%s1 + $0x4c8] sm:$0xff]
    %v185 = vld [vmem:[%s1 + $0x4d0] sm:$0xff]
    %v186 = vld [vmem:[%s1 + $0x4d8] sm:$0xff]
    %v187 = vld [vmem:[%s1 + $0x4e0] sm:$0xff]
    %v188 = vld [vmem:[%s1 + $0x4e8] sm:$0xff]
    %v189 = vld [vmem:[%s1 + $0x4f0] sm:$0xff]
    %v190 = vld [vmem:[%s1 + $0x4f8] sm:$0xff]
    %v191 = vld [vmem:[%s1 + $0x500] sm:$0xff]
    %v192 = vld [vmem:[%s1 + $0x508] sm:$0xff]
    %v193 = vld [vmem:[%s1 + $0x510] sm:$0xff]
    %v194 = vld [vmem:[%s1 + $0x518] sm:$0xff]
    %v195 = vld [vmem:[%s1 + $0x520] sm:$0xff]
    %v196 = vld [vmem:[%s1 + $0x528] sm:$0xff]
    %v197 = vld [vmem:[%s1 + $0x530] sm:$0xff]
    %v198 = vld [vmem:[%s1 + $0x538] sm:$0xff]
    %v199 = vld [vmem:[%s1 + $0x540] sm:$0xff]
    %v200 = vld [vmem:[%s1 + $0x548] sm:$0xff]
    %v201 = vld [vmem:[%s1 + $0x550] sm:$0xff]
    %v202 = vld [vmem:[%s1 + $0x558] sm:$0xff]
    %v203 = vld [vmem:[%s1 + $0x560] sm:$0xff]
    %v204 = vld [vmem:[%s1 + $0x568] sm:$0xff]
    %v205 = vld [vmem:[%s1 + $0x570] sm:$0xff]
    %v206 = vld [vmem:[%s1 + $0x578] sm:$0xff]
    %v207 = vld [vmem:[%s1 + $0x580] sm:$0xff]
    %v208 = vld [vmem:[%s1 + $0x588] sm:$0xff]
    %v209 = vld [vmem:[%s1 + $0x590] sm:$0xff]
    %v210 = vld [vmem:[%s1 + $0x598] sm:$0xff]
    %v211 = vld [vmem:[%s1 + $0x5a0] sm:$0xff]
    %v212 = vld [vmem:[%s1 + $0x5a8] sm:$0xff]
    %v213 = vld [vmem:[%s1 + $0x5b0] sm:$0xff]
    %v214 = vld [vmem:[%s1 + $0x5b8] sm:$0xff]
    %v215 = vld [vmem:[%s1 + $0x5c0] sm:$0xff]
    %v216 = vld [vmem:[%s1 + $0x5c8] sm:$0xff]
    %v217 = vld [vmem:[%s1 + $0x5d0] sm:$0xff]
    %v218 = vld [vmem:[%s1 + $0x5d8] sm:$0xff]
    %v219 = vld [vmem:[%s1 + $0x5e0] sm:$0xff]
    %v220 = vld [vmem:[%s1 + $0x5e8] sm:$0xff]
    %v221 = vld [vmem:[%s1 + $0x5f0] sm:$0xff]
    %v222 = vld [vmem:[%s1 + $0x5f8] sm:$0xff]
    %v223 = vld [vmem:[%s1 + $0x600] sm:$0xff]
    %v224 = vld [vmem:[%s1 + $0x608] sm:$0xff]
    %v225 = vld [vmem:[%s1 + $0x610] sm:$0xff]
    %v226 = vld [vmem:[%s1 + $0x618] sm:$0xff]
    %v227 = vld [vmem:[%s1 + $0x620] sm:$0xff]
    %v228 = vld [vmem:[%s1 + $0x628] sm:$0xff]
    %v229 = vld [vmem:[%s1 + $0x630] sm:$0xff]
    %v230 = vld [vmem:[%s1 + $0x638] sm:$0xff]
    %v231 = vld [vmem:[%s1 + $0x640] sm:$0xff]
    %v232 = vld [vmem:[%s1 + $0x648] sm:$0xff]
    %v233 = vld [vmem:[%s1 + $0x650] sm:$0xff]
    %v234 = vld [vmem:[%s1 + $0x658] sm:$0xff]
    %v235 = vld [vmem:[%s1 + $0x660] sm:$0xff]
    %v236 = vld [vmem:[%s1 + $0x668] sm:$0xff]
    %v237 = vld [vmem:[%s1 + $0x670] sm:$0xff]
    %v238 = vld [vmem:[%s1 + $0x678] sm:$0xff]
    %v239 = vld [vmem:[%s1 + $0x680] sm:$0xff]
    %v240 = vld [vmem:[%s1 + $0x688] sm:$0xff]
    %v241 = vld [vmem:[%s1 + $0x690] sm:$0xff]
    %v242 = vld [vmem:[%s1 + $0x698] sm:$0xff]
    %v243 = vld [vmem:[%s1 + $0x6a0] sm:$0xff]
    %v244 = vld [vmem:[%s1 + $0x6a8] sm:$0xff]
    %v245 = vld [vmem:[%s1 + $0x6b0] sm:$0xff]
    %v246 = vld [vmem:[%s1 + $0x6b8] sm:$0xff]
    %v247 = vld [vmem:[%s1 + $0x6c0] sm:$0xff]
    %v248 = vld [vmem:[%s1 + $0x6c8] sm:$0xff]
    %v249 = vld [vmem:[%s1 + $0x6d0] sm:$0xff]
    %v250 = vld [vmem:[%s1 + $0x6d8] sm:$0xff]
    %v251 = vld [vmem:[%s1 + $0x6e0] sm:$0xff]
    %v252 = vld [vmem:[%s1 + $0x6e8] sm:$0xff]
    %v253 = vld [vmem:[%s1 + $0x6f0] sm:$0xff]
    %v254 = vld [vmem:[%s1 + $0x6f8] sm:$0xff]
    %v255 = vld [vmem:[%s1 + $0x700] sm:$0xff]
    %v256 = vld [vmem:[%s1 + $0x708] sm:$0xff]
    %v257 = vld [vmem:[%s1 + $0x710] sm:$0xff]
    %v258 = vld [vmem:[%s1 + $0x718] sm:$0xff]
    %v259 = vld [vmem:[%s1 + $0x720] sm:$0xff]
    %v260 = vld [vmem:[%s1 + $0x728] sm:$0xff]
    %v261 = vld [vmem:[%s1 + $0x730] sm:$0xff]
    %v262 = vld [vmem:[%s1 + $0x738] sm:$0xff]
    %v263 = vld [vmem:[%s1 + $0x740] sm:$0xff]
    %v264 = vld [vmem:[%s1 + $0x748] sm:$0xff]
    %v265 = vld [vmem:[%s1 + $0x750] sm:$0xff]
    %v266 = vld [vmem:[%s1 + $0x758] sm:$0xff]
    %v267 = vld [vmem:[%s1 + $0x760] sm:$0xff]
    %v268 = vld [vmem:[%s1 + $0x768] sm:$0xff]
    %v269 = vld [vmem:[%s1 + $0x770] sm:$0xff]
    %v270 = vld [vmem:[%s1 + $0x778] sm:$0xff]
    %v271 = vld [vmem:[%s1 + $0x780] sm:$0xff]
    %v272 = vld [vmem:[%s1 + $0x788] sm:$0xff]
    %v273 = vld [vmem:[%s1 + $0x790] sm:$0xff]
    %v274 = vld [vmem:[%s1 + $0x798] sm:$0xff]
    %v275 = vld [vmem:[%s1 + $0x7a0] sm:$0xff]
    %v276 = vld [vmem:[%s1 + $0x7a8] sm:$0xff]
    %v277 = vld [vmem:[%s1 + $0x7b0] sm:$0xff]
    %v278 = vld [vmem:[%s1 + $0x7b8] sm:$0xff]
    %v279 = vld [vmem:[%s1 + $0x7c0] sm:$0xff]
    %v280 = vld [vmem:[%s1 + $0x7c8] sm:$0xff]
    %v281 = vld [vmem:[%s1 + $0x7d0] sm:$0xff]
    %v282 = vld [vmem:[%s1 + $0x7d8] sm:$0xff]
    %v283 = vld [vmem:[%s1 + $0x7e0] sm:$0xff]
    %v284 = vld [vmem:[%s1 + $0x7e8] sm:$0xff]
    %v285 = vld [vmem:[%s1 + $0x7f0] sm:$0xff]
    %v286 = vld [vmem:[%s1 + $0x7f8] sm:$0xff]
    %v287 = vld [vmem:[%s1 + $0x800] sm:$0xff]
    %v288 = vld [vmem:[%s1 + $0x808] sm:$0xff]
    %v289 = vld [vmem:[%s1 + $0x810] sm:$0xff]
    %v290 = vld [vmem:[%s1 + $0x818] sm:$0xff]
    %v291 = vld [vmem:[%s1 + $0x820] sm:$0xff]
    %v292 = vld [vmem:[%s1 + $0x828] sm:$0xff]
    %v293 = vld [vmem:[%s1 + $0x830] sm:$0xff]
    %v294 = vld [vmem:[%s1 + $0x838] sm:$0xff]
    %v295 = vld [vmem:[%s1 + $0x840] sm:$0xff]
    %v296 = vld [vmem:[%s1 + $0x848] sm:$0xff]
    %v297 = vld [vmem:[%s1 + $0x850] sm:$0xff]
    %v298 = vld [vmem:[%s1 + $0x858] sm:$0xff]
    %v299 = vld [vmem:[%s1 + $0x860] sm:$0xff]
    %v300 = vld [vmem:[%s1 + $0x868] sm:$0xff]
    %v301 = vld [vmem:[%s1 + $0x870] sm:$0xff]
    %v302 = vld [vmem:[%s1 + $0x878] sm:$0xff]
    %v303 = vld [vmem:[%s1 + $0x880] sm:$0xff]
    %v304 = vld [vmem:[%s1 + $0x888] sm:$0xff]
    %v305 = vld [vmem:[%s1 + $0x890] sm:$0xff]
    %v306 = vld [vmem:[%s1 + $0x898] sm:$0xff]
    %v307 = vld [vmem:[%s1 + $0x8a0] sm:$0xff]
    %v308 = vld [vmem:[%s1 + $0x8a8] sm:$0xff]
    %v309 = vld [vmem:[%s1 + $0x8b0] sm:$0xff]
    %v310 = vld [vmem:[%s1 + $0x8b8] sm:$0xff]
    %v311 = vld [vmem:[%s1 + $0x8c0] sm:$0xff]
    %v312 = vld [vmem:[%s1 + $0x8c8] sm:$0xff]
    %v313 = vld [vmem:[%s1 + $0x8d0] sm:$0xff]
    %v314 = vld [vmem:[%s1 + $0x8d8] sm:$0xff]
    %v315 = vld [vmem:[%s1 + $0x8e0] sm:$0xff]
    %v316 = vld [vmem:[%s1 + $0x8e8] sm:$0xff]
    %v317 = vld [vmem:[%s1 + $0x8f0] sm:$0xff]
    %v318 = vld [vmem:[%s1 + $0x8f8] sm:$0xff]
    %v319 = vld [vmem:[%s1 + $0x900] sm:$0xff]
    %v320 = vld [vmem:[%s1 + $0x908] sm:$0xff]
    %v321 = vld [vmem:[%s1 + $0x910] sm:$0xff]
    %v322 = vld [vmem:[%s1 + $0x918] sm:$0xff]
    %v323 = vld [vmem:[%s1 + $0x920] sm:$0xff]
    %v324 = vld [vmem:[%s1 + $0x928] sm:$0xff]
    %v325 = vld [vmem:[%s1 + $0x930] sm:$0xff]
    %v326 = vld [vmem:[%s1 + $0x938] sm:$0xff]
    %v327 = vld [vmem:[%s1 + $0x940] sm:$0xff]
    %v328 = vld [vmem:[%s1 + $0x948] sm:$0xff]
    %v329 = vld [vmem:[%s1 + $0x950] sm:$0xff]
    %v330 = vld [vmem:[%s1 + $0x958] sm:$0xff]
    %v331 = vld [vmem:[%s1 + $0x960] sm:$0xff]
    %v332 = vld [vmem:[%s1 + $0x968] sm:$0xff]
    %v333 = vld [vmem:[%s1 + $0x970] sm:$0xff]
    %v334 = vld [vmem:[%s1 + $0x978] sm:$0xff]
    %v335 = vld [vmem:[%s1 + $0x980] sm:$0xff]
    %v336 = vld [vmem:[%s1 + $0x988] sm:$0xff]
    %v337 = vld [vmem:[%s1 + $0x990] sm:$0xff]
    %v338 = vld [vmem:[%s1 + $0x998] sm:$0xff]
    %v339 = vld [vmem:[%s1 + $0x9a0] sm:$0xff]
    %v340 = vld [vmem:[%s1 + $0x9a8] sm:$0xff]
    %v341 = vld [vmem:[%s1 + $0x9b0] sm:$0xff]
    %v342 = vld [vmem:[%s1 + $0x9b8] sm:$0xff]
    %v343 = vld [vmem:[%s1 + $0x9c0] sm:$0xff]
    %v344 = vld [vmem:[%s1 + $0x9c8] sm:$0xff]
    %v345 = vld [vmem:[%s1 + $0x9d0] sm:$0xff]
    %v346 = vld [vmem:[%s1 + $0x9d8] sm:$0xff]
    %v347 = vld [vmem:[%s1 + $0x9e0] sm:$0xff]
    %v348 = vld [vmem:[%s1 + $0x9e8] sm:$0xff]
    %v349 = vld [vmem:[%s1 + $0x9f0] sm:$0xff]
    %v350 = vld [vmem:[%s1 + $0x9f8] sm:$0xff]
    %v351 = vld [vmem:[%s1 + $0xa00] sm:$0xff]
    %v352 = vld [vmem:[%s1 + $0xa08] sm:$0xff]
    %v353 = vld [vmem:[%s1 + $0xa10] sm:$0xff]
    %v354 = vld [vmem:[%s1 + $0xa18] sm:$0xff]
    %v355 = vld [vmem:[%s1 + $0xa20] sm:$0xff]
    %v356 = vld [vmem:[%s1 + $0xa28] sm:$0xff]
    %v357 = vld [vmem:[%s1 + $0xa30] sm:$0xff]
    %v358 = vld [vmem:[%s1 + $0xa38] sm:$0xff]
    %v359 = vld [vmem:[%s1 + $0xa40] sm:$0xff]
    %v360 = vld [vmem:[%s1 + $0xa48] sm:$0xff]
    %v361 = vld [vmem:[%s1 + $0xa50] sm:$0xff]
    %v362 = vld [vmem:[%s1 + $0xa58] sm:$0xff]
    %v363 = vld [vmem:[%s1 + $0xa60] sm:$0xff]
    %v364 = vld [vmem:[%s1 + $0xa68] sm:$0xff]
    %v365 = vld [vmem:[%s1 + $0xa70] sm:$0xff]
    %v366 = vld [vmem:[%s1 + $0xa78] sm:$0xff]
    %v367 = vld [vmem:[%s1 + $0xa80] sm:$0xff]
    %v368 = vld [vmem:[%s1 + $0xa88] sm:$0xff]
    %v369 = vld [vmem:[%s1 + $0xa90] sm:$0xff]
    %v370 = vld [vmem:[%s1 + $0xa98] sm:$0xff]
    %v371 = vld [vmem:[%s1 + $0xaa0] sm:$0xff]
    %v372 = vld [vmem:[%s1 + $0xaa8] sm:$0xff]
    %v373 = vld [vmem:[%s1 + $0xab0] sm:$0xff]
    %v374 = vld [vmem:[%s1 + $0xab8] sm:$0xff]
    %v375 = vld [vmem:[%s1 + $0xac0] sm:$0xff]
    %v376 = vld [vmem:[%s1 + $0xac8] sm:$0xff]
    %v377 = vld [vmem:[%s1 + $0xad0] sm:$0xff]
    %v378 = vld [vmem:[%s1 + $0xad8] sm:$0xff]
    %v379 = vld [vmem:[%s1 + $0xae0] sm:$0xff]
    %v380 = vld [vmem:[%s1 + $0xae8] sm:$0xff]
    %v381 = vld [vmem:[%s1 + $0xaf0] sm:$0xff]
    %v382 = vld [vmem:[%s1 + $0xaf8] sm:$0xff]
    %v383 = vld [vmem:[%s1 + $0xb00] sm:$0xff]
    %v384 = vld [vmem:[%s1 + $0xb08] sm:$0xff]
    %v385 = vld [vmem:[%s1 + $0xb10] sm:$0xff]
    %v386 = vld [vmem:[%s1 + $0xb18] sm:$0xff]
    %v387 = vld [vmem:[%s1 + $0xb20] sm:$0xff]
    %v388 = vld [vmem:[%s1 + $0xb28] sm:$0xff]
    %v389 = vld [vmem:[%s1 + $0xb30] sm:$0xff]
    %v390 = vld [vmem:[%s1 + $0xb38] sm:$0xff]
    %v391 = vld [vmem:[%s1 + $0xb40] sm:$0xff]
    %v392 = vld [vmem:[%s1 + $0xb48] sm:$0xff]
    %v393 = vld [vmem:[%s1 + $0xb50] sm:$0xff]
    %v394 = vld [vmem:[%s1 + $0xb58] sm:$0xff]
    %v395 = vld [vmem:[%s1 + $0xb60] sm:$0xff]
    %v396 = vld [vmem:[%s1 + $0xb68] sm:$0xff]
    %v397 = vld [vmem:[%s1 + $0xb70] sm:$0xff]
    %v398 = vld [vmem:[%s1 + $0xb78] sm:$0xff]
    %v399 = vld [vmem:[%s1 + $0xb80] sm:$0xff]
    %v400 = vld [vmem:[%s1 + $0xb88] sm:$0xff]
    %v401 = vld [vmem:[%s1 + $0xb90] sm:$0xff]
    %v402 = vld [vmem:[%s1 + $0xb98] sm:$0xff]
    %v403 = vld [vmem:[%s1 + $0xba0] sm:$0xff]
    %v404 = vld [vmem:[%s1 + $0xba8] sm:$0xff]
    %v405 = vld [vmem:[%s1 + $0xbb0] sm:$0xff]
    %v406 = vld [vmem:[%s1 + $0xbb8] sm:$0xff]
    %v407 = vld [vmem:[%s1 + $0xbc0] sm:$0xff]
    %v408 = vld [vmem:[%s1 + $0xbc8] sm:$0xff]
    %v409 = vld [vmem:[%s1 + $0xbd0] sm:$0xff]
    %v410 = vld [vmem:[%s1 + $0xbd8] sm:$0xff]
    %v411 = vld [vmem:[%s1 + $0xbe0] sm:$0xff]
    %v412 = vld [vmem:[%s1 + $0xbe8] sm:$0xff]
    %v413 = vld [vmem:[%s1 + $0xbf0] sm:$0xff]
    %v414 = vld [vmem:[%s1 + $0xbf8] sm:$0xff]
    %v415 = vld [vmem:[%s1 + $0xc00] sm:$0xff]
    %v416 = vld [vmem:[%s1 + $0xc08] sm:$0xff]
    %v417 = vld [vmem:[%s1 + $0xc10] sm:$0xff]
    %v418 = vld [vmem:[%s1 + $0xc18] sm:$0xff]
    %v419 = vld [vmem:[%s1 + $0xc20] sm:$0xff]
    %v420 = vld [vmem:[%s1 + $0xc28] sm:$0xff]
    %v421 = vld [vmem:[%s1 + $0xc30] sm:$0xff]
    %v422 = vld [vmem:[%s1 + $0xc38] sm:$0xff]
    %v423 = vld [vmem:[%s1 + $0xc40] sm:$0xff]
    %v424 = vld [vmem:[%s1 + $0xc48] sm:$0xff]
    %v425 = vld [vmem:[%s1 + $0xc50] sm:$0xff]
    %v426 = vld [vmem:[%s1 + $0xc58] sm:$0xff]
    %v427 = vld [vmem:[%s1 + $0xc60] sm:$0xff]
    %v428 = vld [vmem:[%s1 + $0xc68] sm:$0xff]
    %v429 = vld [vmem:[%s1 + $0xc70] sm:$0xff]
    %v430 = vld [vmem:[%s1 + $0xc78] sm:$0xff]
    %v431 = vld [vmem:[%s1 + $0xc80] sm:$0xff]
    %v432 = vld [vmem:[%s1 + $0xc88] sm:$0xff]
    %v433 = vld [vmem:[%s1 + $0xc90] sm:$0xff]
    %v434 = vld [vmem:[%s1 + $0xc98] sm:$0xff]
    %v435 = vld [vmem:[%s1 + $0xca0] sm:$0xff]
    %v436 = vld [vmem:[%s1 + $0xca8] sm:$0xff]
    %v437 = vld [vmem:[%s1 + $0xcb0] sm:$0xff]
    %v438 = vld [vmem:[%s1 + $0xcb8] sm:$0xff]
    %v439 = vld [vmem:[%s1 + $0xcc0] sm:$0xff]
    %v440 = vld [vmem:[%s1 + $0xcc8] sm:$0xff]
    %v441 = vld [vmem:[%s1 + $0xcd0] sm:$0xff]
    %v442 = vld [vmem:[%s1 + $0xcd8] sm:$0xff]
    %v443 = vld [vmem:[%s1 + $0xce0] sm:$0xff]
    %v444 = vld [vmem:[%s1 + $0xce8] sm:$0xff]
    %v445 = vld [vmem:[%s1 + $0xcf0] sm:$0xff]
    %v446 = vld [vmem:[%s1 + $0xcf8] sm:$0xff]
    %v447 = vld [vmem:[%s1 + $0xd00] sm:$0xff]
    %v448 = vld [vmem:[%s1 + $0xd08] sm:$0xff]
    %v449 = vld [vmem:[%s1 + $0xd10] sm:$0xff]
    %v450 = vld [vmem:[%s1 + $0xd18] sm:$0xff]
    %v451 = vld [vmem:[%s1 + $0xd20] sm:$0xff]
    %v452 = vld [vmem:[%s1 + $0xd28] sm:$0xff]
    %v453 = vld [vmem:[%s1 + $0xd30] sm:$0xff]
    %v454 = vld [vmem:[%s1 + $0xd38] sm:$0xff]
    %v455 = vld [vmem:[%s1 + $0xd40] sm:$0xff]
    %v456 = vld [vmem:[%s1 + $0xd48] sm:$0xff]
    %v457 = vld [vmem:[%s1 + $0xd50] sm:$0xff]
    %v458 = vld [vmem:[%s1 + $0xd58] sm:$0xff]
    %v459 = vld [vmem:[%s1 + $0xd60] sm:$0xff]
    %v460 = vld [vmem:[%s1 + $0xd68] sm:$0xff]
    %v461 = vld [vmem:[%s1 + $0xd70] sm:$0xff]
    %v462 = vld [vmem:[%s1 + $0xd78] sm:$0xff]
    %v463 = vld [vmem:[%s1 + $0xd80] sm:$0xff]
    %v464 = vld [vmem:[%s1 + $0xd88] sm:$0xff]
    %v465 = vld [vmem:[%s1 + $0xd90] sm:$0xff]
    %v466 = vld [vmem:[%s1 + $0xd98] sm:$0xff]
    %v467 = vld [vmem:[%s1 + $0xda0] sm:$0xff]
    %v468 = vld [vmem:[%s1 + $0xda8] sm:$0xff]
    %v469 = vld [vmem:[%s1 + $0xdb0] sm:$0xff]
    %v470 = vld [vmem:[%s1 + $0xdb8] sm:$0xff]
    %v471 = vld [vmem:[%s1 + $0xdc0] sm:$0xff]
    %v472 = vld [vmem:[%s1 + $0xdc8] sm:$0xff]
    %v473 = vld [vmem:[%s1 + $0xdd0] sm:$0xff]
    %v474 = vld [vmem:[%s1 + $0xdd8] sm:$0xff]
    %v475 = vld [vmem:[%s1 + $0xde0] sm:$0xff]
    %v476 = vld [vmem:[%s1 + $0xde8] sm:$0xff]
    %v477 = vld [vmem:[%s1 + $0xdf0] sm:$0xff]
    %v478 = vld [vmem:[%s1 + $0xdf8] sm:$0xff]
    %v479 = vld [vmem:[%s1 + $0xe00] sm:$0xff]
    %v480 = vld [vmem:[%s1 + $0xe08] sm:$0xff]
    %v481 = vld [vmem:[%s1 + $0xe10] sm:$0xff]
    %v482 = vld [vmem:[%s1 + $0xe18] sm:$0xff]
    %v483 = vld [vmem:[%s1 + $0xe20] sm:$0xff]
    %v484 = vld [vmem:[%s1 + $0xe28] sm:$0xff]
    %v485 = vld [vmem:[%s1 + $0xe30] sm:$0xff]
    %v486 = vld [vmem:[%s1 + $0xe38] sm:$0xff]
    %v487 = vld [vmem:[%s1 + $0xe40] sm:$0xff]
    %v488 = vld [vmem:[%s1 + $0xe48] sm:$0xff]
    %v489 = vld [vmem:[%s1 + $0xe50] sm:$0xff]
    %v490 = vld [vmem:[%s1 + $0xe58] sm:$0xff]
    %v491 = vld [vmem:[%s1 + $0xe60] sm:$0xff]
    %v492 = vld [vmem:[%s1 + $0xe68] sm:$0xff]
    %v493 = vld [vmem:[%s1 + $0xe70] sm:$0xff]
    %v494 = vld [vmem:[%s1 + $0xe78] sm:$0xff]
    %v495 = vld [vmem:[%s1 + $0xe80] sm:$0xff]
    %v496 = vld [vmem:[%s1 + $0xe88] sm:$0xff]
    %v497 = vld [vmem:[%s1 + $0xe90] sm:$0xff]
    %v498 = vld [vmem:[%s1 + $0xe98] sm:$0xff]
    %v499 = vld [vmem:[%s1 + $0xea0] sm:$0xff]
    %v500 = vld [vmem:[%s1 + $0xea8] sm:$0xff]
    %v501 = vld [vmem:[%s1 + $0xeb0] sm:$0xff]
    %v502 = vld [vmem:[%s1 + $0xeb8] sm:$0xff]
    %v503 = vld [vmem:[%s1 + $0xec0] sm:$0xff]
    %v504 = vld [vmem:[%s1 + $0xec8] sm:$0xff]
    %v505 = vld [vmem:[%s1 + $0xed0] sm:$0xff]
    %v506 = vld [vmem:[%s1 + $0xed8] sm:$0xff]
    %v507 = vld [vmem:[%s1 + $0xee0] sm:$0xff]
    %v508 = vld [vmem:[%s1 + $0xee8] sm:$0xff]
    %v509 = vld [vmem:[%s1 + $0xef0] sm:$0xff]
    %v510 = vld [vmem:[%s1 + $0xef8] sm:$0xff]
    %v511 = vld [vmem:[%s1 + $0xf00] sm:$0xff]
    %v512 = vld [vmem:[%s1 + $0xf08] sm:$0xff]
    %v513 = vld [vmem:[%s1 + $0xf10] sm:$0xff]
    %v514 = vld [vmem:[%s1 + $0xf18] sm:$0xff]
    %v515 = vld [vmem:[%s1 + $0xf20] sm:$0xff]
    %v516 = vld [vmem:[%s1 + $0xf28] sm:$0xff]
    %v517 = vld [vmem:[%s1 + $0xf30] sm:$0xff]
    %v518 = vld [vmem:[%s1 + $0xf38] sm:$0xff]
    %v519 = vld [vmem:[%s1 + $0xf40] sm:$0xff]
    %v520 = vld [vmem:[%s1 + $0xf48] sm:$0xff]
    %v521 = vld [vmem:[%s1 + $0xf50] sm:$0xff]
    %v522 = vld [vmem:[%s1 + $0xf58] sm:$0xff]
    %v523 = vld [vmem:[%s1 + $0xf60] sm:$0xff]
    %v524 = vld [vmem:[%s1 + $0xf68] sm:$0xff]
    %v525 = vld [vmem:[%s1 + $0xf70] sm:$0xff]
    %v526 = vld [vmem:[%s1 + $0xf78] sm:$0xff]
    %v527 = vld [vmem:[%s1 + $0xf80] sm:$0xff]
    %v528 = vld [vmem:[%s1 + $0xf88] sm:$0xff]
    %v529 = vld [vmem:[%s1 + $0xf90] sm:$0xff]
    %v530 = vld [vmem:[%s1 + $0xf98] sm:$0xff]
    %v531 = vld [vmem:[%s1 + $0xfa0] sm:$0xff]
    %v532 = vld [vmem:[%s1 + $0xfa8] sm:$0xff]
    %v533 = vld [vmem:[%s1 + $0xfb0] sm:$0xff]
    %v534 = vld [vmem:[%s1 + $0xfb8] sm:$0xff]
    %v535 = vld [vmem:[%s1 + $0xfc0] sm:$0xff]
    %v536 = vld [vmem:[%s1 + $0xfc8] sm:$0xff]
    %v537 = vld [vmem:[%s1 + $0xfd0] sm:$0xff]
    %v538 = vld [vmem:[%s1 + $0xfd8] sm:$0xff]
    %v539 = vld [vmem:[%s1 + $0xfe0] sm:$0xff]
    %v540 = vld [vmem:[%s1 + $0xfe8] sm:$0xff]
    %v541 = vld [vmem:[%s1 + $0xff0] sm:$0xff]
    %v542 = vld [vmem:[%s1 + $0xff8] sm:$0xff]
    %v543 = vld [vmem:[%s1 + $0x1000] sm:$0xff]
    %v544 = vld [vmem:[%s1 + $0x1008] sm:$0xff]
    %v545 = vld [vmem:[%s1 + $0x1010] sm:$0xff]
    %v546 = vld [vmem:[%s1 + $0x1018] sm:$0xff]
    %v547 = vld [vmem:[%s1 + $0x1020] sm:$0xff]
    %v548 = vld [vmem:[%s1 + $0x1028] sm:$0xff]
    %v549 = vld [vmem:[%s1 + $0x1030] sm:$0xff]
    %v550 = vld [vmem:[%s1 + $0x1038] sm:$0xff]
    %v551 = vld [vmem:[%s1 + $0x1040] sm:$0xff]
    %v552 = vld [vmem:[%s1 + $0x1048] sm:$0xff]
    %v553 = vld [vmem:[%s1 + $0x1050] sm:$0xff]
    %v554 = vld [vmem:[%s1 + $0x1058] sm:$0xff]
    %v555 = vld [vmem:[%s1 + $0x1060] sm:$0xff]
    %v556 = vld [vmem:[%s1 + $0x1068] sm:$0xff]
    %v557 = vld [vmem:[%s1 + $0x1070] sm:$0xff]
    %v558 = vld [vmem:[%s1 + $0x1078] sm:$0xff]
    %v559 = vld [vmem:[%s1 + $0x1080] sm:$0xff]
    %v560 = vld [vmem:[%s1 + $0x1088] sm:$0xff]
    %v561 = vld [vmem:[%s1 + $0x1090] sm:$0xff]
    %v562 = vld [vmem:[%s1 + $0x1098] sm:$0xff]
    %v563 = vld [vmem:[%s1 + $0x10a0] sm:$0xff]
    %v564 = vld [vmem:[%s1 + $0x10a8] sm:$0xff]
    %v565 = vld [vmem:[%s1 + $0x10b0] sm:$0xff]
    %v566 = vld [vmem:[%s1 + $0x10b8] sm:$0xff]
    %v567 = vld [vmem:[%s1 + $0x10c0] sm:$0xff]
    %v568 = vld [vmem:[%s1 + $0x10c8] sm:$0xff]
    %v569 = vld [vmem:[%s1 + $0x10d0] sm:$0xff]
    %v570 = vld [vmem:[%s1 + $0x10d8] sm:$0xff]
    %v571 = vld [vmem:[%s1 + $0x10e0] sm:$0xff]
    %v572 = vld [vmem:[%s1 + $0x10e8] sm:$0xff]
    %v573 = vld [vmem:[%s1 + $0x10f0] sm:$0xff]
    %v574 = vld [vmem:[%s1 + $0x10f8] sm:$0xff]
    %v575 = vld [vmem:[%s1 + $0x1100] sm:$0xff]
    %v576 = vld [vmem:[%s1 + $0x1108] sm:$0xff]
    %v577 = vld [vmem:[%s1 + $0x1110] sm:$0xff]
    %v578 = vld [vmem:[%s1 + $0x1118] sm:$0xff]
    %v579 = vld [vmem:[%s1 + $0x1120] sm:$0xff]
    %v580 = vld [vmem:[%s1 + $0x1128] sm:$0xff]
    %v581 = vld [vmem:[%s1 + $0x1130] sm:$0xff]
    %v582 = vld [vmem:[%s1 + $0x1138] sm:$0xff]
    %v583 = vld [vmem:[%s1 + $0x1140] sm:$0xff]
    %v584 = vld [vmem:[%s1 + $0x1148] sm:$0xff]
    %v585 = vld [vmem:[%s1 + $0x1150] sm:$0xff]
    %v586 = vld [vmem:[%s1 + $0x1158] sm:$0xff]
    %v587 = vld [vmem:[%s1 + $0x1160] sm:$0xff]
    %v588 = vld [vmem:[%s1 + $0x1168] sm:$0xff]
    %v589 = vld [vmem:[%s1 + $0x1170] sm:$0xff]
    %v590 = vld [vmem:[%s1 + $0x1178] sm:$0xff]
    %v591 = vld [vmem:[%s1 + $0x1180] sm:$0xff]
    %v592 = vld [vmem:[%s1 + $0x1188] sm:$0xff]
    %v593 = vld [vmem:[%s1 + $0x1190] sm:$0xff]
    %v594 = vld [vmem:[%s1 + $0x1198] sm:$0xff]
    %v595 = vld [vmem:[%s1 + $0x11a0] sm:$0xff]
    %v596 = vld [vmem:[%s1 + $0x11a8] sm:$0xff]
    %v597 = vld [vmem:[%s1 + $0x11b0] sm:$0xff]
    %v598 = vld [vmem:[%s1 + $0x11b8] sm:$0xff]
    %v599 = vld [vmem:[%s1 + $0x11c0] sm:$0xff]
    %v600 = vld [vmem:[%s1 + $0x11c8] sm:$0xff]
    %v601 = vld [vmem:[%s1 + $0x11d0] sm:$0xff]
    %v602 = vld [vmem:[%s1 + $0x11d8] sm:$0xff]
    %v603 = vld [vmem:[%s1 + $0x11e0] sm:$0xff]
    %v604 = vld [vmem:[%s1 + $0x11e8] sm:$0xff]
    %v605 = vld [vmem:[%s1 + $0x11f0] sm:$0xff]
    %v606 = vld [vmem:[%s1 + $0x11f8] sm:$0xff]
    %v607 = vld [vmem:[%s1 + $0x1200] sm:$0xff]
    %v608 = vld [vmem:[%s1 + $0x1208] sm:$0xff]
    %v609 = vld [vmem:[%s1 + $0x1210] sm:$0xff]
    %v610 = vld [vmem:[%s1 + $0x1218] sm:$0xff]
    %v611 = vld [vmem:[%s1 + $0x1220] sm:$0xff]
    %v612 = vld [vmem:[%s1 + $0x1228] sm:$0xff]
    %v613 = vld [vmem:[%s1 + $0x1230] sm:$0xff]
    %v614 = vld [vmem:[%s1 + $0x1238] sm:$0xff]
    %v615 = vld [vmem:[%s1 + $0x1240] sm:$0xff]
    %v616 = vld [vmem:[%s1 + $0x1248] sm:$0xff]
    %v617 = vld [vmem:[%s1 + $0x1250] sm:$0xff]
    %v618 = vld [vmem:[%s1 + $0x1258] sm:$0xff]
    %v619 = vld [vmem:[%s1 + $0x1260] sm:$0xff]
    %v620 = vld [vmem:[%s1 + $0x1268] sm:$0xff]
    %v621 = vld [vmem:[%s1 + $0x1270] sm:$0xff]
    %v622 = vld [vmem:[%s1 + $0x1278] sm:$0xff]
    %v623 = vld [vmem:[%s1 + $0x1280] sm:$0xff]
    %v624 = vld [vmem:[%s1 + $0x1288] sm:$0xff]
    %v625 = vld [vmem:[%s1 + $0x1290] sm:$0xff]
    %v626 = vld [vmem:[%s1 + $0x1298] sm:$0xff]
    %v627 = vld [vmem:[%s1 + $0x12a0] sm:$0xff]
    %v628 = vld [vmem:[%s1 + $0x12a8] sm:$0xff]
    %v629 = vld [vmem:[%s1 + $0x12b0] sm:$0xff]
    %v630 = vld [vmem:[%s1 + $0x12b8] sm:$0xff]
    %v631 = vld [vmem:[%s2] sm:$0x7]
    %v633 = vperm.slane %v631, 0
    %v634 = vperm.slane %v631, 1
    %v635 = vperm.slane %v631, 2
    %643 = vst [vmem:[#allocation1] ss:$4 sm:$0xff] %v27
    %s644 = scalar_lea.vmem [#allocation1], 32
    %645 = vst [vmem:[%s644] ss:$4 sm:$0xff] %v28
    %v646 = vld.sshfl [vmem:[#allocation1] sm:$0xff pattern:$0x73625140]
    %v647 = vld.sshfl [vmem:[#allocation1 + $0x8] sm:$0xff pattern:$0x73625140]
    %v648 = vld.sshfl [vmem:[#allocation1 + $0x10] sm:$0xff pattern:$0x73625140]
    %v649 = vld.sshfl [vmem:[#allocation1 + $0x18] sm:$0xff pattern:$0x73625140]
    %v650 = vld.sshfl [vmem:[#allocation1 + $0x20] sm:$0xff pattern:$0x73625140]
    %v651 = vld.sshfl [vmem:[#allocation1 + $0x28] sm:$0xff pattern:$0x73625140]
    %v652 = vld.sshfl [vmem:[#allocation1 + $0x30] sm:$0xff pattern:$0x73625140]
    %v653 = vld.sshfl [vmem:[#allocation1 + $0x38] sm:$0xff pattern:$0x73625140]
    %654 = vst [vmem:[#allocation1] ss:$4 sm:$0xff] %v29
    %655 = vst [vmem:[%s644] ss:$4 sm:$0xff] %v30
    %v656 = vld.sshfl [vmem:[#allocation1] sm:$0xff pattern:$0x73625140]
    %v657 = vld.sshfl [vmem:[#allocation1 + $0x8] sm:$0xff pattern:$0x73625140]
    %v658 = vld.sshfl [vmem:[#allocation1 + $0x10] sm:$0xff pattern:$0x73625140]
    %v659 = vld.sshfl [vmem:[#allocation1 + $0x18] sm:$0xff pattern:$0x73625140]
    %v660 = vld.sshfl [vmem:[#allocation1 + $0x20] sm:$0xff pattern:$0x73625140]
    %vm673 = vcmask 523264
    %v674 = vsel %vm673, %v660, 0
    %676 = vmatpush.msra.mxu0 %v76
    %677 = vmatpush.msra.mxu0 %v73
    %678 = vmatpush.msra.mxu0 %v70
    %679 = vmatpush.msra.mxu0 %v67
    %680 = vmatpush.msra.mxu0 %v64
    %681 = vmatpush.msra.mxu0 %v61
    %682 = vmatpush.msra.mxu0 %v58
    %683 = vmatpush.msra.mxu0 %v55
    %684 = vmatpush.msra.mxu0 %v52
    %685 = vmatpush.msra.mxu0 %v49
    %686 = vmatpush.msra.mxu0 %v46
    %687 = vmatpush.msra.mxu0 %v43
    %688 = vmatpush.msra.mxu0 %v40
    %689 = vmatpush.msra.mxu0 %v37
    %690 = vmatpush.msra.mxu0 %v34
    %691 = vmatpush.msra.mxu0 %v31
    %692 = vmatmul.f32.gmra.mxu0 %v646
    %v693 = vpop.f32.mrf.mxu0
    %v694 = vadd.f32 %v633, %v693
    %695 = vdwg.mxu0
    %696 = vmatpush.msra.mxu0 %v124
    %697 = vmatpush.msra.mxu0 %v121
    %698 = vmatpush.msra.mxu0 %v118
    %699 = vmatpush.msra.mxu0 %v115
    %700 = vmatpush.msra.mxu0 %v112
    %701 = vmatpush.msra.mxu0 %v109
    %702 = vmatpush.msra.mxu0 %v106
    %703 = vmatpush.msra.mxu0 %v103
    %704 = vmatpush.msra.mxu0 %v100
    %705 = vmatpush.msra.mxu0 %v97
    %706 = vmatpush.msra.mxu0 %v94
    %707 = vmatpush.msra.mxu0 %v91
    %708 = vmatpush.msra.mxu0 %v88
    %709 = vmatpush.msra.mxu0 %v85
    %710 = vmatpush.msra.mxu0 %v82
    %711 = vmatpush.msra.mxu0 %v79
    %712 = vmatmul.f32.gmra.mxu0 %v647
    %v713 = vpop.f32.mrf.mxu0
    %v714 = vadd.f32 %v694, %v713
    %715 = vdwg.mxu0
    %716 = vmatpush.msra.mxu0 %v172
    %717 = vmatpush.msra.mxu0 %v169
    %718 = vmatpush.msra.mxu0 %v166
    %719 = vmatpush.msra.mxu0 %v163
    %720 = vmatpush.msra.mxu0 %v160
    %721 = vmatpush.msra.mxu0 %v157
    %722 = vmatpush.msra.mxu0 %v154
    %723 = vmatpush.msra.mxu0 %v151
    %724 = vmatpush.msra.mxu0 %v148
    %725 = vmatpush.msra.mxu0 %v145
    %726 = vmatpush.msra.mxu0 %v142
    %727 = vmatpush.msra.mxu0 %v139
    %728 = vmatpush.msra.mxu0 %v136
    %729 = vmatpush.msra.mxu0 %v133
    %730 = vmatpush.msra.mxu0 %v130
    %731 = vmatpush.msra.mxu0 %v127
    %732 = vmatmul.f32.gmra.mxu0 %v648
    %v733 = vpop.f32.mrf.mxu0
    %v734 = vadd.f32 %v714, %v733
    %735 = vdwg.mxu0
    %736 = vmatpush.msra.mxu0 %v220
    %737 = vmatpush.msra.mxu0 %v217
    %738 = vmatpush.msra.mxu0 %v214
    %739 = vmatpush.msra.mxu0 %v211
    %740 = vmatpush.msra.mxu0 %v208
    %741 = vmatpush.msra.mxu0 %v205
    %742 = vmatpush.msra.mxu0 %v202
    %743 = vmatpush.msra.mxu0 %v199
    %744 = vmatpush.msra.mxu0 %v196
    %745 = vmatpush.msra.mxu0 %v193
    %746 = vmatpush.msra.mxu0 %v190
    %747 = vmatpush.msra.mxu0 %v187
    %748 = vmatpush.msra.mxu0 %v184
    %749 = vmatpush.msra.mxu0 %v181
    %750 = vmatpush.msra.mxu0 %v178
    %751 = vmatpush.msra.mxu0 %v175
    %752 = vmatmul.f32.gmra.mxu0 %v649
    %v753 = vpop.f32.mrf.mxu0
    %v754 = vadd.f32 %v734, %v753
    %755 = vdwg.mxu0
    %756 = vmatpush.msra.mxu0 %v268
    %757 = vmatpush.msra.mxu0 %v265
    %758 = vmatpush.msra.mxu0 %v262
    %759 = vmatpush.msra.mxu0 %v259
    %760 = vmatpush.msra.mxu0 %v256
    %761 = vmatpush.msra.mxu0 %v253
    %762 = vmatpush.msra.mxu0 %v250
    %763 = vmatpush.msra.mxu0 %v247
    %764 = vmatpush.msra.mxu0 %v244
    %765 = vmatpush.msra.mxu0 %v241
    %766 = vmatpush.msra.mxu0 %v238
    %767 = vmatpush.msra.mxu0 %v235
    %768 = vmatpush.msra.mxu0 %v232
    %769 = vmatpush.msra.mxu0 %v229
    %770 = vmatpush.msra.mxu0 %v226
    %771 = vmatpush.msra.mxu0 %v223
    %772 = vmatmul.f32.gmra.mxu0 %v650
    %v773 = vpop.f32.mrf.mxu0
    %v774 = vadd.f32 %v754, %v773
    %775 = vdwg.mxu0
    %776 = vmatpush.msra.mxu0 %v316
    %777 = vmatpush.msra.mxu0 %v313
    %778 = vmatpush.msra.mxu0 %v310
    %779 = vmatpush.msra.mxu0 %v307
    %780 = vmatpush.msra.mxu0 %v304
    %781 = vmatpush.msra.mxu0 %v301
    %782 = vmatpush.msra.mxu0 %v298
    %783 = vmatpush.msra.mxu0 %v295
    %784 = vmatpush.msra.mxu0 %v292
    %785 = vmatpush.msra.mxu0 %v289
    %786 = vmatpush.msra.mxu0 %v286
    %787 = vmatpush.msra.mxu0 %v283
    %788 = vmatpush.msra.mxu0 %v280
    %789 = vmatpush.msra.mxu0 %v277
    %790 = vmatpush.msra.mxu0 %v274
    %791 = vmatpush.msra.mxu0 %v271
    %792 = vmatmul.f32.gmra.mxu0 %v651
    %v793 = vpop.f32.mrf.mxu0
    %v794 = vadd.f32 %v774, %v793
    %795 = vdwg.mxu0
    %796 = vmatpush.msra.mxu0 %v364
    %797 = vmatpush.msra.mxu0 %v361
    %798 = vmatpush.msra.mxu0 %v358
    %799 = vmatpush.msra.mxu0 %v355
    %800 = vmatpush.msra.mxu0 %v352
    %801 = vmatpush.msra.mxu0 %v349
    %802 = vmatpush.msra.mxu0 %v346
    %803 = vmatpush.msra.mxu0 %v343
    %804 = vmatpush.msra.mxu0 %v340
    %805 = vmatpush.msra.mxu0 %v337
    %806 = vmatpush.msra.mxu0 %v334
    %807 = vmatpush.msra.mxu0 %v331
    %808 = vmatpush.msra.mxu0 %v328
    %809 = vmatpush.msra.mxu0 %v325
    %810 = vmatpush.msra.mxu0 %v322
    %811 = vmatpush.msra.mxu0 %v319
    %812 = vmatmul.f32.gmra.mxu0 %v652
    %v813 = vpop.f32.mrf.mxu0
    %v814 = vadd.f32 %v794, %v813
    %815 = vdwg.mxu0
    %816 = vmatpush.msra.mxu0 %v412
    %817 = vmatpush.msra.mxu0 %v409
    %818 = vmatpush.msra.mxu0 %v406
    %819 = vmatpush.msra.mxu0 %v403
    %820 = vmatpush.msra.mxu0 %v400
    %821 = vmatpush.msra.mxu0 %v397
    %822 = vmatpush.msra.mxu0 %v394
    %823 = vmatpush.msra.mxu0 %v391
    %824 = vmatpush.msra.mxu0 %v388
    %825 = vmatpush.msra.mxu0 %v385
    %826 = vmatpush.msra.mxu0 %v382
    %827 = vmatpush.msra.mxu0 %v379
    %828 = vmatpush.msra.mxu0 %v376
    %829 = vmatpush.msra.mxu0 %v373
    %830 = vmatpush.msra.mxu0 %v370
    %831 = vmatpush.msra.mxu0 %v367
    %832 = vmatmul.f32.gmra.mxu0 %v653
    %v833 = vpop.f32.mrf.mxu0
    %v834 = vadd.f32 %v814, %v833
    %835 = vdwg.mxu0
    %836 = vmatpush.msra.mxu0 %v460
    %837 = vmatpush.msra.mxu0 %v457
    %838 = vmatpush.msra.mxu0 %v454
    %839 = vmatpush.msra.mxu0 %v451
    %840 = vmatpush.msra.mxu0 %v448
    %841 = vmatpush.msra.mxu0 %v445
    %842 = vmatpush.msra.mxu0 %v442
    %843 = vmatpush.msra.mxu0 %v439
    %844 = vmatpush.msra.mxu0 %v436
    %845 = vmatpush.msra.mxu0 %v433
    %846 = vmatpush.msra.mxu0 %v430
    %847 = vmatpush.msra.mxu0 %v427
    %848 = vmatpush.msra.mxu0 %v424
    %849 = vmatpush.msra.mxu0 %v421
    %850 = vmatpush.msra.mxu0 %v418
    %851 = vmatpush.msra.mxu0 %v415
    %852 = vmatmul.f32.gmra.mxu0 %v656
    %v853 = vpop.f32.mrf.mxu0
    %v854 = vadd.f32 %v834, %v853
    %855 = vdwg.mxu0
    %856 = vmatpush.msra.mxu0 %v508
    %857 = vmatpush.msra.mxu0 %v505
    %858 = vmatpush.msra.mxu0 %v502
    %859 = vmatpush.msra.mxu0 %v499
    %860 = vmatpush.msra.mxu0 %v496
    %861 = vmatpush.msra.mxu0 %v493
    %862 = vmatpush.msra.mxu0 %v490
    %863 = vmatpush.msra.mxu0 %v487
    %864 = vmatpush.msra.mxu0 %v484
    %865 = vmatpush.msra.mxu0 %v481
    %866 = vmatpush.msra.mxu0 %v478
    %867 = vmatpush.msra.mxu0 %v475
    %868 = vmatpush.msra.mxu0 %v472
    %869 = vmatpush.msra.mxu0 %v469
    %870 = vmatpush.msra.mxu0 %v466
    %871 = vmatpush.msra.mxu0 %v463
    %872 = vmatmul.f32.gmra.mxu0 %v657
    %v873 = vpop.f32.mrf.mxu0
    %v874 = vadd.f32 %v854, %v873
    %875 = vdwg.mxu0
    %876 = vmatpush.msra.mxu0 %v556
    %877 = vmatpush.msra.mxu0 %v553
    %878 = vmatpush.msra.mxu0 %v550
    %879 = vmatpush.msra.mxu0 %v547
    %880 = vmatpush.msra.mxu0 %v544
    %881 = vmatpush.msra.mxu0 %v541
    %882 = vmatpush.msra.mxu0 %v538
    %883 = vmatpush.msra.mxu0 %v535
    %884 = vmatpush.msra.mxu0 %v532
    %885 = vmatpush.msra.mxu0 %v529
    %886 = vmatpush.msra.mxu0 %v526
    %887 = vmatpush.msra.mxu0 %v523
    %888 = vmatpush.msra.mxu0 %v520
    %889 = vmatpush.msra.mxu0 %v517
    %890 = vmatpush.msra.mxu0 %v514
    %891 = vmatpush.msra.mxu0 %v511
    %892 = vmatmul.f32.gmra.mxu0 %v658
    %v893 = vpop.f32.mrf.mxu0
    %v894 = vadd.f32 %v874, %v893
    %895 = vdwg.mxu0
    %896 = vmatpush.msra.mxu0 %v604
    %897 = vmatpush.msra.mxu0 %v601
    %898 = vmatpush.msra.mxu0 %v598
    %899 = vmatpush.msra.mxu0 %v595
    %900 = vmatpush.msra.mxu0 %v592
    %901 = vmatpush.msra.mxu0 %v589
    %902 = vmatpush.msra.mxu0 %v586
    %903 = vmatpush.msra.mxu0 %v583
    %904 = vmatpush.msra.mxu0 %v580
    %905 = vmatpush.msra.mxu0 %v577
    %906 = vmatpush.msra.mxu0 %v574
    %907 = vmatpush.msra.mxu0 %v571
    %908 = vmatpush.msra.mxu0 %v568
    %909 = vmatpush.msra.mxu0 %v565
    %910 = vmatpush.msra.mxu0 %v562
    %911 = vmatpush.msra.mxu0 %v559
    %912 = vmatmul.f32.gmra.mxu0 %v659
    %v913 = vpop.f32.mrf.mxu0
    %v914 = vadd.f32 %v894, %v913
    %915 = vdwg.mxu0
    %916 = vmatpush.msra.mxu0 0.0
    %917 = vmatpush.msra.mxu0 0.0
    %918 = vmatpush.msra.mxu0 0.0
    %919 = vmatpush.msra.mxu0 0.0
    %920 = vmatpush.msra.mxu0 0.0
    %921 = vmatpush.msra.mxu0 0.0
    %922 = vmatpush.msra.mxu0 0.0
    %923 = vmatpush.msra.mxu0 0.0
    %924 = vmatpush.msra.mxu0 %v628
    %925 = vmatpush.msra.mxu0 %v625
    %926 = vmatpush.msra.mxu0 %v622
    %927 = vmatpush.msra.mxu0 %v619
    %928 = vmatpush.msra.mxu0 %v616
    %929 = vmatpush.msra.mxu0 %v613
    %930 = vmatpush.msra.mxu0 %v610
    %931 = vmatpush.msra.mxu0 %v607
    %932 = vmatmul.f32.gmra.mxu0 %v674
    %v933 = vpop.f32.mrf.mxu0
    %v934 = vadd.f32 %v914, %v933
    %935 = vdwg.mxu0
    %936 = vmatpush.msra.mxu0 %v77
    %937 = vmatpush.msra.mxu0 %v74
    %938 = vmatpush.msra.mxu0 %v71
    %939 = vmatpush.msra.mxu0 %v68
    %940 = vmatpush.msra.mxu0 %v65
    %941 = vmatpush.msra.mxu0 %v62
    %942 = vmatpush.msra.mxu0 %v59
    %943 = vmatpush.msra.mxu0 %v56
    %944 = vmatpush.msra.mxu0 %v53
    %945 = vmatpush.msra.mxu0 %v50
    %946 = vmatpush.msra.mxu0 %v47
    %947 = vmatpush.msra.mxu0 %v44
    %948 = vmatpush.msra.mxu0 %v41
    %949 = vmatpush.msra.mxu0 %v38
    %950 = vmatpush.msra.mxu0 %v35
    %951 = vmatpush.msra.mxu0 %v32
    %952 = vmatmul.f32.gmra.mxu0 %v646
    %v953 = vpop.f32.mrf.mxu0
    %v954 = vadd.f32 %v634, %v953
    %955 = vdwg.mxu0
    %956 = vmatpush.msra.mxu0 %v125
    %957 = vmatpush.msra.mxu0 %v122
    %958 = vmatpush.msra.mxu0 %v119
    %959 = vmatpush.msra.mxu0 %v116
    %960 = vmatpush.msra.mxu0 %v113
    %961 = vmatpush.msra.mxu0 %v110
    %962 = vmatpush.msra.mxu0 %v107
    %963 = vmatpush.msra.mxu0 %v104
    %964 = vmatpush.msra.mxu0 %v101
    %965 = vmatpush.msra.mxu0 %v98
    %966 = vmatpush.msra.mxu0 %v95
    %967 = vmatpush.msra.mxu0 %v92
    %968 = vmatpush.msra.mxu0 %v89
    %969 = vmatpush.msra.mxu0 %v86
    %970 = vmatpush.msra.mxu0 %v83
    %971 = vmatpush.msra.mxu0 %v80
    %972 = vmatmul.f32.gmra.mxu0 %v647
    %v973 = vpop.f32.mrf.mxu0
    %v974 = vadd.f32 %v954, %v973
    %975 = vdwg.mxu0
    %976 = vmatpush.msra.mxu0 %v173
    %977 = vmatpush.msra.mxu0 %v170
    %978 = vmatpush.msra.mxu0 %v167
    %979 = vmatpush.msra.mxu0 %v164
    %980 = vmatpush.msra.mxu0 %v161
    %981 = vmatpush.msra.mxu0 %v158
    %982 = vmatpush.msra.mxu0 %v155
    %983 = vmatpush.msra.mxu0 %v152
    %984 = vmatpush.msra.mxu0 %v149
    %985 = vmatpush.msra.mxu0 %v146
    %986 = vmatpush.msra.mxu0 %v143
    %987 = vmatpush.msra.mxu0 %v140
    %988 = vmatpush.msra.mxu0 %v137
    %989 = vmatpush.msra.mxu0 %v134
    %990 = vmatpush.msra.mxu0 %v131
    %991 = vmatpush.msra.mxu0 %v128
    %992 = vmatmul.f32.gmra.mxu0 %v648
    %v993 = vpop.f32.mrf.mxu0
    %v994 = vadd.f32 %v974, %v993
    %995 = vdwg.mxu0
    %996 = vmatpush.msra.mxu0 %v221
    %997 = vmatpush.msra.mxu0 %v218
    %998 = vmatpush.msra.mxu0 %v215
    %999 = vmatpush.msra.mxu0 %v212
    %1000 = vmatpush.msra.mxu0 %v209
    %1001 = vmatpush.msra.mxu0 %v206
    %1002 = vmatpush.msra.mxu0 %v203
    %1003 = vmatpush.msra.mxu0 %v200
    %1004 = vmatpush.msra.mxu0 %v197
    %1005 = vmatpush.msra.mxu0 %v194
    %1006 = vmatpush.msra.mxu0 %v191
    %1007 = vmatpush.msra.mxu0 %v188
    %1008 = vmatpush.msra.mxu0 %v185
    %1009 = vmatpush.msra.mxu0 %v182
    %1010 = vmatpush.msra.mxu0 %v179
    %1011 = vmatpush.msra.mxu0 %v176
    %1012 = vmatmul.f32.gmra.mxu0 %v649
    %v1013 = vpop.f32.mrf.mxu0
    %v1014 = vadd.f32 %v994, %v1013
    %1015 = vdwg.mxu0
    %1016 = vmatpush.msra.mxu0 %v269
    %1017 = vmatpush.msra.mxu0 %v266
    %1018 = vmatpush.msra.mxu0 %v263
    %1019 = vmatpush.msra.mxu0 %v260
    %1020 = vmatpush.msra.mxu0 %v257
    %1021 = vmatpush.msra.mxu0 %v254
    %1022 = vmatpush.msra.mxu0 %v251
    %1023 = vmatpush.msra.mxu0 %v248
    %1024 = vmatpush.msra.mxu0 %v245
    %1025 = vmatpush.msra.mxu0 %v242
    %1026 = vmatpush.msra.mxu0 %v239
    %1027 = vmatpush.msra.mxu0 %v236
    %1028 = vmatpush.msra.mxu0 %v233
    %1029 = vmatpush.msra.mxu0 %v230
    %1030 = vmatpush.msra.mxu0 %v227
    %1031 = vmatpush.msra.mxu0 %v224
    %1032 = vmatmul.f32.gmra.mxu0 %v650
    %v1033 = vpop.f32.mrf.mxu0
    %v1034 = vadd.f32 %v1014, %v1033
    %1035 = vdwg.mxu0
    %1036 = vmatpush.msra.mxu0 %v317
    %1037 = vmatpush.msra.mxu0 %v314
    %1038 = vmatpush.msra.mxu0 %v311
    %1039 = vmatpush.msra.mxu0 %v308
    %1040 = vmatpush.msra.mxu0 %v305
    %1041 = vmatpush.msra.mxu0 %v302
    %1042 = vmatpush.msra.mxu0 %v299
    %1043 = vmatpush.msra.mxu0 %v296
    %1044 = vmatpush.msra.mxu0 %v293
    %1045 = vmatpush.msra.mxu0 %v290
    %1046 = vmatpush.msra.mxu0 %v287
    %1047 = vmatpush.msra.mxu0 %v284
    %1048 = vmatpush.msra.mxu0 %v281
    %1049 = vmatpush.msra.mxu0 %v278
    %1050 = vmatpush.msra.mxu0 %v275
    %1051 = vmatpush.msra.mxu0 %v272
    %1052 = vmatmul.f32.gmra.mxu0 %v651
    %v1053 = vpop.f32.mrf.mxu0
    %v1054 = vadd.f32 %v1034, %v1053
    %1055 = vdwg.mxu0
    %1056 = vmatpush.msra.mxu0 %v365
    %1057 = vmatpush.msra.mxu0 %v362
    %1058 = vmatpush.msra.mxu0 %v359
    %1059 = vmatpush.msra.mxu0 %v356
    %1060 = vmatpush.msra.mxu0 %v353
    %1061 = vmatpush.msra.mxu0 %v350
    %1062 = vmatpush.msra.mxu0 %v347
    %1063 = vmatpush.msra.mxu0 %v344
    %1064 = vmatpush.msra.mxu0 %v341
    %1065 = vmatpush.msra.mxu0 %v338
    %1066 = vmatpush.msra.mxu0 %v335
    %1067 = vmatpush.msra.mxu0 %v332
    %1068 = vmatpush.msra.mxu0 %v329
    %1069 = vmatpush.msra.mxu0 %v326
    %1070 = vmatpush.msra.mxu0 %v323
    %1071 = vmatpush.msra.mxu0 %v320
    %1072 = vmatmul.f32.gmra.mxu0 %v652
    %v1073 = vpop.f32.mrf.mxu0
    %v1074 = vadd.f32 %v1054, %v1073
    %1075 = vdwg.mxu0
    %1076 = vmatpush.msra.mxu0 %v413
    %1077 = vmatpush.msra.mxu0 %v410
    %1078 = vmatpush.msra.mxu0 %v407
    %1079 = vmatpush.msra.mxu0 %v404
    %1080 = vmatpush.msra.mxu0 %v401
    %1081 = vmatpush.msra.mxu0 %v398
    %1082 = vmatpush.msra.mxu0 %v395
    %1083 = vmatpush.msra.mxu0 %v392
    %1084 = vmatpush.msra.mxu0 %v389
    %1085 = vmatpush.msra.mxu0 %v386
    %1086 = vmatpush.msra.mxu0 %v383
    %1087 = vmatpush.msra.mxu0 %v380
    %1088 = vmatpush.msra.mxu0 %v377
    %1089 = vmatpush.msra.mxu0 %v374
    %1090 = vmatpush.msra.mxu0 %v371
    %1091 = vmatpush.msra.mxu0 %v368
    %1092 = vmatmul.f32.gmra.mxu0 %v653
    %v1093 = vpop.f32.mrf.mxu0
    %v1094 = vadd.f32 %v1074, %v1093
    %1095 = vdwg.mxu0
    %1096 = vmatpush.msra.mxu0 %v461
    %1097 = vmatpush.msra.mxu0 %v458
    %1098 = vmatpush.msra.mxu0 %v455
    %1099 = vmatpush.msra.mxu0 %v452
    %1100 = vmatpush.msra.mxu0 %v449
    %1101 = vmatpush.msra.mxu0 %v446
    %1102 = vmatpush.msra.mxu0 %v443
    %1103 = vmatpush.msra.mxu0 %v440
    %1104 = vmatpush.msra.mxu0 %v437
    %1105 = vmatpush.msra.mxu0 %v434
    %1106 = vmatpush.msra.mxu0 %v431
    %1107 = vmatpush.msra.mxu0 %v428
    %1108 = vmatpush.msra.mxu0 %v425
    %1109 = vmatpush.msra.mxu0 %v422
    %1110 = vmatpush.msra.mxu0 %v419
    %1111 = vmatpush.msra.mxu0 %v416
    %1112 = vmatmul.f32.gmra.mxu0 %v656
    %v1113 = vpop.f32.mrf.mxu0
    %v1114 = vadd.f32 %v1094, %v1113
    %1115 = vdwg.mxu0
    %1116 = vmatpush.msra.mxu0 %v509
    %1117 = vmatpush.msra.mxu0 %v506
    %1118 = vmatpush.msra.mxu0 %v503
    %1119 = vmatpush.msra.mxu0 %v500
    %1120 = vmatpush.msra.mxu0 %v497
    %1121 = vmatpush.msra.mxu0 %v494
    %1122 = vmatpush.msra.mxu0 %v491
    %1123 = vmatpush.msra.mxu0 %v488
    %1124 = vmatpush.msra.mxu0 %v485
    %1125 = vmatpush.msra.mxu0 %v482
    %1126 = vmatpush.msra.mxu0 %v479
    %1127 = vmatpush.msra.mxu0 %v476
    %1128 = vmatpush.msra.mxu0 %v473
    %1129 = vmatpush.msra.mxu0 %v470
    %1130 = vmatpush.msra.mxu0 %v467
    %1131 = vmatpush.msra.mxu0 %v464
    %1132 = vmatmul.f32.gmra.mxu0 %v657
    %v1133 = vpop.f32.mrf.mxu0
    %v1134 = vadd.f32 %v1114, %v1133
    %1135 = vdwg.mxu0
    %1136 = vmatpush.msra.mxu0 %v557
    %1137 = vmatpush.msra.mxu0 %v554
    %1138 = vmatpush.msra.mxu0 %v551
    %1139 = vmatpush.msra.mxu0 %v548
    %1140 = vmatpush.msra.mxu0 %v545
    %1141 = vmatpush.msra.mxu0 %v542
    %1142 = vmatpush.msra.mxu0 %v539
    %1143 = vmatpush.msra.mxu0 %v536
    %1144 = vmatpush.msra.mxu0 %v533
    %1145 = vmatpush.msra.mxu0 %v530
    %1146 = vmatpush.msra.mxu0 %v527
    %1147 = vmatpush.msra.mxu0 %v524
    %1148 = vmatpush.msra.mxu0 %v521
    %1149 = vmatpush.msra.mxu0 %v518
    %1150 = vmatpush.msra.mxu0 %v515
    %1151 = vmatpush.msra.mxu0 %v512
    %1152 = vmatmul.f32.gmra.mxu0 %v658
    %v1153 = vpop.f32.mrf.mxu0
    %v1154 = vadd.f32 %v1134, %v1153
    %1155 = vdwg.mxu0
    %1156 = vmatpush.msra.mxu0 %v605
    %1157 = vmatpush.msra.mxu0 %v602
    %1158 = vmatpush.msra.mxu0 %v599
    %1159 = vmatpush.msra.mxu0 %v596
    %1160 = vmatpush.msra.mxu0 %v593
    %1161 = vmatpush.msra.mxu0 %v590
    %1162 = vmatpush.msra.mxu0 %v587
    %1163 = vmatpush.msra.mxu0 %v584
    %1164 = vmatpush.msra.mxu0 %v581
    %1165 = vmatpush.msra.mxu0 %v578
    %1166 = vmatpush.msra.mxu0 %v575
    %1167 = vmatpush.msra.mxu0 %v572
    %1168 = vmatpush.msra.mxu0 %v569
    %1169 = vmatpush.msra.mxu0 %v566
    %1170 = vmatpush.msra.mxu0 %v563
    %1171 = vmatpush.msra.mxu0 %v560
    %1172 = vmatmul.f32.gmra.mxu0 %v659
    %v1173 = vpop.f32.mrf.mxu0
    %v1174 = vadd.f32 %v1154, %v1173
    %1175 = vdwg.mxu0
    %1176 = vmatpush.msra.mxu0 0.0
    %1177 = vmatpush.msra.mxu0 0.0
    %1178 = vmatpush.msra.mxu0 0.0
    %1179 = vmatpush.msra.mxu0 0.0
    %1180 = vmatpush.msra.mxu0 0.0
    %1181 = vmatpush.msra.mxu0 0.0
    %1182 = vmatpush.msra.mxu0 0.0
    %1183 = vmatpush.msra.mxu0 0.0
    %1184 = vmatpush.msra.mxu0 %v629
    %1185 = vmatpush.msra.mxu0 %v626
    %1186 = vmatpush.msra.mxu0 %v623
    %1187 = vmatpush.msra.mxu0 %v620
    %1188 = vmatpush.msra.mxu0 %v617
    %1189 = vmatpush.msra.mxu0 %v614
    %1190 = vmatpush.msra.mxu0 %v611
    %1191 = vmatpush.msra.mxu0 %v608
    %1192 = vmatmul.f32.gmra.mxu0 %v674
    %v1193 = vpop.f32.mrf.mxu0
    %v1194 = vadd.f32 %v1174, %v1193
    %1195 = vdwg.mxu0
    %1196 = vmatpush.msra.mxu0 %v78
    %1197 = vmatpush.msra.mxu0 %v75
    %1198 = vmatpush.msra.mxu0 %v72
    %1199 = vmatpush.msra.mxu0 %v69
    %1200 = vmatpush.msra.mxu0 %v66
    %1201 = vmatpush.msra.mxu0 %v63
    %1202 = vmatpush.msra.mxu0 %v60
    %1203 = vmatpush.msra.mxu0 %v57
    %1204 = vmatpush.msra.mxu0 %v54
    %1205 = vmatpush.msra.mxu0 %v51
    %1206 = vmatpush.msra.mxu0 %v48
    %1207 = vmatpush.msra.mxu0 %v45
    %1208 = vmatpush.msra.mxu0 %v42
    %1209 = vmatpush.msra.mxu0 %v39
    %1210 = vmatpush.msra.mxu0 %v36
    %1211 = vmatpush.msra.mxu0 %v33
    %1212 = vmatmul.f32.gmra.mxu0 %v646
    %v1213 = vpop.f32.mrf.mxu0
    %v1214 = vadd.f32 %v635, %v1213
    %1215 = vdwg.mxu0
    %1216 = vmatpush.msra.mxu0 %v126
    %1217 = vmatpush.msra.mxu0 %v123
    %1218 = vmatpush.msra.mxu0 %v120
    %1219 = vmatpush.msra.mxu0 %v117
    %1220 = vmatpush.msra.mxu0 %v114
    %1221 = vmatpush.msra.mxu0 %v111
    %1222 = vmatpush.msra.mxu0 %v108
    %1223 = vmatpush.msra.mxu0 %v105
    %1224 = vmatpush.msra.mxu0 %v102
    %1225 = vmatpush.msra.mxu0 %v99
    %1226 = vmatpush.msra.mxu0 %v96
    %1227 = vmatpush.msra.mxu0 %v93
    %1228 = vmatpush.msra.mxu0 %v90
    %1229 = vmatpush.msra.mxu0 %v87
    %1230 = vmatpush.msra.mxu0 %v84
    %1231 = vmatpush.msra.mxu0 %v81
    %1232 = vmatmul.f32.gmra.mxu0 %v647
    %v1233 = vpop.f32.mrf.mxu0
    %v1234 = vadd.f32 %v1214, %v1233
    %1235 = vdwg.mxu0
    %1236 = vmatpush.msra.mxu0 %v174
    %1237 = vmatpush.msra.mxu0 %v171
    %1238 = vmatpush.msra.mxu0 %v168
    %1239 = vmatpush.msra.mxu0 %v165
    %1240 = vmatpush.msra.mxu0 %v162
    %1241 = vmatpush.msra.mxu0 %v159
    %1242 = vmatpush.msra.mxu0 %v156
    %1243 = vmatpush.msra.mxu0 %v153
    %1244 = vmatpush.msra.mxu0 %v150
    %1245 = vmatpush.msra.mxu0 %v147
    %1246 = vmatpush.msra.mxu0 %v144
    %1247 = vmatpush.msra.mxu0 %v141
    %1248 = vmatpush.msra.mxu0 %v138
    %1249 = vmatpush.msra.mxu0 %v135
    %1250 = vmatpush.msra.mxu0 %v132
    %1251 = vmatpush.msra.mxu0 %v129
    %1252 = vmatmul.f32.gmra.mxu0 %v648
    %v1253 = vpop.f32.mrf.mxu0
    %v1254 = vadd.f32 %v1234, %v1253
    %1255 = vdwg.mxu0
    %1256 = vmatpush.msra.mxu0 %v222
    %1257 = vmatpush.msra.mxu0 %v219
    %1258 = vmatpush.msra.mxu0 %v216
    %1259 = vmatpush.msra.mxu0 %v213
    %1260 = vmatpush.msra.mxu0 %v210
    %1261 = vmatpush.msra.mxu0 %v207
    %1262 = vmatpush.msra.mxu0 %v204
    %1263 = vmatpush.msra.mxu0 %v201
    %1264 = vmatpush.msra.mxu0 %v198
    %1265 = vmatpush.msra.mxu0 %v195
    %1266 = vmatpush.msra.mxu0 %v192
    %1267 = vmatpush.msra.mxu0 %v189
    %1268 = vmatpush.msra.mxu0 %v186
    %1269 = vmatpush.msra.mxu0 %v183
    %1270 = vmatpush.msra.mxu0 %v180
    %1271 = vmatpush.msra.mxu0 %v177
    %1272 = vmatmul.f32.gmra.mxu0 %v649
    %v1273 = vpop.f32.mrf.mxu0
    %v1274 = vadd.f32 %v1254, %v1273
    %1275 = vdwg.mxu0
    %1276 = vmatpush.msra.mxu0 %v270
    %1277 = vmatpush.msra.mxu0 %v267
    %1278 = vmatpush.msra.mxu0 %v264
    %1279 = vmatpush.msra.mxu0 %v261
    %1280 = vmatpush.msra.mxu0 %v258
    %1281 = vmatpush.msra.mxu0 %v255
    %1282 = vmatpush.msra.mxu0 %v252
    %1283 = vmatpush.msra.mxu0 %v249
    %1284 = vmatpush.msra.mxu0 %v246
    %1285 = vmatpush.msra.mxu0 %v243
    %1286 = vmatpush.msra.mxu0 %v240
    %1287 = vmatpush.msra.mxu0 %v237
    %1288 = vmatpush.msra.mxu0 %v234
    %1289 = vmatpush.msra.mxu0 %v231
    %1290 = vmatpush.msra.mxu0 %v228
    %1291 = vmatpush.msra.mxu0 %v225
    %1292 = vmatmul.f32.gmra.mxu0 %v650
    %v1293 = vpop.f32.mrf.mxu0
    %v1294 = vadd.f32 %v1274, %v1293
    %1295 = vdwg.mxu0
    %1296 = vmatpush.msra.mxu0 %v318
    %1297 = vmatpush.msra.mxu0 %v315
    %1298 = vmatpush.msra.mxu0 %v312
    %1299 = vmatpush.msra.mxu0 %v309
    %1300 = vmatpush.msra.mxu0 %v306
    %1301 = vmatpush.msra.mxu0 %v303
    %1302 = vmatpush.msra.mxu0 %v300
    %1303 = vmatpush.msra.mxu0 %v297
    %1304 = vmatpush.msra.mxu0 %v294
    %1305 = vmatpush.msra.mxu0 %v291
    %1306 = vmatpush.msra.mxu0 %v288
    %1307 = vmatpush.msra.mxu0 %v285
    %1308 = vmatpush.msra.mxu0 %v282
    %1309 = vmatpush.msra.mxu0 %v279
    %1310 = vmatpush.msra.mxu0 %v276
    %1311 = vmatpush.msra.mxu0 %v273
    %1312 = vmatmul.f32.gmra.mxu0 %v651
    %v1313 = vpop.f32.mrf.mxu0
    %v1314 = vadd.f32 %v1294, %v1313
    %1315 = vdwg.mxu0
    %1316 = vmatpush.msra.mxu0 %v366
    %1317 = vmatpush.msra.mxu0 %v363
    %1318 = vmatpush.msra.mxu0 %v360
    %1319 = vmatpush.msra.mxu0 %v357
    %1320 = vmatpush.msra.mxu0 %v354
    %1321 = vmatpush.msra.mxu0 %v351
    %1322 = vmatpush.msra.mxu0 %v348
    %1323 = vmatpush.msra.mxu0 %v345
    %1324 = vmatpush.msra.mxu0 %v342
    %1325 = vmatpush.msra.mxu0 %v339
    %1326 = vmatpush.msra.mxu0 %v336
    %1327 = vmatpush.msra.mxu0 %v333
    %1328 = vmatpush.msra.mxu0 %v330
    %1329 = vmatpush.msra.mxu0 %v327
    %1330 = vmatpush.msra.mxu0 %v324
    %1331 = vmatpush.msra.mxu0 %v321
    %1332 = vmatmul.f32.gmra.mxu0 %v652
    %v1333 = vpop.f32.mrf.mxu0
    %v1334 = vadd.f32 %v1314, %v1333
    %1335 = vdwg.mxu0
    %1336 = vmatpush.msra.mxu0 %v414
    %1337 = vmatpush.msra.mxu0 %v411
    %1338 = vmatpush.msra.mxu0 %v408
    %1339 = vmatpush.msra.mxu0 %v405
    %1340 = vmatpush.msra.mxu0 %v402
    %1341 = vmatpush.msra.mxu0 %v399
    %1342 = vmatpush.msra.mxu0 %v396
    %1343 = vmatpush.msra.mxu0 %v393
    %1344 = vmatpush.msra.mxu0 %v390
    %1345 = vmatpush.msra.mxu0 %v387
    %1346 = vmatpush.msra.mxu0 %v384
    %1347 = vmatpush.msra.mxu0 %v381
    %1348 = vmatpush.msra.mxu0 %v378
    %1349 = vmatpush.msra.mxu0 %v375
    %1350 = vmatpush.msra.mxu0 %v372
    %1351 = vmatpush.msra.mxu0 %v369
    %1352 = vmatmul.f32.gmra.mxu0 %v653
    %v1353 = vpop.f32.mrf.mxu0
    %v1354 = vadd.f32 %v1334, %v1353
    %1355 = vdwg.mxu0
    %1356 = vmatpush.msra.mxu0 %v462
    %1357 = vmatpush.msra.mxu0 %v459
    %1358 = vmatpush.msra.mxu0 %v456
    %1359 = vmatpush.msra.mxu0 %v453
    %1360 = vmatpush.msra.mxu0 %v450
    %1361 = vmatpush.msra.mxu0 %v447
    %1362 = vmatpush.msra.mxu0 %v444
    %1363 = vmatpush.msra.mxu0 %v441
    %1364 = vmatpush.msra.mxu0 %v438
    %1365 = vmatpush.msra.mxu0 %v435
    %1366 = vmatpush.msra.mxu0 %v432
    %1367 = vmatpush.msra.mxu0 %v429
    %1368 = vmatpush.msra.mxu0 %v426
    %1369 = vmatpush.msra.mxu0 %v423
    %1370 = vmatpush.msra.mxu0 %v420
    %1371 = vmatpush.msra.mxu0 %v417
    %1372 = vmatmul.f32.gmra.mxu0 %v656
    %v1373 = vpop.f32.mrf.mxu0
    %v1374 = vadd.f32 %v1354, %v1373
    %1375 = vdwg.mxu0
    %1376 = vmatpush.msra.mxu0 %v510
    %1377 = vmatpush.msra.mxu0 %v507
    %1378 = vmatpush.msra.mxu0 %v504
    %1379 = vmatpush.msra.mxu0 %v501
    %1380 = vmatpush.msra.mxu0 %v498
    %1381 = vmatpush.msra.mxu0 %v495
    %1382 = vmatpush.msra.mxu0 %v492
    %1383 = vmatpush.msra.mxu0 %v489
    %1384 = vmatpush.msra.mxu0 %v486
    %1385 = vmatpush.msra.mxu0 %v483
    %1386 = vmatpush.msra.mxu0 %v480
    %1387 = vmatpush.msra.mxu0 %v477
    %1388 = vmatpush.msra.mxu0 %v474
    %1389 = vmatpush.msra.mxu0 %v471
    %1390 = vmatpush.msra.mxu0 %v468
    %1391 = vmatpush.msra.mxu0 %v465
    %1392 = vmatmul.f32.gmra.mxu0 %v657
    %v1393 = vpop.f32.mrf.mxu0
    %v1394 = vadd.f32 %v1374, %v1393
    %1395 = vdwg.mxu0
    %1396 = vmatpush.msra.mxu0 %v558
    %1397 = vmatpush.msra.mxu0 %v555
    %1398 = vmatpush.msra.mxu0 %v552
    %1399 = vmatpush.msra.mxu0 %v549
    %1400 = vmatpush.msra.mxu0 %v546
    %1401 = vmatpush.msra.mxu0 %v543
    %1402 = vmatpush.msra.mxu0 %v540
    %1403 = vmatpush.msra.mxu0 %v537
    %1404 = vmatpush.msra.mxu0 %v534
    %1405 = vmatpush.msra.mxu0 %v531
    %1406 = vmatpush.msra.mxu0 %v528
    %1407 = vmatpush.msra.mxu0 %v525
    %1408 = vmatpush.msra.mxu0 %v522
    %1409 = vmatpush.msra.mxu0 %v519
    %1410 = vmatpush.msra.mxu0 %v516
    %1411 = vmatpush.msra.mxu0 %v513
    %1412 = vmatmul.f32.gmra.mxu0 %v658
    %v1413 = vpop.f32.mrf.mxu0
    %v1414 = vadd.f32 %v1394, %v1413
    %1415 = vdwg.mxu0
    %1416 = vmatpush.msra.mxu0 %v606
    %1417 = vmatpush.msra.mxu0 %v603
    %1418 = vmatpush.msra.mxu0 %v600
    %1419 = vmatpush.msra.mxu0 %v597
    %1420 = vmatpush.msra.mxu0 %v594
    %1421 = vmatpush.msra.mxu0 %v591
    %1422 = vmatpush.msra.mxu0 %v588
    %1423 = vmatpush.msra.mxu0 %v585
    %1424 = vmatpush.msra.mxu0 %v582
    %1425 = vmatpush.msra.mxu0 %v579
    %1426 = vmatpush.msra.mxu0 %v576
    %1427 = vmatpush.msra.mxu0 %v573
    %1428 = vmatpush.msra.mxu0 %v570
    %1429 = vmatpush.msra.mxu0 %v567
    %1430 = vmatpush.msra.mxu0 %v564
    %1431 = vmatpush.msra.mxu0 %v561
    %1432 = vmatmul.f32.gmra.mxu0 %v659
    %v1433 = vpop.f32.mrf.mxu0
    %v1434 = vadd.f32 %v1414, %v1433
    %1435 = vdwg.mxu0
    %1436 = vmatpush.msra.mxu0 0.0
    %1437 = vmatpush.msra.mxu0 0.0
    %1438 = vmatpush.msra.mxu0 0.0
    %1439 = vmatpush.msra.mxu0 0.0
    %1440 = vmatpush.msra.mxu0 0.0
    %1441 = vmatpush.msra.mxu0 0.0
    %1442 = vmatpush.msra.mxu0 0.0
    %1443 = vmatpush.msra.mxu0 0.0
    %1444 = vmatpush.msra.mxu0 %v630
    %1445 = vmatpush.msra.mxu0 %v627
    %1446 = vmatpush.msra.mxu0 %v624
    %1447 = vmatpush.msra.mxu0 %v621
    %1448 = vmatpush.msra.mxu0 %v618
    %1449 = vmatpush.msra.mxu0 %v615
    %1450 = vmatpush.msra.mxu0 %v612
    %1451 = vmatpush.msra.mxu0 %v609
    %1452 = vmatmul.f32.gmra.mxu0 %v674
    %v1453 = vpop.f32.mrf.mxu0
    %v1454 = vadd.f32 %v1434, %v1453
    %1455 = vdwg.mxu0
    %v1456 = vmax.f32 %v934, 0.0
    %v1457 = vmax.f32 %v1194, 0.0
    %v1458 = vmax.f32 %v1454, 0.0
    %v1459 = vld [vmem:[%s3] sm:$0xff]
    %v1460 = vld [vmem:[%s3 + $0x8] sm:$0xff]
    %v1461 = vld [vmem:[%s3 + $0x10] sm:$0xff]
    %v1462 = vld [vmem:[%s3 + $0x18] sm:$0xff]
    %v1463 = vld [vmem:[%s3 + $0x20] sm:$0xff]
    %v1464 = vld [vmem:[%s3 + $0x28] sm:$0xff]
    %v1465 = vld [vmem:[%s3 + $0x30] sm:$0xff]
    %v1466 = vld [vmem:[%s3 + $0x38] sm:$0xff]
    %v1467 = vld [vmem:[%s3 + $0x40] sm:$0xff]
    %v1468 = vld [vmem:[%s3 + $0x48] sm:$0xff]
    %v1469 = vld [vmem:[%s3 + $0x50] sm:$0xff]
    %v1470 = vld [vmem:[%s3 + $0x58] sm:$0xff]
    %v1471 = vld [vmem:[%s3 + $0x60] sm:$0xff]
    %v1472 = vld [vmem:[%s3 + $0x68] sm:$0xff]
    %v1473 = vld [vmem:[%s3 + $0x70] sm:$0xff]
    %v1474 = vld [vmem:[%s3 + $0x78] sm:$0xff]
    %v1475 = vld [vmem:[%s3 + $0x80] sm:$0xff]
    %v1476 = vld [vmem:[%s3 + $0x88] sm:$0xff]
    %v1477 = vld [vmem:[%s3 + $0x90] sm:$0xff]
    %v1478 = vld [vmem:[%s3 + $0x98] sm:$0xff]
    %v1479 = vld [vmem:[%s3 + $0xa0] sm:$0xff]
    %v1480 = vld [vmem:[%s3 + $0xa8] sm:$0xff]
    %v1481 = vld [vmem:[%s3 + $0xb0] sm:$0xff]
    %v1482 = vld [vmem:[%s3 + $0xb8] sm:$0xff]
    %v1483 = vld [vmem:[%s3 + $0xc0] sm:$0xff]
    %v1484 = vld [vmem:[%s3 + $0xc8] sm:$0xff]
    %v1485 = vld [vmem:[%s3 + $0xd0] sm:$0xff]
    %v1486 = vld [vmem:[%s3 + $0xd8] sm:$0xff]
    %v1487 = vld [vmem:[%s3 + $0xe0] sm:$0xff]
    %v1488 = vld [vmem:[%s3 + $0xe8] sm:$0xff]
    %v1489 = vld [vmem:[%s3 + $0xf0] sm:$0xff]
    %v1490 = vld [vmem:[%s3 + $0xf8] sm:$0xff]
    %v1491 = vld [vmem:[%s3 + $0x100] sm:$0xff]
    %v1492 = vld [vmem:[%s3 + $0x108] sm:$0xff]
    %v1493 = vld [vmem:[%s3 + $0x110] sm:$0xff]
    %v1494 = vld [vmem:[%s3 + $0x118] sm:$0xff]
    %v1495 = vld [vmem:[%s3 + $0x120] sm:$0xff]
    %v1496 = vld [vmem:[%s3 + $0x128] sm:$0xff]
    %v1497 = vld [vmem:[%s3 + $0x130] sm:$0xff]
    %v1498 = vld [vmem:[%s3 + $0x138] sm:$0xff]
    %v1499 = vld [vmem:[%s3 + $0x140] sm:$0xff]
    %v1500 = vld [vmem:[%s3 + $0x148] sm:$0xff]
    %v1501 = vld [vmem:[%s3 + $0x150] sm:$0xff]
    %v1502 = vld [vmem:[%s3 + $0x158] sm:$0xff]
    %v1503 = vld [vmem:[%s3 + $0x160] sm:$0xff]
    %v1504 = vld [vmem:[%s3 + $0x168] sm:$0xff]
    %v1505 = vld [vmem:[%s3 + $0x170] sm:$0xff]
    %v1506 = vld [vmem:[%s3 + $0x178] sm:$0xff]
    %v1507 = vld [vmem:[%s3 + $0x180] sm:$0xff]
    %v1508 = vld [vmem:[%s3 + $0x188] sm:$0xff]
    %v1509 = vld [vmem:[%s3 + $0x190] sm:$0xff]
    %v1510 = vld [vmem:[%s3 + $0x198] sm:$0xff]
    %v1511 = vld [vmem:[%s3 + $0x1a0] sm:$0xff]
    %v1512 = vld [vmem:[%s3 + $0x1a8] sm:$0xff]
    %v1513 = vld [vmem:[%s3 + $0x1b0] sm:$0xff]
    %v1514 = vld [vmem:[%s3 + $0x1b8] sm:$0xff]
    %v1515 = vld [vmem:[%s3 + $0x1c0] sm:$0xff]
    %v1516 = vld [vmem:[%s3 + $0x1c8] sm:$0xff]
    %v1517 = vld [vmem:[%s3 + $0x1d0] sm:$0xff]
    %v1518 = vld [vmem:[%s3 + $0x1d8] sm:$0xff]
    %v1519 = vld [vmem:[%s3 + $0x1e0] sm:$0xff]
    %v1520 = vld [vmem:[%s3 + $0x1e8] sm:$0xff]
    %v1521 = vld [vmem:[%s3 + $0x1f0] sm:$0xff]
    %v1522 = vld [vmem:[%s3 + $0x1f8] sm:$0xff]
    %v1523 = vld [vmem:[%s3 + $0x200] sm:$0xff]
    %v1524 = vld [vmem:[%s3 + $0x208] sm:$0xff]
    %v1525 = vld [vmem:[%s3 + $0x210] sm:$0xff]
    %v1526 = vld [vmem:[%s3 + $0x218] sm:$0xff]
    %v1527 = vld [vmem:[%s3 + $0x220] sm:$0xff]
    %v1528 = vld [vmem:[%s3 + $0x228] sm:$0xff]
    %v1529 = vld [vmem:[%s3 + $0x230] sm:$0xff]
    %v1530 = vld [vmem:[%s3 + $0x238] sm:$0xff]
    %v1531 = vld [vmem:[%s3 + $0x240] sm:$0xff]
    %v1532 = vld [vmem:[%s3 + $0x248] sm:$0xff]
    %v1533 = vld [vmem:[%s3 + $0x250] sm:$0xff]
    %v1534 = vld [vmem:[%s3 + $0x258] sm:$0xff]
    %v1535 = vld [vmem:[%s3 + $0x260] sm:$0xff]
    %v1536 = vld [vmem:[%s3 + $0x268] sm:$0xff]
    %v1537 = vld [vmem:[%s3 + $0x270] sm:$0xff]
    %v1538 = vld [vmem:[%s3 + $0x278] sm:$0xff]
    %v1539 = vld [vmem:[%s3 + $0x280] sm:$0xff]
    %v1540 = vld [vmem:[%s3 + $0x288] sm:$0xff]
    %v1541 = vld [vmem:[%s3 + $0x290] sm:$0xff]
    %v1542 = vld [vmem:[%s3 + $0x298] sm:$0xff]
    %v1543 = vld [vmem:[%s3 + $0x2a0] sm:$0xff]
    %v1544 = vld [vmem:[%s3 + $0x2a8] sm:$0xff]
    %v1545 = vld [vmem:[%s3 + $0x2b0] sm:$0xff]
    %v1546 = vld [vmem:[%s3 + $0x2b8] sm:$0xff]
    %v1547 = vld [vmem:[%s3 + $0x2c0] sm:$0xff]
    %v1548 = vld [vmem:[%s3 + $0x2c8] sm:$0xff]
    %v1549 = vld [vmem:[%s3 + $0x2d0] sm:$0xff]
    %v1550 = vld [vmem:[%s3 + $0x2d8] sm:$0xff]
    %v1551 = vld [vmem:[%s3 + $0x2e0] sm:$0xff]
    %v1552 = vld [vmem:[%s3 + $0x2e8] sm:$0xff]
    %v1553 = vld [vmem:[%s3 + $0x2f0] sm:$0xff]
    %v1554 = vld [vmem:[%s3 + $0x2f8] sm:$0xff]
    %v1555 = vld [vmem:[%s4] sm:$0x3]
    %v1557 = vperm.slane %v1555, 0
    %v1558 = vperm.slane %v1555, 1
    %1561 = vmatpush.msra.mxu0 %v1489
    %1562 = vmatpush.msra.mxu0 %v1487
    %1563 = vmatpush.msra.mxu0 %v1485
    %1564 = vmatpush.msra.mxu0 %v1483
    %1565 = vmatpush.msra.mxu0 %v1481
    %1566 = vmatpush.msra.mxu0 %v1479
    %1567 = vmatpush.msra.mxu0 %v1477
    %1568 = vmatpush.msra.mxu0 %v1475
    %1569 = vmatpush.msra.mxu0 %v1473
    %1570 = vmatpush.msra.mxu0 %v1471
    %1571 = vmatpush.msra.mxu0 %v1469
    %1572 = vmatpush.msra.mxu0 %v1467
    %1573 = vmatpush.msra.mxu0 %v1465
    %1574 = vmatpush.msra.mxu0 %v1463
    %1575 = vmatpush.msra.mxu0 %v1461
    %1576 = vmatpush.msra.mxu0 %v1459
    %1577 = vmatmul.f32.gmra.mxu0 %v1456
    %v1578 = vpop.f32.mrf.mxu0
    %v1579 = vadd.f32 %v1557, %v1578
    %1580 = vdwg.mxu0
    %1581 = vmatpush.msra.mxu0 %v1521
    %1582 = vmatpush.msra.mxu0 %v1519
    %1583 = vmatpush.msra.mxu0 %v1517
    %1584 = vmatpush.msra.mxu0 %v1515
    %1585 = vmatpush.msra.mxu0 %v1513
    %1586 = vmatpush.msra.mxu0 %v1511
    %1587 = vmatpush.msra.mxu0 %v1509
    %1588 = vmatpush.msra.mxu0 %v1507
    %1589 = vmatpush.msra.mxu0 %v1505
    %1590 = vmatpush.msra.mxu0 %v1503
    %1591 = vmatpush.msra.mxu0 %v1501
    %1592 = vmatpush.msra.mxu0 %v1499
    %1593 = vmatpush.msra.mxu0 %v1497
    %1594 = vmatpush.msra.mxu0 %v1495
    %1595 = vmatpush.msra.mxu0 %v1493
    %1596 = vmatpush.msra.mxu0 %v1491
    %1597 = vmatmul.f32.gmra.mxu0 %v1457
    %v1598 = vpop.f32.mrf.mxu0
    %v1599 = vadd.f32 %v1579, %v1598
    %1600 = vdwg.mxu0
    %1601 = vmatpush.msra.mxu0 %v1553
    %1602 = vmatpush.msra.mxu0 %v1551
    %1603 = vmatpush.msra.mxu0 %v1549
    %1604 = vmatpush.msra.mxu0 %v1547
    %1605 = vmatpush.msra.mxu0 %v1545
    %1606 = vmatpush.msra.mxu0 %v1543
    %1607 = vmatpush.msra.mxu0 %v1541
    %1608 = vmatpush.msra.mxu0 %v1539
    %1609 = vmatpush.msra.mxu0 %v1537
    %1610 = vmatpush.msra.mxu0 %v1535
    %1611 = vmatpush.msra.mxu0 %v1533
    %1612 = vmatpush.msra.mxu0 %v1531
    %1613 = vmatpush.msra.mxu0 %v1529
    %1614 = vmatpush.msra.mxu0 %v1527
    %1615 = vmatpush.msra.mxu0 %v1525
    %1616 = vmatpush.msra.mxu0 %v1523
    %1617 = vmatmul.f32.gmra.mxu0 %v1458
    %v1618 = vpop.f32.mrf.mxu0
    %v1619 = vadd.f32 %v1599, %v1618
    %1620 = vdwg.mxu0
    %1621 = vmatpush.msra.mxu0 %v1490
    %1622 = vmatpush.msra.mxu0 %v1488
    %1623 = vmatpush.msra.mxu0 %v1486
    %1624 = vmatpush.msra.mxu0 %v1484
    %1625 = vmatpush.msra.mxu0 %v1482
    %1626 = vmatpush.msra.mxu0 %v1480
    %1627 = vmatpush.msra.mxu0 %v1478
    %1628 = vmatpush.msra.mxu0 %v1476
    %1629 = vmatpush.msra.mxu0 %v1474
    %1630 = vmatpush.msra.mxu0 %v1472
    %1631 = vmatpush.msra.mxu0 %v1470
    %1632 = vmatpush.msra.mxu0 %v1468
    %1633 = vmatpush.msra.mxu0 %v1466
    %1634 = vmatpush.msra.mxu0 %v1464
    %1635 = vmatpush.msra.mxu0 %v1462
    %1636 = vmatpush.msra.mxu0 %v1460
    %1637 = vmatmul.f32.gmra.mxu0 %v1456
    %v1638 = vpop.f32.mrf.mxu0
    %v1639 = vadd.f32 %v1558, %v1638
    %1640 = vdwg.mxu0
    %1641 = vmatpush.msra.mxu0 %v1522
    %1642 = vmatpush.msra.mxu0 %v1520
    %1643 = vmatpush.msra.mxu0 %v1518
    %1644 = vmatpush.msra.mxu0 %v1516
    %1645 = vmatpush.msra.mxu0 %v1514
    %1646 = vmatpush.msra.mxu0 %v1512
    %1647 = vmatpush.msra.mxu0 %v1510
    %1648 = vmatpush.msra.mxu0 %v1508
    %1649 = vmatpush.msra.mxu0 %v1506
    %1650 = vmatpush.msra.mxu0 %v1504
    %1651 = vmatpush.msra.mxu0 %v1502
    %1652 = vmatpush.msra.mxu0 %v1500
    %1653 = vmatpush.msra.mxu0 %v1498
    %1654 = vmatpush.msra.mxu0 %v1496
    %1655 = vmatpush.msra.mxu0 %v1494
    %1656 = vmatpush.msra.mxu0 %v1492
    %1657 = vmatmul.f32.gmra.mxu0 %v1457
    %v1658 = vpop.f32.mrf.mxu0
    %v1659 = vadd.f32 %v1639, %v1658
    %1660 = vdwg.mxu0
    %1661 = vmatpush.msra.mxu0 %v1554
    %1662 = vmatpush.msra.mxu0 %v1552
    %1663 = vmatpush.msra.mxu0 %v1550
    %1664 = vmatpush.msra.mxu0 %v1548
    %1665 = vmatpush.msra.mxu0 %v1546
    %1666 = vmatpush.msra.mxu0 %v1544
    %1667 = vmatpush.msra.mxu0 %v1542
    %1668 = vmatpush.msra.mxu0 %v1540
    %1669 = vmatpush.msra.mxu0 %v1538
    %1670 = vmatpush.msra.mxu0 %v1536
    %1671 = vmatpush.msra.mxu0 %v1534
    %1672 = vmatpush.msra.mxu0 %v1532
    %1673 = vmatpush.msra.mxu0 %v1530
    %1674 = vmatpush.msra.mxu0 %v1528
    %1675 = vmatpush.msra.mxu0 %v1526
    %1676 = vmatpush.msra.mxu0 %v1524
    %1677 = vmatmul.f32.gmra.mxu0 %v1458
    %v1678 = vpop.f32.mrf.mxu0
    %v1679 = vadd.f32 %v1659, %v1678
    %1680 = vdwg.mxu0
    %v1681 = vmax.f32 %v1619, 0.0
    %v1682 = vmax.f32 %v1679, 0.0
    %v1683 = vld [vmem:[%s5] sm:$0xff]
    %v1684 = vld [vmem:[%s5 + $0x8] sm:$0xff]
    %v1685 = vld [vmem:[%s5 + $0x10] sm:$0xff]
    %v1686 = vld [vmem:[%s5 + $0x18] sm:$0xff]
    %v1687 = vld [vmem:[%s5 + $0x20] sm:$0xff]
    %v1688 = vld [vmem:[%s5 + $0x28] sm:$0xff]
    %v1689 = vld [vmem:[%s5 + $0x30] sm:$0xff]
    %v1690 = vld [vmem:[%s5 + $0x38] sm:$0xff]
    %v1691 = vld [vmem:[%s5 + $0x40] sm:$0xff]
    %v1692 = vld [vmem:[%s5 + $0x48] sm:$0xff]
    %v1693 = vld [vmem:[%s5 + $0x50] sm:$0xff]
    %v1694 = vld [vmem:[%s5 + $0x58] sm:$0xff]
    %v1695 = vld [vmem:[%s5 + $0x60] sm:$0xff]
    %v1696 = vld [vmem:[%s5 + $0x68] sm:$0xff]
    %v1697 = vld [vmem:[%s5 + $0x70] sm:$0xff]
    %v1698 = vld [vmem:[%s5 + $0x78] sm:$0xff]
    %v1699 = vld [vmem:[%s5 + $0x80] sm:$0xff]
    %v1700 = vld [vmem:[%s5 + $0x88] sm:$0xff]
    %v1701 = vld [vmem:[%s5 + $0x90] sm:$0xff]
    %v1702 = vld [vmem:[%s5 + $0x98] sm:$0xff]
    %v1703 = vld [vmem:[%s5 + $0xa0] sm:$0xff]
    %v1704 = vld [vmem:[%s5 + $0xa8] sm:$0xff]
    %v1705 = vld [vmem:[%s5 + $0xb0] sm:$0xff]
    %v1706 = vld [vmem:[%s5 + $0xb8] sm:$0xff]
    %v1707 = vld [vmem:[%s6] sm:$0x1]
    %v1709 = vperm.slane %v1707, 0
    %v1712 = vsel %vm673, %v1682, 0
    %1714 = vmatpush.msra.mxu0 %v1698
    %1715 = vmatpush.msra.mxu0 %v1697
    %1716 = vmatpush.msra.mxu0 %v1696
    %1717 = vmatpush.msra.mxu0 %v1695
    %1718 = vmatpush.msra.mxu0 %v1694
    %1719 = vmatpush.msra.mxu0 %v1693
    %1720 = vmatpush.msra.mxu0 %v1692
    %1721 = vmatpush.msra.mxu0 %v1691
    %1722 = vmatpush.msra.mxu0 %v1690
    %1723 = vmatpush.msra.mxu0 %v1689
    %1724 = vmatpush.msra.mxu0 %v1688
    %1725 = vmatpush.msra.mxu0 %v1687
    %1726 = vmatpush.msra.mxu0 %v1686
    %1727 = vmatpush.msra.mxu0 %v1685
    %1728 = vmatpush.msra.mxu0 %v1684
    %1729 = vmatpush.msra.mxu0 %v1683
    %1730 = vmatmul.f32.gmra.mxu0 %v1681
    %v1731 = vpop.f32.mrf.mxu0
    %v1732 = vadd.f32 %v1709, %v1731
    %1733 = vdwg.mxu0
    %1734 = vmatpush.msra.mxu0 0.0
    %1735 = vmatpush.msra.mxu0 0.0
    %1736 = vmatpush.msra.mxu0 0.0
    %1737 = vmatpush.msra.mxu0 0.0
    %1738 = vmatpush.msra.mxu0 0.0
    %1739 = vmatpush.msra.mxu0 0.0
    %1740 = vmatpush.msra.mxu0 0.0
    %1741 = vmatpush.msra.mxu0 0.0
    %1742 = vmatpush.msra.mxu0 %v1706
    %1743 = vmatpush.msra.mxu0 %v1705
    %1744 = vmatpush.msra.mxu0 %v1704
    %1745 = vmatpush.msra.mxu0 %v1703
    %1746 = vmatpush.msra.mxu0 %v1702
    %1747 = vmatpush.msra.mxu0 %v1701
    %1748 = vmatpush.msra.mxu0 %v1700
    %1749 = vmatpush.msra.mxu0 %v1699
    %1750 = vmatmul.f32.gmra.mxu0 %v1712
    %v1751 = vpop.f32.mrf.mxu0
    %v1752 = vadd.f32 %v1732, %v1751
    %1753 = vdwg.mxu0
    %vm1754 = vcmask 74752
    %1755 = vst.msk [vmem:[#allocation2] sm:$0x3] %vm1754, %v1752
    // Predicated region
    $region30: #{cnn_cifar10_forward.5} parent=1 // pred_check
      _
    $region31: #{cnn_cifar10_forward.5} parent=1 // pred_check_branch
      %1757 = sbr.rel (0) target = $region33
    $region32: #{cnn_cifar10_forward.5} parent=1 // pred_region
      %1759 = vsyncadd [#allocation3], 0
      %s1761 = sshll.u32 [#allocation2], 4
      %s1762 = int_to_ptr.vmem [resolvable:$true] %s1761
      %s1763 = sshll.u32 %s7, 4
      %s1764 = int_to_ptr.hbm [resolvable:$true] %s1763
      %1766 = dma.vmem_to_hbm [thread:$0]  %s1762, 32, %s1764, [#allocation3]
    $region33: #{cnn_cifar10_forward.5} parent=1 // pred_fallthru
      _
    // Predicated region
    $region34: #{cnn_cifar10_forward.5} parent=1 // pred_check
      _
    $region35: #{cnn_cifar10_forward.5} parent=1 // pred_check_branch
      %1768 = sbr.rel (0) target = $region37
    $region36: #{cnn_cifar10_forward.5} parent=1 // pred_region
      %1770 = dma.done [#allocation3], 32
    $region37: #{cnn_cifar10_forward.5} parent=1 // pred_fallthru
      _
    %1771 = vsyncpa [#allocation3], 1

</llo_original>
